<compile_context>
chip_gen: v7x
topology: tpu7x:2x2x1
jax: 0.10.0
libtpu: 0.0.40
codegen_flags: <defaults>
</compile_context>

<pallas_src>
import functools

import jax
import jax.numpy as jnp
from jax.experimental import pallas as pl
from jax.experimental.pallas import tpu as pltpu

LN_EPS = 1e-6                      # timm LayerNorm default
INV_SQRT2 = 0.7071067811865476
IO_DTYPE = jnp.bfloat16            # kernel I/O + weights; elementwise math stays f32
_VMEM_FULL = pl.BlockSpec(memory_space=pltpu.MemorySpace.VMEM)

# TODO(synk): at real ViT-Base scale on v7x (64 MiB VMEM), additionally mark the
# grid-constant weight BlockSpecs pipeline_mode=pl.Buffered(1) (or split the block
# into attention / MLP pallas_calls) to avoid double-buffering ~14 MB of bf16 weights.


@functools.lru_cache(maxsize=None)
def _vmem_limit_bytes(default=48 * 1024 * 1024):
    """Generation-aware VMEM budget: ~3/4 of physical (96 MiB on v5e/v6e, 48 MiB on v7x)."""
    try:
        cap = int(pltpu.get_tpu_info().vmem_capacity_bytes)
        return max(32 * 1024 * 1024, (cap * 3) // 4)
    except Exception:
        return default


def _pick_batch_block(batch, seq, target_rows=256):
    """Pick Bt so Bt*seq ~ target MXU rows while keeping >= 2 grid steps (v7x 2 TCs)."""
    bt = max(1, min(batch, target_rows // max(seq, 1)))
    while batch % bt:
        bt -= 1
    if bt == batch and batch > 1:
        bt = batch // 2
        while batch % bt:
            bt -= 1
    return bt


# ------------------------------ in-kernel helpers ----------------------------

def _layernorm_no_affine(x):
    mu = jnp.mean(x, axis=-1, keepdims=True)
    xc = x - mu
    var = jnp.mean(jnp.square(xc), axis=-1, keepdims=True)
    return xc * jax.lax.rsqrt(var + LN_EPS)


def _gelu_exact(x):
    # exact (erf) GELU, matching torch.nn.GELU default used by timm MLP
    return 0.5 * x * (1.0 + jax.lax.erf(x * INV_SQRT2))


# --------------------------------- kernels -----------------------------------

def _patch_embed_kernel(xp_ref, w_ref, cls_ref, pos_ref, o_ref):
    """Bt samples per step: patch matmul + cls row + pos add, stored directly (no concat)."""
    Bt, N, K = xp_ref.shape
    S, D = pos_ref.shape

    xp = xp_ref[...].reshape(Bt * N, K)                               # leading collapse
    tok = jnp.dot(xp, w_ref[...], preferred_element_type=jnp.float32)  # (Bt*N, D) f32
    pos = pos_ref[...].astype(jnp.float32)
    tok = tok.reshape(Bt, N, D) + pos[1:1 + N][None, :, :]

    cls = cls_ref[...].astype(jnp.float32) + pos[0:1]                 # (1, D)
    cls_rows = jnp.broadcast_to(cls[None], (Bt, 1, D))

    o_ref[:, 0:1, :] = cls_rows.astype(o_ref.dtype)
    o_ref[:, 1:1 + N, :] = tok.astype(o_ref.dtype)
    if S > 1 + N:   # zero the sublane-pad rows so downstream LN/QKV see finite values
        o_ref[:, 1 + N:, :] = jnp.zeros((Bt, S - 1 - N, D), o_ref.dtype)


def _block_kernel(seq_ref, qkv_w_ref, qkv_b_ref, proj_w_ref, proj_b_ref,
                  fc1_w_ref, fc1_b_ref, fc2_w_ref, fc2_b_ref, o_ref, attn_ref,
                  *, num_heads, s_real):
    """One full pre-norm transformer block for Bt batch samples (rows flattened)."""
    Bt, S, D = seq_ref.shape
    hd = D // num_heads
    M = Bt * S
    w_dtype = qkv_w_ref.dtype

    x = seq_ref[...].astype(jnp.float32).reshape(M, D)                # (M, D) f32

    # ---- attention branch: x = x + proj(MHSA(norm1(x)))  (LN1 affine + q-scale folded) ----
    xn = _layernorm_no_affine(x).astype(w_dtype)
    qkv = (jnp.dot(xn, qkv_w_ref[...], preferred_element_type=jnp.float32)
           + qkv_b_ref[...]).astype(w_dtype)                          # (M, 3D)

    # key mask for the sublane-padded tokens (hoisted out of the head loop)
    if S != s_real:
        kmask = jax.lax.broadcasted_iota(jnp.int32, (S, S), 1) < s_real
        neg_bias = jnp.broadcast_to(
            jnp.where(kmask, 0.0, -1e30).astype(jnp.float32)[None], (Bt, S, S))
    else:
        neg_bias = None

    for h in range(num_heads):            # static unroll; each head batched over Bt
        q = qkv[:, h * hd:(h + 1) * hd].reshape(Bt, S, hd)
        k = qkv[:, D + h * hd:D + (h + 1) * hd].reshape(Bt, S, hd)
        v = qkv[:, 2 * D + h * hd:2 * D + (h + 1) * hd].reshape(Bt, S, hd)

        sc = jnp.einsum('bqd,bkd->bqk', q, k,
                        preferred_element_type=jnp.float32)           # (Bt, S, S) f32
        if neg_bias is not None:
            sc = sc + neg_bias
        sc = sc - jnp.max(sc, axis=-1, keepdims=True)
        p = jnp.exp(sc)
        # TODO(synk): approx reciprocal (EUP slot) -> attention rows sum to 1 +- ~1e-3;
        # switch to an exact divide if bit-tight parity with the torch reference is needed.
        p = p * pl.reciprocal(jnp.sum(p, axis=-1, keepdims=True), approx=True)

        o_h = jnp.einsum('bqk,bkd->bqd', p.astype(w_dtype), v,
                         preferred_element_type=jnp.float32)          # (Bt, S, hd)
        # lane-offset store into VMEM scratch: no lane-axis concatenate relayout
        attn_ref[:, h * hd:(h + 1) * hd] = o_h.reshape(M, hd).astype(attn_ref.dtype)

    x = x + jnp.dot(attn_ref[...], proj_w_ref[...],
                    preferred_element_type=jnp.float32) + proj_b_ref[...]

    # ---- MLP branch: x = x + fc2(gelu(fc1(norm2(x))))  (LN2 affine folded) ----
    xn2 = _layernorm_no_affine(x).astype(w_dtype)
    h1 = jnp.dot(xn2, fc1_w_ref[...],
                 preferred_element_type=jnp.float32) + fc1_b_ref[...]
    g = _gelu_exact(h1)
    x = x + jnp.dot(g.astype(w_dtype), fc2_w_ref[...],
                    preferred_element_type=jnp.float32) + fc2_b_ref[...]

    o_ref[...] = x.reshape(Bt, S, D).astype(o_ref.dtype)


def _cls_norm_kernel(x_ref, g_ref, b_ref, o_ref):
    """Final LayerNorm (with affine) applied to the cls-token rows only."""
    y = _layernorm_no_affine(x_ref[...].astype(jnp.float32))
    o_ref[...] = (y * g_ref[...] + b_ref[...]).astype(o_ref.dtype)


# ------------------------------ kernel wrappers -------------------------------

def pallas_patch_embed(xp, patch_w, cls_tok, pos, *, bt):
    B, N, K = xp.shape
    S, D = pos.shape
    return pl.pallas_call(
        _patch_embed_kernel,
        out_shape=jax.ShapeDtypeStruct((B, S, D), IO_DTYPE),
        grid=(B // bt,),
        in_specs=[
            pl.BlockSpec((bt, N, K), lambda b: (b, 0, 0)),
            pl.BlockSpec((K, D), lambda b: (0, 0)),
            pl.BlockSpec((1, D), lambda b: (0, 0)),
            pl.BlockSpec((S, D), lambda b: (0, 0)),
        ],
        out_specs=pl.BlockSpec((bt, S, D), lambda b: (b, 0, 0)),
        compiler_params=pltpu.CompilerParams(
            dimension_semantics=("parallel",),
            vmem_limit_bytes=_vmem_limit_bytes()),
    )(xp, patch_w, cls_tok, pos)


def pallas_block(seq, blk, *, num_heads, s_real, bt):
    B, S, D = seq.shape
    H = blk['fc1_w'].shape[1]
    kern = functools.partial(_block_kernel, num_heads=num_heads, s_real=s_real)
    return pl.pallas_call(
        kern,
        out_shape=jax.ShapeDtypeStruct((B, S, D), seq.dtype),
        grid=(B // bt,),
        in_specs=[
            pl.BlockSpec((bt, S, D), lambda b: (b, 0, 0)),
            pl.BlockSpec((D, 3 * D), lambda b: (0, 0)),
            pl.BlockSpec((1, 3 * D), lambda b: (0, 0)),
            pl.BlockSpec((D, D), lambda b: (0, 0)),
            pl.BlockSpec((1, D), lambda b: (0, 0)),
            pl.BlockSpec((D, H), lambda b: (0, 0)),
            pl.BlockSpec((1, H), lambda b: (0, 0)),
            pl.BlockSpec((H, D), lambda b: (0, 0)),
            pl.BlockSpec((1, D), lambda b: (0, 0)),
        ],
        out_specs=pl.BlockSpec((bt, S, D), lambda b: (b, 0, 0)),
        scratch_shapes=[pltpu.VMEM((bt * S, D), seq.dtype)],
        compiler_params=pltpu.CompilerParams(
            dimension_semantics=("parallel",),
            vmem_limit_bytes=_vmem_limit_bytes()),
    )(seq, blk['qkv_w'], blk['qkv_b'], blk['proj_w'], blk['proj_b'],
      blk['fc1_w'], blk['fc1_b'], blk['fc2_w'], blk['fc2_b'])


def pallas_cls_norm(x, g, b):
    B, D = x.shape
    return pl.pallas_call(
        _cls_norm_kernel,
        out_shape=jax.ShapeDtypeStruct((B, D), jnp.float32),
        in_specs=[_VMEM_FULL, _VMEM_FULL, _VMEM_FULL],
        out_specs=_VMEM_FULL,
    )(x, g.reshape(1, D), b.reshape(1, D))


# -------------------------------- parameters ----------------------------------

def init_params(key, *, embed_dim, depth, num_heads, mlp_ratio, num_patches, patch=16):
    D = embed_dim
    H = int(D * mlp_ratio)
    hd = D // num_heads
    s_real = num_patches + 1
    s_pad = ((s_real + 7) // 8) * 8          # sublane-aligned token axis
    keys = jax.random.split(key, 4 + depth)

    def trunc(k, shape, std=0.02):
        return (std * jax.random.normal(k, shape)).astype(jnp.float32)

    # "pretrained" RGB conv weight (D, 3, 16, 16); RGBD 4th channel = mean of the RGB
    # channels, mirroring RGBDViT.__init__ when config.USE_RGBD is True.
    # TODO(synk): real timm checkpoint loading not available; synthetic weights.
    w_rgb = trunc(keys[0], (D, 3, patch, patch))
    w_rgbd = jnp.concatenate([w_rgb, w_rgb.mean(axis=1, keepdims=True)], axis=1)
    patch_w = w_rgbd.reshape(D, 4 * patch * patch).T        # (C*kh*kw, D)

    pos = trunc(keys[2], (s_real, D))
    pos = jnp.pad(pos, ((0, s_pad - s_real), (0, 0)))        # zero pad rows

    params = {
        'patch_w': patch_w.astype(IO_DTYPE),
        'cls': trunc(keys[1], (1, D)).astype(IO_DTYPE),
        'pos': pos.astype(IO_DTYPE),
        'norm_g': jnp.ones((D,), jnp.float32),
        'norm_b': jnp.zeros((D,), jnp.float32),
        'blocks': [],
    }

    # fold the attention 1/sqrt(head_dim) scale into the Q third of qkv (exact)
    scale = hd ** -0.5
    col_scale = jnp.concatenate([jnp.full((D,), scale, jnp.float32),
                                 jnp.ones((2 * D,), jnp.float32)])

    for i in range(depth):
        bk = jax.random.split(keys[4 + i], 4)
        ln1_g = jnp.ones((D,), jnp.float32); ln1_b = jnp.zeros((D,), jnp.float32)
        ln2_g = jnp.ones((D,), jnp.float32); ln2_b = jnp.zeros((D,), jnp.float32)
        qkv_w = trunc(bk[0], (D, 3 * D)); qkv_b = jnp.zeros((3 * D,), jnp.float32)
        proj_w = trunc(bk[1], (D, D));    proj_b = jnp.zeros((D,), jnp.float32)
        fc1_w = trunc(bk[2], (D, H));     fc1_b = jnp.zeros((H,), jnp.float32)
        fc2_w = trunc(bk[3], (H, D));     fc2_b = jnp.zeros((D,), jnp.float32)
        # Fold LayerNorm affine into the following linear: (g*xhat+b)@W + c
        #   == xhat @ (diag(g)W) + (b@W + c).  Exact algebra, done once offline.
        qkv_w_f = (qkv_w * ln1_g[:, None]) * col_scale[None, :]
        qkv_b_f = (qkv_b + ln1_b @ qkv_w) * col_scale
        fc1_w_f = fc1_w * ln2_g[:, None]
        fc1_b_f = fc1_b + ln2_b @ fc1_w
        params['blocks'].append({
            'qkv_w': qkv_w_f.astype(IO_DTYPE),
            'qkv_b': qkv_b_f.reshape(1, 3 * D).astype(jnp.float32),
            'proj_w': proj_w.astype(IO_DTYPE),
            'proj_b': proj_b.reshape(1, D).astype(jnp.float32),
            'fc1_w': fc1_w_f.astype(IO_DTYPE),
            'fc1_b': fc1_b_f.reshape(1, H).astype(jnp.float32),
            'fc2_w': fc2_w.astype(IO_DTYPE),
            'fc2_b': fc2_b.reshape(1, D).astype(jnp.float32),
        })
    return params


# ------------------------------- forward pass ---------------------------------

def rgbd_vit_forward(params, x, *, num_heads, patch=16, use_rgbd=True):
    """x: (B, 4, H, W) NCHW float32. Returns (cls features (B, D), per-block features)."""
    if not use_rgbd:
        x = x[:, :3]   # RGB-only path of the PyTorch forward
    B, C, Himg, Wimg = x.shape
    gh, gw = Himg // patch, Wimg // patch
    N = gh * gw
    s_real = N + 1
    S = params['pos'].shape[0]                 # sublane-padded token axis
    assert S >= s_real
    assert C * patch * patch == params['patch_w'].shape[0]

    # unfold NCHW into per-patch vectors ordered (c, kh, kw) == conv-weight flattening
    # TODO(synk): at 224x224 this XLA transpose is an extra HBM round trip of the input;
    # fuse the patch gather into the embed kernel (gh,gw grid) or accept NHWC inputs.
    xp = (x.reshape(B, C, gh, patch, gw, patch)
            .transpose(0, 2, 4, 1, 3, 5)
            .reshape(B, N, C * patch * patch)).astype(IO_DTYPE)

    bt = _pick_batch_block(B, S)

    # fused: patch matmul + cls row + pos add   -> (B, S, D) bf16
    seq = pallas_patch_embed(xp, params['patch_w'], params['cls'], params['pos'], bt=bt)

    features = {}   # mirrors the forward hooks registered on each transformer block
    for i, blk in enumerate(params['blocks']):
        seq = pallas_block(seq, blk, num_heads=num_heads, s_real=s_real, bt=bt)
        features[i] = seq[:, :s_real, :]       # strip sublane padding

    # num_classes=0 -> Identity head -> final-norm'd cls-token features (B, D)
    pooled = pallas_cls_norm(seq[:, 0, :], params['norm_g'], params['norm_b'])
    return pooled, features
    # TODO(synk): pos_drop / attn_drop / proj_drop are identity in eval mode;
    # training-mode stochastic dropout is not implemented.


# ------------------------------------ main -------------------------------------

if __name__ == "__main__":
    key = jax.random.PRNGKey(0)
    kp, kx = jax.random.split(key)

    # lane-dense demo config: D=128 (full 128-lane tiles), 4 heads (head_dim=32);
    # B=32 so batch-blocking fills ~128 MXU rows per grid step with 2 parallel steps.
    embed_dim, depth, num_heads, mlp_ratio = 128, 2, 4, 4.0
    patch = 16
    B, C, Himg, Wimg = 32, 4, 32, 32
    num_patches = (Himg // patch) * (Wimg // patch)   # 4 patches + cls = 5 tokens (pad->8)

    params = init_params(kp, embed_dim=embed_dim, depth=depth, num_heads=num_heads,
                         mlp_ratio=mlp_ratio, num_patches=num_patches, patch=patch)
    x = jax.random.normal(kx, (B, C, Himg, Wimg), dtype=jnp.float32)

    fwd = jax.jit(functools.partial(rgbd_vit_forward, num_heads=num_heads,
                                    patch=patch, use_rgbd=True))
    pooled, feats = fwd(params, x)
    jax.block_until_ready(pooled)

    assert pooled.shape == (B, embed_dim)
    assert len(feats) == depth
    assert all(f.shape == (B, num_patches + 1, embed_dim) for f in feats.values())
    print("KERNEL_OK")
</pallas_src>

<mosaic_0001>
module attributes {stable_mosaic.version = 11 : i64} {
  func.func @_patch_embed_kernel(%arg0: i32, %arg1: memref<16x4x1024xbf16, #tpu.memory_space<vmem>>, %arg2: memref<1024x128xbf16, #tpu.memory_space<vmem>>, %arg3: memref<1x128xbf16, #tpu.memory_space<vmem>>, %arg4: memref<8x128xbf16, #tpu.memory_space<vmem>>, %arg5: memref<16x8x128xbf16, #tpu.memory_space<vmem>>) attributes {dimension_semantics = [#tpu.dimension_semantics<parallel>], iteration_bounds = array<i64: 2>, scalar_prefetch = 0 : i64, scratch_operands = 0 : i64, tpu.core_type = #tpu.core_type<tc>, window_params = [{transform_indices = @transform_0, window_bounds = array<i64: 16, 4, 1024>}, {pipeline_mode = #tpu.pipeline_mode<synchronous>, transform_indices = @transform_1, window_bounds = array<i64: 1024, 128>}, {pipeline_mode = #tpu.pipeline_mode<synchronous>, transform_indices = @transform_2, window_bounds = array<i64: 1, 128>}, {pipeline_mode = #tpu.pipeline_mode<synchronous>, transform_indices = @transform_3, window_bounds = array<i64: 8, 128>}, {transform_indices = @transform_4, window_bounds = array<i64: 16, 8, 128>}]} {
    %c0 = arith.constant 0 : index
    %c0_0 = arith.constant 0 : index
    %c0_1 = arith.constant 0 : index
    %0 = vector.load %arg1[%c0, %c0_0, %c0_1] : memref<16x4x1024xbf16, #tpu.memory_space<vmem>>, vector<16x4x1024xbf16>
    %1 = vector.shape_cast %0 : vector<16x4x1024xbf16> to vector<64x1024xbf16>
    %c0_2 = arith.constant 0 : index
    %c0_3 = arith.constant 0 : index
    %2 = vector.load %arg2[%c0_2, %c0_3] : memref<1024x128xbf16, #tpu.memory_space<vmem>>, vector<1024x128xbf16>
    %cst = arith.constant dense<0.000000e+00> : vector<64x128xf32>
    %3 = tpu.matmul %1, %2, %cst {dimension_numbers = #tpu.dot_dimension_numbers<[1], [0], [0], [1], [0, 0, 1, 1], [], []>} : vector<64x1024xbf16>, vector<1024x128xbf16>, vector<64x128xf32> -> vector<64x128xf32>
    %c0_4 = arith.constant 0 : index
    %c0_5 = arith.constant 0 : index
    %4 = vector.load %arg4[%c0_4, %c0_5] : memref<8x128xbf16, #tpu.memory_space<vmem>>, vector<8x128xbf16>
    %5 = arith.extf %4 : vector<8x128xbf16> to vector<8x128xf32>
    %6 = vector.shape_cast %3 : vector<64x128xf32> to vector<16x4x128xf32>
    %7 = vector.extract_strided_slice %5 {offsets = [1, 0], sizes = [4, 128], strides = [1, 1]} : vector<8x128xf32> to vector<4x128xf32>
    %8 = vector.shape_cast %7 : vector<4x128xf32> to vector<1x4x128xf32>
    %9 = vector.broadcast %8 : vector<1x4x128xf32> to vector<16x4x128xf32>
    %10 = arith.addf %6, %9 : vector<16x4x128xf32>
    %c0_6 = arith.constant 0 : index
    %c0_7 = arith.constant 0 : index
    %11 = vector.load %arg3[%c0_6, %c0_7] : memref<1x128xbf16, #tpu.memory_space<vmem>>, vector<1x128xbf16>
    %12 = arith.extf %11 : vector<1x128xbf16> to vector<1x128xf32>
    %13 = vector.extract_strided_slice %5 {offsets = [0, 0], sizes = [1, 128], strides = [1, 1]} : vector<8x128xf32> to vector<1x128xf32>
    %14 = arith.addf %12, %13 : vector<1x128xf32>
    %15 = vector.shape_cast %14 : vector<1x128xf32> to vector<1x1x128xf32>
    %16 = vector.shape_cast %15 : vector<1x1x128xf32> to vector<1x1x128xf32>
    %17 = vector.broadcast %16 : vector<1x1x128xf32> to vector<16x1x128xf32>
    %18 = arith.truncf %17 : vector<16x1x128xf32> to vector<16x1x128xbf16>
    %c0_8 = arith.constant 0 : index
    %c0_9 = arith.constant 0 : index
    %c0_10 = arith.constant 0 : index
    %19 = vector.load %arg5[%c0_8, %c0_9, %c0_10] : memref<16x8x128xbf16, #tpu.memory_space<vmem>>, vector<16x1x128xbf16>
    tpu.vector_store %arg5[%c0_8, %c0_9, %c0_10], %18 {strides = array<i32>} : memref<16x8x128xbf16, #tpu.memory_space<vmem>>, vector<16x1x128xbf16>,
    %20 = arith.truncf %10 : vector<16x4x128xf32> to vector<16x4x128xbf16>
    %c0_11 = arith.constant 0 : index
    %c1 = arith.constant 1 : index
    %c0_12 = arith.constant 0 : index
    %21 = vector.load %arg5[%c0_11, %c1, %c0_12] : memref<16x8x128xbf16, #tpu.memory_space<vmem>>, vector<16x4x128xbf16>
    tpu.vector_store %arg5[%c0_11, %c1, %c0_12], %20 {strides = array<i32>} : memref<16x8x128xbf16, #tpu.memory_space<vmem>>, vector<16x4x128xbf16>,
    %cst_13 = arith.constant 0.000000e+00 : bf16
    %22 = vector.broadcast %cst_13 : bf16 to vector<16x3x128xbf16>
    %c0_14 = arith.constant 0 : index
    %c5 = arith.constant 5 : index
    %c0_15 = arith.constant 0 : index
    %23 = vector.load %arg5[%c0_14, %c5, %c0_15] : memref<16x8x128xbf16, #tpu.memory_space<vmem>>, vector<16x3x128xbf16>
    tpu.vector_store %arg5[%c0_14, %c5, %c0_15], %22 {strides = array<i32>} : memref<16x8x128xbf16, #tpu.memory_space<vmem>>, vector<16x3x128xbf16>,
    return
  }
  func.func @transform_0(%arg0: i32) -> (i32, i32, i32) {
    %c0_i32 = arith.constant 0 : i32
    %c0_i32_0 = arith.constant 0 : i32
    %c0_i32_1 = arith.constant 0 : i32
    return %arg0, %c0_i32, %c0_i32_0 : i32, i32, i32
  }
  func.func @transform_1(%arg0: i32) -> (i32, i32) {
    %c0_i32 = arith.constant 0 : i32
    %c0_i32_0 = arith.constant 0 : i32
    %c0_i32_1 = arith.constant 0 : i32
    return %c0_i32, %c0_i32_0 : i32, i32
  }
  func.func @transform_2(%arg0: i32) -> (i32, i32) {
    %c0_i32 = arith.constant 0 : i32
    %c0_i32_0 = arith.constant 0 : i32
    %c0_i32_1 = arith.constant 0 : i32
    return %c0_i32, %c0_i32_0 : i32, i32
  }
  func.func @transform_3(%arg0: i32) -> (i32, i32) {
    %c0_i32 = arith.constant 0 : i32
    %c0_i32_0 = arith.constant 0 : i32
    %c0_i32_1 = arith.constant 0 : i32
    return %c0_i32, %c0_i32_0 : i32, i32
  }
  func.func @transform_4(%arg0: i32) -> (i32, i32, i32) {
    %c0_i32 = arith.constant 0 : i32
    %c0_i32_0 = arith.constant 0 : i32
    %c0_i32_1 = arith.constant 0 : i32
    return %arg0, %c0_i32, %c0_i32_0 : i32, i32, i32
  }
}

module attributes {stable_mosaic.version = 11 : i64} {
  func.func @_block_kernel(%arg0: i32, %arg1: memref<16x8x128xbf16, #tpu.memory_space<vmem>>, %arg2: memref<128x384xbf16, #tpu.memory_space<vmem>>, %arg3: memref<1x384xf32, #tpu.memory_space<vmem>>, %arg4: memref<128x128xbf16, #tpu.memory_space<vmem>>, %arg5: memref<1x128xf32, #tpu.memory_space<vmem>>, %arg6: memref<128x512xbf16, #tpu.memory_space<vmem>>, %arg7: memref<1x512xf32, #tpu.memory_space<vmem>>, %arg8: memref<512x128xbf16, #tpu.memory_space<vmem>>, %arg9: memref<1x128xf32, #tpu.memory_space<vmem>>, %arg10: memref<16x8x128xbf16, #tpu.memory_space<vmem>>, %arg11: memref<128x128xbf16, #tpu.memory_space<vmem>>) attributes {dimension_semantics = [#tpu.dimension_semantics<parallel>], iteration_bounds = array<i64: 2>, scalar_prefetch = 0 : i64, scratch_operands = 1 : i64, tpu.core_type = #tpu.core_type<tc>, window_params = [{transform_indices = @transform_0, window_bounds = array<i64: 16, 8, 128>}, {pipeline_mode = #tpu.pipeline_mode<synchronous>, transform_indices = @transform_1, window_bounds = array<i64: 128, 384>}, {pipeline_mode = #tpu.pipeline_mode<synchronous>, transform_indices = @transform_2, window_bounds = array<i64: 1, 384>}, {pipeline_mode = #tpu.pipeline_mode<synchronous>, transform_indices = @transform_3, window_bounds = array<i64: 128, 128>}, {pipeline_mode = #tpu.pipeline_mode<synchronous>, transform_indices = @transform_4, window_bounds = array<i64: 1, 128>}, {pipeline_mode = #tpu.pipeline_mode<synchronous>, transform_indices = @transform_5, window_bounds = array<i64: 128, 512>}, {pipeline_mode = #tpu.pipeline_mode<synchronous>, transform_indices = @transform_6, window_bounds = array<i64: 1, 512>}, {pipeline_mode = #tpu.pipeline_mode<synchronous>, transform_indices = @transform_7, window_bounds = array<i64: 512, 128>}, {pipeline_mode = #tpu.pipeline_mode<synchronous>, transform_indices = @transform_8, window_bounds = array<i64: 1, 128>}, {transform_indices = @transform_9, window_bounds = array<i64: 16, 8, 128>}]} {
    %c0 = arith.constant 0 : index
    %c0_0 = arith.constant 0 : index
    %c0_1 = arith.constant 0 : index
    %0 = vector.load %arg1[%c0, %c0_0, %c0_1] : memref<16x8x128xbf16, #tpu.memory_space<vmem>>, vector<16x8x128xbf16>
    %1 = arith.extf %0 : vector<16x8x128xbf16> to vector<16x8x128xf32>
    %2 = vector.shape_cast %1 : vector<16x8x128xf32> to vector<128x128xf32>
    %cst = arith.constant dense<0.000000e+00> : vector<128xf32>
    %3 = vector.multi_reduction <add>, %2, %cst [1] : vector<128x128xf32> to vector<128xf32>
    %4 = vector.shape_cast %3 : vector<128xf32> to vector<128x1xf32>
    %cst_2 = arith.constant 1.280000e+02 : f32
    %5 = vector.broadcast %cst_2 : f32 to vector<128x1xf32>
    %6 = arith.divf %4, %5 : vector<128x1xf32>
    %7 = vector.broadcast %6 : vector<128x1xf32> to vector<128x128xf32>
    %8 = arith.subf %2, %7 : vector<128x128xf32>
    %9 = arith.mulf %8, %8 : vector<128x128xf32>
    %cst_3 = arith.constant dense<0.000000e+00> : vector<128xf32>
    %10 = vector.multi_reduction <add>, %9, %cst_3 [1] : vector<128x128xf32> to vector<128xf32>
    %11 = vector.shape_cast %10 : vector<128xf32> to vector<128x1xf32>
    %cst_4 = arith.constant 1.280000e+02 : f32
    %12 = vector.broadcast %cst_4 : f32 to vector<128x1xf32>
    %13 = arith.divf %11, %12 : vector<128x1xf32>
    %cst_5 = arith.constant 9.99999997E-7 : f32
    %14 = vector.broadcast %cst_5 : f32 to vector<128x1xf32>
    %15 = arith.addf %13, %14 : vector<128x1xf32>
    %16 = math.rsqrt %15 : vector<128x1xf32>
    %17 = vector.broadcast %16 : vector<128x1xf32> to vector<128x128xf32>
    %18 = arith.mulf %8, %17 : vector<128x128xf32>
    %19 = arith.truncf %18 : vector<128x128xf32> to vector<128x128xbf16>
    %c0_6 = arith.constant 0 : index
    %c0_7 = arith.constant 0 : index
    %20 = vector.load %arg2[%c0_6, %c0_7] : memref<128x384xbf16, #tpu.memory_space<vmem>>, vector<128x384xbf16>
    %cst_8 = arith.constant dense<0.000000e+00> : vector<128x384xf32>
    %21 = tpu.matmul %19, %20, %cst_8 {dimension_numbers = #tpu.dot_dimension_numbers<[1], [0], [0], [1], [0, 0, 1, 1], [], []>} : vector<128x128xbf16>, vector<128x384xbf16>, vector<128x384xf32> -> vector<128x384xf32>
    %c0_9 = arith.constant 0 : index
    %c0_10 = arith.constant 0 : index
    %22 = vector.load %arg3[%c0_9, %c0_10] : memref<1x384xf32, #tpu.memory_space<vmem>>, vector<1x384xf32>
    %23 = vector.broadcast %22 : vector<1x384xf32> to vector<128x384xf32>
    %24 = arith.addf %21, %23 : vector<128x384xf32>
    %25 = arith.truncf %24 : vector<128x384xf32> to vector<128x384xbf16>
    %26 = tpu.iota {dimensions = array<i32: 1>} : vector<8x8xi32>
    %c5_i32 = arith.constant 5 : i32
    %27 = vector.broadcast %c5_i32 : i32 to vector<8x8xi32>
    %28 = arith.cmpi slt, %26, %27 : vector<8x8xi32>
    %cst_11 = arith.constant 0.000000e+00 : f32
    %cst_12 = arith.constant -1.000000e+30 : f32
    %29 = vector.broadcast %cst_11 : f32 to vector<8x8xf32>
    %30 = vector.broadcast %cst_12 : f32 to vector<8x8xf32>
    %31 = arith.select %28, %29, %30 : vector<8x8xi1>, vector<8x8xf32>
    %32 = vector.shape_cast %31 : vector<8x8xf32> to vector<1x8x8xf32>
    %33 = vector.shape_cast %32 : vector<1x8x8xf32> to vector<1x8x8xf32>
    %34 = vector.broadcast %33 : vector<1x8x8xf32> to vector<16x8x8xf32>
    %35 = vector.extract_strided_slice %25 {offsets = [0, 0], sizes = [128, 32], strides = [1, 1]} : vector<128x384xbf16> to vector<128x32xbf16>
    %36 = vector.shape_cast %35 : vector<128x32xbf16> to vector<16x8x32xbf16>
    %37 = vector.extract_strided_slice %25 {offsets = [0, 128], sizes = [128, 32], strides = [1, 1]} : vector<128x384xbf16> to vector<128x32xbf16>
    %38 = vector.shape_cast %37 : vector<128x32xbf16> to vector<16x8x32xbf16>
    %39 = vector.extract_strided_slice %25 {offsets = [0, 256], sizes = [128, 32], strides = [1, 1]} : vector<128x384xbf16> to vector<128x32xbf16>
    %40 = vector.shape_cast %39 : vector<128x32xbf16> to vector<16x8x32xbf16>
    "tpu.trace_start"() <{level = 10 : i32, message = "bqd,bkd->bqk"}> : () -> ()
    %cst_13 = arith.constant dense<0.000000e+00> : vector<16x8x8xf32>
    %41 = tpu.matmul %36, %38, %cst_13 {dimension_numbers = #tpu.dot_dimension_numbers<[2], [2], [1], [1], [0, 0, 0, 1, 1, 1], [0], [0]>} : vector<16x8x32xbf16>, vector<16x8x32xbf16>, vector<16x8x8xf32> -> vector<16x8x8xf32>
    "tpu.trace_stop"() : () -> ()
    %42 = arith.addf %41, %34 : vector<16x8x8xf32>
    %cst_14 = arith.constant dense<0xFF800000> : vector<16x8xf32>
    %43 = vector.multi_reduction <maximumf>, %42, %cst_14 [2] : vector<16x8x8xf32> to vector<16x8xf32>
    %44 = vector.shape_cast %43 : vector<16x8xf32> to vector<16x8x1xf32>
    %45 = vector.broadcast %44 : vector<16x8x1xf32> to vector<16x8x8xf32>
    %46 = arith.subf %42, %45 : vector<16x8x8xf32>
    %47 = math.exp %46 : vector<16x8x8xf32>
    %cst_15 = arith.constant dense<0.000000e+00> : vector<16x8xf32>
    %48 = vector.multi_reduction <add>, %47, %cst_15 [2] : vector<16x8x8xf32> to vector<16x8xf32>
    %49 = vector.shape_cast %48 : vector<16x8xf32> to vector<16x8x1xf32>
    %50 = tpu.reciprocal %49 {approx = true} : vector<16x8x1xf32> -> vector<16x8x1xf32>
    %51 = vector.broadcast %50 : vector<16x8x1xf32> to vector<16x8x8xf32>
    %52 = arith.mulf %47, %51 : vector<16x8x8xf32>
    %53 = arith.truncf %52 : vector<16x8x8xf32> to vector<16x8x8xbf16>
    "tpu.trace_start"() <{level = 10 : i32, message = "bqk,bkd->bqd"}> : () -> ()
    %cst_16 = arith.constant dense<0.000000e+00> : vector<16x8x32xf32>
    %54 = tpu.matmul %53, %40, %cst_16 {dimension_numbers = #tpu.dot_dimension_numbers<[2], [1], [1], [2], [0, 0, 0, 1, 1, 2], [0], [0]>} : vector<16x8x8xbf16>, vector<16x8x32xbf16>, vector<16x8x32xf32> -> vector<16x8x32xf32>
    "tpu.trace_stop"() : () -> ()
    %55 = vector.shape_cast %54 : vector<16x8x32xf32> to vector<128x32xf32>
    %56 = arith.truncf %55 : vector<128x32xf32> to vector<128x32xbf16>
    %c0_17 = arith.constant 0 : index
    %c0_18 = arith.constant 0 : index
    %57 = vector.load %arg11[%c0_17, %c0_18] : memref<128x128xbf16, #tpu.memory_space<vmem>>, vector<128x32xbf16>
    tpu.vector_store %arg11[%c0_17, %c0_18], %56 {strides = array<i32>} : memref<128x128xbf16, #tpu.memory_space<vmem>>, vector<128x32xbf16>,
    %58 = vector.extract_strided_slice %25 {offsets = [0, 32], sizes = [128, 32], strides = [1, 1]} : vector<128x384xbf16> to vector<128x32xbf16>
    %59 = vector.shape_cast %58 : vector<128x32xbf16> to vector<16x8x32xbf16>
    %60 = vector.extract_strided_slice %25 {offsets = [0, 160], sizes = [128, 32], strides = [1, 1]} : vector<128x384xbf16> to vector<128x32xbf16>
    %61 = vector.shape_cast %60 : vector<128x32xbf16> to vector<16x8x32xbf16>
    %62 = vector.extract_strided_slice %25 {offsets = [0, 288], sizes = [128, 32], strides = [1, 1]} : vector<128x384xbf16> to vector<128x32xbf16>
    %63 = vector.shape_cast %62 : vector<128x32xbf16> to vector<16x8x32xbf16>
    "tpu.trace_start"() <{level = 10 : i32, message = "bqd,bkd->bqk"}> : () -> ()
    %cst_19 = arith.constant dense<0.000000e+00> : vector<16x8x8xf32>
    %64 = tpu.matmul %59, %61, %cst_19 {dimension_numbers = #tpu.dot_dimension_numbers<[2], [2], [1], [1], [0, 0, 0, 1, 1, 1], [0], [0]>} : vector<16x8x32xbf16>, vector<16x8x32xbf16>, vector<16x8x8xf32> -> vector<16x8x8xf32>
    "tpu.trace_stop"() : () -> ()
    %65 = arith.addf %64, %34 : vector<16x8x8xf32>
    %cst_20 = arith.constant dense<0xFF800000> : vector<16x8xf32>
    %66 = vector.multi_reduction <maximumf>, %65, %cst_20 [2] : vector<16x8x8xf32> to vector<16x8xf32>
    %67 = vector.shape_cast %66 : vector<16x8xf32> to vector<16x8x1xf32>
    %68 = vector.broadcast %67 : vector<16x8x1xf32> to vector<16x8x8xf32>
    %69 = arith.subf %65, %68 : vector<16x8x8xf32>
    %70 = math.exp %69 : vector<16x8x8xf32>
    %cst_21 = arith.constant dense<0.000000e+00> : vector<16x8xf32>
    %71 = vector.multi_reduction <add>, %70, %cst_21 [2] : vector<16x8x8xf32> to vector<16x8xf32>
    %72 = vector.shape_cast %71 : vector<16x8xf32> to vector<16x8x1xf32>
    %73 = tpu.reciprocal %72 {approx = true} : vector<16x8x1xf32> -> vector<16x8x1xf32>
    %74 = vector.broadcast %73 : vector<16x8x1xf32> to vector<16x8x8xf32>
    %75 = arith.mulf %70, %74 : vector<16x8x8xf32>
    %76 = arith.truncf %75 : vector<16x8x8xf32> to vector<16x8x8xbf16>
    "tpu.trace_start"() <{level = 10 : i32, message = "bqk,bkd->bqd"}> : () -> ()
    %cst_22 = arith.constant dense<0.000000e+00> : vector<16x8x32xf32>
    %77 = tpu.matmul %76, %63, %cst_22 {dimension_numbers = #tpu.dot_dimension_numbers<[2], [1], [1], [2], [0, 0, 0, 1, 1, 2], [0], [0]>} : vector<16x8x8xbf16>, vector<16x8x32xbf16>, vector<16x8x32xf32> -> vector<16x8x32xf32>
    "tpu.trace_stop"() : () -> ()
    %78 = vector.shape_cast %77 : vector<16x8x32xf32> to vector<128x32xf32>
    %79 = arith.truncf %78 : vector<128x32xf32> to vector<128x32xbf16>
    %c0_23 = arith.constant 0 : index
    %c32 = arith.constant 32 : index
    %80 = vector.load %arg11[%c0_23, %c32] : memref<128x128xbf16, #tpu.memory_space<vmem>>, vector<128x32xbf16>
    tpu.vector_store %arg11[%c0_23, %c32], %79 {strides = array<i32>} : memref<128x128xbf16, #tpu.memory_space<vmem>>, vector<128x32xbf16>,
    %81 = vector.extract_strided_slice %25 {offsets = [0, 64], sizes = [128, 32], strides = [1, 1]} : vector<128x384xbf16> to vector<128x32xbf16>
    %82 = vector.shape_cast %81 : vector<128x32xbf16> to vector<16x8x32xbf16>
    %83 = vector.extract_strided_slice %25 {offsets = [0, 192], sizes = [128, 32], strides = [1, 1]} : vector<128x384xbf16> to vector<128x32xbf16>
    %84 = vector.shape_cast %83 : vector<128x32xbf16> to vector<16x8x32xbf16>
    %85 = vector.extract_strided_slice %25 {offsets = [0, 320], sizes = [128, 32], strides = [1, 1]} : vector<128x384xbf16> to vector<128x32xbf16>
    %86 = vector.shape_cast %85 : vector<128x32xbf16> to vector<16x8x32xbf16>
    "tpu.trace_start"() <{level = 10 : i32, message = "bqd,bkd->bqk"}> : () -> ()
    %cst_24 = arith.constant dense<0.000000e+00> : vector<16x8x8xf32>
    %87 = tpu.matmul %82, %84, %cst_24 {dimension_numbers = #tpu.dot_dimension_numbers<[2], [2], [1], [1], [0, 0, 0, 1, 1, 1], [0], [0]>} : vector<16x8x32xbf16>, vector<16x8x32xbf16>, vector<16x8x8xf32> -> vector<16x8x8xf32>
    "tpu.trace_stop"() : () -> ()
    %88 = arith.addf %87, %34 : vector<16x8x8xf32>
    %cst_25 = arith.constant dense<0xFF800000> : vector<16x8xf32>
    %89 = vector.multi_reduction <maximumf>, %88, %cst_25 [2] : vector<16x8x8xf32> to vector<16x8xf32>
    %90 = vector.shape_cast %89 : vector<16x8xf32> to vector<16x8x1xf32>
    %91 = vector.broadcast %90 : vector<16x8x1xf32> to vector<16x8x8xf32>
    %92 = arith.subf %88, %91 : vector<16x8x8xf32>
    %93 = math.exp %92 : vector<16x8x8xf32>
    %cst_26 = arith.constant dense<0.000000e+00> : vector<16x8xf32>
    %94 = vector.multi_reduction <add>, %93, %cst_26 [2] : vector<16x8x8xf32> to vector<16x8xf32>
    %95 = vector.shape_cast %94 : vector<16x8xf32> to vector<16x8x1xf32>
    %96 = tpu.reciprocal %95 {approx = true} : vector<16x8x1xf32> -> vector<16x8x1xf32>
    %97 = vector.broadcast %96 : vector<16x8x1xf32> to vector<16x8x8xf32>
    %98 = arith.mulf %93, %97 : vector<16x8x8xf32>
    %99 = arith.truncf %98 : vector<16x8x8xf32> to vector<16x8x8xbf16>
    "tpu.trace_start"() <{level = 10 : i32, message = "bqk,bkd->bqd"}> : () -> ()
    %cst_27 = arith.constant dense<0.000000e+00> : vector<16x8x32xf32>
    %100 = tpu.matmul %99, %86, %cst_27 {dimension_numbers = #tpu.dot_dimension_numbers<[2], [1], [1], [2], [0, 0, 0, 1, 1, 2], [0], [0]>} : vector<16x8x8xbf16>, vector<16x8x32xbf16>, vector<16x8x32xf32> -> vector<16x8x32xf32>
    "tpu.trace_stop"() : () -> ()
    %101 = vector.shape_cast %100 : vector<16x8x32xf32> to vector<128x32xf32>
    %102 = arith.truncf %101 : vector<128x32xf32> to vector<128x32xbf16>
    %c0_28 = arith.constant 0 : index
    %c64 = arith.constant 64 : index
    %103 = vector.load %arg11[%c0_28, %c64] : memref<128x128xbf16, #tpu.memory_space<vmem>>, vector<128x32xbf16>
    tpu.vector_store %arg11[%c0_28, %c64], %102 {strides = array<i32>} : memref<128x128xbf16, #tpu.memory_space<vmem>>, vector<128x32xbf16>,
    %104 = vector.extract_strided_slice %25 {offsets = [0, 96], sizes = [128, 32], strides = [1, 1]} : vector<128x384xbf16> to vector<128x32xbf16>
    %105 = vector.shape_cast %104 : vector<128x32xbf16> to vector<16x8x32xbf16>
    %106 = vector.extract_strided_slice %25 {offsets = [0, 224], sizes = [128, 32], strides = [1, 1]} : vector<128x384xbf16> to vector<128x32xbf16>
    %107 = vector.shape_cast %106 : vector<128x32xbf16> to vector<16x8x32xbf16>
    %108 = vector.extract_strided_slice %25 {offsets = [0, 352], sizes = [128, 32], strides = [1, 1]} : vector<128x384xbf16> to vector<128x32xbf16>
    %109 = vector.shape_cast %108 : vector<128x32xbf16> to vector<16x8x32xbf16>
    "tpu.trace_start"() <{level = 10 : i32, message = "bqd,bkd->bqk"}> : () -> ()
    %cst_29 = arith.constant dense<0.000000e+00> : vector<16x8x8xf32>
    %110 = tpu.matmul %105, %107, %cst_29 {dimension_numbers = #tpu.dot_dimension_numbers<[2], [2], [1], [1], [0, 0, 0, 1, 1, 1], [0], [0]>} : vector<16x8x32xbf16>, vector<16x8x32xbf16>, vector<16x8x8xf32> -> vector<16x8x8xf32>
    "tpu.trace_stop"() : () -> ()
    %111 = arith.addf %110, %34 : vector<16x8x8xf32>
    %cst_30 = arith.constant dense<0xFF800000> : vector<16x8xf32>
    %112 = vector.multi_reduction <maximumf>, %111, %cst_30 [2] : vector<16x8x8xf32> to vector<16x8xf32>
    %113 = vector.shape_cast %112 : vector<16x8xf32> to vector<16x8x1xf32>
    %114 = vector.broadcast %113 : vector<16x8x1xf32> to vector<16x8x8xf32>
    %115 = arith.subf %111, %114 : vector<16x8x8xf32>
    %116 = math.exp %115 : vector<16x8x8xf32>
    %cst_31 = arith.constant dense<0.000000e+00> : vector<16x8xf32>
    %117 = vector.multi_reduction <add>, %116, %cst_31 [2] : vector<16x8x8xf32> to vector<16x8xf32>
    %118 = vector.shape_cast %117 : vector<16x8xf32> to vector<16x8x1xf32>
    %119 = tpu.reciprocal %118 {approx = true} : vector<16x8x1xf32> -> vector<16x8x1xf32>
    %120 = vector.broadcast %119 : vector<16x8x1xf32> to vector<16x8x8xf32>
    %121 = arith.mulf %116, %120 : vector<16x8x8xf32>
    %122 = arith.truncf %121 : vector<16x8x8xf32> to vector<16x8x8xbf16>
    "tpu.trace_start"() <{level = 10 : i32, message = "bqk,bkd->bqd"}> : () -> ()
    %cst_32 = arith.constant dense<0.000000e+00> : vector<16x8x32xf32>
    %123 = tpu.matmul %122, %109, %cst_32 {dimension_numbers = #tpu.dot_dimension_numbers<[2], [1], [1], [2], [0, 0, 0, 1, 1, 2], [0], [0]>} : vector<16x8x8xbf16>, vector<16x8x32xbf16>, vector<16x8x32xf32> -> vector<16x8x32xf32>
    "tpu.trace_stop"() : () -> ()
    %124 = vector.shape_cast %123 : vector<16x8x32xf32> to vector<128x32xf32>
    %125 = arith.truncf %124 : vector<128x32xf32> to vector<128x32xbf16>
    %c0_33 = arith.constant 0 : index
    %c96 = arith.constant 96 : index
    %126 = vector.load %arg11[%c0_33, %c96] : memref<128x128xbf16, #tpu.memory_space<vmem>>, vector<128x32xbf16>
    tpu.vector_store %arg11[%c0_33, %c96], %125 {strides = array<i32>} : memref<128x128xbf16, #tpu.memory_space<vmem>>, vector<128x32xbf16>,
    %c0_34 = arith.constant 0 : index
    %c0_35 = arith.constant 0 : index
    %127 = vector.load %arg11[%c0_34, %c0_35] : memref<128x128xbf16, #tpu.memory_space<vmem>>, vector<128x128xbf16>
    %c0_36 = arith.constant 0 : index
    %c0_37 = arith.constant 0 : index
    %128 = vector.load %arg4[%c0_36, %c0_37] : memref<128x128xbf16, #tpu.memory_space<vmem>>, vector<128x128xbf16>
    %cst_38 = arith.constant dense<0.000000e+00> : vector<128x128xf32>
    %129 = tpu.matmul %127, %128, %cst_38 {dimension_numbers = #tpu.dot_dimension_numbers<[1], [0], [0], [1], [0, 0, 1, 1], [], []>} : vector<128x128xbf16>, vector<128x128xbf16>, vector<128x128xf32> -> vector<128x128xf32>
    %130 = arith.addf %2, %129 : vector<128x128xf32>
    %c0_39 = arith.constant 0 : index
    %c0_40 = arith.constant 0 : index
    %131 = vector.load %arg5[%c0_39, %c0_40] : memref<1x128xf32, #tpu.memory_space<vmem>>, vector<1x128xf32>
    %132 = vector.broadcast %131 : vector<1x128xf32> to vector<128x128xf32>
    %133 = arith.addf %130, %132 : vector<128x128xf32>
    %cst_41 = arith.constant dense<0.000000e+00> : vector<128xf32>
    %134 = vector.multi_reduction <add>, %133, %cst_41 [1] : vector<128x128xf32> to vector<128xf32>
    %135 = vector.shape_cast %134 : vector<128xf32> to vector<128x1xf32>
    %cst_42 = arith.constant 1.280000e+02 : f32
    %136 = vector.broadcast %cst_42 : f32 to vector<128x1xf32>
    %137 = arith.divf %135, %136 : vector<128x1xf32>
    %138 = vector.broadcast %137 : vector<128x1xf32> to vector<128x128xf32>
    %139 = arith.subf %133, %138 : vector<128x128xf32>
    %140 = arith.mulf %139, %139 : vector<128x128xf32>
    %cst_43 = arith.constant dense<0.000000e+00> : vector<128xf32>
    %141 = vector.multi_reduction <add>, %140, %cst_43 [1] : vector<128x128xf32> to vector<128xf32>
    %142 = vector.shape_cast %141 : vector<128xf32> to vector<128x1xf32>
    %cst_44 = arith.constant 1.280000e+02 : f32
    %143 = vector.broadcast %cst_44 : f32 to vector<128x1xf32>
    %144 = arith.divf %142, %143 : vector<128x1xf32>
    %cst_45 = arith.constant 9.99999997E-7 : f32
    %145 = vector.broadcast %cst_45 : f32 to vector<128x1xf32>
    %146 = arith.addf %144, %145 : vector<128x1xf32>
    %147 = math.rsqrt %146 : vector<128x1xf32>
    %148 = vector.broadcast %147 : vector<128x1xf32> to vector<128x128xf32>
    %149 = arith.mulf %139, %148 : vector<128x128xf32>
    %150 = arith.truncf %149 : vector<128x128xf32> to vector<128x128xbf16>
    %c0_46 = arith.constant 0 : index
    %c0_47 = arith.constant 0 : index
    %151 = vector.load %arg6[%c0_46, %c0_47] : memref<128x512xbf16, #tpu.memory_space<vmem>>, vector<128x512xbf16>
    %cst_48 = arith.constant dense<0.000000e+00> : vector<128x512xf32>
    %152 = tpu.matmul %150, %151, %cst_48 {dimension_numbers = #tpu.dot_dimension_numbers<[1], [0], [0], [1], [0, 0, 1, 1], [], []>} : vector<128x128xbf16>, vector<128x512xbf16>, vector<128x512xf32> -> vector<128x512xf32>
    %c0_49 = arith.constant 0 : index
    %c0_50 = arith.constant 0 : index
    %153 = vector.load %arg7[%c0_49, %c0_50] : memref<1x512xf32, #tpu.memory_space<vmem>>, vector<1x512xf32>
    %154 = vector.broadcast %153 : vector<1x512xf32> to vector<128x512xf32>
    %155 = arith.addf %152, %154 : vector<128x512xf32>
    %cst_51 = arith.constant 5.000000e-01 : f32
    %156 = vector.broadcast %cst_51 : f32 to vector<128x512xf32>
    %157 = arith.mulf %156, %155 : vector<128x512xf32>
    %cst_52 = arith.constant 0.707106769 : f32
    %158 = vector.broadcast %cst_52 : f32 to vector<128x512xf32>
    %159 = arith.mulf %155, %158 : vector<128x512xf32>
    %160 = math.erf %159 : vector<128x512xf32>
    %cst_53 = arith.constant 1.000000e+00 : f32
    %161 = vector.broadcast %cst_53 : f32 to vector<128x512xf32>
    %162 = arith.addf %161, %160 : vector<128x512xf32>
    %163 = arith.mulf %157, %162 : vector<128x512xf32>
    %164 = arith.truncf %163 : vector<128x512xf32> to vector<128x512xbf16>
    %c0_54 = arith.constant 0 : index
    %c0_55 = arith.constant 0 : index
    %165 = vector.load %arg8[%c0_54, %c0_55] : memref<512x128xbf16, #tpu.memory_space<vmem>>, vector<512x128xbf16>
    %cst_56 = arith.constant dense<0.000000e+00> : vector<128x128xf32>
    %166 = tpu.matmul %164, %165, %cst_56 {dimension_numbers = #tpu.dot_dimension_numbers<[1], [0], [0], [1], [0, 0, 1, 1], [], []>} : vector<128x512xbf16>, vector<512x128xbf16>, vector<128x128xf32> -> vector<128x128xf32>
    %167 = arith.addf %133, %166 : vector<128x128xf32>
    %c0_57 = arith.constant 0 : index
    %c0_58 = arith.constant 0 : index
    %168 = vector.load %arg9[%c0_57, %c0_58] : memref<1x128xf32, #tpu.memory_space<vmem>>, vector<1x128xf32>
    %169 = vector.broadcast %168 : vector<1x128xf32> to vector<128x128xf32>
    %170 = arith.addf %167, %169 : vector<128x128xf32>
    %171 = vector.shape_cast %170 : vector<128x128xf32> to vector<16x8x128xf32>
    %172 = arith.truncf %171 : vector<16x8x128xf32> to vector<16x8x128xbf16>
    %c0_59 = arith.constant 0 : index
    %c0_60 = arith.constant 0 : index
    %c0_61 = arith.constant 0 : index
    %173 = vector.load %arg10[%c0_59, %c0_60, %c0_61] : memref<16x8x128xbf16, #tpu.memory_space<vmem>>, vector<16x8x128xbf16>
    tpu.vector_store %arg10[%c0_59, %c0_60, %c0_61], %172 {strides = array<i32>} : memref<16x8x128xbf16, #tpu.memory_space<vmem>>, vector<16x8x128xbf16>,
    return
  }
  func.func @transform_0(%arg0: i32) -> (i32, i32, i32) {
    %c0_i32 = arith.constant 0 : i32
    %c0_i32_0 = arith.constant 0 : i32
    %c0_i32_1 = arith.constant 0 : i32
    return %arg0, %c0_i32, %c0_i32_0 : i32, i32, i32
  }
  func.func @transform_1(%arg0: i32) -> (i32, i32) {
    %c0_i32 = arith.constant 0 : i32
    %c0_i32_0 = arith.constant 0 : i32
    %c0_i32_1 = arith.constant 0 : i32
    return %c0_i32, %c0_i32_0 : i32, i32
  }
  func.func @transform_2(%arg0: i32) -> (i32, i32) {
    %c0_i32 = arith.constant 0 : i32
    %c0_i32_0 = arith.constant 0 : i32
    %c0_i32_1 = arith.constant 0 : i32
    return %c0_i32, %c0_i32_0 : i32, i32
  }
  func.func @transform_3(%arg0: i32) -> (i32, i32) {
    %c0_i32 = arith.constant 0 : i32
    %c0_i32_0 = arith.constant 0 : i32
    %c0_i32_1 = arith.constant 0 : i32
    return %c0_i32, %c0_i32_0 : i32, i32
  }
  func.func @transform_4(%arg0: i32) -> (i32, i32) {
    %c0_i32 = arith.constant 0 : i32
    %c0_i32_0 = arith.constant 0 : i32
    %c0_i32_1 = arith.constant 0 : i32
    return %c0_i32, %c0_i32_0 : i32, i32
  }
  func.func @transform_5(%arg0: i32) -> (i32, i32) {
    %c0_i32 = arith.constant 0 : i32
    %c0_i32_0 = arith.constant 0 : i32
    %c0_i32_1 = arith.constant 0 : i32
    return %c0_i32, %c0_i32_0 : i32, i32
  }
  func.func @transform_6(%arg0: i32) -> (i32, i32) {
    %c0_i32 = arith.constant 0 : i32
    %c0_i32_0 = arith.constant 0 : i32
    %c0_i32_1 = arith.constant 0 : i32
    return %c0_i32, %c0_i32_0 : i32, i32
  }
  func.func @transform_7(%arg0: i32) -> (i32, i32) {
    %c0_i32 = arith.constant 0 : i32
    %c0_i32_0 = arith.constant 0 : i32
    %c0_i32_1 = arith.constant 0 : i32
    return %c0_i32, %c0_i32_0 : i32, i32
  }
  func.func @transform_8(%arg0: i32) -> (i32, i32) {
    %c0_i32 = arith.constant 0 : i32
    %c0_i32_0 = arith.constant 0 : i32
    %c0_i32_1 = arith.constant 0 : i32
    return %c0_i32, %c0_i32_0 : i32, i32
  }
  func.func @transform_9(%arg0: i32) -> (i32, i32, i32) {
    %c0_i32 = arith.constant 0 : i32
    %c0_i32_0 = arith.constant 0 : i32
    %c0_i32_1 = arith.constant 0 : i32
    return %arg0, %c0_i32, %c0_i32_0 : i32, i32, i32
  }
}

module attributes {stable_mosaic.version = 11 : i64} {
  func.func @_cls_norm_kernel(%arg0: memref<32x128xbf16, #tpu.memory_space<vmem>>, %arg1: memref<1x128xf32, #tpu.memory_space<vmem>>, %arg2: memref<1x128xf32, #tpu.memory_space<vmem>>, %arg3: memref<32x128xf32, #tpu.memory_space<vmem>>) attributes {dimension_semantics = [], scalar_prefetch = 0 : i64, scratch_operands = 0 : i64, tpu.core_type = #tpu.core_type<tc>} {
    %c0 = arith.constant 0 : index
    %c0_0 = arith.constant 0 : index
    %0 = vector.load %arg0[%c0, %c0_0] : memref<32x128xbf16, #tpu.memory_space<vmem>>, vector<32x128xbf16>
    %1 = arith.extf %0 : vector<32x128xbf16> to vector<32x128xf32>
    %cst = arith.constant dense<0.000000e+00> : vector<32xf32>
    %2 = vector.multi_reduction <add>, %1, %cst [1] : vector<32x128xf32> to vector<32xf32>
    %3 = vector.shape_cast %2 : vector<32xf32> to vector<32x1xf32>
    %cst_1 = arith.constant 1.280000e+02 : f32
    %4 = vector.broadcast %cst_1 : f32 to vector<32x1xf32>
    %5 = arith.divf %3, %4 : vector<32x1xf32>
    %6 = vector.broadcast %5 : vector<32x1xf32> to vector<32x128xf32>
    %7 = arith.subf %1, %6 : vector<32x128xf32>
    %8 = arith.mulf %7, %7 : vector<32x128xf32>
    %cst_2 = arith.constant dense<0.000000e+00> : vector<32xf32>
    %9 = vector.multi_reduction <add>, %8, %cst_2 [1] : vector<32x128xf32> to vector<32xf32>
    %10 = vector.shape_cast %9 : vector<32xf32> to vector<32x1xf32>
    %cst_3 = arith.constant 1.280000e+02 : f32
    %11 = vector.broadcast %cst_3 : f32 to vector<32x1xf32>
    %12 = arith.divf %10, %11 : vector<32x1xf32>
    %cst_4 = arith.constant 9.99999997E-7 : f32
    %13 = vector.broadcast %cst_4 : f32 to vector<32x1xf32>
    %14 = arith.addf %12, %13 : vector<32x1xf32>
    %15 = math.rsqrt %14 : vector<32x1xf32>
    %16 = vector.broadcast %15 : vector<32x1xf32> to vector<32x128xf32>
    %17 = arith.mulf %7, %16 : vector<32x128xf32>
    %c0_5 = arith.constant 0 : index
    %c0_6 = arith.constant 0 : index
    %18 = vector.load %arg1[%c0_5, %c0_6] : memref<1x128xf32, #tpu.memory_space<vmem>>, vector<1x128xf32>
    %19 = vector.broadcast %18 : vector<1x128xf32> to vector<32x128xf32>
    %20 = arith.mulf %17, %19 : vector<32x128xf32>
    %c0_7 = arith.constant 0 : index
    %c0_8 = arith.constant 0 : index
    %21 = vector.load %arg2[%c0_7, %c0_8] : memref<1x128xf32, #tpu.memory_space<vmem>>, vector<1x128xf32>
    %22 = vector.broadcast %21 : vector<1x128xf32> to vector<32x128xf32>
    %23 = arith.addf %20, %22 : vector<32x128xf32>
    %c0_9 = arith.constant 0 : index
    %c0_10 = arith.constant 0 : index
    %24 = vector.load %arg3[%c0_9, %c0_10] : memref<32x128xf32, #tpu.memory_space<vmem>>, vector<32x128xf32>
    tpu.vector_store %arg3[%c0_9, %c0_10], %23 {strides = array<i32>} : memref<32x128xf32, #tpu.memory_space<vmem>>, vector<32x128xf32>,
    return
  }
}

</mosaic_0001>

<llo_original>
// kernel: rgbd_vit_forward.4
$region0: #{rgbd_vit_forward.4}
  #allocation0 [shape = 'u32[]', space=smem, size = 0x4, offset = 0x4, fixed_abs, tag = 'smem constant byte address 0x4 - core index']
  #allocation1 [shape = 'u32[144,128]{1,0:T(1,128)}', space=vmem, size = 0x12000, scoped, tag = 'internal scratch']
  %s0 = inlined_call_operand.vmem [shape: bf16[32,4,1024], index: 0, kind: input, shape index: {}]
  %s1 = inlined_call_operand.vmem [shape: bf16[1024,128], index: 1, kind: input, shape index: {}]
  %s2 = inlined_call_operand.vmem [shape: bf16[1,128], index: 2, kind: input, shape index: {}]
  %s3 = inlined_call_operand.vmem [shape: bf16[8,128], index: 3, kind: input, shape index: {}]
  %s4 = inlined_call_operand.vmem [shape: bf16[32,8,128], index: 4, kind: output, shape index: {}]
  %s5 = sld [smem:[#allocation0]]
  $region49: #{rgbd_vit_forward.4} parent=0
    _
  %s7 = ssub.s32 1, %s5
  %s8 = scalar_select 0, %s7, %s5
  loop: start=0, step=1, limit=4
  $region2: #{rgbd_vit_forward.4} parent=0 // loop_pre_header
    _
  $region3: #{rgbd_vit_forward.4} parent=0 // loop_header
    %s10 = sphi 0, %s14
    %p11 = scmp.ge.s32.totalorder %s10, 4
    %s20 = sphi 0, %s22
    %s23 = sphi 0, %s20
    %s24 = sphi 0, %s23
    %s40 = sphi 0, %s24
    %s44 = sphi 0, %s44
    %s46 = sphi 0, %s44
    %s47 = sphi 0, %s46
    %s61 = sphi 0, %s47
    %s65 = sphi 0, %s65
    %s67 = sphi 0, %s65
    %s68 = sphi 0, %s67
    %s82 = sphi 0, %s68
    %s86 = sphi 0, %s86
    %s88 = sphi 0, %s86
    %s89 = sphi 0, %s88
    %s103 = sphi 0, %s89
    %s109 = sphi 0, %s111
    %s112 = sphi 0, %s109
    %s113 = sphi 0, %s112
    %s129 = sphi 0, %s113
  $region4: #{rgbd_vit_forward.4} parent=0 // loop_header_branch
    %13 = sbr.rel (%p11) target = $region8
  $region5: #{rgbd_vit_forward.4} parent=0 // loop_body
    %s15 = ssub.s32 %s10, 1
    %s16 = ssub.s32 %s10, 2
    %s17 = sadd.s32 %s10, 1
    %s18 = ssub.s32 %s10, %s17
    %p19 = scmp.eq.s32.totalorder %s18, 0
    %s21 = sadd.s32 %s20, 1
    %s22 = scalar_select %p19, %s20, %s21
    %p25 = pneg %p19
    %p26 = scmp.eq.s32.totalorder %s10, 1
    %p27 = por %p25, %p26
    %p28 = scmp.ne.s32.totalorder %s20, %s23
    %p29 = scmp.eq.s32.totalorder %s10, 0
    %p30 = por %p28, %p29
    %p31 = scmp.ne.s32.totalorder %s20, %s23
    %p32 = scmp.eq.s32.totalorder %s15, 1
    %p33 = por %p31, %p32
    %p34 = scmp.ne.s32.totalorder %s23, %s24
    %p35 = scmp.eq.s32.totalorder %s15, 0
    %p36 = por %p34, %p35
    %p37 = scmp.ne.s32.totalorder %s23, %s24
    %p38 = scmp.eq.s32.totalorder %s16, 1
    %p39 = por %p37, %p38
    %p41 = scmp.ne.s32.totalorder %s24, %s40
    %p42 = scmp.eq.s32.totalorder %s16, 0
    %p43 = por %p41, %p42
    %s45 = sadd.s32 %s44, 1
    %p48 = scmp.eq.s32.totalorder %s10, 1
    %p49 = scmp.ne.s32.totalorder %s44, %s46
    %p50 = scmp.eq.s32.totalorder %s10, 0
    %p51 = por %p49, %p50
    %p52 = scmp.ne.s32.totalorder %s44, %s46
    %p53 = scmp.eq.s32.totalorder %s15, 1
    %p54 = por %p52, %p53
    %p55 = scmp.ne.s32.totalorder %s46, %s47
    %p56 = scmp.eq.s32.totalorder %s15, 0
    %p57 = por %p55, %p56
    %p58 = scmp.ne.s32.totalorder %s46, %s47
    %p59 = scmp.eq.s32.totalorder %s16, 1
    %p60 = por %p58, %p59
    %p62 = scmp.ne.s32.totalorder %s47, %s61
    %p63 = scmp.eq.s32.totalorder %s16, 0
    %p64 = por %p62, %p63
    %s66 = sadd.s32 %s65, 1
    %p69 = scmp.eq.s32.totalorder %s10, 1
    %p70 = scmp.ne.s32.totalorder %s65, %s67
    %p71 = scmp.eq.s32.totalorder %s10, 0
    %p72 = por %p70, %p71
    %p73 = scmp.ne.s32.totalorder %s65, %s67
    %p74 = scmp.eq.s32.totalorder %s15, 1
    %p75 = por %p73, %p74
    %p76 = scmp.ne.s32.totalorder %s67, %s68
    %p77 = scmp.eq.s32.totalorder %s15, 0
    %p78 = por %p76, %p77
    %p79 = scmp.ne.s32.totalorder %s67, %s68
    %p80 = scmp.eq.s32.totalorder %s16, 1
    %p81 = por %p79, %p80
    %p83 = scmp.ne.s32.totalorder %s68, %s82
    %p84 = scmp.eq.s32.totalorder %s16, 0
    %p85 = por %p83, %p84
    %s87 = sadd.s32 %s86, 1
    %p90 = scmp.eq.s32.totalorder %s10, 1
    %p91 = scmp.ne.s32.totalorder %s86, %s88
    %p92 = scmp.eq.s32.totalorder %s10, 0
    %p93 = por %p91, %p92
    %p94 = scmp.ne.s32.totalorder %s86, %s88
    %p95 = scmp.eq.s32.totalorder %s15, 1
    %p96 = por %p94, %p95
    %p97 = scmp.ne.s32.totalorder %s88, %s89
    %p98 = scmp.eq.s32.totalorder %s15, 0
    %p99 = por %p97, %p98
    %p100 = scmp.ne.s32.totalorder %s88, %s89
    %p101 = scmp.eq.s32.totalorder %s16, 1
    %p102 = por %p100, %p101
    %p104 = scmp.ne.s32.totalorder %s89, %s103
    %p105 = scmp.eq.s32.totalorder %s16, 0
    %p106 = por %p104, %p105
    %s107 = ssub.s32 %s10, %s17
    %p108 = scmp.eq.s32.totalorder %s107, 0
    %s110 = sadd.s32 %s109, 1
    %s111 = scalar_select %p108, %s109, %s110
    %p114 = pneg %p108
    %p115 = scmp.eq.s32.totalorder %s10, 1
    %p116 = por %p114, %p115
    %p117 = scmp.ne.s32.totalorder %s109, %s112
    %p118 = scmp.eq.s32.totalorder %s10, 0
    %p119 = por %p117, %p118
    %p120 = scmp.ne.s32.totalorder %s109, %s112
    %p121 = scmp.eq.s32.totalorder %s15, 1
    %p122 = por %p120, %p121
    %p123 = scmp.ne.s32.totalorder %s112, %s113
    %p124 = scmp.eq.s32.totalorder %s15, 0
    %p125 = por %p123, %p124
    %p126 = scmp.ne.s32.totalorder %s112, %s113
    %p127 = scmp.eq.s32.totalorder %s16, 1
    %p128 = por %p126, %p127
    %p130 = scmp.ne.s32.totalorder %s113, %s129
    %p131 = scmp.eq.s32.totalorder %s16, 0
    %p132 = por %p130, %p131
    %p133 = scmp.le.s32.totalorder 1, %s10
    %p134 = scmp.lt.s32.totalorder %s10, 3
    %p135 = pnand %p133, %p134
    %p136 = pneg %p135
    // Predicated region
    $region9: #{rgbd_vit_forward.4} parent=5 // pred_check
      _
    $region10: #{rgbd_vit_forward.4} parent=5 // pred_check_branch
      %138 = sbr.rel (%p135) target = $region12
    $region11: #{rgbd_vit_forward.4} parent=5 // pred_region
      %s139 = ssub.s32 %s10, 1
      // Predicated region
      $region13: #{rgbd_vit_forward.4} parent=11 // pred_check
        %p140 = pneg %p57
      $region14: #{rgbd_vit_forward.4} parent=11 // pred_check_branch
        %142 = sbr.rel (%p140) target = $region16
      $region15: #{rgbd_vit_forward.4} parent=11 // pred_region
        _
      $region16: #{rgbd_vit_forward.4} parent=11 // pred_fallthru
        _
      // Predicated region
      $region17: #{rgbd_vit_forward.4} parent=11 // pred_check
        %p143 = pneg %p78
      $region18: #{rgbd_vit_forward.4} parent=11 // pred_check_branch
        %145 = sbr.rel (%p143) target = $region20
      $region19: #{rgbd_vit_forward.4} parent=11 // pred_region
        _
      $region20: #{rgbd_vit_forward.4} parent=11 // pred_fallthru
        _
      // Predicated region
      $region21: #{rgbd_vit_forward.4} parent=11 // pred_check
        %p146 = pneg %p99
      $region22: #{rgbd_vit_forward.4} parent=11 // pred_check_branch
        %148 = sbr.rel (%p146) target = $region24
      $region23: #{rgbd_vit_forward.4} parent=11 // pred_region
        _
      $region24: #{rgbd_vit_forward.4} parent=11 // pred_fallthru
        _
    $region12: #{rgbd_vit_forward.4} parent=5 // pred_fallthru
      _
    %p149 = scmp.lt.s32.totalorder %s10, 2
    // Predicated region
    $region25: #{rgbd_vit_forward.4} parent=5 // pred_check
      %p150 = pneg %p149
    $region26: #{rgbd_vit_forward.4} parent=5 // pred_check_branch
      %152 = sbr.rel (%p150) target = $region28
    $region27: #{rgbd_vit_forward.4} parent=5 // pred_region
      // Predicated region
      $region29: #{rgbd_vit_forward.4} parent=27 // pred_check
        %p153 = pneg %p30
      $region30: #{rgbd_vit_forward.4} parent=27 // pred_check_branch
        %155 = sbr.rel (%p153) target = $region32
      $region31: #{rgbd_vit_forward.4} parent=27 // pred_region
        %s156 = smul.u32 16, %s10
        %p157 = scmp.lt.s32.totalorder %s156, 31
        %s158 = scalar_select %p157, %s156, 31
        %s159 = smul.addr %s158, 8
        %s160 = smul.addr %s159, 2
        %s161 = scalar_lea.vmem %s0, %s160
        %s162 = smul.u32 16, %s10
      $region32: #{rgbd_vit_forward.4} parent=27 // pred_fallthru
        _
    $region28: #{rgbd_vit_forward.4} parent=5 // pred_fallthru
      _
    %p163 = scmp.le.s32.totalorder 1, %s10
    %p164 = scmp.lt.s32.totalorder %s10, 3
    %p165 = pnand %p163, %p164
    %p166 = pneg %p165
    // Predicated region
    $region33: #{rgbd_vit_forward.4} parent=5 // pred_check
      _
    $region34: #{rgbd_vit_forward.4} parent=5 // pred_check_branch
      %168 = sbr.rel (%p165) target = $region36
    $region35: #{rgbd_vit_forward.4} parent=5 // pred_region
      %s169 = ssub.s32 %s10, 1
      %s170 = smul.u32 16, %s15
      %p171 = scmp.lt.s32.totalorder %s170, 31
      %s172 = scalar_select %p171, %s170, 31
      %s173 = smul.addr %s172, 8
      %s174 = smul.addr %s173, 2
      %s175 = scalar_lea.vmem %s0, %s174
      %p176 = pneg %p36
      %p177 = pneg %p33
      %p178 = pneg %p57
      %p179 = pneg %p54
      %p180 = pneg %p78
      %p181 = pneg %p75
      %p182 = pneg %p99
      %p183 = pneg %p96
      %p184 = pneg %p125
      %p185 = pneg %p122
      %s186 = smul.u32 16, %s15
      %p187 = scmp.lt.s32.totalorder %s186, 31
      %s188 = scalar_select %p187, %s186, 31
      %s189 = smul.addr %s188, 4
      %s190 = scalar_lea.vmem %s4, %s189
      %s191 = smul.u32 16, %s15
      %p192 = scmp.lt.s32.totalorder %s191, 31
      %s193 = scalar_select %p192, %s191, 31
      %s194 = smul.addr %s193, 8
      %s195 = smul.addr %s194, 2
      %s196 = scalar_lea.vmem %s0, %s195
      %s197 = smul.u32 16, %s15
      %s198 = smul.u32 16, %s15
      %p199 = scmp.lt.s32.totalorder %s198, 31
      %s200 = scalar_select %p199, %s198, 31
      %s201 = smul.addr %s200, 4
      %s202 = scalar_lea.vmem %s4, %s201
      %s203 = smul.u32 16, %s15
      %v205 = vld [vmem:[%s196] sm:$0xff]
      %v206 = vld [vmem:[%s196 + $0x8] sm:$0xff]
      %v207 = vld [vmem:[%s196 + $0x10] sm:$0xff]
      %v208 = vld [vmem:[%s196 + $0x18] sm:$0xff]
      %v209 = vld [vmem:[%s196 + $0x20] sm:$0xff]
      %v210 = vld [vmem:[%s196 + $0x28] sm:$0xff]
      %v211 = vld [vmem:[%s196 + $0x30] sm:$0xff]
      %v212 = vld [vmem:[%s196 + $0x38] sm:$0xff]
      %v213 = vld [vmem:[%s196 + $0x40] sm:$0xff]
      %v214 = vld [vmem:[%s196 + $0x48] sm:$0xff]
      %v215 = vld [vmem:[%s196 + $0x50] sm:$0xff]
      %v216 = vld [vmem:[%s196 + $0x58] sm:$0xff]
      %v217 = vld [vmem:[%s196 + $0x60] sm:$0xff]
      %v218 = vld [vmem:[%s196 + $0x68] sm:$0xff]
      %v219 = vld [vmem:[%s196 + $0x70] sm:$0xff]
      %v220 = vld [vmem:[%s196 + $0x78] sm:$0xff]
      %v221 = vld [vmem:[%s196 + $0x80] sm:$0xff]
      %v222 = vld [vmem:[%s196 + $0x88] sm:$0xff]
      %v223 = vld [vmem:[%s196 + $0x90] sm:$0xff]
      %v224 = vld [vmem:[%s196 + $0x98] sm:$0xff]
      %v225 = vld [vmem:[%s196 + $0xa0] sm:$0xff]
      %v226 = vld [vmem:[%s196 + $0xa8] sm:$0xff]
      %v227 = vld [vmem:[%s196 + $0xb0] sm:$0xff]
      %v228 = vld [vmem:[%s196 + $0xb8] sm:$0xff]
      %v229 = vld [vmem:[%s196 + $0xc0] sm:$0xff]
      %v230 = vld [vmem:[%s196 + $0xc8] sm:$0xff]
      %v231 = vld [vmem:[%s196 + $0xd0] sm:$0xff]
      %v232 = vld [vmem:[%s196 + $0xd8] sm:$0xff]
      %v233 = vld [vmem:[%s196 + $0xe0] sm:$0xff]
      %v234 = vld [vmem:[%s196 + $0xe8] sm:$0xff]
      %v235 = vld [vmem:[%s196 + $0xf0] sm:$0xff]
      %v236 = vld [vmem:[%s196 + $0xf8] sm:$0xff]
      %v237 = vld [vmem:[%s1] sm:$0xf]
      %v238 = vld [vmem:[%s1 + $0x4] sm:$0xf]
      %v239 = vld [vmem:[%s1 + $0x8] sm:$0xf]
      %v240 = vld [vmem:[%s1 + $0xc] sm:$0xf]
      %v241 = vld [vmem:[%s1 + $0x10] sm:$0xf]
      %v242 = vld [vmem:[%s1 + $0x14] sm:$0xf]
      %v243 = vld [vmem:[%s1 + $0x18] sm:$0xf]
      %v244 = vld [vmem:[%s1 + $0x1c] sm:$0xf]
      %v245 = vld [vmem:[%s1 + $0x20] sm:$0xf]
      %v246 = vld [vmem:[%s1 + $0x24] sm:$0xf]
      %v247 = vld [vmem:[%s1 + $0x28] sm:$0xf]
      %v248 = vld [vmem:[%s1 + $0x2c] sm:$0xf]
      %v249 = vld [vmem:[%s1 + $0x30] sm:$0xf]
      %v250 = vld [vmem:[%s1 + $0x34] sm:$0xf]
      %v251 = vld [vmem:[%s1 + $0x38] sm:$0xf]
      %v252 = vld [vmem:[%s1 + $0x3c] sm:$0xf]
      %v253 = vld [vmem:[%s1 + $0x40] sm:$0xf]
      %v254 = vld [vmem:[%s1 + $0x44] sm:$0xf]
      %v255 = vld [vmem:[%s1 + $0x48] sm:$0xf]
      %v256 = vld [vmem:[%s1 + $0x4c] sm:$0xf]
      %v257 = vld [vmem:[%s1 + $0x50] sm:$0xf]
      %v258 = vld [vmem:[%s1 + $0x54] sm:$0xf]
      %v259 = vld [vmem:[%s1 + $0x58] sm:$0xf]
      %v260 = vld [vmem:[%s1 + $0x5c] sm:$0xf]
      %v261 = vld [vmem:[%s1 + $0x60] sm:$0xf]
      %v262 = vld [vmem:[%s1 + $0x64] sm:$0xf]
      %v263 = vld [vmem:[%s1 + $0x68] sm:$0xf]
      %v264 = vld [vmem:[%s1 + $0x6c] sm:$0xf]
      %v265 = vld [vmem:[%s1 + $0x70] sm:$0xf]
      %v266 = vld [vmem:[%s1 + $0x74] sm:$0xf]
      %v267 = vld [vmem:[%s1 + $0x78] sm:$0xf]
      %v268 = vld [vmem:[%s1 + $0x7c] sm:$0xf]
      %v269 = vld [vmem:[%s1 + $0x80] sm:$0xf]
      %v270 = vld [vmem:[%s1 + $0x84] sm:$0xf]
      %v271 = vld [vmem:[%s1 + $0x88] sm:$0xf]
      %v272 = vld [vmem:[%s1 + $0x8c] sm:$0xf]
      %v273 = vld [vmem:[%s1 + $0x90] sm:$0xf]
      %v274 = vld [vmem:[%s1 + $0x94] sm:$0xf]
      %v275 = vld [vmem:[%s1 + $0x98] sm:$0xf]
      %v276 = vld [vmem:[%s1 + $0x9c] sm:$0xf]
      %v277 = vld [vmem:[%s1 + $0xa0] sm:$0xf]
      %v278 = vld [vmem:[%s1 + $0xa4] sm:$0xf]
      %v279 = vld [vmem:[%s1 + $0xa8] sm:$0xf]
      %v280 = vld [vmem:[%s1 + $0xac] sm:$0xf]
      %v281 = vld [vmem:[%s1 + $0xb0] sm:$0xf]
      %v282 = vld [vmem:[%s1 + $0xb4] sm:$0xf]
      %v283 = vld [vmem:[%s1 + $0xb8] sm:$0xf]
      %v284 = vld [vmem:[%s1 + $0xbc] sm:$0xf]
      %v285 = vld [vmem:[%s1 + $0xc0] sm:$0xf]
      %v286 = vld [vmem:[%s1 + $0xc4] sm:$0xf]
      %v287 = vld [vmem:[%s1 + $0xc8] sm:$0xf]
      %v288 = vld [vmem:[%s1 + $0xcc] sm:$0xf]
      %v289 = vld [vmem:[%s1 + $0xd0] sm:$0xf]
      %v290 = vld [vmem:[%s1 + $0xd4] sm:$0xf]
      %v291 = vld [vmem:[%s1 + $0xd8] sm:$0xf]
      %v292 = vld [vmem:[%s1 + $0xdc] sm:$0xf]
      %v293 = vld [vmem:[%s1 + $0xe0] sm:$0xf]
      %v294 = vld [vmem:[%s1 + $0xe4] sm:$0xf]
      %v295 = vld [vmem:[%s1 + $0xe8] sm:$0xf]
      %v296 = vld [vmem:[%s1 + $0xec] sm:$0xf]
      %v297 = vld [vmem:[%s1 + $0xf0] sm:$0xf]
      %v298 = vld [vmem:[%s1 + $0xf4] sm:$0xf]
      %v299 = vld [vmem:[%s1 + $0xf8] sm:$0xf]
      %v300 = vld [vmem:[%s1 + $0xfc] sm:$0xf]
      %v301 = vld [vmem:[%s1 + $0x100] sm:$0xf]
      %v302 = vld [vmem:[%s1 + $0x104] sm:$0xf]
      %v303 = vld [vmem:[%s1 + $0x108] sm:$0xf]
      %v304 = vld [vmem:[%s1 + $0x10c] sm:$0xf]
      %v305 = vld [vmem:[%s1 + $0x110] sm:$0xf]
      %v306 = vld [vmem:[%s1 + $0x114] sm:$0xf]
      %v307 = vld [vmem:[%s1 + $0x118] sm:$0xf]
      %v308 = vld [vmem:[%s1 + $0x11c] sm:$0xf]
      %v309 = vld [vmem:[%s1 + $0x120] sm:$0xf]
      %v310 = vld [vmem:[%s1 + $0x124] sm:$0xf]
      %v311 = vld [vmem:[%s1 + $0x128] sm:$0xf]
      %v312 = vld [vmem:[%s1 + $0x12c] sm:$0xf]
      %v313 = vld [vmem:[%s1 + $0x130] sm:$0xf]
      %v314 = vld [vmem:[%s1 + $0x134] sm:$0xf]
      %v315 = vld [vmem:[%s1 + $0x138] sm:$0xf]
      %v316 = vld [vmem:[%s1 + $0x13c] sm:$0xf]
      %v317 = vld [vmem:[%s1 + $0x140] sm:$0xf]
      %v318 = vld [vmem:[%s1 + $0x144] sm:$0xf]
      %v319 = vld [vmem:[%s1 + $0x148] sm:$0xf]
      %v320 = vld [vmem:[%s1 + $0x14c] sm:$0xf]
      %v321 = vld [vmem:[%s1 + $0x150] sm:$0xf]
      %v322 = vld [vmem:[%s1 + $0x154] sm:$0xf]
      %v323 = vld [vmem:[%s1 + $0x158] sm:$0xf]
      %v324 = vld [vmem:[%s1 + $0x15c] sm:$0xf]
      %v325 = vld [vmem:[%s1 + $0x160] sm:$0xf]
      %v326 = vld [vmem:[%s1 + $0x164] sm:$0xf]
      %v327 = vld [vmem:[%s1 + $0x168] sm:$0xf]
      %v328 = vld [vmem:[%s1 + $0x16c] sm:$0xf]
      %v329 = vld [vmem:[%s1 + $0x170] sm:$0xf]
      %v330 = vld [vmem:[%s1 + $0x174] sm:$0xf]
      %v331 = vld [vmem:[%s1 + $0x178] sm:$0xf]
      %v332 = vld [vmem:[%s1 + $0x17c] sm:$0xf]
      %v333 = vld [vmem:[%s1 + $0x180] sm:$0xf]
      %v334 = vld [vmem:[%s1 + $0x184] sm:$0xf]
      %v335 = vld [vmem:[%s1 + $0x188] sm:$0xf]
      %v336 = vld [vmem:[%s1 + $0x18c] sm:$0xf]
      %v337 = vld [vmem:[%s1 + $0x190] sm:$0xf]
      %v338 = vld [vmem:[%s1 + $0x194] sm:$0xf]
      %v339 = vld [vmem:[%s1 + $0x198] sm:$0xf]
      %v340 = vld [vmem:[%s1 + $0x19c] sm:$0xf]
      %v341 = vld [vmem:[%s1 + $0x1a0] sm:$0xf]
      %v342 = vld [vmem:[%s1 + $0x1a4] sm:$0xf]
      %v343 = vld [vmem:[%s1 + $0x1a8] sm:$0xf]
      %v344 = vld [vmem:[%s1 + $0x1ac] sm:$0xf]
      %v345 = vld [vmem:[%s1 + $0x1b0] sm:$0xf]
      %v346 = vld [vmem:[%s1 + $0x1b4] sm:$0xf]
      %v347 = vld [vmem:[%s1 + $0x1b8] sm:$0xf]
      %v348 = vld [vmem:[%s1 + $0x1bc] sm:$0xf]
      %v349 = vld [vmem:[%s1 + $0x1c0] sm:$0xf]
      %v350 = vld [vmem:[%s1 + $0x1c4] sm:$0xf]
      %v351 = vld [vmem:[%s1 + $0x1c8] sm:$0xf]
      %v352 = vld [vmem:[%s1 + $0x1cc] sm:$0xf]
      %v353 = vld [vmem:[%s1 + $0x1d0] sm:$0xf]
      %v354 = vld [vmem:[%s1 + $0x1d4] sm:$0xf]
      %v355 = vld [vmem:[%s1 + $0x1d8] sm:$0xf]
      %v356 = vld [vmem:[%s1 + $0x1dc] sm:$0xf]
      %v357 = vld [vmem:[%s1 + $0x1e0] sm:$0xf]
      %v358 = vld [vmem:[%s1 + $0x1e4] sm:$0xf]
      %v359 = vld [vmem:[%s1 + $0x1e8] sm:$0xf]
      %v360 = vld [vmem:[%s1 + $0x1ec] sm:$0xf]
      %v361 = vld [vmem:[%s1 + $0x1f0] sm:$0xf]
      %v362 = vld [vmem:[%s1 + $0x1f4] sm:$0xf]
      %v363 = vld [vmem:[%s1 + $0x1f8] sm:$0xf]
      %v364 = vld [vmem:[%s1 + $0x1fc] sm:$0xf]
      %v397 = vcombine.low %v205, %v207
      %v398 = vcombine.high %v205, %v207
      %v399 = vcombine.low %v209, %v211
      %v400 = vcombine.high %v209, %v211
      %v402 = vunpack.c.l.s4 1983009808
      %v403 = vunpack.c.0.s8 %v402
      %v404 = vlaneseq
      %v405 = vshrl.u32 %v404, 7
      %v406 = vsub.s32 %v403, %v405
      %v407 = vrot.slane %v397, %v406
      %v409 = vunpack.c.l.s4 1983009808
      %v410 = vunpack.c.0.s8 %v409
      %v411 = vlaneseq
      %v412 = vshrl.u32 %v411, 7
      %v413 = vsub.s32 %v410, %v412
      %v414 = vrot.slane %v398, %v413
      %v416 = vunpack.c.l.s4 1983009808
      %v417 = vunpack.c.0.s8 %v416
      %v418 = vlaneseq
      %v419 = vshrl.u32 %v418, 7
      %v420 = vsub.s32 %v417, %v419
      %v421 = vrot.slane %v399, %v420
      %v423 = vunpack.c.l.s4 1983009808
      %v424 = vunpack.c.0.s8 %v423
      %v425 = vlaneseq
      %v426 = vshrl.u32 %v425, 7
      %v427 = vsub.s32 %v424, %v426
      %v428 = vrot.slane %v400, %v427
      %v429 = vcombine.low %v407, %v421
      %v430 = vcombine.high %v407, %v421
      %v431 = vcombine.low %v414, %v428
      %v432 = vcombine.high %v414, %v428
      %v433 = vcombine.low %v206, %v208
      %v434 = vcombine.high %v206, %v208
      %v435 = vcombine.low %v210, %v212
      %v436 = vcombine.high %v210, %v212
      %v438 = vunpack.c.l.s4 1983009808
      %v439 = vunpack.c.0.s8 %v438
      %v440 = vlaneseq
      %v441 = vshrl.u32 %v440, 7
      %v442 = vsub.s32 %v439, %v441
      %v443 = vrot.slane %v433, %v442
      %v445 = vunpack.c.l.s4 1983009808
      %v446 = vunpack.c.0.s8 %v445
      %v447 = vlaneseq
      %v448 = vshrl.u32 %v447, 7
      %v449 = vsub.s32 %v446, %v448
      %v450 = vrot.slane %v434, %v449
      %v452 = vunpack.c.l.s4 1983009808
      %v453 = vunpack.c.0.s8 %v452
      %v454 = vlaneseq
      %v455 = vshrl.u32 %v454, 7
      %v456 = vsub.s32 %v453, %v455
      %v457 = vrot.slane %v435, %v456
      %v459 = vunpack.c.l.s4 1983009808
      %v460 = vunpack.c.0.s8 %v459
      %v461 = vlaneseq
      %v462 = vshrl.u32 %v461, 7
      %v463 = vsub.s32 %v460, %v462
      %v464 = vrot.slane %v436, %v463
      %v465 = vcombine.low %v443, %v457
      %v466 = vcombine.high %v443, %v457
      %v467 = vcombine.low %v450, %v464
      %v468 = vcombine.high %v450, %v464
      %v469 = vcombine.low %v213, %v215
      %v470 = vcombine.high %v213, %v215
      %v471 = vcombine.low %v217, %v219
      %v472 = vcombine.high %v217, %v219
      %v474 = vunpack.c.l.s4 1983009808
      %v475 = vunpack.c.0.s8 %v474
      %v476 = vlaneseq
      %v477 = vshrl.u32 %v476, 7
      %v478 = vsub.s32 %v475, %v477
      %v479 = vrot.slane %v469, %v478
      %v481 = vunpack.c.l.s4 1983009808
      %v482 = vunpack.c.0.s8 %v481
      %v483 = vlaneseq
      %v484 = vshrl.u32 %v483, 7
      %v485 = vsub.s32 %v482, %v484
      %v486 = vrot.slane %v470, %v485
      %v488 = vunpack.c.l.s4 1983009808
      %v489 = vunpack.c.0.s8 %v488
      %v490 = vlaneseq
      %v491 = vshrl.u32 %v490, 7
      %v492 = vsub.s32 %v489, %v491
      %v493 = vrot.slane %v471, %v492
      %v495 = vunpack.c.l.s4 1983009808
      %v496 = vunpack.c.0.s8 %v495
      %v497 = vlaneseq
      %v498 = vshrl.u32 %v497, 7
      %v499 = vsub.s32 %v496, %v498
      %v500 = vrot.slane %v472, %v499
      %v501 = vcombine.low %v479, %v493
      %v502 = vcombine.high %v479, %v493
      %v503 = vcombine.low %v486, %v500
      %v504 = vcombine.high %v486, %v500
      %v505 = vcombine.low %v214, %v216
      %v506 = vcombine.high %v214, %v216
      %v507 = vcombine.low %v218, %v220
      %v508 = vcombine.high %v218, %v220
      %v510 = vunpack.c.l.s4 1983009808
      %v511 = vunpack.c.0.s8 %v510
      %v512 = vlaneseq
      %v513 = vshrl.u32 %v512, 7
      %v514 = vsub.s32 %v511, %v513
      %v515 = vrot.slane %v505, %v514
      %v517 = vunpack.c.l.s4 1983009808
      %v518 = vunpack.c.0.s8 %v517
      %v519 = vlaneseq
      %v520 = vshrl.u32 %v519, 7
      %v521 = vsub.s32 %v518, %v520
      %v522 = vrot.slane %v506, %v521
      %v524 = vunpack.c.l.s4 1983009808
      %v525 = vunpack.c.0.s8 %v524
      %v526 = vlaneseq
      %v527 = vshrl.u32 %v526, 7
      %v528 = vsub.s32 %v525, %v527
      %v529 = vrot.slane %v507, %v528
      %v531 = vunpack.c.l.s4 1983009808
      %v532 = vunpack.c.0.s8 %v531
      %v533 = vlaneseq
      %v534 = vshrl.u32 %v533, 7
      %v535 = vsub.s32 %v532, %v534
      %v536 = vrot.slane %v508, %v535
      %v537 = vcombine.low %v515, %v529
      %v538 = vcombine.high %v515, %v529
      %v539 = vcombine.low %v522, %v536
      %v540 = vcombine.high %v522, %v536
      %v541 = vcombine.low %v221, %v223
      %v542 = vcombine.high %v221, %v223
      %v543 = vcombine.low %v225, %v227
      %v544 = vcombine.high %v225, %v227
      %v546 = vunpack.c.l.s4 1983009808
      %v547 = vunpack.c.0.s8 %v546
      %v548 = vlaneseq
      %v549 = vshrl.u32 %v548, 7
      %v550 = vsub.s32 %v547, %v549
      %v551 = vrot.slane %v541, %v550
      %v553 = vunpack.c.l.s4 1983009808
      %v554 = vunpack.c.0.s8 %v553
      %v555 = vlaneseq
      %v556 = vshrl.u32 %v555, 7
      %v557 = vsub.s32 %v554, %v556
      %v558 = vrot.slane %v542, %v557
      %v560 = vunpack.c.l.s4 1983009808
      %v561 = vunpack.c.0.s8 %v560
      %v562 = vlaneseq
      %v563 = vshrl.u32 %v562, 7
      %v564 = vsub.s32 %v561, %v563
      %v565 = vrot.slane %v543, %v564
      %v567 = vunpack.c.l.s4 1983009808
      %v568 = vunpack.c.0.s8 %v567
      %v569 = vlaneseq
      %v570 = vshrl.u32 %v569, 7
      %v571 = vsub.s32 %v568, %v570
      %v572 = vrot.slane %v544, %v571
      %v573 = vcombine.low %v551, %v565
      %v574 = vcombine.high %v551, %v565
      %v575 = vcombine.low %v558, %v572
      %v576 = vcombine.high %v558, %v572
      %v577 = vcombine.low %v222, %v224
      %v578 = vcombine.high %v222, %v224
      %v579 = vcombine.low %v226, %v228
      %v580 = vcombine.high %v226, %v228
      %v582 = vunpack.c.l.s4 1983009808
      %v583 = vunpack.c.0.s8 %v582
      %v584 = vlaneseq
      %v585 = vshrl.u32 %v584, 7
      %v586 = vsub.s32 %v583, %v585
      %v587 = vrot.slane %v577, %v586
      %v589 = vunpack.c.l.s4 1983009808
      %v590 = vunpack.c.0.s8 %v589
      %v591 = vlaneseq
      %v592 = vshrl.u32 %v591, 7
      %v593 = vsub.s32 %v590, %v592
      %v594 = vrot.slane %v578, %v593
      %v596 = vunpack.c.l.s4 1983009808
      %v597 = vunpack.c.0.s8 %v596
      %v598 = vlaneseq
      %v599 = vshrl.u32 %v598, 7
      %v600 = vsub.s32 %v597, %v599
      %v601 = vrot.slane %v579, %v600
      %v603 = vunpack.c.l.s4 1983009808
      %v604 = vunpack.c.0.s8 %v603
      %v605 = vlaneseq
      %v606 = vshrl.u32 %v605, 7
      %v607 = vsub.s32 %v604, %v606
      %v608 = vrot.slane %v580, %v607
      %v609 = vcombine.low %v587, %v601
      %v610 = vcombine.high %v587, %v601
      %v611 = vcombine.low %v594, %v608
      %v612 = vcombine.high %v594, %v608
      %v613 = vcombine.low %v229, %v231
      %v614 = vcombine.high %v229, %v231
      %v615 = vcombine.low %v233, %v235
      %v616 = vcombine.high %v233, %v235
      %v618 = vunpack.c.l.s4 1983009808
      %v619 = vunpack.c.0.s8 %v618
      %v620 = vlaneseq
      %v621 = vshrl.u32 %v620, 7
      %v622 = vsub.s32 %v619, %v621
      %v623 = vrot.slane %v613, %v622
      %v625 = vunpack.c.l.s4 1983009808
      %v626 = vunpack.c.0.s8 %v625
      %v627 = vlaneseq
      %v628 = vshrl.u32 %v627, 7
      %v629 = vsub.s32 %v626, %v628
      %v630 = vrot.slane %v614, %v629
      %v632 = vunpack.c.l.s4 1983009808
      %v633 = vunpack.c.0.s8 %v632
      %v634 = vlaneseq
      %v635 = vshrl.u32 %v634, 7
      %v636 = vsub.s32 %v633, %v635
      %v637 = vrot.slane %v615, %v636
      %v639 = vunpack.c.l.s4 1983009808
      %v640 = vunpack.c.0.s8 %v639
      %v641 = vlaneseq
      %v642 = vshrl.u32 %v641, 7
      %v643 = vsub.s32 %v640, %v642
      %v644 = vrot.slane %v616, %v643
      %v645 = vcombine.low %v623, %v637
      %v646 = vcombine.high %v623, %v637
      %v647 = vcombine.low %v630, %v644
      %v648 = vcombine.high %v630, %v644
      %v649 = vcombine.low %v230, %v232
      %v650 = vcombine.high %v230, %v232
      %v651 = vcombine.low %v234, %v236
      %v652 = vcombine.high %v234, %v236
      %v654 = vunpack.c.l.s4 1983009808
      %v655 = vunpack.c.0.s8 %v654
      %v656 = vlaneseq
      %v657 = vshrl.u32 %v656, 7
      %v658 = vsub.s32 %v655, %v657
      %v659 = vrot.slane %v649, %v658
      %v661 = vunpack.c.l.s4 1983009808
      %v662 = vunpack.c.0.s8 %v661
      %v663 = vlaneseq
      %v664 = vshrl.u32 %v663, 7
      %v665 = vsub.s32 %v662, %v664
      %v666 = vrot.slane %v650, %v665
      %v668 = vunpack.c.l.s4 1983009808
      %v669 = vunpack.c.0.s8 %v668
      %v670 = vlaneseq
      %v671 = vshrl.u32 %v670, 7
      %v672 = vsub.s32 %v669, %v671
      %v673 = vrot.slane %v651, %v672
      %v675 = vunpack.c.l.s4 1983009808
      %v676 = vunpack.c.0.s8 %v675
      %v677 = vlaneseq
      %v678 = vshrl.u32 %v677, 7
      %v679 = vsub.s32 %v676, %v678
      %v680 = vrot.slane %v652, %v679
      %v681 = vcombine.low %v659, %v673
      %v682 = vcombine.high %v659, %v673
      %v683 = vcombine.low %v666, %v680
      %v684 = vcombine.high %v666, %v680
      %v845 = vunpack.c.l.b16 %v237
      %v846 = vunpack.c.l.b16 %v238
      %v847 = vunpack.c.l.b16 %v239
      %v848 = vunpack.c.l.b16 %v240
      %v849 = vunpack.c.l.b16 %v241
      %v850 = vunpack.c.l.b16 %v242
      %v851 = vunpack.c.l.b16 %v243
      %v852 = vunpack.c.l.b16 %v244
      %v853 = vunpack.c.l.b16 %v245
      %v854 = vunpack.c.l.b16 %v246
      %v855 = vunpack.c.l.b16 %v247
      %v856 = vunpack.c.l.b16 %v248
      %v857 = vunpack.c.l.b16 %v249
      %v858 = vunpack.c.l.b16 %v250
      %v859 = vunpack.c.l.b16 %v251
      %v860 = vunpack.c.l.b16 %v252
      %v861 = vunpack.c.l.b16 %v253
      %v862 = vunpack.c.l.b16 %v254
      %v863 = vunpack.c.l.b16 %v255
      %v864 = vunpack.c.l.b16 %v256
      %v865 = vunpack.c.l.b16 %v257
      %v866 = vunpack.c.l.b16 %v258
      %v867 = vunpack.c.l.b16 %v259
      %v868 = vunpack.c.l.b16 %v260
      %v869 = vunpack.c.l.b16 %v261
      %v870 = vunpack.c.l.b16 %v262
      %v871 = vunpack.c.l.b16 %v263
      %v872 = vunpack.c.l.b16 %v264
      %v873 = vunpack.c.l.b16 %v265
      %v874 = vunpack.c.l.b16 %v266
      %v875 = vunpack.c.l.b16 %v267
      %v876 = vunpack.c.l.b16 %v268
      %v877 = vunpack.c.l.b16 %v269
      %v878 = vunpack.c.l.b16 %v270
      %v879 = vunpack.c.l.b16 %v271
      %v880 = vunpack.c.l.b16 %v272
      %v881 = vunpack.c.l.b16 %v273
      %v882 = vunpack.c.l.b16 %v274
      %v883 = vunpack.c.l.b16 %v275
      %v884 = vunpack.c.l.b16 %v276
      %v885 = vunpack.c.l.b16 %v277
      %v886 = vunpack.c.l.b16 %v278
      %v887 = vunpack.c.l.b16 %v279
      %v888 = vunpack.c.l.b16 %v280
      %v889 = vunpack.c.l.b16 %v281
      %v890 = vunpack.c.l.b16 %v282
      %v891 = vunpack.c.l.b16 %v283
      %v892 = vunpack.c.l.b16 %v284
      %v893 = vunpack.c.l.b16 %v285
      %v894 = vunpack.c.l.b16 %v286
      %v895 = vunpack.c.l.b16 %v287
      %v896 = vunpack.c.l.b16 %v288
      %v897 = vunpack.c.l.b16 %v289
      %v898 = vunpack.c.l.b16 %v290
      %v899 = vunpack.c.l.b16 %v291
      %v900 = vunpack.c.l.b16 %v292
      %v901 = vunpack.c.l.b16 %v293
      %v902 = vunpack.c.l.b16 %v294
      %v903 = vunpack.c.l.b16 %v295
      %v904 = vunpack.c.l.b16 %v296
      %v905 = vunpack.c.l.b16 %v297
      %v906 = vunpack.c.l.b16 %v298
      %v907 = vunpack.c.l.b16 %v299
      %v908 = vunpack.c.l.b16 %v300
      %v909 = vunpack.c.l.b16 %v301
      %v910 = vunpack.c.l.b16 %v302
      %v911 = vunpack.c.l.b16 %v303
      %v912 = vunpack.c.l.b16 %v304
      %v913 = vunpack.c.l.b16 %v305
      %v914 = vunpack.c.l.b16 %v306
      %v915 = vunpack.c.l.b16 %v307
      %v916 = vunpack.c.l.b16 %v308
      %v917 = vunpack.c.l.b16 %v309
      %v918 = vunpack.c.l.b16 %v310
      %v919 = vunpack.c.l.b16 %v311
      %v920 = vunpack.c.l.b16 %v312
      %v921 = vunpack.c.l.b16 %v313
      %v922 = vunpack.c.l.b16 %v314
      %v923 = vunpack.c.l.b16 %v315
      %v924 = vunpack.c.l.b16 %v316
      %v925 = vunpack.c.l.b16 %v317
      %v926 = vunpack.c.l.b16 %v318
      %v927 = vunpack.c.l.b16 %v319
      %v928 = vunpack.c.l.b16 %v320
      %v929 = vunpack.c.l.b16 %v321
      %v930 = vunpack.c.l.b16 %v322
      %v931 = vunpack.c.l.b16 %v323
      %v932 = vunpack.c.l.b16 %v324
      %v933 = vunpack.c.l.b16 %v325
      %v934 = vunpack.c.l.b16 %v326
      %v935 = vunpack.c.l.b16 %v327
      %v936 = vunpack.c.l.b16 %v328
      %v937 = vunpack.c.l.b16 %v329
      %v938 = vunpack.c.l.b16 %v330
      %v939 = vunpack.c.l.b16 %v331
      %v940 = vunpack.c.l.b16 %v332
      %v941 = vunpack.c.l.b16 %v333
      %v942 = vunpack.c.l.b16 %v334
      %v943 = vunpack.c.l.b16 %v335
      %v944 = vunpack.c.l.b16 %v336
      %v945 = vunpack.c.l.b16 %v337
      %v946 = vunpack.c.l.b16 %v338
      %v947 = vunpack.c.l.b16 %v339
      %v948 = vunpack.c.l.b16 %v340
      %v949 = vunpack.c.l.b16 %v341
      %v950 = vunpack.c.l.b16 %v342
      %v951 = vunpack.c.l.b16 %v343
      %v952 = vunpack.c.l.b16 %v344
      %v953 = vunpack.c.l.b16 %v345
      %v954 = vunpack.c.l.b16 %v346
      %v955 = vunpack.c.l.b16 %v347
      %v956 = vunpack.c.l.b16 %v348
      %v957 = vunpack.c.l.b16 %v349
      %v958 = vunpack.c.l.b16 %v350
      %v959 = vunpack.c.l.b16 %v351
      %v960 = vunpack.c.l.b16 %v352
      %v961 = vunpack.c.l.b16 %v353
      %v962 = vunpack.c.l.b16 %v354
      %v963 = vunpack.c.l.b16 %v355
      %v964 = vunpack.c.l.b16 %v356
      %v965 = vunpack.c.l.b16 %v357
      %v966 = vunpack.c.l.b16 %v358
      %v967 = vunpack.c.l.b16 %v359
      %v968 = vunpack.c.l.b16 %v360
      %v969 = vunpack.c.l.b16 %v361
      %v970 = vunpack.c.l.b16 %v362
      %v971 = vunpack.c.l.b16 %v363
      %v972 = vunpack.c.l.b16 %v364
      %v973 = vpack.c.b16 %v846, %v845
      %v974 = vpack.c.b16 %v848, %v847
      %v975 = vpack.c.b16 %v850, %v849
      %v976 = vpack.c.b16 %v852, %v851
      %v977 = vpack.c.b16 %v854, %v853
      %v978 = vpack.c.b16 %v856, %v855
      %v979 = vpack.c.b16 %v858, %v857
      %v980 = vpack.c.b16 %v860, %v859
      %v981 = vpack.c.b16 %v862, %v861
      %v982 = vpack.c.b16 %v864, %v863
      %v983 = vpack.c.b16 %v866, %v865
      %v984 = vpack.c.b16 %v868, %v867
      %v985 = vpack.c.b16 %v870, %v869
      %v986 = vpack.c.b16 %v872, %v871
      %v987 = vpack.c.b16 %v874, %v873
      %v988 = vpack.c.b16 %v876, %v875
      %v989 = vpack.c.b16 %v878, %v877
      %v990 = vpack.c.b16 %v880, %v879
      %v991 = vpack.c.b16 %v882, %v881
      %v992 = vpack.c.b16 %v884, %v883
      %v993 = vpack.c.b16 %v886, %v885
      %v994 = vpack.c.b16 %v888, %v887
      %v995 = vpack.c.b16 %v890, %v889
      %v996 = vpack.c.b16 %v892, %v891
      %v997 = vpack.c.b16 %v894, %v893
      %v998 = vpack.c.b16 %v896, %v895
      %v999 = vpack.c.b16 %v898, %v897
      %v1000 = vpack.c.b16 %v900, %v899
      %v1001 = vpack.c.b16 %v902, %v901
      %v1002 = vpack.c.b16 %v904, %v903
      %v1003 = vpack.c.b16 %v906, %v905
      %v1004 = vpack.c.b16 %v908, %v907
      %v1005 = vpack.c.b16 %v910, %v909
      %v1006 = vpack.c.b16 %v912, %v911
      %v1007 = vpack.c.b16 %v914, %v913
      %v1008 = vpack.c.b16 %v916, %v915
      %v1009 = vpack.c.b16 %v918, %v917
      %v1010 = vpack.c.b16 %v920, %v919
      %v1011 = vpack.c.b16 %v922, %v921
      %v1012 = vpack.c.b16 %v924, %v923
      %v1013 = vpack.c.b16 %v926, %v925
      %v1014 = vpack.c.b16 %v928, %v927
      %v1015 = vpack.c.b16 %v930, %v929
      %v1016 = vpack.c.b16 %v932, %v931
      %v1017 = vpack.c.b16 %v934, %v933
      %v1018 = vpack.c.b16 %v936, %v935
      %v1019 = vpack.c.b16 %v938, %v937
      %v1020 = vpack.c.b16 %v940, %v939
      %v1021 = vpack.c.b16 %v942, %v941
      %v1022 = vpack.c.b16 %v944, %v943
      %v1023 = vpack.c.b16 %v946, %v945
      %v1024 = vpack.c.b16 %v948, %v947
      %v1025 = vpack.c.b16 %v950, %v949
      %v1026 = vpack.c.b16 %v952, %v951
      %v1027 = vpack.c.b16 %v954, %v953
      %v1028 = vpack.c.b16 %v956, %v955
      %v1029 = vpack.c.b16 %v958, %v957
      %v1030 = vpack.c.b16 %v960, %v959
      %v1031 = vpack.c.b16 %v962, %v961
      %v1032 = vpack.c.b16 %v964, %v963
      %v1033 = vpack.c.b16 %v966, %v965
      %v1034 = vpack.c.b16 %v968, %v967
      %v1035 = vpack.c.b16 %v970, %v969
      %v1036 = vpack.c.b16 %v972, %v971
      %1101 = vmatprep.subr.bf16.mxu0 0
      %1102 = vmatpush1.bf16.msra.mxu0 %v973
      %1103 = vmatprep.subr.bf16.mxu0 0
      %1104 = vmatpush1.bf16.msra.mxu0 %v974
      %1105 = vmatprep.subr.bf16.mxu0 0
      %1106 = vmatpush1.bf16.msra.mxu0 %v975
      %1107 = vmatprep.subr.bf16.mxu0 0
      %1108 = vmatpush1.bf16.msra.mxu0 %v976
      %1109 = vmatprep.subr.bf16.mxu0 0
      %1110 = vmatpush1.bf16.msra.mxu0 %v977
      %1111 = vmatprep.subr.bf16.mxu0 0
      %1112 = vmatpush1.bf16.msra.mxu0 %v978
      %1113 = vmatprep.subr.bf16.mxu0 0
      %1114 = vmatpush1.bf16.msra.mxu0 %v979
      %1115 = vmatprep.subr.bf16.mxu0 0
      %1116 = vmatpush1.bf16.msra.mxu0 %v980
      %1117 = vmatprep.subr.bf16.mxu0 0
      %1118 = vmatpush1.bf16.msra.mxu0 %v981
      %1119 = vmatprep.subr.bf16.mxu0 0
      %1120 = vmatpush1.bf16.msra.mxu0 %v982
      %1121 = vmatprep.subr.bf16.mxu0 0
      %1122 = vmatpush1.bf16.msra.mxu0 %v983
      %1123 = vmatprep.subr.bf16.mxu0 0
      %1124 = vmatpush1.bf16.msra.mxu0 %v984
      %1125 = vmatprep.subr.bf16.mxu0 0
      %1126 = vmatpush1.bf16.msra.mxu0 %v985
      %1127 = vmatprep.subr.bf16.mxu0 0
      %1128 = vmatpush1.bf16.msra.mxu0 %v986
      %1129 = vmatprep.subr.bf16.mxu0 0
      %1130 = vmatpush1.bf16.msra.mxu0 %v987
      %1131 = vmatprep.subr.bf16.mxu0 0
      %1132 = vmatpush1.bf16.msra.mxu0 %v988
      %1133 = vmatprep.mubr.bf16.mxu0 %v430
      %1134 = vmatmul.mubr.bf16.gmra.mrb[0].mxu0 %v429
      %v1135 = vpop.f32.mrb[0].mxu0
      %v1136 = vadd.f32 0.0, %v1135
      %v1137 = vpop.f32.mrb[0].mxu0
      %v1138 = vpop.f32.mrb[0].mxu0
      %v1139 = vadd.f32 0.0, %v1138
      %v1140 = vpop.f32.mrb[0].mxu0
      %1141 = vmatprep.mubr.bf16.mxu0 %v502
      %1142 = vmatmul.mubr.bf16.gmra.mrb[0].mxu0 %v501
      %v1143 = vpop.f32.mrb[0].mxu0
      %v1144 = vadd.f32 0.0, %v1143
      %v1145 = vpop.f32.mrb[0].mxu0
      %v1146 = vpop.f32.mrb[0].mxu0
      %v1147 = vadd.f32 0.0, %v1146
      %v1148 = vpop.f32.mrb[0].mxu0
      %1149 = vmatprep.mubr.bf16.mxu0 %v574
      %1150 = vmatmul.mubr.bf16.gmra.mrb[0].mxu0 %v573
      %v1151 = vpop.f32.mrb[0].mxu0
      %v1152 = vadd.f32 0.0, %v1151
      %v1153 = vpop.f32.mrb[0].mxu0
      %v1154 = vpop.f32.mrb[0].mxu0
      %v1155 = vadd.f32 0.0, %v1154
      %v1156 = vpop.f32.mrb[0].mxu0
      %1157 = vmatprep.mubr.bf16.mxu0 %v646
      %1158 = vmatmul.mubr.bf16.gmra.mrb[0].mxu0 %v645
      %v1159 = vpop.f32.mrb[0].mxu0
      %v1160 = vadd.f32 0.0, %v1159
      %v1161 = vpop.f32.mrb[0].mxu0
      %v1162 = vpop.f32.mrb[0].mxu0
      %v1163 = vadd.f32 0.0, %v1162
      %v1164 = vpop.f32.mrb[0].mxu0
      %1165 = vdwg.mxu0
      %1166 = vmatprep.subr.bf16.mxu0 0
      %1167 = vmatpush1.bf16.msra.mxu0 %v989
      %1168 = vmatprep.subr.bf16.mxu0 0
      %1169 = vmatpush1.bf16.msra.mxu0 %v990
      %1170 = vmatprep.subr.bf16.mxu0 0
      %1171 = vmatpush1.bf16.msra.mxu0 %v991
      %1172 = vmatprep.subr.bf16.mxu0 0
      %1173 = vmatpush1.bf16.msra.mxu0 %v992
      %1174 = vmatprep.subr.bf16.mxu0 0
      %1175 = vmatpush1.bf16.msra.mxu0 %v993
      %1176 = vmatprep.subr.bf16.mxu0 0
      %1177 = vmatpush1.bf16.msra.mxu0 %v994
      %1178 = vmatprep.subr.bf16.mxu0 0
      %1179 = vmatpush1.bf16.msra.mxu0 %v995
      %1180 = vmatprep.subr.bf16.mxu0 0
      %1181 = vmatpush1.bf16.msra.mxu0 %v996
      %1182 = vmatprep.subr.bf16.mxu0 0
      %1183 = vmatpush1.bf16.msra.mxu0 %v997
      %1184 = vmatprep.subr.bf16.mxu0 0
      %1185 = vmatpush1.bf16.msra.mxu0 %v998
      %1186 = vmatprep.subr.bf16.mxu0 0
      %1187 = vmatpush1.bf16.msra.mxu0 %v999
      %1188 = vmatprep.subr.bf16.mxu0 0
      %1189 = vmatpush1.bf16.msra.mxu0 %v1000
      %1190 = vmatprep.subr.bf16.mxu0 0
      %1191 = vmatpush1.bf16.msra.mxu0 %v1001
      %1192 = vmatprep.subr.bf16.mxu0 0
      %1193 = vmatpush1.bf16.msra.mxu0 %v1002
      %1194 = vmatprep.subr.bf16.mxu0 0
      %1195 = vmatpush1.bf16.msra.mxu0 %v1003
      %1196 = vmatprep.subr.bf16.mxu0 0
      %1197 = vmatpush1.bf16.msra.mxu0 %v1004
      %1198 = vmatprep.mubr.bf16.mxu0 %v432
      %1199 = vmatmul.mubr.bf16.gmra.mrb[0].mxu0 %v431
      %v1200 = vpop.f32.mrb[0].mxu0
      %v1201 = vadd.f32 %v1136, %v1200
      %v1202 = vpop.f32.mrb[0].mxu0
      %v1203 = vpop.f32.mrb[0].mxu0
      %v1204 = vadd.f32 %v1139, %v1203
      %v1205 = vpop.f32.mrb[0].mxu0
      %1206 = vmatprep.mubr.bf16.mxu0 %v504
      %1207 = vmatmul.mubr.bf16.gmra.mrb[0].mxu0 %v503
      %v1208 = vpop.f32.mrb[0].mxu0
      %v1209 = vadd.f32 %v1144, %v1208
      %v1210 = vpop.f32.mrb[0].mxu0
      %v1211 = vpop.f32.mrb[0].mxu0
      %v1212 = vadd.f32 %v1147, %v1211
      %v1213 = vpop.f32.mrb[0].mxu0
      %1214 = vmatprep.mubr.bf16.mxu0 %v576
      %1215 = vmatmul.mubr.bf16.gmra.mrb[0].mxu0 %v575
      %v1216 = vpop.f32.mrb[0].mxu0
      %v1217 = vadd.f32 %v1152, %v1216
      %v1218 = vpop.f32.mrb[0].mxu0
      %v1219 = vpop.f32.mrb[0].mxu0
      %v1220 = vadd.f32 %v1155, %v1219
      %v1221 = vpop.f32.mrb[0].mxu0
      %1222 = vmatprep.mubr.bf16.mxu0 %v648
      %1223 = vmatmul.mubr.bf16.gmra.mrb[0].mxu0 %v647
      %v1224 = vpop.f32.mrb[0].mxu0
      %v1225 = vadd.f32 %v1160, %v1224
      %v1226 = vpop.f32.mrb[0].mxu0
      %v1227 = vpop.f32.mrb[0].mxu0
      %v1228 = vadd.f32 %v1163, %v1227
      %v1229 = vpop.f32.mrb[0].mxu0
      %1230 = vdwg.mxu0
      %1231 = vmatprep.subr.bf16.mxu0 0
      %1232 = vmatpush1.bf16.msra.mxu0 %v1005
      %1233 = vmatprep.subr.bf16.mxu0 0
      %1234 = vmatpush1.bf16.msra.mxu0 %v1006
      %1235 = vmatprep.subr.bf16.mxu0 0
      %1236 = vmatpush1.bf16.msra.mxu0 %v1007
      %1237 = vmatprep.subr.bf16.mxu0 0
      %1238 = vmatpush1.bf16.msra.mxu0 %v1008
      %1239 = vmatprep.subr.bf16.mxu0 0
      %1240 = vmatpush1.bf16.msra.mxu0 %v1009
      %1241 = vmatprep.subr.bf16.mxu0 0
      %1242 = vmatpush1.bf16.msra.mxu0 %v1010
      %1243 = vmatprep.subr.bf16.mxu0 0
      %1244 = vmatpush1.bf16.msra.mxu0 %v1011
      %1245 = vmatprep.subr.bf16.mxu0 0
      %1246 = vmatpush1.bf16.msra.mxu0 %v1012
      %1247 = vmatprep.subr.bf16.mxu0 0
      %1248 = vmatpush1.bf16.msra.mxu0 %v1013
      %1249 = vmatprep.subr.bf16.mxu0 0
      %1250 = vmatpush1.bf16.msra.mxu0 %v1014
      %1251 = vmatprep.subr.bf16.mxu0 0
      %1252 = vmatpush1.bf16.msra.mxu0 %v1015
      %1253 = vmatprep.subr.bf16.mxu0 0
      %1254 = vmatpush1.bf16.msra.mxu0 %v1016
      %1255 = vmatprep.subr.bf16.mxu0 0
      %1256 = vmatpush1.bf16.msra.mxu0 %v1017
      %1257 = vmatprep.subr.bf16.mxu0 0
      %1258 = vmatpush1.bf16.msra.mxu0 %v1018
      %1259 = vmatprep.subr.bf16.mxu0 0
      %1260 = vmatpush1.bf16.msra.mxu0 %v1019
      %1261 = vmatprep.subr.bf16.mxu0 0
      %1262 = vmatpush1.bf16.msra.mxu0 %v1020
      %1263 = vmatprep.mubr.bf16.mxu0 %v466
      %1264 = vmatmul.mubr.bf16.gmra.mrb[0].mxu0 %v465
      %v1265 = vpop.f32.mrb[0].mxu0
      %v1266 = vadd.f32 %v1201, %v1265
      %v1267 = vpop.f32.mrb[0].mxu0
      %v1268 = vpop.f32.mrb[0].mxu0
      %v1269 = vadd.f32 %v1204, %v1268
      %v1270 = vpop.f32.mrb[0].mxu0
      %1271 = vmatprep.mubr.bf16.mxu0 %v538
      %1272 = vmatmul.mubr.bf16.gmra.mrb[0].mxu0 %v537
      %v1273 = vpop.f32.mrb[0].mxu0
      %v1274 = vadd.f32 %v1209, %v1273
      %v1275 = vpop.f32.mrb[0].mxu0
      %v1276 = vpop.f32.mrb[0].mxu0
      %v1277 = vadd.f32 %v1212, %v1276
      %v1278 = vpop.f32.mrb[0].mxu0
      %1279 = vmatprep.mubr.bf16.mxu0 %v610
      %1280 = vmatmul.mubr.bf16.gmra.mrb[0].mxu0 %v609
      %v1281 = vpop.f32.mrb[0].mxu0
      %v1282 = vadd.f32 %v1217, %v1281
      %v1283 = vpop.f32.mrb[0].mxu0
      %v1284 = vpop.f32.mrb[0].mxu0
      %v1285 = vadd.f32 %v1220, %v1284
      %v1286 = vpop.f32.mrb[0].mxu0
      %1287 = vmatprep.mubr.bf16.mxu0 %v682
      %1288 = vmatmul.mubr.bf16.gmra.mrb[0].mxu0 %v681
      %v1289 = vpop.f32.mrb[0].mxu0
      %v1290 = vadd.f32 %v1225, %v1289
      %v1291 = vpop.f32.mrb[0].mxu0
      %v1292 = vpop.f32.mrb[0].mxu0
      %v1293 = vadd.f32 %v1228, %v1292
      %v1294 = vpop.f32.mrb[0].mxu0
      %1295 = vdwg.mxu0
      %1296 = vmatprep.subr.bf16.mxu0 0
      %1297 = vmatpush1.bf16.msra.mxu0 %v1021
      %1298 = vmatprep.subr.bf16.mxu0 0
      %1299 = vmatpush1.bf16.msra.mxu0 %v1022
      %1300 = vmatprep.subr.bf16.mxu0 0
      %1301 = vmatpush1.bf16.msra.mxu0 %v1023
      %1302 = vmatprep.subr.bf16.mxu0 0
      %1303 = vmatpush1.bf16.msra.mxu0 %v1024
      %1304 = vmatprep.subr.bf16.mxu0 0
      %1305 = vmatpush1.bf16.msra.mxu0 %v1025
      %1306 = vmatprep.subr.bf16.mxu0 0
      %1307 = vmatpush1.bf16.msra.mxu0 %v1026
      %1308 = vmatprep.subr.bf16.mxu0 0
      %1309 = vmatpush1.bf16.msra.mxu0 %v1027
      %1310 = vmatprep.subr.bf16.mxu0 0
      %1311 = vmatpush1.bf16.msra.mxu0 %v1028
      %1312 = vmatprep.subr.bf16.mxu0 0
      %1313 = vmatpush1.bf16.msra.mxu0 %v1029
      %1314 = vmatprep.subr.bf16.mxu0 0
      %1315 = vmatpush1.bf16.msra.mxu0 %v1030
      %1316 = vmatprep.subr.bf16.mxu0 0
      %1317 = vmatpush1.bf16.msra.mxu0 %v1031
      %1318 = vmatprep.subr.bf16.mxu0 0
      %1319 = vmatpush1.bf16.msra.mxu0 %v1032
      %1320 = vmatprep.subr.bf16.mxu0 0
      %1321 = vmatpush1.bf16.msra.mxu0 %v1033
      %1322 = vmatprep.subr.bf16.mxu0 0
      %1323 = vmatpush1.bf16.msra.mxu0 %v1034
      %1324 = vmatprep.subr.bf16.mxu0 0
      %1325 = vmatpush1.bf16.msra.mxu0 %v1035
      %1326 = vmatprep.subr.bf16.mxu0 0
      %1327 = vmatpush1.bf16.msra.mxu0 %v1036
      %1328 = vmatprep.mubr.bf16.mxu0 %v468
      %1329 = vmatmul.mubr.bf16.gmra.mrb[0].mxu0 %v467
      %v1330 = vpop.f32.mrb[0].mxu0
      %v1331 = vadd.f32 %v1266, %v1330
      %v1332 = vpop.f32.mrb[0].mxu0
      %v1333 = vpop.f32.mrb[0].mxu0
      %v1334 = vadd.f32 %v1269, %v1333
      %v1335 = vpop.f32.mrb[0].mxu0
      %1336 = vmatprep.mubr.bf16.mxu0 %v540
      %1337 = vmatmul.mubr.bf16.gmra.mrb[0].mxu0 %v539
      %v1338 = vpop.f32.mrb[0].mxu0
      %v1339 = vadd.f32 %v1274, %v1338
      %v1340 = vpop.f32.mrb[0].mxu0
      %v1341 = vpop.f32.mrb[0].mxu0
      %v1342 = vadd.f32 %v1277, %v1341
      %v1343 = vpop.f32.mrb[0].mxu0
      %1344 = vmatprep.mubr.bf16.mxu0 %v612
      %1345 = vmatmul.mubr.bf16.gmra.mrb[0].mxu0 %v611
      %v1346 = vpop.f32.mrb[0].mxu0
      %v1347 = vadd.f32 %v1282, %v1346
      %v1348 = vpop.f32.mrb[0].mxu0
      %v1349 = vpop.f32.mrb[0].mxu0
      %v1350 = vadd.f32 %v1285, %v1349
      %v1351 = vpop.f32.mrb[0].mxu0
      %1352 = vmatprep.mubr.bf16.mxu0 %v684
      %1353 = vmatmul.mubr.bf16.gmra.mrb[0].mxu0 %v683
      %v1354 = vpop.f32.mrb[0].mxu0
      %v1355 = vadd.f32 %v1290, %v1354
      %v1356 = vpop.f32.mrb[0].mxu0
      %v1357 = vpop.f32.mrb[0].mxu0
      %v1358 = vadd.f32 %v1293, %v1357
      %v1359 = vpop.f32.mrb[0].mxu0
      %1360 = vdwg.mxu0
      %v1361 = vld [vmem:[%s3] sm:$0xf]
      %v1362 = vunpack.c.l.bf16 %v1361
      %v1371 = vcombine.high %v1331, %v1331
      %v1372 = vcombine.high %v1334, %v1334
      %v1373 = vcombine.high %v1339, %v1339
      %v1374 = vcombine.high %v1342, %v1342
      %v1375 = vcombine.high %v1347, %v1347
      %v1376 = vcombine.high %v1350, %v1350
      %v1377 = vcombine.high %v1355, %v1355
      %v1378 = vcombine.high %v1358, %v1358
      %v1388 = vcombine.high %v1362, %v1362
      %vm1389 = vcmask 1042432
      %vm1390 = vcmask 1046532
      %vm1391 = vmor %vm1389, %vm1390
      %v1392 = vrot.slane %v1362, 5
      %v1393 = vrot.slane %v1392, 4
      %v1394 = vrot.slane %v1388, 5
      %v1395 = vsel %vm1391, %v1393, %v1394
      %v1397 = vadd.f32 %v1331, %v1395
      %v1398 = vadd.f32 %v1371, %v1395
      %v1399 = vadd.f32 %v1334, %v1395
      %v1400 = vadd.f32 %v1372, %v1395
      %v1401 = vadd.f32 %v1339, %v1395
      %v1402 = vadd.f32 %v1373, %v1395
      %v1403 = vadd.f32 %v1342, %v1395
      %v1404 = vadd.f32 %v1374, %v1395
      %v1405 = vadd.f32 %v1347, %v1395
      %v1406 = vadd.f32 %v1375, %v1395
      %v1407 = vadd.f32 %v1350, %v1395
      %v1408 = vadd.f32 %v1376, %v1395
      %v1409 = vadd.f32 %v1355, %v1395
      %v1410 = vadd.f32 %v1377, %v1395
      %v1411 = vadd.f32 %v1358, %v1395
      %v1412 = vadd.f32 %v1378, %v1395
      %v1413 = vld [vmem:[%s2] sm:$0x1]
      %v1414 = vunpack.c.l.bf16 %v1413
      %v1415 = vadd.f32 %v1414, %v1362
      %v1416 = vpack.c.bf16 %v1415, %v1415
      %vm1417 = vcmask 1040384
      %vm1418 = vsmask.f32 256
      %vm1419 = vmand %vm1417, %vm1418
      %v1420 = vld [vmem:[%s202] sm:$0x1]
      %v1421 = vsel %vm1419, %v1416, %v1420
      %1422 = vst [vmem:[%s202] sm:$0x1] %v1421
      %v1423 = vld [vmem:[%s202 + $0x4] sm:$0x1]
      %v1424 = vsel %vm1419, %v1416, %v1423
      %1425 = vst [vmem:[%s202 + $0x4] sm:$0x1] %v1424
      %v1426 = vld [vmem:[%s202 + $0x8] sm:$0x1]
      %v1427 = vsel %vm1419, %v1416, %v1426
      %1428 = vst [vmem:[%s202 + $0x8] sm:$0x1] %v1427
      %v1429 = vld [vmem:[%s202 + $0xc] sm:$0x1]
      %v1430 = vsel %vm1419, %v1416, %v1429
      %1431 = vst [vmem:[%s202 + $0xc] sm:$0x1] %v1430
      %v1432 = vld [vmem:[%s202 + $0x10] sm:$0x1]
      %v1433 = vsel %vm1419, %v1416, %v1432
      %1434 = vst [vmem:[%s202 + $0x10] sm:$0x1] %v1433
      %v1435 = vld [vmem:[%s202 + $0x14] sm:$0x1]
      %v1436 = vsel %vm1419, %v1416, %v1435
      %1437 = vst [vmem:[%s202 + $0x14] sm:$0x1] %v1436
      %v1438 = vld [vmem:[%s202 + $0x18] sm:$0x1]
      %v1439 = vsel %vm1419, %v1416, %v1438
      %1440 = vst [vmem:[%s202 + $0x18] sm:$0x1] %v1439
      %v1441 = vld [vmem:[%s202 + $0x1c] sm:$0x1]
      %v1442 = vsel %vm1419, %v1416, %v1441
      %1443 = vst [vmem:[%s202 + $0x1c] sm:$0x1] %v1442
      %v1444 = vld [vmem:[%s202 + $0x20] sm:$0x1]
      %v1445 = vsel %vm1419, %v1416, %v1444
      %1446 = vst [vmem:[%s202 + $0x20] sm:$0x1] %v1445
      %v1447 = vld [vmem:[%s202 + $0x24] sm:$0x1]
      %v1448 = vsel %vm1419, %v1416, %v1447
      %1449 = vst [vmem:[%s202 + $0x24] sm:$0x1] %v1448
      %v1450 = vld [vmem:[%s202 + $0x28] sm:$0x1]
      %v1451 = vsel %vm1419, %v1416, %v1450
      %1452 = vst [vmem:[%s202 + $0x28] sm:$0x1] %v1451
      %v1453 = vld [vmem:[%s202 + $0x2c] sm:$0x1]
      %v1454 = vsel %vm1419, %v1416, %v1453
      %1455 = vst [vmem:[%s202 + $0x2c] sm:$0x1] %v1454
      %v1456 = vld [vmem:[%s202 + $0x30] sm:$0x1]
      %v1457 = vsel %vm1419, %v1416, %v1456
      %1458 = vst [vmem:[%s202 + $0x30] sm:$0x1] %v1457
      %v1459 = vld [vmem:[%s202 + $0x34] sm:$0x1]
      %v1460 = vsel %vm1419, %v1416, %v1459
      %1461 = vst [vmem:[%s202 + $0x34] sm:$0x1] %v1460
      %v1462 = vld [vmem:[%s202 + $0x38] sm:$0x1]
      %v1463 = vsel %vm1419, %v1416, %v1462
      %1464 = vst [vmem:[%s202 + $0x38] sm:$0x1] %v1463
      %v1465 = vld [vmem:[%s202 + $0x3c] sm:$0x1]
      %v1466 = vsel %vm1419, %v1416, %v1465
      %1467 = vst [vmem:[%s202 + $0x3c] sm:$0x1] %v1466
      %v1468 = vpack.c.bf16 %v1397, %v1397
      %v1469 = vpack.c.bf16 %v1398, %v1398
      %v1470 = vpack.c.bf16 %v1399, %v1399
      %v1471 = vpack.c.bf16 %v1400, %v1400
      %v1472 = vpack.c.bf16 %v1401, %v1401
      %v1473 = vpack.c.bf16 %v1402, %v1402
      %v1474 = vpack.c.bf16 %v1403, %v1403
      %v1475 = vpack.c.bf16 %v1404, %v1404
      %v1476 = vpack.c.bf16 %v1405, %v1405
      %v1477 = vpack.c.bf16 %v1406, %v1406
      %v1478 = vpack.c.bf16 %v1407, %v1407
      %v1479 = vpack.c.bf16 %v1408, %v1408
      %v1480 = vpack.c.bf16 %v1409, %v1409
      %v1481 = vpack.c.bf16 %v1410, %v1410
      %v1482 = vpack.c.bf16 %v1411, %v1411
      %v1483 = vpack.c.bf16 %v1412, %v1412
      %v1500 = vunpack.c.l.b16 %v1468
      %v1501 = vunpack.c.l.b16 %v1469
      %v1502 = vunpack.c.l.b16 %v1470
      %v1503 = vunpack.c.l.b16 %v1471
      %v1504 = vunpack.c.l.b16 %v1472
      %v1505 = vunpack.c.l.b16 %v1473
      %v1506 = vunpack.c.l.b16 %v1474
      %v1507 = vunpack.c.l.b16 %v1475
      %v1508 = vunpack.c.l.b16 %v1476
      %v1509 = vunpack.c.l.b16 %v1477
      %v1510 = vunpack.c.l.b16 %v1478
      %v1511 = vunpack.c.l.b16 %v1479
      %v1512 = vunpack.c.l.b16 %v1480
      %v1513 = vunpack.c.l.b16 %v1481
      %v1514 = vunpack.c.l.b16 %v1482
      %v1515 = vunpack.c.l.b16 %v1483
      %v1516 = vpack.c.b16 %v1500, %v1500
      %v1517 = vpack.c.b16 %v1501, %v1501
      %v1518 = vpack.c.b16 %v1502, %v1502
      %v1519 = vpack.c.b16 %v1503, %v1503
      %v1520 = vpack.c.b16 %v1504, %v1504
      %v1521 = vpack.c.b16 %v1505, %v1505
      %v1522 = vpack.c.b16 %v1506, %v1506
      %v1523 = vpack.c.b16 %v1507, %v1507
      %v1524 = vpack.c.b16 %v1508, %v1508
      %v1525 = vpack.c.b16 %v1509, %v1509
      %v1526 = vpack.c.b16 %v1510, %v1510
      %v1527 = vpack.c.b16 %v1511, %v1511
      %v1528 = vpack.c.b16 %v1512, %v1512
      %v1529 = vpack.c.b16 %v1513, %v1513
      %v1530 = vpack.c.b16 %v1514, %v1514
      %v1531 = vpack.c.b16 %v1515, %v1515
      %v1533 = vshrl.u32 %v1516, 16
      %v1535 = vrot.slane %v1533, 7
      %v1536 = vshll.u32 %v1516, 16
      %v1538 = vor.u32 %v1535, %v1536
      %v1540 = vshrl.u32 %v1517, 16
      %v1542 = vrot.slane %v1540, 7
      %v1543 = vshll.u32 %v1517, 16
      %v1545 = vor.u32 %v1542, %v1543
      %v1547 = vshrl.u32 %v1518, 16
      %v1549 = vrot.slane %v1547, 7
      %v1550 = vshll.u32 %v1518, 16
      %v1552 = vor.u32 %v1549, %v1550
      %v1554 = vshrl.u32 %v1519, 16
      %v1556 = vrot.slane %v1554, 7
      %v1557 = vshll.u32 %v1519, 16
      %v1559 = vor.u32 %v1556, %v1557
      %v1561 = vshrl.u32 %v1520, 16
      %v1563 = vrot.slane %v1561, 7
      %v1564 = vshll.u32 %v1520, 16
      %v1566 = vor.u32 %v1563, %v1564
      %v1568 = vshrl.u32 %v1521, 16
      %v1570 = vrot.slane %v1568, 7
      %v1571 = vshll.u32 %v1521, 16
      %v1573 = vor.u32 %v1570, %v1571
      %v1575 = vshrl.u32 %v1522, 16
      %v1577 = vrot.slane %v1575, 7
      %v1578 = vshll.u32 %v1522, 16
      %v1580 = vor.u32 %v1577, %v1578
      %v1582 = vshrl.u32 %v1523, 16
      %v1584 = vrot.slane %v1582, 7
      %v1585 = vshll.u32 %v1523, 16
      %v1587 = vor.u32 %v1584, %v1585
      %v1589 = vshrl.u32 %v1524, 16
      %v1591 = vrot.slane %v1589, 7
      %v1592 = vshll.u32 %v1524, 16
      %v1594 = vor.u32 %v1591, %v1592
      %v1596 = vshrl.u32 %v1525, 16
      %v1598 = vrot.slane %v1596, 7
      %v1599 = vshll.u32 %v1525, 16
      %v1601 = vor.u32 %v1598, %v1599
      %v1603 = vshrl.u32 %v1526, 16
      %v1605 = vrot.slane %v1603, 7
      %v1606 = vshll.u32 %v1526, 16
      %v1608 = vor.u32 %v1605, %v1606
      %v1610 = vshrl.u32 %v1527, 16
      %v1612 = vrot.slane %v1610, 7
      %v1613 = vshll.u32 %v1527, 16
      %v1615 = vor.u32 %v1612, %v1613
      %v1617 = vshrl.u32 %v1528, 16
      %v1619 = vrot.slane %v1617, 7
      %v1620 = vshll.u32 %v1528, 16
      %v1622 = vor.u32 %v1619, %v1620
      %v1624 = vshrl.u32 %v1529, 16
      %v1626 = vrot.slane %v1624, 7
      %v1627 = vshll.u32 %v1529, 16
      %v1629 = vor.u32 %v1626, %v1627
      %v1631 = vshrl.u32 %v1530, 16
      %v1633 = vrot.slane %v1631, 7
      %v1634 = vshll.u32 %v1530, 16
      %v1636 = vor.u32 %v1633, %v1634
      %v1638 = vshrl.u32 %v1531, 16
      %v1640 = vrot.slane %v1638, 7
      %v1641 = vshll.u32 %v1531, 16
      %v1643 = vor.u32 %v1640, %v1641
      %vm1660 = vcmask 1042432
      %vm1661 = vsmask.f32 2306
      %vm1662 = vmand %vm1660, %vm1661
      %v1663 = vld [vmem:[%s202] sm:$0x7]
      %v1664 = vsel %vm1662, %v1538, %v1663
      %1665 = vst [vmem:[%s202] sm:$0x7] %v1664
      %v1666 = vld [vmem:[%s202 + $0x4] sm:$0x7]
      %v1667 = vsel %vm1662, %v1545, %v1666
      %1668 = vst [vmem:[%s202 + $0x4] sm:$0x7] %v1667
      %v1669 = vld [vmem:[%s202 + $0x8] sm:$0x7]
      %v1670 = vsel %vm1662, %v1552, %v1669
      %1671 = vst [vmem:[%s202 + $0x8] sm:$0x7] %v1670
      %v1672 = vld [vmem:[%s202 + $0xc] sm:$0x7]
      %v1673 = vsel %vm1662, %v1559, %v1672
      %1674 = vst [vmem:[%s202 + $0xc] sm:$0x7] %v1673
      %v1675 = vld [vmem:[%s202 + $0x10] sm:$0x7]
      %v1676 = vsel %vm1662, %v1566, %v1675
      %1677 = vst [vmem:[%s202 + $0x10] sm:$0x7] %v1676
      %v1678 = vld [vmem:[%s202 + $0x14] sm:$0x7]
      %v1679 = vsel %vm1662, %v1573, %v1678
      %1680 = vst [vmem:[%s202 + $0x14] sm:$0x7] %v1679
      %v1681 = vld [vmem:[%s202 + $0x18] sm:$0x7]
      %v1682 = vsel %vm1662, %v1580, %v1681
      %1683 = vst [vmem:[%s202 + $0x18] sm:$0x7] %v1682
      %v1684 = vld [vmem:[%s202 + $0x1c] sm:$0x7]
      %v1685 = vsel %vm1662, %v1587, %v1684
      %1686 = vst [vmem:[%s202 + $0x1c] sm:$0x7] %v1685
      %v1687 = vld [vmem:[%s202 + $0x20] sm:$0x7]
      %v1688 = vsel %vm1662, %v1594, %v1687
      %1689 = vst [vmem:[%s202 + $0x20] sm:$0x7] %v1688
      %v1690 = vld [vmem:[%s202 + $0x24] sm:$0x7]
      %v1691 = vsel %vm1662, %v1601, %v1690
      %1692 = vst [vmem:[%s202 + $0x24] sm:$0x7] %v1691
      %v1693 = vld [vmem:[%s202 + $0x28] sm:$0x7]
      %v1694 = vsel %vm1662, %v1608, %v1693
      %1695 = vst [vmem:[%s202 + $0x28] sm:$0x7] %v1694
      %v1696 = vld [vmem:[%s202 + $0x2c] sm:$0x7]
      %v1697 = vsel %vm1662, %v1615, %v1696
      %1698 = vst [vmem:[%s202 + $0x2c] sm:$0x7] %v1697
      %v1699 = vld [vmem:[%s202 + $0x30] sm:$0x7]
      %v1700 = vsel %vm1662, %v1622, %v1699
      %1701 = vst [vmem:[%s202 + $0x30] sm:$0x7] %v1700
      %v1702 = vld [vmem:[%s202 + $0x34] sm:$0x7]
      %v1703 = vsel %vm1662, %v1629, %v1702
      %1704 = vst [vmem:[%s202 + $0x34] sm:$0x7] %v1703
      %v1705 = vld [vmem:[%s202 + $0x38] sm:$0x7]
      %v1706 = vsel %vm1662, %v1636, %v1705
      %1707 = vst [vmem:[%s202 + $0x38] sm:$0x7] %v1706
      %v1708 = vld [vmem:[%s202 + $0x3c] sm:$0x7]
      %v1709 = vsel %vm1662, %v1643, %v1708
      %1710 = vst [vmem:[%s202 + $0x3c] sm:$0x7] %v1709
      %vm1711 = vcmask 1043458
      %vm1712 = vsmask.f32 7946
      %vm1713 = vmand %vm1711, %vm1712
      %v1714 = vld [vmem:[%s202] sm:$0xc]
      %v1715 = vsel %vm1713, 0, %v1714
      %1716 = vst [vmem:[%s202] sm:$0xc] %v1715
      %v1717 = vld [vmem:[%s202 + $0x4] sm:$0xc]
      %v1718 = vsel %vm1713, 0, %v1717
      %1719 = vst [vmem:[%s202 + $0x4] sm:$0xc] %v1718
      %v1720 = vld [vmem:[%s202 + $0x8] sm:$0xc]
      %v1721 = vsel %vm1713, 0, %v1720
      %1722 = vst [vmem:[%s202 + $0x8] sm:$0xc] %v1721
      %v1723 = vld [vmem:[%s202 + $0xc] sm:$0xc]
      %v1724 = vsel %vm1713, 0, %v1723
      %1725 = vst [vmem:[%s202 + $0xc] sm:$0xc] %v1724
      %v1726 = vld [vmem:[%s202 + $0x10] sm:$0xc]
      %v1727 = vsel %vm1713, 0, %v1726
      %1728 = vst [vmem:[%s202 + $0x10] sm:$0xc] %v1727
      %v1729 = vld [vmem:[%s202 + $0x14] sm:$0xc]
      %v1730 = vsel %vm1713, 0, %v1729
      %1731 = vst [vmem:[%s202 + $0x14] sm:$0xc] %v1730
      %v1732 = vld [vmem:[%s202 + $0x18] sm:$0xc]
      %v1733 = vsel %vm1713, 0, %v1732
      %1734 = vst [vmem:[%s202 + $0x18] sm:$0xc] %v1733
      %v1735 = vld [vmem:[%s202 + $0x1c] sm:$0xc]
      %v1736 = vsel %vm1713, 0, %v1735
      %1737 = vst [vmem:[%s202 + $0x1c] sm:$0xc] %v1736
      %v1738 = vld [vmem:[%s202 + $0x20] sm:$0xc]
      %v1739 = vsel %vm1713, 0, %v1738
      %1740 = vst [vmem:[%s202 + $0x20] sm:$0xc] %v1739
      %v1741 = vld [vmem:[%s202 + $0x24] sm:$0xc]
      %v1742 = vsel %vm1713, 0, %v1741
      %1743 = vst [vmem:[%s202 + $0x24] sm:$0xc] %v1742
      %v1744 = vld [vmem:[%s202 + $0x28] sm:$0xc]
      %v1745 = vsel %vm1713, 0, %v1744
      %1746 = vst [vmem:[%s202 + $0x28] sm:$0xc] %v1745
      %v1747 = vld [vmem:[%s202 + $0x2c] sm:$0xc]
      %v1748 = vsel %vm1713, 0, %v1747
      %1749 = vst [vmem:[%s202 + $0x2c] sm:$0xc] %v1748
      %v1750 = vld [vmem:[%s202 + $0x30] sm:$0xc]
      %v1751 = vsel %vm1713, 0, %v1750
      %1752 = vst [vmem:[%s202 + $0x30] sm:$0xc] %v1751
      %v1753 = vld [vmem:[%s202 + $0x34] sm:$0xc]
      %v1754 = vsel %vm1713, 0, %v1753
      %1755 = vst [vmem:[%s202 + $0x34] sm:$0xc] %v1754
      %v1756 = vld [vmem:[%s202 + $0x38] sm:$0xc]
      %v1757 = vsel %vm1713, 0, %v1756
      %1758 = vst [vmem:[%s202 + $0x38] sm:$0xc] %v1757
      %v1759 = vld [vmem:[%s202 + $0x3c] sm:$0xc]
      %v1760 = vsel %vm1713, 0, %v1759
      %1761 = vst [vmem:[%s202 + $0x3c] sm:$0xc] %v1760
      %s1762 = smul.u32 16, %s15
      %p1763 = scmp.lt.s32.totalorder %s1762, 31
      %s1764 = scalar_select %p1763, %s1762, 31
      %s1765 = smul.addr %s1764, 4
      %s1766 = scalar_lea.vmem %s4, %s1765
      // Predicated region
      $region37: #{rgbd_vit_forward.4} parent=35 // pred_check
        %p1767 = pneg %p122
      $region38: #{rgbd_vit_forward.4} parent=35 // pred_check_branch
        %1769 = sbr.rel (%p1767) target = $region40
      $region39: #{rgbd_vit_forward.4} parent=35 // pred_region
        %s1770 = smul.u32 16, %s15
      $region40: #{rgbd_vit_forward.4} parent=35 // pred_fallthru
        _
    $region36: #{rgbd_vit_forward.4} parent=5 // pred_fallthru
      _
    %p1771 = scmp.le.s32.totalorder 2, %s10
    // Predicated region
    $region41: #{rgbd_vit_forward.4} parent=5 // pred_check
      %p1772 = pneg %p1771
    $region42: #{rgbd_vit_forward.4} parent=5 // pred_check_branch
      %1774 = sbr.rel (%p1772) target = $region44
    $region43: #{rgbd_vit_forward.4} parent=5 // pred_region
      %s1775 = ssub.s32 %s10, 2
      // Predicated region
      $region45: #{rgbd_vit_forward.4} parent=43 // pred_check
        %p1776 = pneg %p128
      $region46: #{rgbd_vit_forward.4} parent=43 // pred_check_branch
        %1778 = sbr.rel (%p1776) target = $region48
      $region47: #{rgbd_vit_forward.4} parent=43 // pred_region
        %s1779 = smul.u32 16, %s16
        %p1780 = scmp.lt.s32.totalorder %s1779, 31
        %s1781 = scalar_select %p1780, %s1779, 31
        %s1782 = smul.addr %s1781, 4
        %s1783 = scalar_lea.vmem %s4, %s1782
      $region48: #{rgbd_vit_forward.4} parent=43 // pred_fallthru
        _
    $region44: #{rgbd_vit_forward.4} parent=5 // pred_fallthru
      _
  $region6: #{rgbd_vit_forward.4} parent=0 // loop_footer
    %s14 = sadd.s32 1, %s10
  $region7: #{rgbd_vit_forward.4} parent=0 // loop_footer_branch
    %9 = sbr.rel target = $region3
  $region8: #{rgbd_vit_forward.4} parent=0 // loop_exit
    _

// kernel: rgbd_vit_forward.7
$region0: #{rgbd_vit_forward.7}
  #allocation0 [shape = 'u32[]', space=smem, size = 0x4, offset = 0x4, fixed_abs, tag = 'smem constant byte address 0x4 - core index']
  #allocation1 [shape = 'u32[144,128]{1,0:T(1,128)}', space=vmem, size = 0x12000, scoped, tag = 'internal scratch']
  %s0 = inlined_call_operand.vmem [shape: bf16[32,128], index: 0, kind: input, shape index: {}]
  %s1 = inlined_call_operand.vmem [shape: f32[1,128], index: 1, kind: input, shape index: {}]
  %s2 = inlined_call_operand.vmem [shape: f32[1,128], index: 2, kind: input, shape index: {}]
  %s3 = inlined_call_operand.hbm [shape: f32[32,128], index: 3, kind: output, shape index: {}]
  %s4 = sld [smem:[#allocation0]]
  $region22: #{rgbd_vit_forward.7} parent=0
    _
  %s6 = ssub.s32 1, %s4
  %s7 = scalar_select 0, %s6, %s4
  $region1: #{rgbd_vit_forward.7} parent=0
    #allocation2 [shape = 'u8[16384]{0}', space=vmem, size = 0x4000, scoped, tag = 'output window, operand 0, single buffered']
    #allocation3 [shape = 's32[1]{0}', space=sflag, size = 0x4, scoped, tag = 'scoped memory for rgbd_vit_forward.7']
    %8 = vsyncpa [#allocation3], 0
    // Predicated region
    $region2: #{rgbd_vit_forward.7} parent=1 // pred_check
      _
    $region3: #{rgbd_vit_forward.7} parent=1 // pred_check_branch
      %10 = sbr.rel (0) target = $region5
    $region4: #{rgbd_vit_forward.7} parent=1 // pred_region
      _
    $region5: #{rgbd_vit_forward.7} parent=1 // pred_fallthru
      _
    // Predicated region
    $region6: #{rgbd_vit_forward.7} parent=1 // pred_check
      _
    $region7: #{rgbd_vit_forward.7} parent=1 // pred_check_branch
      %12 = sbr.rel (0) target = $region9
    $region8: #{rgbd_vit_forward.7} parent=1 // pred_region
      _
    $region9: #{rgbd_vit_forward.7} parent=1 // pred_fallthru
      _
    // Predicated region
    $region10: #{rgbd_vit_forward.7} parent=1 // pred_check
      _
    $region11: #{rgbd_vit_forward.7} parent=1 // pred_check_branch
      %14 = sbr.rel (0) target = $region13
    $region12: #{rgbd_vit_forward.7} parent=1 // pred_region
      _
    $region13: #{rgbd_vit_forward.7} parent=1 // pred_fallthru
      _
    %v15 = vld [vmem:[%s0] sm:$0xf]
    %v16 = vld [vmem:[%s0 + $0x4] sm:$0xf]
    %v17 = vld [vmem:[%s0 + $0x8] sm:$0xf]
    %v18 = vld [vmem:[%s0 + $0xc] sm:$0xf]
    %v19 = vunpack.c.l.bf16 %v15
    %v20 = vunpack.c.l.bf16 %v16
    %v21 = vunpack.c.l.bf16 %v17
    %v22 = vunpack.c.l.bf16 %v18
    %23 = vadd.xlane.f32.xlu0 %v19
    %v24 = vpop.xlane.xlu0 %23
    %25 = vadd.xlane.f32.xlu0 %v20
    %v26 = vpop.xlane.xlu0 %25
    %27 = vadd.xlane.f32.xlu0 %v21
    %v28 = vpop.xlane.xlu0 %27
    %29 = vadd.xlane.f32.xlu0 %v22
    %v30 = vpop.xlane.xlu0 %29
    %v31 = vrcp.pop 128.0
    %v32 = vmul.f32 %v24, %v31
    %v33 = vmul.f32 %v26, %v31
    %v34 = vmul.f32 %v28, %v31
    %v35 = vmul.f32 %v30, %v31
    %v36 = vsub.f32 %v19, %v32
    %v37 = vsub.f32 %v20, %v33
    %v38 = vsub.f32 %v21, %v34
    %v39 = vsub.f32 %v22, %v35
    %v40 = vmul.f32 %v36, %v36
    %v41 = vmul.f32 %v37, %v37
    %v42 = vmul.f32 %v38, %v38
    %v43 = vmul.f32 %v39, %v39
    %44 = vadd.xlane.f32.xlu0 %v40
    %v45 = vpop.xlane.xlu0 %44
    %46 = vadd.xlane.f32.xlu0 %v41
    %v47 = vpop.xlane.xlu0 %46
    %48 = vadd.xlane.f32.xlu0 %v42
    %v49 = vpop.xlane.xlu0 %48
    %50 = vadd.xlane.f32.xlu0 %v43
    %v51 = vpop.xlane.xlu0 %50
    %v52 = vmul.f32 %v45, %v31
    %v53 = vmul.f32 %v47, %v31
    %v54 = vmul.f32 %v49, %v31
    %v55 = vmul.f32 %v51, %v31
    %v56 = vadd.f32 %v52, 1e-06
    %v57 = vadd.f32 %v53, 1e-06
    %v58 = vadd.f32 %v54, 1e-06
    %v59 = vadd.f32 %v55, 1e-06
    %v60 = vrsqrt.pop %v56
    %v61 = vrsqrt.pop %v57
    %v62 = vrsqrt.pop %v58
    %v63 = vrsqrt.pop %v59
    %v64 = vmul.f32 %v36, %v60
    %v65 = vmul.f32 %v37, %v61
    %v66 = vmul.f32 %v38, %v62
    %v67 = vmul.f32 %v39, %v63
    %v68 = vld [vmem:[%s1] sm:$0x1]
    %v70 = vlaneseq
    %v71 = vshrl.u32 %v70, 7
    %v72 = vsub.s32 0, %v71
    %v73 = vrot.slane %v68, %v72
    %v75 = vmul.f32 %v64, %v73
    %v76 = vmul.f32 %v65, %v73
    %v77 = vmul.f32 %v66, %v73
    %v78 = vmul.f32 %v67, %v73
    %v79 = vld [vmem:[%s2] sm:$0x1]
    %v81 = vlaneseq
    %v82 = vshrl.u32 %v81, 7
    %v83 = vsub.s32 0, %v82
    %v84 = vrot.slane %v79, %v83
    %v86 = vadd.f32 %v75, %v84
    %v87 = vadd.f32 %v76, %v84
    %v88 = vadd.f32 %v77, %v84
    %v89 = vadd.f32 %v78, %v84
    %90 = vst [vmem:[#allocation2] sm:$0xff] %v86
    %91 = vst [vmem:[#allocation2 + $0x8] sm:$0xff] %v87
    %92 = vst [vmem:[#allocation2 + $0x10] sm:$0xff] %v88
    %93 = vst [vmem:[#allocation2 + $0x18] sm:$0xff] %v89
    // Predicated region
    $region14: #{rgbd_vit_forward.7} parent=1 // pred_check
      _
    $region15: #{rgbd_vit_forward.7} parent=1 // pred_check_branch
      %95 = sbr.rel (0) target = $region17
    $region16: #{rgbd_vit_forward.7} parent=1 // pred_region
      %s97 = ssub.s32 512, 512
      %98 = vsyncadd [#allocation3], %s97
      %s99 = sshll.u32 [#allocation2], 4
      %s100 = int_to_ptr.vmem [resolvable:$true] %s99
      %105 = dma.vmem_to_hbm [thread:$0]  %s100, 512, %s3, [#allocation3], 128, 128, 8
    $region17: #{rgbd_vit_forward.7} parent=1 // pred_fallthru
      _
    // Predicated region
    $region18: #{rgbd_vit_forward.7} parent=1 // pred_check
      _
    $region19: #{rgbd_vit_forward.7} parent=1 // pred_check_branch
      %107 = sbr.rel (0) target = $region21
    $region20: #{rgbd_vit_forward.7} parent=1 // pred_region
      %108 = dma.done [#allocation3], 512
    $region21: #{rgbd_vit_forward.7} parent=1 // pred_fallthru
      _
    %109 = vsyncpa [#allocation3], 1

// kernel: rgbd_vit_forward.5
$region0: #{rgbd_vit_forward.5}
  #allocation0 [shape = 'u32[]', space=smem, size = 0x4, offset = 0x4, fixed_abs, tag = 'smem constant byte address 0x4 - core index']
  #allocation1 [shape = 'u32[144,128]{1,0:T(1,128)}', space=vmem, size = 0x12000, scoped, tag = 'internal scratch']
  #allocation2 [shape = 'bf16[128,128]{1,0:T(16,128)(2,1)}', space=vmem, size = 0x8000, scoped, tag = 'scratch operand']
  %s0 = inlined_call_operand.vmem [shape: bf16[32,8,128], index: 0, kind: input, shape index: {}]
  %s1 = inlined_call_operand.vmem [shape: bf16[128,384], index: 1, kind: input, shape index: {}]
  %s2 = inlined_call_operand.vmem [shape: f32[1,384], index: 2, kind: input, shape index: {}]
  %s3 = inlined_call_operand.vmem [shape: bf16[128,128], index: 3, kind: input, shape index: {}]
  %s4 = inlined_call_operand.vmem [shape: f32[1,128], index: 4, kind: input, shape index: {}]
  %s5 = inlined_call_operand.vmem [shape: bf16[128,512], index: 5, kind: input, shape index: {}]
  %s6 = inlined_call_operand.vmem [shape: f32[1,512], index: 6, kind: input, shape index: {}]
  %s7 = inlined_call_operand.vmem [shape: bf16[512,128], index: 7, kind: input, shape index: {}]
  %s8 = inlined_call_operand.vmem [shape: f32[1,128], index: 8, kind: input, shape index: {}]
  %s9 = inlined_call_operand.vmem [shape: bf16[32,8,128], index: 9, kind: output, shape index: {}]
  %s10 = sld [smem:[#allocation0]]
  $region69: #{rgbd_vit_forward.5} parent=0
    _
  %s12 = ssub.s32 1, %s10
  %s13 = scalar_select 0, %s12, %s10
  loop: start=0, step=1, limit=4
  $region2: #{rgbd_vit_forward.5} parent=0 // loop_pre_header
    _
  $region3: #{rgbd_vit_forward.5} parent=0 // loop_header
    %s15 = sphi 0, %s19
    %p16 = scmp.ge.s32.totalorder %s15, 4
    %s25 = sphi 0, %s27
    %s28 = sphi 0, %s25
    %s29 = sphi 0, %s28
    %s45 = sphi 0, %s29
    %s49 = sphi 0, %s49
    %s51 = sphi 0, %s49
    %s52 = sphi 0, %s51
    %s66 = sphi 0, %s52
    %s70 = sphi 0, %s70
    %s72 = sphi 0, %s70
    %s73 = sphi 0, %s72
    %s87 = sphi 0, %s73
    %s91 = sphi 0, %s91
    %s93 = sphi 0, %s91
    %s94 = sphi 0, %s93
    %s108 = sphi 0, %s94
    %s112 = sphi 0, %s112
    %s114 = sphi 0, %s112
    %s115 = sphi 0, %s114
    %s129 = sphi 0, %s115
    %s133 = sphi 0, %s133
    %s135 = sphi 0, %s133
    %s136 = sphi 0, %s135
    %s150 = sphi 0, %s136
    %s154 = sphi 0, %s154
    %s156 = sphi 0, %s154
    %s157 = sphi 0, %s156
    %s171 = sphi 0, %s157
    %s175 = sphi 0, %s175
    %s177 = sphi 0, %s175
    %s178 = sphi 0, %s177
    %s192 = sphi 0, %s178
    %s196 = sphi 0, %s196
    %s198 = sphi 0, %s196
    %s199 = sphi 0, %s198
    %s213 = sphi 0, %s199
    %s219 = sphi 0, %s221
    %s222 = sphi 0, %s219
    %s223 = sphi 0, %s222
    %s239 = sphi 0, %s223
  $region4: #{rgbd_vit_forward.5} parent=0 // loop_header_branch
    %18 = sbr.rel (%p16) target = $region8
  $region5: #{rgbd_vit_forward.5} parent=0 // loop_body
    %s20 = ssub.s32 %s15, 1
    %s21 = ssub.s32 %s15, 2
    %s22 = sadd.s32 %s15, 1
    %s23 = ssub.s32 %s15, %s22
    %p24 = scmp.eq.s32.totalorder %s23, 0
    %s26 = sadd.s32 %s25, 1
    %s27 = scalar_select %p24, %s25, %s26
    %p30 = pneg %p24
    %p31 = scmp.eq.s32.totalorder %s15, 1
    %p32 = por %p30, %p31
    %p33 = scmp.ne.s32.totalorder %s25, %s28
    %p34 = scmp.eq.s32.totalorder %s15, 0
    %p35 = por %p33, %p34
    %p36 = scmp.ne.s32.totalorder %s25, %s28
    %p37 = scmp.eq.s32.totalorder %s20, 1
    %p38 = por %p36, %p37
    %p39 = scmp.ne.s32.totalorder %s28, %s29
    %p40 = scmp.eq.s32.totalorder %s20, 0
    %p41 = por %p39, %p40
    %p42 = scmp.ne.s32.totalorder %s28, %s29
    %p43 = scmp.eq.s32.totalorder %s21, 1
    %p44 = por %p42, %p43
    %p46 = scmp.ne.s32.totalorder %s29, %s45
    %p47 = scmp.eq.s32.totalorder %s21, 0
    %p48 = por %p46, %p47
    %s50 = sadd.s32 %s49, 1
    %p53 = scmp.eq.s32.totalorder %s15, 1
    %p54 = scmp.ne.s32.totalorder %s49, %s51
    %p55 = scmp.eq.s32.totalorder %s15, 0
    %p56 = por %p54, %p55
    %p57 = scmp.ne.s32.totalorder %s49, %s51
    %p58 = scmp.eq.s32.totalorder %s20, 1
    %p59 = por %p57, %p58
    %p60 = scmp.ne.s32.totalorder %s51, %s52
    %p61 = scmp.eq.s32.totalorder %s20, 0
    %p62 = por %p60, %p61
    %p63 = scmp.ne.s32.totalorder %s51, %s52
    %p64 = scmp.eq.s32.totalorder %s21, 1
    %p65 = por %p63, %p64
    %p67 = scmp.ne.s32.totalorder %s52, %s66
    %p68 = scmp.eq.s32.totalorder %s21, 0
    %p69 = por %p67, %p68
    %s71 = sadd.s32 %s70, 1
    %p74 = scmp.eq.s32.totalorder %s15, 1
    %p75 = scmp.ne.s32.totalorder %s70, %s72
    %p76 = scmp.eq.s32.totalorder %s15, 0
    %p77 = por %p75, %p76
    %p78 = scmp.ne.s32.totalorder %s70, %s72
    %p79 = scmp.eq.s32.totalorder %s20, 1
    %p80 = por %p78, %p79
    %p81 = scmp.ne.s32.totalorder %s72, %s73
    %p82 = scmp.eq.s32.totalorder %s20, 0
    %p83 = por %p81, %p82
    %p84 = scmp.ne.s32.totalorder %s72, %s73
    %p85 = scmp.eq.s32.totalorder %s21, 1
    %p86 = por %p84, %p85
    %p88 = scmp.ne.s32.totalorder %s73, %s87
    %p89 = scmp.eq.s32.totalorder %s21, 0
    %p90 = por %p88, %p89
    %s92 = sadd.s32 %s91, 1
    %p95 = scmp.eq.s32.totalorder %s15, 1
    %p96 = scmp.ne.s32.totalorder %s91, %s93
    %p97 = scmp.eq.s32.totalorder %s15, 0
    %p98 = por %p96, %p97
    %p99 = scmp.ne.s32.totalorder %s91, %s93
    %p100 = scmp.eq.s32.totalorder %s20, 1
    %p101 = por %p99, %p100
    %p102 = scmp.ne.s32.totalorder %s93, %s94
    %p103 = scmp.eq.s32.totalorder %s20, 0
    %p104 = por %p102, %p103
    %p105 = scmp.ne.s32.totalorder %s93, %s94
    %p106 = scmp.eq.s32.totalorder %s21, 1
    %p107 = por %p105, %p106
    %p109 = scmp.ne.s32.totalorder %s94, %s108
    %p110 = scmp.eq.s32.totalorder %s21, 0
    %p111 = por %p109, %p110
    %s113 = sadd.s32 %s112, 1
    %p116 = scmp.eq.s32.totalorder %s15, 1
    %p117 = scmp.ne.s32.totalorder %s112, %s114
    %p118 = scmp.eq.s32.totalorder %s15, 0
    %p119 = por %p117, %p118
    %p120 = scmp.ne.s32.totalorder %s112, %s114
    %p121 = scmp.eq.s32.totalorder %s20, 1
    %p122 = por %p120, %p121
    %p123 = scmp.ne.s32.totalorder %s114, %s115
    %p124 = scmp.eq.s32.totalorder %s20, 0
    %p125 = por %p123, %p124
    %p126 = scmp.ne.s32.totalorder %s114, %s115
    %p127 = scmp.eq.s32.totalorder %s21, 1
    %p128 = por %p126, %p127
    %p130 = scmp.ne.s32.totalorder %s115, %s129
    %p131 = scmp.eq.s32.totalorder %s21, 0
    %p132 = por %p130, %p131
    %s134 = sadd.s32 %s133, 1
    %p137 = scmp.eq.s32.totalorder %s15, 1
    %p138 = scmp.ne.s32.totalorder %s133, %s135
    %p139 = scmp.eq.s32.totalorder %s15, 0
    %p140 = por %p138, %p139
    %p141 = scmp.ne.s32.totalorder %s133, %s135
    %p142 = scmp.eq.s32.totalorder %s20, 1
    %p143 = por %p141, %p142
    %p144 = scmp.ne.s32.totalorder %s135, %s136
    %p145 = scmp.eq.s32.totalorder %s20, 0
    %p146 = por %p144, %p145
    %p147 = scmp.ne.s32.totalorder %s135, %s136
    %p148 = scmp.eq.s32.totalorder %s21, 1
    %p149 = por %p147, %p148
    %p151 = scmp.ne.s32.totalorder %s136, %s150
    %p152 = scmp.eq.s32.totalorder %s21, 0
    %p153 = por %p151, %p152
    %s155 = sadd.s32 %s154, 1
    %p158 = scmp.eq.s32.totalorder %s15, 1
    %p159 = scmp.ne.s32.totalorder %s154, %s156
    %p160 = scmp.eq.s32.totalorder %s15, 0
    %p161 = por %p159, %p160
    %p162 = scmp.ne.s32.totalorder %s154, %s156
    %p163 = scmp.eq.s32.totalorder %s20, 1
    %p164 = por %p162, %p163
    %p165 = scmp.ne.s32.totalorder %s156, %s157
    %p166 = scmp.eq.s32.totalorder %s20, 0
    %p167 = por %p165, %p166
    %p168 = scmp.ne.s32.totalorder %s156, %s157
    %p169 = scmp.eq.s32.totalorder %s21, 1
    %p170 = por %p168, %p169
    %p172 = scmp.ne.s32.totalorder %s157, %s171
    %p173 = scmp.eq.s32.totalorder %s21, 0
    %p174 = por %p172, %p173
    %s176 = sadd.s32 %s175, 1
    %p179 = scmp.eq.s32.totalorder %s15, 1
    %p180 = scmp.ne.s32.totalorder %s175, %s177
    %p181 = scmp.eq.s32.totalorder %s15, 0
    %p182 = por %p180, %p181
    %p183 = scmp.ne.s32.totalorder %s175, %s177
    %p184 = scmp.eq.s32.totalorder %s20, 1
    %p185 = por %p183, %p184
    %p186 = scmp.ne.s32.totalorder %s177, %s178
    %p187 = scmp.eq.s32.totalorder %s20, 0
    %p188 = por %p186, %p187
    %p189 = scmp.ne.s32.totalorder %s177, %s178
    %p190 = scmp.eq.s32.totalorder %s21, 1
    %p191 = por %p189, %p190
    %p193 = scmp.ne.s32.totalorder %s178, %s192
    %p194 = scmp.eq.s32.totalorder %s21, 0
    %p195 = por %p193, %p194
    %s197 = sadd.s32 %s196, 1
    %p200 = scmp.eq.s32.totalorder %s15, 1
    %p201 = scmp.ne.s32.totalorder %s196, %s198
    %p202 = scmp.eq.s32.totalorder %s15, 0
    %p203 = por %p201, %p202
    %p204 = scmp.ne.s32.totalorder %s196, %s198
    %p205 = scmp.eq.s32.totalorder %s20, 1
    %p206 = por %p204, %p205
    %p207 = scmp.ne.s32.totalorder %s198, %s199
    %p208 = scmp.eq.s32.totalorder %s20, 0
    %p209 = por %p207, %p208
    %p210 = scmp.ne.s32.totalorder %s198, %s199
    %p211 = scmp.eq.s32.totalorder %s21, 1
    %p212 = por %p210, %p211
    %p214 = scmp.ne.s32.totalorder %s199, %s213
    %p215 = scmp.eq.s32.totalorder %s21, 0
    %p216 = por %p214, %p215
    %s217 = ssub.s32 %s15, %s22
    %p218 = scmp.eq.s32.totalorder %s217, 0
    %s220 = sadd.s32 %s219, 1
    %s221 = scalar_select %p218, %s219, %s220
    %p224 = pneg %p218
    %p225 = scmp.eq.s32.totalorder %s15, 1
    %p226 = por %p224, %p225
    %p227 = scmp.ne.s32.totalorder %s219, %s222
    %p228 = scmp.eq.s32.totalorder %s15, 0
    %p229 = por %p227, %p228
    %p230 = scmp.ne.s32.totalorder %s219, %s222
    %p231 = scmp.eq.s32.totalorder %s20, 1
    %p232 = por %p230, %p231
    %p233 = scmp.ne.s32.totalorder %s222, %s223
    %p234 = scmp.eq.s32.totalorder %s20, 0
    %p235 = por %p233, %p234
    %p236 = scmp.ne.s32.totalorder %s222, %s223
    %p237 = scmp.eq.s32.totalorder %s21, 1
    %p238 = por %p236, %p237
    %p240 = scmp.ne.s32.totalorder %s223, %s239
    %p241 = scmp.eq.s32.totalorder %s21, 0
    %p242 = por %p240, %p241
    %p243 = scmp.le.s32.totalorder 1, %s15
    %p244 = scmp.lt.s32.totalorder %s15, 3
    %p245 = pnand %p243, %p244
    %p246 = pneg %p245
    // Predicated region
    $region9: #{rgbd_vit_forward.5} parent=5 // pred_check
      _
    $region10: #{rgbd_vit_forward.5} parent=5 // pred_check_branch
      %248 = sbr.rel (%p245) target = $region12
    $region11: #{rgbd_vit_forward.5} parent=5 // pred_region
      %s249 = ssub.s32 %s15, 1
      // Predicated region
      $region13: #{rgbd_vit_forward.5} parent=11 // pred_check
        %p250 = pneg %p62
      $region14: #{rgbd_vit_forward.5} parent=11 // pred_check_branch
        %252 = sbr.rel (%p250) target = $region16
      $region15: #{rgbd_vit_forward.5} parent=11 // pred_region
        _
      $region16: #{rgbd_vit_forward.5} parent=11 // pred_fallthru
        _
      // Predicated region
      $region17: #{rgbd_vit_forward.5} parent=11 // pred_check
        %p253 = pneg %p83
      $region18: #{rgbd_vit_forward.5} parent=11 // pred_check_branch
        %255 = sbr.rel (%p253) target = $region20
      $region19: #{rgbd_vit_forward.5} parent=11 // pred_region
        _
      $region20: #{rgbd_vit_forward.5} parent=11 // pred_fallthru
        _
      // Predicated region
      $region21: #{rgbd_vit_forward.5} parent=11 // pred_check
        %p256 = pneg %p104
      $region22: #{rgbd_vit_forward.5} parent=11 // pred_check_branch
        %258 = sbr.rel (%p256) target = $region24
      $region23: #{rgbd_vit_forward.5} parent=11 // pred_region
        _
      $region24: #{rgbd_vit_forward.5} parent=11 // pred_fallthru
        _
      // Predicated region
      $region25: #{rgbd_vit_forward.5} parent=11 // pred_check
        %p259 = pneg %p125
      $region26: #{rgbd_vit_forward.5} parent=11 // pred_check_branch
        %261 = sbr.rel (%p259) target = $region28
      $region27: #{rgbd_vit_forward.5} parent=11 // pred_region
        _
      $region28: #{rgbd_vit_forward.5} parent=11 // pred_fallthru
        _
      // Predicated region
      $region29: #{rgbd_vit_forward.5} parent=11 // pred_check
        %p262 = pneg %p146
      $region30: #{rgbd_vit_forward.5} parent=11 // pred_check_branch
        %264 = sbr.rel (%p262) target = $region32
      $region31: #{rgbd_vit_forward.5} parent=11 // pred_region
        _
      $region32: #{rgbd_vit_forward.5} parent=11 // pred_fallthru
        _
      // Predicated region
      $region33: #{rgbd_vit_forward.5} parent=11 // pred_check
        %p265 = pneg %p167
      $region34: #{rgbd_vit_forward.5} parent=11 // pred_check_branch
        %267 = sbr.rel (%p265) target = $region36
      $region35: #{rgbd_vit_forward.5} parent=11 // pred_region
        _
      $region36: #{rgbd_vit_forward.5} parent=11 // pred_fallthru
        _
      // Predicated region
      $region37: #{rgbd_vit_forward.5} parent=11 // pred_check
        %p268 = pneg %p188
      $region38: #{rgbd_vit_forward.5} parent=11 // pred_check_branch
        %270 = sbr.rel (%p268) target = $region40
      $region39: #{rgbd_vit_forward.5} parent=11 // pred_region
        _
      $region40: #{rgbd_vit_forward.5} parent=11 // pred_fallthru
        _
      // Predicated region
      $region41: #{rgbd_vit_forward.5} parent=11 // pred_check
        %p271 = pneg %p209
      $region42: #{rgbd_vit_forward.5} parent=11 // pred_check_branch
        %273 = sbr.rel (%p271) target = $region44
      $region43: #{rgbd_vit_forward.5} parent=11 // pred_region
        _
      $region44: #{rgbd_vit_forward.5} parent=11 // pred_fallthru
        _
    $region12: #{rgbd_vit_forward.5} parent=5 // pred_fallthru
      _
    %p274 = scmp.lt.s32.totalorder %s15, 2
    // Predicated region
    $region45: #{rgbd_vit_forward.5} parent=5 // pred_check
      %p275 = pneg %p274
    $region46: #{rgbd_vit_forward.5} parent=5 // pred_check_branch
      %277 = sbr.rel (%p275) target = $region48
    $region47: #{rgbd_vit_forward.5} parent=5 // pred_region
      // Predicated region
      $region49: #{rgbd_vit_forward.5} parent=47 // pred_check
        %p278 = pneg %p35
      $region50: #{rgbd_vit_forward.5} parent=47 // pred_check_branch
        %280 = sbr.rel (%p278) target = $region52
      $region51: #{rgbd_vit_forward.5} parent=47 // pred_region
        %s281 = smul.u32 16, %s15
        %p282 = scmp.lt.s32.totalorder %s281, 31
        %s283 = scalar_select %p282, %s281, 31
        %s284 = smul.addr %s283, 4
        %s285 = scalar_lea.vmem %s0, %s284
        %s286 = smul.u32 16, %s15
      $region52: #{rgbd_vit_forward.5} parent=47 // pred_fallthru
        _
    $region48: #{rgbd_vit_forward.5} parent=5 // pred_fallthru
      _
    %p287 = scmp.le.s32.totalorder 1, %s15
    %p288 = scmp.lt.s32.totalorder %s15, 3
    %p289 = pnand %p287, %p288
    %p290 = pneg %p289
    // Predicated region
    $region53: #{rgbd_vit_forward.5} parent=5 // pred_check
      _
    $region54: #{rgbd_vit_forward.5} parent=5 // pred_check_branch
      %292 = sbr.rel (%p289) target = $region56
    $region55: #{rgbd_vit_forward.5} parent=5 // pred_region
      %s293 = ssub.s32 %s15, 1
      %s294 = smul.u32 16, %s20
      %p295 = scmp.lt.s32.totalorder %s294, 31
      %s296 = scalar_select %p295, %s294, 31
      %s297 = smul.addr %s296, 4
      %s298 = scalar_lea.vmem %s0, %s297
      %p299 = pneg %p41
      %p300 = pneg %p38
      %p301 = pneg %p62
      %p302 = pneg %p59
      %p303 = pneg %p83
      %p304 = pneg %p80
      %p305 = pneg %p104
      %p306 = pneg %p101
      %p307 = pneg %p125
      %p308 = pneg %p122
      %p309 = pneg %p146
      %p310 = pneg %p143
      %p311 = pneg %p167
      %p312 = pneg %p164
      %p313 = pneg %p188
      %p314 = pneg %p185
      %p315 = pneg %p209
      %p316 = pneg %p206
      %p317 = pneg %p235
      %p318 = pneg %p232
      %s319 = smul.u32 16, %s20
      %p320 = scmp.lt.s32.totalorder %s319, 31
      %s321 = scalar_select %p320, %s319, 31
      %s322 = smul.addr %s321, 4
      %s323 = scalar_lea.vmem %s9, %s322
      %s324 = smul.u32 16, %s20
      %p325 = scmp.lt.s32.totalorder %s324, 31
      %s326 = scalar_select %p325, %s324, 31
      %s327 = smul.addr %s326, 4
      %s328 = scalar_lea.vmem %s0, %s327
      %s329 = smul.u32 16, %s20
      %s330 = smul.u32 16, %s20
      %p331 = scmp.lt.s32.totalorder %s330, 31
      %s332 = scalar_select %p331, %s330, 31
      %s333 = smul.addr %s332, 4
      %s334 = scalar_lea.vmem %s9, %s333
      %s335 = smul.u32 16, %s20
      %v337 = vld [vmem:[%s328] sm:$0xf]
      %v338 = vld [vmem:[%s328 + $0x4] sm:$0xf]
      %v339 = vld [vmem:[%s328 + $0x8] sm:$0xf]
      %v340 = vld [vmem:[%s328 + $0xc] sm:$0xf]
      %v341 = vld [vmem:[%s328 + $0x10] sm:$0xf]
      %v342 = vld [vmem:[%s328 + $0x14] sm:$0xf]
      %v343 = vld [vmem:[%s328 + $0x18] sm:$0xf]
      %v344 = vld [vmem:[%s328 + $0x1c] sm:$0xf]
      %v345 = vld [vmem:[%s328 + $0x20] sm:$0xf]
      %v346 = vld [vmem:[%s328 + $0x24] sm:$0xf]
      %v347 = vld [vmem:[%s328 + $0x28] sm:$0xf]
      %v348 = vld [vmem:[%s328 + $0x2c] sm:$0xf]
      %v349 = vld [vmem:[%s328 + $0x30] sm:$0xf]
      %v350 = vld [vmem:[%s328 + $0x34] sm:$0xf]
      %v351 = vld [vmem:[%s328 + $0x38] sm:$0xf]
      %v352 = vld [vmem:[%s328 + $0x3c] sm:$0xf]
      %v353 = vunpack.c.l.bf16 %v337
      %v354 = vunpack.c.l.bf16 %v338
      %v355 = vunpack.c.l.bf16 %v339
      %v356 = vunpack.c.l.bf16 %v340
      %v357 = vunpack.c.l.bf16 %v341
      %v358 = vunpack.c.l.bf16 %v342
      %v359 = vunpack.c.l.bf16 %v343
      %v360 = vunpack.c.l.bf16 %v344
      %v361 = vunpack.c.l.bf16 %v345
      %v362 = vunpack.c.l.bf16 %v346
      %v363 = vunpack.c.l.bf16 %v347
      %v364 = vunpack.c.l.bf16 %v348
      %v365 = vunpack.c.l.bf16 %v349
      %v366 = vunpack.c.l.bf16 %v350
      %v367 = vunpack.c.l.bf16 %v351
      %v368 = vunpack.c.l.bf16 %v352
      %369 = vadd.xlane.f32.xlu0 %v353
      %v370 = vpop.xlane.xlu0 %369
      %371 = vadd.xlane.f32.xlu0 %v354
      %v372 = vpop.xlane.xlu0 %371
      %373 = vadd.xlane.f32.xlu0 %v355
      %v374 = vpop.xlane.xlu0 %373
      %375 = vadd.xlane.f32.xlu0 %v356
      %v376 = vpop.xlane.xlu0 %375
      %377 = vadd.xlane.f32.xlu0 %v357
      %v378 = vpop.xlane.xlu0 %377
      %379 = vadd.xlane.f32.xlu0 %v358
      %v380 = vpop.xlane.xlu0 %379
      %381 = vadd.xlane.f32.xlu0 %v359
      %v382 = vpop.xlane.xlu0 %381
      %383 = vadd.xlane.f32.xlu0 %v360
      %v384 = vpop.xlane.xlu0 %383
      %385 = vadd.xlane.f32.xlu0 %v361
      %v386 = vpop.xlane.xlu0 %385
      %387 = vadd.xlane.f32.xlu0 %v362
      %v388 = vpop.xlane.xlu0 %387
      %389 = vadd.xlane.f32.xlu0 %v363
      %v390 = vpop.xlane.xlu0 %389
      %391 = vadd.xlane.f32.xlu0 %v364
      %v392 = vpop.xlane.xlu0 %391
      %393 = vadd.xlane.f32.xlu0 %v365
      %v394 = vpop.xlane.xlu0 %393
      %395 = vadd.xlane.f32.xlu0 %v366
      %v396 = vpop.xlane.xlu0 %395
      %397 = vadd.xlane.f32.xlu0 %v367
      %v398 = vpop.xlane.xlu0 %397
      %399 = vadd.xlane.f32.xlu0 %v368
      %v400 = vpop.xlane.xlu0 %399
      %v401 = vrcp.pop 128.0
      %v402 = vmul.f32 %v370, %v401
      %v403 = vmul.f32 %v372, %v401
      %v404 = vmul.f32 %v374, %v401
      %v405 = vmul.f32 %v376, %v401
      %v406 = vmul.f32 %v378, %v401
      %v407 = vmul.f32 %v380, %v401
      %v408 = vmul.f32 %v382, %v401
      %v409 = vmul.f32 %v384, %v401
      %v410 = vmul.f32 %v386, %v401
      %v411 = vmul.f32 %v388, %v401
      %v412 = vmul.f32 %v390, %v401
      %v413 = vmul.f32 %v392, %v401
      %v414 = vmul.f32 %v394, %v401
      %v415 = vmul.f32 %v396, %v401
      %v416 = vmul.f32 %v398, %v401
      %v417 = vmul.f32 %v400, %v401
      %v418 = vsub.f32 %v353, %v402
      %v419 = vsub.f32 %v354, %v403
      %v420 = vsub.f32 %v355, %v404
      %v421 = vsub.f32 %v356, %v405
      %v422 = vsub.f32 %v357, %v406
      %v423 = vsub.f32 %v358, %v407
      %v424 = vsub.f32 %v359, %v408
      %v425 = vsub.f32 %v360, %v409
      %v426 = vsub.f32 %v361, %v410
      %v427 = vsub.f32 %v362, %v411
      %v428 = vsub.f32 %v363, %v412
      %v429 = vsub.f32 %v364, %v413
      %v430 = vsub.f32 %v365, %v414
      %v431 = vsub.f32 %v366, %v415
      %v432 = vsub.f32 %v367, %v416
      %v433 = vsub.f32 %v368, %v417
      %v434 = vmul.f32 %v418, %v418
      %v435 = vmul.f32 %v419, %v419
      %v436 = vmul.f32 %v420, %v420
      %v437 = vmul.f32 %v421, %v421
      %v438 = vmul.f32 %v422, %v422
      %v439 = vmul.f32 %v423, %v423
      %v440 = vmul.f32 %v424, %v424
      %v441 = vmul.f32 %v425, %v425
      %v442 = vmul.f32 %v426, %v426
      %v443 = vmul.f32 %v427, %v427
      %v444 = vmul.f32 %v428, %v428
      %v445 = vmul.f32 %v429, %v429
      %v446 = vmul.f32 %v430, %v430
      %v447 = vmul.f32 %v431, %v431
      %v448 = vmul.f32 %v432, %v432
      %v449 = vmul.f32 %v433, %v433
      %450 = vadd.xlane.f32.xlu0 %v434
      %v451 = vpop.xlane.xlu0 %450
      %452 = vadd.xlane.f32.xlu0 %v435
      %v453 = vpop.xlane.xlu0 %452
      %454 = vadd.xlane.f32.xlu0 %v436
      %v455 = vpop.xlane.xlu0 %454
      %456 = vadd.xlane.f32.xlu0 %v437
      %v457 = vpop.xlane.xlu0 %456
      %458 = vadd.xlane.f32.xlu0 %v438
      %v459 = vpop.xlane.xlu0 %458
      %460 = vadd.xlane.f32.xlu0 %v439
      %v461 = vpop.xlane.xlu0 %460
      %462 = vadd.xlane.f32.xlu0 %v440
      %v463 = vpop.xlane.xlu0 %462
      %464 = vadd.xlane.f32.xlu0 %v441
      %v465 = vpop.xlane.xlu0 %464
      %466 = vadd.xlane.f32.xlu0 %v442
      %v467 = vpop.xlane.xlu0 %466
      %468 = vadd.xlane.f32.xlu0 %v443
      %v469 = vpop.xlane.xlu0 %468
      %470 = vadd.xlane.f32.xlu0 %v444
      %v471 = vpop.xlane.xlu0 %470
      %472 = vadd.xlane.f32.xlu0 %v445
      %v473 = vpop.xlane.xlu0 %472
      %474 = vadd.xlane.f32.xlu0 %v446
      %v475 = vpop.xlane.xlu0 %474
      %476 = vadd.xlane.f32.xlu0 %v447
      %v477 = vpop.xlane.xlu0 %476
      %478 = vadd.xlane.f32.xlu0 %v448
      %v479 = vpop.xlane.xlu0 %478
      %480 = vadd.xlane.f32.xlu0 %v449
      %v481 = vpop.xlane.xlu0 %480
      %v482 = vmul.f32 %v451, %v401
      %v483 = vmul.f32 %v453, %v401
      %v484 = vmul.f32 %v455, %v401
      %v485 = vmul.f32 %v457, %v401
      %v486 = vmul.f32 %v459, %v401
      %v487 = vmul.f32 %v461, %v401
      %v488 = vmul.f32 %v463, %v401
      %v489 = vmul.f32 %v465, %v401
      %v490 = vmul.f32 %v467, %v401
      %v491 = vmul.f32 %v469, %v401
      %v492 = vmul.f32 %v471, %v401
      %v493 = vmul.f32 %v473, %v401
      %v494 = vmul.f32 %v475, %v401
      %v495 = vmul.f32 %v477, %v401
      %v496 = vmul.f32 %v479, %v401
      %v497 = vmul.f32 %v481, %v401
      %v498 = vadd.f32 %v482, 1e-06
      %v499 = vadd.f32 %v483, 1e-06
      %v500 = vadd.f32 %v484, 1e-06
      %v501 = vadd.f32 %v485, 1e-06
      %v502 = vadd.f32 %v486, 1e-06
      %v503 = vadd.f32 %v487, 1e-06
      %v504 = vadd.f32 %v488, 1e-06
      %v505 = vadd.f32 %v489, 1e-06
      %v506 = vadd.f32 %v490, 1e-06
      %v507 = vadd.f32 %v491, 1e-06
      %v508 = vadd.f32 %v492, 1e-06
      %v509 = vadd.f32 %v493, 1e-06
      %v510 = vadd.f32 %v494, 1e-06
      %v511 = vadd.f32 %v495, 1e-06
      %v512 = vadd.f32 %v496, 1e-06
      %v513 = vadd.f32 %v497, 1e-06
      %v514 = vrsqrt.pop %v498
      %v515 = vrsqrt.pop %v499
      %v516 = vrsqrt.pop %v500
      %v517 = vrsqrt.pop %v501
      %v518 = vrsqrt.pop %v502
      %v519 = vrsqrt.pop %v503
      %v520 = vrsqrt.pop %v504
      %v521 = vrsqrt.pop %v505
      %v522 = vrsqrt.pop %v506
      %v523 = vrsqrt.pop %v507
      %v524 = vrsqrt.pop %v508
      %v525 = vrsqrt.pop %v509
      %v526 = vrsqrt.pop %v510
      %v527 = vrsqrt.pop %v511
      %v528 = vrsqrt.pop %v512
      %v529 = vrsqrt.pop %v513
      %v530 = vmul.f32 %v418, %v514
      %v531 = vmul.f32 %v419, %v515
      %v532 = vmul.f32 %v420, %v516
      %v533 = vmul.f32 %v421, %v517
      %v534 = vmul.f32 %v422, %v518
      %v535 = vmul.f32 %v423, %v519
      %v536 = vmul.f32 %v424, %v520
      %v537 = vmul.f32 %v425, %v521
      %v538 = vmul.f32 %v426, %v522
      %v539 = vmul.f32 %v427, %v523
      %v540 = vmul.f32 %v428, %v524
      %v541 = vmul.f32 %v429, %v525
      %v542 = vmul.f32 %v430, %v526
      %v543 = vmul.f32 %v431, %v527
      %v544 = vmul.f32 %v432, %v528
      %v545 = vmul.f32 %v433, %v529
      %v546 = vpack.c.bf16 %v531, %v530
      %v547 = vpack.c.bf16 %v533, %v532
      %v548 = vpack.c.bf16 %v535, %v534
      %v549 = vpack.c.bf16 %v537, %v536
      %v550 = vpack.c.bf16 %v539, %v538
      %v551 = vpack.c.bf16 %v541, %v540
      %v552 = vpack.c.bf16 %v543, %v542
      %v553 = vpack.c.bf16 %v545, %v544
      %v554 = vld [vmem:[%s1] sm:$0xff]
      %v555 = vld [vmem:[%s1 + $0x8] sm:$0xf]
      %v556 = vld [vmem:[%s1 + $0xc] sm:$0xff]
      %v557 = vld [vmem:[%s1 + $0x14] sm:$0xf]
      %v558 = vld [vmem:[%s1 + $0x18] sm:$0xff]
      %v559 = vld [vmem:[%s1 + $0x20] sm:$0xf]
      %v560 = vld [vmem:[%s1 + $0x24] sm:$0xff]
      %v561 = vld [vmem:[%s1 + $0x2c] sm:$0xf]
      %v562 = vld [vmem:[%s1 + $0x30] sm:$0xff]
      %v563 = vld [vmem:[%s1 + $0x38] sm:$0xf]
      %v564 = vld [vmem:[%s1 + $0x3c] sm:$0xff]
      %v565 = vld [vmem:[%s1 + $0x44] sm:$0xf]
      %v566 = vld [vmem:[%s1 + $0x48] sm:$0xff]
      %v567 = vld [vmem:[%s1 + $0x50] sm:$0xf]
      %v568 = vld [vmem:[%s1 + $0x54] sm:$0xff]
      %v569 = vld [vmem:[%s1 + $0x5c] sm:$0xf]
      %v570 = vld [vmem:[%s1 + $0x60] sm:$0xff]
      %v571 = vld [vmem:[%s1 + $0x68] sm:$0xf]
      %v572 = vld [vmem:[%s1 + $0x6c] sm:$0xff]
      %v573 = vld [vmem:[%s1 + $0x74] sm:$0xf]
      %v574 = vld [vmem:[%s1 + $0x78] sm:$0xff]
      %v575 = vld [vmem:[%s1 + $0x80] sm:$0xf]
      %v576 = vld [vmem:[%s1 + $0x84] sm:$0xff]
      %v577 = vld [vmem:[%s1 + $0x8c] sm:$0xf]
      %v578 = vld [vmem:[%s1 + $0x90] sm:$0xff]
      %v579 = vld [vmem:[%s1 + $0x98] sm:$0xf]
      %v580 = vld [vmem:[%s1 + $0x9c] sm:$0xff]
      %v581 = vld [vmem:[%s1 + $0xa4] sm:$0xf]
      %v582 = vld [vmem:[%s1 + $0xa8] sm:$0xff]
      %v583 = vld [vmem:[%s1 + $0xb0] sm:$0xf]
      %v584 = vld [vmem:[%s1 + $0xb4] sm:$0xff]
      %v585 = vld [vmem:[%s1 + $0xbc] sm:$0xf]
      %v586 = vld [vmem:[%s2] sm:$0x7]
      %v588 = vlaneseq
      %v589 = vshrl.u32 %v588, 7
      %v590 = vsub.s32 0, %v589
      %v591 = vrot.slane %v586, %v590
      %v592 = vlaneseq
      %v593 = vshrl.u32 %v592, 7
      %v594 = vsub.s32 1, %v593
      %v595 = vrot.slane %v586, %v594
      %v596 = vlaneseq
      %v597 = vshrl.u32 %v596, 7
      %v598 = vsub.s32 2, %v597
      %v599 = vrot.slane %v586, %v598
      %v635 = vunpack.c.l.b16 %v554
      %v636 = vunpack.c.h.b16 %v554
      %v637 = vunpack.c.l.b16 %v555
      %v638 = vunpack.c.l.b16 %v556
      %v639 = vunpack.c.h.b16 %v556
      %v640 = vunpack.c.l.b16 %v557
      %v641 = vunpack.c.l.b16 %v558
      %v642 = vunpack.c.h.b16 %v558
      %v643 = vunpack.c.l.b16 %v559
      %v644 = vunpack.c.l.b16 %v560
      %v645 = vunpack.c.h.b16 %v560
      %v646 = vunpack.c.l.b16 %v561
      %v647 = vunpack.c.l.b16 %v562
      %v648 = vunpack.c.h.b16 %v562
      %v649 = vunpack.c.l.b16 %v563
      %v650 = vunpack.c.l.b16 %v564
      %v651 = vunpack.c.h.b16 %v564
      %v652 = vunpack.c.l.b16 %v565
      %v653 = vunpack.c.l.b16 %v566
      %v654 = vunpack.c.h.b16 %v566
      %v655 = vunpack.c.l.b16 %v567
      %v656 = vunpack.c.l.b16 %v568
      %v657 = vunpack.c.h.b16 %v568
      %v658 = vunpack.c.l.b16 %v569
      %v659 = vunpack.c.l.b16 %v570
      %v660 = vunpack.c.h.b16 %v570
      %v661 = vunpack.c.l.b16 %v571
      %v662 = vunpack.c.l.b16 %v572
      %v663 = vunpack.c.h.b16 %v572
      %v664 = vunpack.c.l.b16 %v573
      %v665 = vunpack.c.l.b16 %v574
      %v666 = vunpack.c.h.b16 %v574
      %v667 = vunpack.c.l.b16 %v575
      %v668 = vunpack.c.l.b16 %v576
      %v669 = vunpack.c.h.b16 %v576
      %v670 = vunpack.c.l.b16 %v577
      %v671 = vunpack.c.l.b16 %v578
      %v672 = vunpack.c.h.b16 %v578
      %v673 = vunpack.c.l.b16 %v579
      %v674 = vunpack.c.l.b16 %v580
      %v675 = vunpack.c.h.b16 %v580
      %v676 = vunpack.c.l.b16 %v581
      %v677 = vunpack.c.l.b16 %v582
      %v678 = vunpack.c.h.b16 %v582
      %v679 = vunpack.c.l.b16 %v583
      %v680 = vunpack.c.l.b16 %v584
      %v681 = vunpack.c.h.b16 %v584
      %v682 = vunpack.c.l.b16 %v585
      %v683 = vpack.c.b16 %v638, %v635
      %v684 = vpack.c.b16 %v639, %v636
      %v685 = vpack.c.b16 %v640, %v637
      %v686 = vpack.c.b16 %v644, %v641
      %v687 = vpack.c.b16 %v645, %v642
      %v688 = vpack.c.b16 %v646, %v643
      %v689 = vpack.c.b16 %v650, %v647
      %v690 = vpack.c.b16 %v651, %v648
      %v691 = vpack.c.b16 %v652, %v649
      %v692 = vpack.c.b16 %v656, %v653
      %v693 = vpack.c.b16 %v657, %v654
      %v694 = vpack.c.b16 %v658, %v655
      %v695 = vpack.c.b16 %v662, %v659
      %v696 = vpack.c.b16 %v663, %v660
      %v697 = vpack.c.b16 %v664, %v661
      %v698 = vpack.c.b16 %v668, %v665
      %v699 = vpack.c.b16 %v669, %v666
      %v700 = vpack.c.b16 %v670, %v667
      %v701 = vpack.c.b16 %v674, %v671
      %v702 = vpack.c.b16 %v675, %v672
      %v703 = vpack.c.b16 %v676, %v673
      %v704 = vpack.c.b16 %v680, %v677
      %v705 = vpack.c.b16 %v681, %v678
      %v706 = vpack.c.b16 %v682, %v679
      %731 = vmatprep.subr.bf16.mxu0 %v684
      %732 = vmatpush1.bf16.msra.mxu0 %v683
      %733 = vmatprep.subr.bf16.mxu0 %v687
      %734 = vmatpush1.bf16.msra.mxu0 %v686
      %735 = vmatprep.subr.bf16.mxu0 %v690
      %736 = vmatpush1.bf16.msra.mxu0 %v689
      %737 = vmatprep.subr.bf16.mxu0 %v693
      %738 = vmatpush1.bf16.msra.mxu0 %v692
      %739 = vmatprep.subr.bf16.mxu0 %v696
      %740 = vmatpush1.bf16.msra.mxu0 %v695
      %741 = vmatprep.subr.bf16.mxu0 %v699
      %742 = vmatpush1.bf16.msra.mxu0 %v698
      %743 = vmatprep.subr.bf16.mxu0 %v702
      %744 = vmatpush1.bf16.msra.mxu0 %v701
      %745 = vmatprep.subr.bf16.mxu0 %v705
      %746 = vmatpush1.bf16.msra.mxu0 %v704
      %747 = vmatprep.subr.bf16.mxu0 0
      %748 = vmatpush1.bf16.msra.mxu0 0
      %749 = vmatprep.subr.bf16.mxu0 0
      %750 = vmatpush1.bf16.msra.mxu0 0
      %751 = vmatprep.subr.bf16.mxu0 0
      %752 = vmatpush1.bf16.msra.mxu0 0
      %753 = vmatprep.subr.bf16.mxu0 0
      %754 = vmatpush1.bf16.msra.mxu0 0
      %755 = vmatprep.subr.bf16.mxu0 0
      %756 = vmatpush1.bf16.msra.mxu0 0
      %757 = vmatprep.subr.bf16.mxu0 0
      %758 = vmatpush1.bf16.msra.mxu0 0
      %759 = vmatprep.subr.bf16.mxu0 0
      %760 = vmatpush1.bf16.msra.mxu0 0
      %761 = vmatprep.subr.bf16.mxu0 0
      %762 = vmatpush1.bf16.msra.mxu0 0
      %763 = vmatprep.mubr.bf16.mxu0 0
      %764 = vmatmul.mubr.bf16.gmra.mrb[0].mxu0 %v546
      %v765 = vpop.f32.mrb[0].mxu0
      %v766 = vadd.f32 %v591, %v765
      %v767 = vpop.f32.mrb[0].mxu0
      %v768 = vadd.f32 %v595, %v767
      %v769 = vpop.f32.mrb[0].mxu0
      %v770 = vadd.f32 %v591, %v769
      %v771 = vpop.f32.mrb[0].mxu0
      %v772 = vadd.f32 %v595, %v771
      %773 = vmatprep.mubr.bf16.mxu0 0
      %774 = vmatmul.mubr.bf16.gmra.mrb[0].mxu0 %v547
      %v775 = vpop.f32.mrb[0].mxu0
      %v776 = vadd.f32 %v591, %v775
      %v777 = vpop.f32.mrb[0].mxu0
      %v778 = vadd.f32 %v595, %v777
      %v779 = vpop.f32.mrb[0].mxu0
      %v780 = vadd.f32 %v591, %v779
      %v781 = vpop.f32.mrb[0].mxu0
      %v782 = vadd.f32 %v595, %v781
      %783 = vmatprep.mubr.bf16.mxu0 0
      %784 = vmatmul.mubr.bf16.gmra.mrb[0].mxu0 %v548
      %v785 = vpop.f32.mrb[0].mxu0
      %v786 = vadd.f32 %v591, %v785
      %v787 = vpop.f32.mrb[0].mxu0
      %v788 = vadd.f32 %v595, %v787
      %v789 = vpop.f32.mrb[0].mxu0
      %v790 = vadd.f32 %v591, %v789
      %v791 = vpop.f32.mrb[0].mxu0
      %v792 = vadd.f32 %v595, %v791
      %793 = vmatprep.mubr.bf16.mxu0 0
      %794 = vmatmul.mubr.bf16.gmra.mrb[0].mxu0 %v549
      %v795 = vpop.f32.mrb[0].mxu0
      %v796 = vadd.f32 %v591, %v795
      %v797 = vpop.f32.mrb[0].mxu0
      %v798 = vadd.f32 %v595, %v797
      %v799 = vpop.f32.mrb[0].mxu0
      %v800 = vadd.f32 %v591, %v799
      %v801 = vpop.f32.mrb[0].mxu0
      %v802 = vadd.f32 %v595, %v801
      %803 = vmatprep.mubr.bf16.mxu0 0
      %804 = vmatmul.mubr.bf16.gmra.mrb[0].mxu0 %v550
      %v805 = vpop.f32.mrb[0].mxu0
      %v806 = vadd.f32 %v591, %v805
      %v807 = vpop.f32.mrb[0].mxu0
      %v808 = vadd.f32 %v595, %v807
      %v809 = vpop.f32.mrb[0].mxu0
      %v810 = vadd.f32 %v591, %v809
      %v811 = vpop.f32.mrb[0].mxu0
      %v812 = vadd.f32 %v595, %v811
      %813 = vmatprep.mubr.bf16.mxu0 0
      %814 = vmatmul.mubr.bf16.gmra.mrb[0].mxu0 %v551
      %v815 = vpop.f32.mrb[0].mxu0
      %v816 = vadd.f32 %v591, %v815
      %v817 = vpop.f32.mrb[0].mxu0
      %v818 = vadd.f32 %v595, %v817
      %v819 = vpop.f32.mrb[0].mxu0
      %v820 = vadd.f32 %v591, %v819
      %v821 = vpop.f32.mrb[0].mxu0
      %v822 = vadd.f32 %v595, %v821
      %823 = vmatprep.mubr.bf16.mxu0 0
      %824 = vmatmul.mubr.bf16.gmra.mrb[0].mxu0 %v552
      %v825 = vpop.f32.mrb[0].mxu0
      %v826 = vadd.f32 %v591, %v825
      %v827 = vpop.f32.mrb[0].mxu0
      %v828 = vadd.f32 %v595, %v827
      %v829 = vpop.f32.mrb[0].mxu0
      %v830 = vadd.f32 %v591, %v829
      %v831 = vpop.f32.mrb[0].mxu0
      %v832 = vadd.f32 %v595, %v831
      %833 = vmatprep.mubr.bf16.mxu0 0
      %834 = vmatmul.mubr.bf16.gmra.mrb[0].mxu0 %v553
      %v835 = vpop.f32.mrb[0].mxu0
      %v836 = vadd.f32 %v591, %v835
      %v837 = vpop.f32.mrb[0].mxu0
      %v838 = vadd.f32 %v595, %v837
      %v839 = vpop.f32.mrb[0].mxu0
      %v840 = vadd.f32 %v591, %v839
      %v841 = vpop.f32.mrb[0].mxu0
      %v842 = vadd.f32 %v595, %v841
      %843 = vdwg.mxu0
      %844 = vmatprep.subr.bf16.mxu0 0
      %845 = vmatpush1.bf16.msra.mxu0 %v685
      %846 = vmatprep.subr.bf16.mxu0 0
      %847 = vmatpush1.bf16.msra.mxu0 %v688
      %848 = vmatprep.subr.bf16.mxu0 0
      %849 = vmatpush1.bf16.msra.mxu0 %v691
      %850 = vmatprep.subr.bf16.mxu0 0
      %851 = vmatpush1.bf16.msra.mxu0 %v694
      %852 = vmatprep.subr.bf16.mxu0 0
      %853 = vmatpush1.bf16.msra.mxu0 %v697
      %854 = vmatprep.subr.bf16.mxu0 0
      %855 = vmatpush1.bf16.msra.mxu0 %v700
      %856 = vmatprep.subr.bf16.mxu0 0
      %857 = vmatpush1.bf16.msra.mxu0 %v703
      %858 = vmatprep.subr.bf16.mxu0 0
      %859 = vmatpush1.bf16.msra.mxu0 %v706
      %860 = vmatprep.subr.bf16.mxu0 0
      %861 = vmatpush1.bf16.msra.mxu0 0
      %862 = vmatprep.subr.bf16.mxu0 0
      %863 = vmatpush1.bf16.msra.mxu0 0
      %864 = vmatprep.subr.bf16.mxu0 0
      %865 = vmatpush1.bf16.msra.mxu0 0
      %866 = vmatprep.subr.bf16.mxu0 0
      %867 = vmatpush1.bf16.msra.mxu0 0
      %868 = vmatprep.subr.bf16.mxu0 0
      %869 = vmatpush1.bf16.msra.mxu0 0
      %870 = vmatprep.subr.bf16.mxu0 0
      %871 = vmatpush1.bf16.msra.mxu0 0
      %872 = vmatprep.subr.bf16.mxu0 0
      %873 = vmatpush1.bf16.msra.mxu0 0
      %874 = vmatprep.subr.bf16.mxu0 0
      %875 = vmatpush1.bf16.msra.mxu0 0
      %876 = vmatprep.mubr.bf16.mxu0 0
      %877 = vmatmul.mubr.bf16.gmra.mrb[0].mxu0 %v546
      %v878 = vpop.f32.mrb[0].mxu0
      %v879 = vadd.f32 %v599, %v878
      %v880 = vpop.f32.mrb[0].mxu0
      %v881 = vpop.f32.mrb[0].mxu0
      %v882 = vadd.f32 %v599, %v881
      %v883 = vpop.f32.mrb[0].mxu0
      %884 = vmatprep.mubr.bf16.mxu0 0
      %885 = vmatmul.mubr.bf16.gmra.mrb[0].mxu0 %v547
      %v886 = vpop.f32.mrb[0].mxu0
      %v887 = vadd.f32 %v599, %v886
      %v888 = vpop.f32.mrb[0].mxu0
      %v889 = vpop.f32.mrb[0].mxu0
      %v890 = vadd.f32 %v599, %v889
      %v891 = vpop.f32.mrb[0].mxu0
      %892 = vmatprep.mubr.bf16.mxu0 0
      %893 = vmatmul.mubr.bf16.gmra.mrb[0].mxu0 %v548
      %v894 = vpop.f32.mrb[0].mxu0
      %v895 = vadd.f32 %v599, %v894
      %v896 = vpop.f32.mrb[0].mxu0
      %v897 = vpop.f32.mrb[0].mxu0
      %v898 = vadd.f32 %v599, %v897
      %v899 = vpop.f32.mrb[0].mxu0
      %900 = vmatprep.mubr.bf16.mxu0 0
      %901 = vmatmul.mubr.bf16.gmra.mrb[0].mxu0 %v549
      %v902 = vpop.f32.mrb[0].mxu0
      %v903 = vadd.f32 %v599, %v902
      %v904 = vpop.f32.mrb[0].mxu0
      %v905 = vpop.f32.mrb[0].mxu0
      %v906 = vadd.f32 %v599, %v905
      %v907 = vpop.f32.mrb[0].mxu0
      %908 = vmatprep.mubr.bf16.mxu0 0
      %909 = vmatmul.mubr.bf16.gmra.mrb[0].mxu0 %v550
      %v910 = vpop.f32.mrb[0].mxu0
      %v911 = vadd.f32 %v599, %v910
      %v912 = vpop.f32.mrb[0].mxu0
      %v913 = vpop.f32.mrb[0].mxu0
      %v914 = vadd.f32 %v599, %v913
      %v915 = vpop.f32.mrb[0].mxu0
      %916 = vmatprep.mubr.bf16.mxu0 0
      %917 = vmatmul.mubr.bf16.gmra.mrb[0].mxu0 %v551
      %v918 = vpop.f32.mrb[0].mxu0
      %v919 = vadd.f32 %v599, %v918
      %v920 = vpop.f32.mrb[0].mxu0
      %v921 = vpop.f32.mrb[0].mxu0
      %v922 = vadd.f32 %v599, %v921
      %v923 = vpop.f32.mrb[0].mxu0
      %924 = vmatprep.mubr.bf16.mxu0 0
      %925 = vmatmul.mubr.bf16.gmra.mrb[0].mxu0 %v552
      %v926 = vpop.f32.mrb[0].mxu0
      %v927 = vadd.f32 %v599, %v926
      %v928 = vpop.f32.mrb[0].mxu0
      %v929 = vpop.f32.mrb[0].mxu0
      %v930 = vadd.f32 %v599, %v929
      %v931 = vpop.f32.mrb[0].mxu0
      %932 = vmatprep.mubr.bf16.mxu0 0
      %933 = vmatmul.mubr.bf16.gmra.mrb[0].mxu0 %v553
      %v934 = vpop.f32.mrb[0].mxu0
      %v935 = vadd.f32 %v599, %v934
      %v936 = vpop.f32.mrb[0].mxu0
      %v937 = vpop.f32.mrb[0].mxu0
      %v938 = vadd.f32 %v599, %v937
      %v939 = vpop.f32.mrb[0].mxu0
      %940 = vdwg.mxu0
      %v941 = vpack.c.bf16 %v770, %v766
      %v942 = vpack.c.bf16 %v772, %v768
      %v943 = vpack.c.bf16 %v882, %v879
      %v944 = vpack.c.bf16 %v780, %v776
      %v945 = vpack.c.bf16 %v782, %v778
      %v946 = vpack.c.bf16 %v890, %v887
      %v947 = vpack.c.bf16 %v790, %v786
      %v948 = vpack.c.bf16 %v792, %v788
      %v949 = vpack.c.bf16 %v898, %v895
      %v950 = vpack.c.bf16 %v800, %v796
      %v951 = vpack.c.bf16 %v802, %v798
      %v952 = vpack.c.bf16 %v906, %v903
      %v953 = vpack.c.bf16 %v810, %v806
      %v954 = vpack.c.bf16 %v812, %v808
      %v955 = vpack.c.bf16 %v914, %v911
      %v956 = vpack.c.bf16 %v820, %v816
      %v957 = vpack.c.bf16 %v822, %v818
      %v958 = vpack.c.bf16 %v922, %v919
      %v959 = vpack.c.bf16 %v830, %v826
      %v960 = vpack.c.bf16 %v832, %v828
      %v961 = vpack.c.bf16 %v930, %v927
      %v962 = vpack.c.bf16 %v840, %v836
      %v963 = vpack.c.bf16 %v842, %v838
      %v964 = vpack.c.bf16 %v938, %v935
      %v965 = vlaneseq
      %v966 = vand.u32 %v965, 127
      %vm967 = vcmp.lt.s32.totalorder %v966, 5
      %v968 = vsel %vm967, 0.0, -1e+30
      %v977 = vunpack.c.l.b16 %v941
      %v978 = vunpack.c.h.b16 %v941
      %v979 = vunpack.c.l.b16 %v944
      %v980 = vunpack.c.h.b16 %v944
      %v981 = vunpack.c.l.b16 %v947
      %v982 = vunpack.c.h.b16 %v947
      %v983 = vunpack.c.l.b16 %v950
      %v984 = vunpack.c.h.b16 %v950
      %v985 = vunpack.c.l.b16 %v953
      %v986 = vunpack.c.h.b16 %v953
      %v987 = vunpack.c.l.b16 %v956
      %v988 = vunpack.c.h.b16 %v956
      %v989 = vunpack.c.l.b16 %v959
      %v990 = vunpack.c.h.b16 %v959
      %v991 = vunpack.c.l.b16 %v962
      %v992 = vunpack.c.h.b16 %v962
      %v993 = vpack.c.b16 %v977, %v977
      %v994 = vpack.c.b16 %v978, %v978
      %v995 = vpack.c.b16 %v979, %v979
      %v996 = vpack.c.b16 %v980, %v980
      %v997 = vpack.c.b16 %v981, %v981
      %v998 = vpack.c.b16 %v982, %v982
      %v999 = vpack.c.b16 %v983, %v983
      %v1000 = vpack.c.b16 %v984, %v984
      %v1001 = vpack.c.b16 %v985, %v985
      %v1002 = vpack.c.b16 %v986, %v986
      %v1003 = vpack.c.b16 %v987, %v987
      %v1004 = vpack.c.b16 %v988, %v988
      %v1005 = vpack.c.b16 %v989, %v989
      %v1006 = vpack.c.b16 %v990, %v990
      %v1007 = vpack.c.b16 %v991, %v991
      %v1008 = vpack.c.b16 %v992, %v992
      %v1017 = vunpack.c.l.b16 %v942
      %v1018 = vunpack.c.h.b16 %v942
      %v1019 = vunpack.c.l.b16 %v945
      %v1020 = vunpack.c.h.b16 %v945
      %v1021 = vunpack.c.l.b16 %v948
      %v1022 = vunpack.c.h.b16 %v948
      %v1023 = vunpack.c.l.b16 %v951
      %v1024 = vunpack.c.h.b16 %v951
      %v1025 = vunpack.c.l.b16 %v954
      %v1026 = vunpack.c.h.b16 %v954
      %v1027 = vunpack.c.l.b16 %v957
      %v1028 = vunpack.c.h.b16 %v957
      %v1029 = vunpack.c.l.b16 %v960
      %v1030 = vunpack.c.h.b16 %v960
      %v1031 = vunpack.c.l.b16 %v963
      %v1032 = vunpack.c.h.b16 %v963
      %v1033 = vpack.c.b16 %v1017, %v1017
      %v1034 = vpack.c.b16 %v1018, %v1018
      %v1035 = vpack.c.b16 %v1019, %v1019
      %v1036 = vpack.c.b16 %v1020, %v1020
      %v1037 = vpack.c.b16 %v1021, %v1021
      %v1038 = vpack.c.b16 %v1022, %v1022
      %v1039 = vpack.c.b16 %v1023, %v1023
      %v1040 = vpack.c.b16 %v1024, %v1024
      %v1041 = vpack.c.b16 %v1025, %v1025
      %v1042 = vpack.c.b16 %v1026, %v1026
      %v1043 = vpack.c.b16 %v1027, %v1027
      %v1044 = vpack.c.b16 %v1028, %v1028
      %v1045 = vpack.c.b16 %v1029, %v1029
      %v1046 = vpack.c.b16 %v1030, %v1030
      %v1047 = vpack.c.b16 %v1031, %v1031
      %v1048 = vpack.c.b16 %v1032, %v1032
      %v1057 = vunpack.c.l.b16 %v943
      %v1058 = vunpack.c.h.b16 %v943
      %v1059 = vunpack.c.l.b16 %v946
      %v1060 = vunpack.c.h.b16 %v946
      %v1061 = vunpack.c.l.b16 %v949
      %v1062 = vunpack.c.h.b16 %v949
      %v1063 = vunpack.c.l.b16 %v952
      %v1064 = vunpack.c.h.b16 %v952
      %v1065 = vunpack.c.l.b16 %v955
      %v1066 = vunpack.c.h.b16 %v955
      %v1067 = vunpack.c.l.b16 %v958
      %v1068 = vunpack.c.h.b16 %v958
      %v1069 = vunpack.c.l.b16 %v961
      %v1070 = vunpack.c.h.b16 %v961
      %v1071 = vunpack.c.l.b16 %v964
      %v1072 = vunpack.c.h.b16 %v964
      %v1073 = vpack.c.b16 %v1057, %v1057
      %v1074 = vpack.c.b16 %v1058, %v1058
      %v1075 = vpack.c.b16 %v1059, %v1059
      %v1076 = vpack.c.b16 %v1060, %v1060
      %v1077 = vpack.c.b16 %v1061, %v1061
      %v1078 = vpack.c.b16 %v1062, %v1062
      %v1079 = vpack.c.b16 %v1063, %v1063
      %v1080 = vpack.c.b16 %v1064, %v1064
      %v1081 = vpack.c.b16 %v1065, %v1065
      %v1082 = vpack.c.b16 %v1066, %v1066
      %v1083 = vpack.c.b16 %v1067, %v1067
      %v1084 = vpack.c.b16 %v1068, %v1068
      %v1085 = vpack.c.b16 %v1069, %v1069
      %v1086 = vpack.c.b16 %v1070, %v1070
      %v1087 = vpack.c.b16 %v1071, %v1071
      %v1088 = vpack.c.b16 %v1072, %v1072
      %vm1089 = vcmask 261120
      %v1091 = vsel %vm1089, %v993, 0
      %v1094 = vsel %vm1089, %v1033, 0
      %1096 = vmatprep.subr.bf16.mxu0 0
      %1097 = vmatpush1.bf16.xpose.msra.mxu0 %v1094
      %1098 = vmatprep.subr.bf16.mxu0 0
      %1099 = vmatpush1.bf16.xpose.msra.mxu0 0
      %1100 = vmatprep.subr.bf16.mxu0 0
      %1101 = vmatpush1.bf16.xpose.msra.mxu0 0
      %1102 = vmatprep.subr.bf16.mxu0 0
      %1103 = vmatpush1.bf16.xpose.msra.mxu0 0
      %1104 = vmatprep.subr.bf16.mxu0 0
      %1105 = vmatpush1.bf16.xpose.msra.mxu0 0
      %1106 = vmatprep.subr.bf16.mxu0 0
      %1107 = vmatpush1.bf16.xpose.msra.mxu0 0
      %1108 = vmatprep.subr.bf16.mxu0 0
      %1109 = vmatpush1.bf16.xpose.msra.mxu0 0
      %1110 = vmatprep.subr.bf16.mxu0 0
      %1111 = vmatpush1.bf16.xpose.msra.mxu0 0
      %1112 = vmatprep.subr.bf16.mxu0 0
      %1113 = vmatpush1.bf16.xpose.msra.mxu0 0
      %1114 = vmatprep.subr.bf16.mxu0 0
      %1115 = vmatpush1.bf16.xpose.msra.mxu0 0
      %1116 = vmatprep.subr.bf16.mxu0 0
      %1117 = vmatpush1.bf16.xpose.msra.mxu0 0
      %1118 = vmatprep.subr.bf16.mxu0 0
      %1119 = vmatpush1.bf16.xpose.msra.mxu0 0
      %1120 = vmatprep.subr.bf16.mxu0 0
      %1121 = vmatpush1.bf16.xpose.msra.mxu0 0
      %1122 = vmatprep.subr.bf16.mxu0 0
      %1123 = vmatpush1.bf16.xpose.msra.mxu0 0
      %1124 = vmatprep.subr.bf16.mxu0 0
      %1125 = vmatpush1.bf16.xpose.msra.mxu0 0
      %1126 = vmatprep.subr.bf16.mxu0 0
      %1127 = vmatpush1.bf16.xpose.msra.mxu0 0
      %1128 = vmatprep.mubr.bf16.mxu0 0
      %1129 = vmatmul.mubr.bf16.gmra.mrb[0].mxu0 %v1091
      %v1130 = vpop.f32.mrb[0].mxu0
      %v1131 = vadd.f32 %v968, %v1130
      %v1132 = vpop.f32.mrb[0].mxu0
      %v1133 = vpop.f32.mrb[0].mxu0
      %v1134 = vpop.f32.mrb[0].mxu0
      %1135 = vdwg.mxu0
      %v1137 = vsel %vm1089, %v994, 0
      %v1140 = vsel %vm1089, %v1034, 0
      %1142 = vmatprep.subr.bf16.mxu0 0
      %1143 = vmatpush1.bf16.xpose.msra.mxu0 %v1140
      %1144 = vmatprep.subr.bf16.mxu0 0
      %1145 = vmatpush1.bf16.xpose.msra.mxu0 0
      %1146 = vmatprep.subr.bf16.mxu0 0
      %1147 = vmatpush1.bf16.xpose.msra.mxu0 0
      %1148 = vmatprep.subr.bf16.mxu0 0
      %1149 = vmatpush1.bf16.xpose.msra.mxu0 0
      %1150 = vmatprep.subr.bf16.mxu0 0
      %1151 = vmatpush1.bf16.xpose.msra.mxu0 0
      %1152 = vmatprep.subr.bf16.mxu0 0
      %1153 = vmatpush1.bf16.xpose.msra.mxu0 0
      %1154 = vmatprep.subr.bf16.mxu0 0
      %1155 = vmatpush1.bf16.xpose.msra.mxu0 0
      %1156 = vmatprep.subr.bf16.mxu0 0
      %1157 = vmatpush1.bf16.xpose.msra.mxu0 0
      %1158 = vmatprep.subr.bf16.mxu0 0
      %1159 = vmatpush1.bf16.xpose.msra.mxu0 0
      %1160 = vmatprep.subr.bf16.mxu0 0
      %1161 = vmatpush1.bf16.xpose.msra.mxu0 0
      %1162 = vmatprep.subr.bf16.mxu0 0
      %1163 = vmatpush1.bf16.xpose.msra.mxu0 0
      %1164 = vmatprep.subr.bf16.mxu0 0
      %1165 = vmatpush1.bf16.xpose.msra.mxu0 0
      %1166 = vmatprep.subr.bf16.mxu0 0
      %1167 = vmatpush1.bf16.xpose.msra.mxu0 0
      %1168 = vmatprep.subr.bf16.mxu0 0
      %1169 = vmatpush1.bf16.xpose.msra.mxu0 0
      %1170 = vmatprep.subr.bf16.mxu0 0
      %1171 = vmatpush1.bf16.xpose.msra.mxu0 0
      %1172 = vmatprep.subr.bf16.mxu0 0
      %1173 = vmatpush1.bf16.xpose.msra.mxu0 0
      %1174 = vmatprep.mubr.bf16.mxu0 0
      %1175 = vmatmul.mubr.bf16.gmra.mrb[0].mxu0 %v1137
      %v1176 = vpop.f32.mrb[0].mxu0
      %v1177 = vadd.f32 %v968, %v1176
      %v1178 = vpop.f32.mrb[0].mxu0
      %v1179 = vpop.f32.mrb[0].mxu0
      %v1180 = vpop.f32.mrb[0].mxu0
      %1181 = vdwg.mxu0
      %v1183 = vsel %vm1089, %v995, 0
      %v1186 = vsel %vm1089, %v1035, 0
      %1188 = vmatprep.subr.bf16.mxu0 0
      %1189 = vmatpush1.bf16.xpose.msra.mxu0 %v1186
      %1190 = vmatprep.subr.bf16.mxu0 0
      %1191 = vmatpush1.bf16.xpose.msra.mxu0 0
      %1192 = vmatprep.subr.bf16.mxu0 0
      %1193 = vmatpush1.bf16.xpose.msra.mxu0 0
      %1194 = vmatprep.subr.bf16.mxu0 0
      %1195 = vmatpush1.bf16.xpose.msra.mxu0 0
      %1196 = vmatprep.subr.bf16.mxu0 0
      %1197 = vmatpush1.bf16.xpose.msra.mxu0 0
      %1198 = vmatprep.subr.bf16.mxu0 0
      %1199 = vmatpush1.bf16.xpose.msra.mxu0 0
      %1200 = vmatprep.subr.bf16.mxu0 0
      %1201 = vmatpush1.bf16.xpose.msra.mxu0 0
      %1202 = vmatprep.subr.bf16.mxu0 0
      %1203 = vmatpush1.bf16.xpose.msra.mxu0 0
      %1204 = vmatprep.subr.bf16.mxu0 0
      %1205 = vmatpush1.bf16.xpose.msra.mxu0 0
      %1206 = vmatprep.subr.bf16.mxu0 0
      %1207 = vmatpush1.bf16.xpose.msra.mxu0 0
      %1208 = vmatprep.subr.bf16.mxu0 0
      %1209 = vmatpush1.bf16.xpose.msra.mxu0 0
      %1210 = vmatprep.subr.bf16.mxu0 0
      %1211 = vmatpush1.bf16.xpose.msra.mxu0 0
      %1212 = vmatprep.subr.bf16.mxu0 0
      %1213 = vmatpush1.bf16.xpose.msra.mxu0 0
      %1214 = vmatprep.subr.bf16.mxu0 0
      %1215 = vmatpush1.bf16.xpose.msra.mxu0 0
      %1216 = vmatprep.subr.bf16.mxu0 0
      %1217 = vmatpush1.bf16.xpose.msra.mxu0 0
      %1218 = vmatprep.subr.bf16.mxu0 0
      %1219 = vmatpush1.bf16.xpose.msra.mxu0 0
      %1220 = vmatprep.mubr.bf16.mxu0 0
      %1221 = vmatmul.mubr.bf16.gmra.mrb[0].mxu0 %v1183
      %v1222 = vpop.f32.mrb[0].mxu0
      %v1223 = vadd.f32 %v968, %v1222
      %v1224 = vpop.f32.mrb[0].mxu0
      %v1225 = vpop.f32.mrb[0].mxu0
      %v1226 = vpop.f32.mrb[0].mxu0
      %1227 = vdwg.mxu0
      %v1229 = vsel %vm1089, %v996, 0
      %v1232 = vsel %vm1089, %v1036, 0
      %1234 = vmatprep.subr.bf16.mxu0 0
      %1235 = vmatpush1.bf16.xpose.msra.mxu0 %v1232
      %1236 = vmatprep.subr.bf16.mxu0 0
      %1237 = vmatpush1.bf16.xpose.msra.mxu0 0
      %1238 = vmatprep.subr.bf16.mxu0 0
      %1239 = vmatpush1.bf16.xpose.msra.mxu0 0
      %1240 = vmatprep.subr.bf16.mxu0 0
      %1241 = vmatpush1.bf16.xpose.msra.mxu0 0
      %1242 = vmatprep.subr.bf16.mxu0 0
      %1243 = vmatpush1.bf16.xpose.msra.mxu0 0
      %1244 = vmatprep.subr.bf16.mxu0 0
      %1245 = vmatpush1.bf16.xpose.msra.mxu0 0
      %1246 = vmatprep.subr.bf16.mxu0 0
      %1247 = vmatpush1.bf16.xpose.msra.mxu0 0
      %1248 = vmatprep.subr.bf16.mxu0 0
      %1249 = vmatpush1.bf16.xpose.msra.mxu0 0
      %1250 = vmatprep.subr.bf16.mxu0 0
      %1251 = vmatpush1.bf16.xpose.msra.mxu0 0
      %1252 = vmatprep.subr.bf16.mxu0 0
      %1253 = vmatpush1.bf16.xpose.msra.mxu0 0
      %1254 = vmatprep.subr.bf16.mxu0 0
      %1255 = vmatpush1.bf16.xpose.msra.mxu0 0
      %1256 = vmatprep.subr.bf16.mxu0 0
      %1257 = vmatpush1.bf16.xpose.msra.mxu0 0
      %1258 = vmatprep.subr.bf16.mxu0 0
      %1259 = vmatpush1.bf16.xpose.msra.mxu0 0
      %1260 = vmatprep.subr.bf16.mxu0 0
      %1261 = vmatpush1.bf16.xpose.msra.mxu0 0
      %1262 = vmatprep.subr.bf16.mxu0 0
      %1263 = vmatpush1.bf16.xpose.msra.mxu0 0
      %1264 = vmatprep.subr.bf16.mxu0 0
      %1265 = vmatpush1.bf16.xpose.msra.mxu0 0
      %1266 = vmatprep.mubr.bf16.mxu0 0
      %1267 = vmatmul.mubr.bf16.gmra.mrb[0].mxu0 %v1229
      %v1268 = vpop.f32.mrb[0].mxu0
      %v1269 = vadd.f32 %v968, %v1268
      %v1270 = vpop.f32.mrb[0].mxu0
      %v1271 = vpop.f32.mrb[0].mxu0
      %v1272 = vpop.f32.mrb[0].mxu0
      %1273 = vdwg.mxu0
      %v1275 = vsel %vm1089, %v997, 0
      %v1278 = vsel %vm1089, %v1037, 0
      %1280 = vmatprep.subr.bf16.mxu0 0
      %1281 = vmatpush1.bf16.xpose.msra.mxu0 %v1278
      %1282 = vmatprep.subr.bf16.mxu0 0
      %1283 = vmatpush1.bf16.xpose.msra.mxu0 0
      %1284 = vmatprep.subr.bf16.mxu0 0
      %1285 = vmatpush1.bf16.xpose.msra.mxu0 0
      %1286 = vmatprep.subr.bf16.mxu0 0
      %1287 = vmatpush1.bf16.xpose.msra.mxu0 0
      %1288 = vmatprep.subr.bf16.mxu0 0
      %1289 = vmatpush1.bf16.xpose.msra.mxu0 0
      %1290 = vmatprep.subr.bf16.mxu0 0
      %1291 = vmatpush1.bf16.xpose.msra.mxu0 0
      %1292 = vmatprep.subr.bf16.mxu0 0
      %1293 = vmatpush1.bf16.xpose.msra.mxu0 0
      %1294 = vmatprep.subr.bf16.mxu0 0
      %1295 = vmatpush1.bf16.xpose.msra.mxu0 0
      %1296 = vmatprep.subr.bf16.mxu0 0
      %1297 = vmatpush1.bf16.xpose.msra.mxu0 0
      %1298 = vmatprep.subr.bf16.mxu0 0
      %1299 = vmatpush1.bf16.xpose.msra.mxu0 0
      %1300 = vmatprep.subr.bf16.mxu0 0
      %1301 = vmatpush1.bf16.xpose.msra.mxu0 0
      %1302 = vmatprep.subr.bf16.mxu0 0
      %1303 = vmatpush1.bf16.xpose.msra.mxu0 0
      %1304 = vmatprep.subr.bf16.mxu0 0
      %1305 = vmatpush1.bf16.xpose.msra.mxu0 0
      %1306 = vmatprep.subr.bf16.mxu0 0
      %1307 = vmatpush1.bf16.xpose.msra.mxu0 0
      %1308 = vmatprep.subr.bf16.mxu0 0
      %1309 = vmatpush1.bf16.xpose.msra.mxu0 0
      %1310 = vmatprep.subr.bf16.mxu0 0
      %1311 = vmatpush1.bf16.xpose.msra.mxu0 0
      %1312 = vmatprep.mubr.bf16.mxu0 0
      %1313 = vmatmul.mubr.bf16.gmra.mrb[0].mxu0 %v1275
      %v1314 = vpop.f32.mrb[0].mxu0
      %v1315 = vadd.f32 %v968, %v1314
      %v1316 = vpop.f32.mrb[0].mxu0
      %v1317 = vpop.f32.mrb[0].mxu0
      %v1318 = vpop.f32.mrb[0].mxu0
      %1319 = vdwg.mxu0
      %v1321 = vsel %vm1089, %v998, 0
      %v1324 = vsel %vm1089, %v1038, 0
      %1326 = vmatprep.subr.bf16.mxu0 0
      %1327 = vmatpush1.bf16.xpose.msra.mxu0 %v1324
      %1328 = vmatprep.subr.bf16.mxu0 0
      %1329 = vmatpush1.bf16.xpose.msra.mxu0 0
      %1330 = vmatprep.subr.bf16.mxu0 0
      %1331 = vmatpush1.bf16.xpose.msra.mxu0 0
      %1332 = vmatprep.subr.bf16.mxu0 0
      %1333 = vmatpush1.bf16.xpose.msra.mxu0 0
      %1334 = vmatprep.subr.bf16.mxu0 0
      %1335 = vmatpush1.bf16.xpose.msra.mxu0 0
      %1336 = vmatprep.subr.bf16.mxu0 0
      %1337 = vmatpush1.bf16.xpose.msra.mxu0 0
      %1338 = vmatprep.subr.bf16.mxu0 0
      %1339 = vmatpush1.bf16.xpose.msra.mxu0 0
      %1340 = vmatprep.subr.bf16.mxu0 0
      %1341 = vmatpush1.bf16.xpose.msra.mxu0 0
      %1342 = vmatprep.subr.bf16.mxu0 0
      %1343 = vmatpush1.bf16.xpose.msra.mxu0 0
      %1344 = vmatprep.subr.bf16.mxu0 0
      %1345 = vmatpush1.bf16.xpose.msra.mxu0 0
      %1346 = vmatprep.subr.bf16.mxu0 0
      %1347 = vmatpush1.bf16.xpose.msra.mxu0 0
      %1348 = vmatprep.subr.bf16.mxu0 0
      %1349 = vmatpush1.bf16.xpose.msra.mxu0 0
      %1350 = vmatprep.subr.bf16.mxu0 0
      %1351 = vmatpush1.bf16.xpose.msra.mxu0 0
      %1352 = vmatprep.subr.bf16.mxu0 0
      %1353 = vmatpush1.bf16.xpose.msra.mxu0 0
      %1354 = vmatprep.subr.bf16.mxu0 0
      %1355 = vmatpush1.bf16.xpose.msra.mxu0 0
      %1356 = vmatprep.subr.bf16.mxu0 0
      %1357 = vmatpush1.bf16.xpose.msra.mxu0 0
      %1358 = vmatprep.mubr.bf16.mxu0 0
      %1359 = vmatmul.mubr.bf16.gmra.mrb[0].mxu0 %v1321
      %v1360 = vpop.f32.mrb[0].mxu0
      %v1361 = vadd.f32 %v968, %v1360
      %v1362 = vpop.f32.mrb[0].mxu0
      %v1363 = vpop.f32.mrb[0].mxu0
      %v1364 = vpop.f32.mrb[0].mxu0
      %1365 = vdwg.mxu0
      %v1367 = vsel %vm1089, %v999, 0
      %v1370 = vsel %vm1089, %v1039, 0
      %1372 = vmatprep.subr.bf16.mxu0 0
      %1373 = vmatpush1.bf16.xpose.msra.mxu0 %v1370
      %1374 = vmatprep.subr.bf16.mxu0 0
      %1375 = vmatpush1.bf16.xpose.msra.mxu0 0
      %1376 = vmatprep.subr.bf16.mxu0 0
      %1377 = vmatpush1.bf16.xpose.msra.mxu0 0
      %1378 = vmatprep.subr.bf16.mxu0 0
      %1379 = vmatpush1.bf16.xpose.msra.mxu0 0
      %1380 = vmatprep.subr.bf16.mxu0 0
      %1381 = vmatpush1.bf16.xpose.msra.mxu0 0
      %1382 = vmatprep.subr.bf16.mxu0 0
      %1383 = vmatpush1.bf16.xpose.msra.mxu0 0
      %1384 = vmatprep.subr.bf16.mxu0 0
      %1385 = vmatpush1.bf16.xpose.msra.mxu0 0
      %1386 = vmatprep.subr.bf16.mxu0 0
      %1387 = vmatpush1.bf16.xpose.msra.mxu0 0
      %1388 = vmatprep.subr.bf16.mxu0 0
      %1389 = vmatpush1.bf16.xpose.msra.mxu0 0
      %1390 = vmatprep.subr.bf16.mxu0 0
      %1391 = vmatpush1.bf16.xpose.msra.mxu0 0
      %1392 = vmatprep.subr.bf16.mxu0 0
      %1393 = vmatpush1.bf16.xpose.msra.mxu0 0
      %1394 = vmatprep.subr.bf16.mxu0 0
      %1395 = vmatpush1.bf16.xpose.msra.mxu0 0
      %1396 = vmatprep.subr.bf16.mxu0 0
      %1397 = vmatpush1.bf16.xpose.msra.mxu0 0
      %1398 = vmatprep.subr.bf16.mxu0 0
      %1399 = vmatpush1.bf16.xpose.msra.mxu0 0
      %1400 = vmatprep.subr.bf16.mxu0 0
      %1401 = vmatpush1.bf16.xpose.msra.mxu0 0
      %1402 = vmatprep.subr.bf16.mxu0 0
      %1403 = vmatpush1.bf16.xpose.msra.mxu0 0
      %1404 = vmatprep.mubr.bf16.mxu0 0
      %1405 = vmatmul.mubr.bf16.gmra.mrb[0].mxu0 %v1367
      %v1406 = vpop.f32.mrb[0].mxu0
      %v1407 = vadd.f32 %v968, %v1406
      %v1408 = vpop.f32.mrb[0].mxu0
      %v1409 = vpop.f32.mrb[0].mxu0
      %v1410 = vpop.f32.mrb[0].mxu0
      %1411 = vdwg.mxu0
      %v1413 = vsel %vm1089, %v1000, 0
      %v1416 = vsel %vm1089, %v1040, 0
      %1418 = vmatprep.subr.bf16.mxu0 0
      %1419 = vmatpush1.bf16.xpose.msra.mxu0 %v1416
      %1420 = vmatprep.subr.bf16.mxu0 0
      %1421 = vmatpush1.bf16.xpose.msra.mxu0 0
      %1422 = vmatprep.subr.bf16.mxu0 0
      %1423 = vmatpush1.bf16.xpose.msra.mxu0 0
      %1424 = vmatprep.subr.bf16.mxu0 0
      %1425 = vmatpush1.bf16.xpose.msra.mxu0 0
      %1426 = vmatprep.subr.bf16.mxu0 0
      %1427 = vmatpush1.bf16.xpose.msra.mxu0 0
      %1428 = vmatprep.subr.bf16.mxu0 0
      %1429 = vmatpush1.bf16.xpose.msra.mxu0 0
      %1430 = vmatprep.subr.bf16.mxu0 0
      %1431 = vmatpush1.bf16.xpose.msra.mxu0 0
      %1432 = vmatprep.subr.bf16.mxu0 0
      %1433 = vmatpush1.bf16.xpose.msra.mxu0 0
      %1434 = vmatprep.subr.bf16.mxu0 0
      %1435 = vmatpush1.bf16.xpose.msra.mxu0 0
      %1436 = vmatprep.subr.bf16.mxu0 0
      %1437 = vmatpush1.bf16.xpose.msra.mxu0 0
      %1438 = vmatprep.subr.bf16.mxu0 0
      %1439 = vmatpush1.bf16.xpose.msra.mxu0 0
      %1440 = vmatprep.subr.bf16.mxu0 0
      %1441 = vmatpush1.bf16.xpose.msra.mxu0 0
      %1442 = vmatprep.subr.bf16.mxu0 0
      %1443 = vmatpush1.bf16.xpose.msra.mxu0 0
      %1444 = vmatprep.subr.bf16.mxu0 0
      %1445 = vmatpush1.bf16.xpose.msra.mxu0 0
      %1446 = vmatprep.subr.bf16.mxu0 0
      %1447 = vmatpush1.bf16.xpose.msra.mxu0 0
      %1448 = vmatprep.subr.bf16.mxu0 0
      %1449 = vmatpush1.bf16.xpose.msra.mxu0 0
      %1450 = vmatprep.mubr.bf16.mxu0 0
      %1451 = vmatmul.mubr.bf16.gmra.mrb[0].mxu0 %v1413
      %v1452 = vpop.f32.mrb[0].mxu0
      %v1453 = vadd.f32 %v968, %v1452
      %v1454 = vpop.f32.mrb[0].mxu0
      %v1455 = vpop.f32.mrb[0].mxu0
      %v1456 = vpop.f32.mrb[0].mxu0
      %1457 = vdwg.mxu0
      %v1459 = vsel %vm1089, %v1001, 0
      %v1462 = vsel %vm1089, %v1041, 0
      %1464 = vmatprep.subr.bf16.mxu0 0
      %1465 = vmatpush1.bf16.xpose.msra.mxu0 %v1462
      %1466 = vmatprep.subr.bf16.mxu0 0
      %1467 = vmatpush1.bf16.xpose.msra.mxu0 0
      %1468 = vmatprep.subr.bf16.mxu0 0
      %1469 = vmatpush1.bf16.xpose.msra.mxu0 0
      %1470 = vmatprep.subr.bf16.mxu0 0
      %1471 = vmatpush1.bf16.xpose.msra.mxu0 0
      %1472 = vmatprep.subr.bf16.mxu0 0
      %1473 = vmatpush1.bf16.xpose.msra.mxu0 0
      %1474 = vmatprep.subr.bf16.mxu0 0
      %1475 = vmatpush1.bf16.xpose.msra.mxu0 0
      %1476 = vmatprep.subr.bf16.mxu0 0
      %1477 = vmatpush1.bf16.xpose.msra.mxu0 0
      %1478 = vmatprep.subr.bf16.mxu0 0
      %1479 = vmatpush1.bf16.xpose.msra.mxu0 0
      %1480 = vmatprep.subr.bf16.mxu0 0
      %1481 = vmatpush1.bf16.xpose.msra.mxu0 0
      %1482 = vmatprep.subr.bf16.mxu0 0
      %1483 = vmatpush1.bf16.xpose.msra.mxu0 0
      %1484 = vmatprep.subr.bf16.mxu0 0
      %1485 = vmatpush1.bf16.xpose.msra.mxu0 0
      %1486 = vmatprep.subr.bf16.mxu0 0
      %1487 = vmatpush1.bf16.xpose.msra.mxu0 0
      %1488 = vmatprep.subr.bf16.mxu0 0
      %1489 = vmatpush1.bf16.xpose.msra.mxu0 0
      %1490 = vmatprep.subr.bf16.mxu0 0
      %1491 = vmatpush1.bf16.xpose.msra.mxu0 0
      %1492 = vmatprep.subr.bf16.mxu0 0
      %1493 = vmatpush1.bf16.xpose.msra.mxu0 0
      %1494 = vmatprep.subr.bf16.mxu0 0
      %1495 = vmatpush1.bf16.xpose.msra.mxu0 0
      %1496 = vmatprep.mubr.bf16.mxu0 0
      %1497 = vmatmul.mubr.bf16.gmra.mrb[0].mxu0 %v1459
      %v1498 = vpop.f32.mrb[0].mxu0
      %v1499 = vadd.f32 %v968, %v1498
      %v1500 = vpop.f32.mrb[0].mxu0
      %v1501 = vpop.f32.mrb[0].mxu0
      %v1502 = vpop.f32.mrb[0].mxu0
      %1503 = vdwg.mxu0
      %v1505 = vsel %vm1089, %v1002, 0
      %v1508 = vsel %vm1089, %v1042, 0
      %1510 = vmatprep.subr.bf16.mxu0 0
      %1511 = vmatpush1.bf16.xpose.msra.mxu0 %v1508
      %1512 = vmatprep.subr.bf16.mxu0 0
      %1513 = vmatpush1.bf16.xpose.msra.mxu0 0
      %1514 = vmatprep.subr.bf16.mxu0 0
      %1515 = vmatpush1.bf16.xpose.msra.mxu0 0
      %1516 = vmatprep.subr.bf16.mxu0 0
      %1517 = vmatpush1.bf16.xpose.msra.mxu0 0
      %1518 = vmatprep.subr.bf16.mxu0 0
      %1519 = vmatpush1.bf16.xpose.msra.mxu0 0
      %1520 = vmatprep.subr.bf16.mxu0 0
      %1521 = vmatpush1.bf16.xpose.msra.mxu0 0
      %1522 = vmatprep.subr.bf16.mxu0 0
      %1523 = vmatpush1.bf16.xpose.msra.mxu0 0
      %1524 = vmatprep.subr.bf16.mxu0 0
      %1525 = vmatpush1.bf16.xpose.msra.mxu0 0
      %1526 = vmatprep.subr.bf16.mxu0 0
      %1527 = vmatpush1.bf16.xpose.msra.mxu0 0
      %1528 = vmatprep.subr.bf16.mxu0 0
      %1529 = vmatpush1.bf16.xpose.msra.mxu0 0
      %1530 = vmatprep.subr.bf16.mxu0 0
      %1531 = vmatpush1.bf16.xpose.msra.mxu0 0
      %1532 = vmatprep.subr.bf16.mxu0 0
      %1533 = vmatpush1.bf16.xpose.msra.mxu0 0
      %1534 = vmatprep.subr.bf16.mxu0 0
      %1535 = vmatpush1.bf16.xpose.msra.mxu0 0
      %1536 = vmatprep.subr.bf16.mxu0 0
      %1537 = vmatpush1.bf16.xpose.msra.mxu0 0
      %1538 = vmatprep.subr.bf16.mxu0 0
      %1539 = vmatpush1.bf16.xpose.msra.mxu0 0
      %1540 = vmatprep.subr.bf16.mxu0 0
      %1541 = vmatpush1.bf16.xpose.msra.mxu0 0
      %1542 = vmatprep.mubr.bf16.mxu0 0
      %1543 = vmatmul.mubr.bf16.gmra.mrb[0].mxu0 %v1505
      %v1544 = vpop.f32.mrb[0].mxu0
      %v1545 = vadd.f32 %v968, %v1544
      %v1546 = vpop.f32.mrb[0].mxu0
      %v1547 = vpop.f32.mrb[0].mxu0
      %v1548 = vpop.f32.mrb[0].mxu0
      %1549 = vdwg.mxu0
      %v1551 = vsel %vm1089, %v1003, 0
      %v1554 = vsel %vm1089, %v1043, 0
      %1556 = vmatprep.subr.bf16.mxu0 0
      %1557 = vmatpush1.bf16.xpose.msra.mxu0 %v1554
      %1558 = vmatprep.subr.bf16.mxu0 0
      %1559 = vmatpush1.bf16.xpose.msra.mxu0 0
      %1560 = vmatprep.subr.bf16.mxu0 0
      %1561 = vmatpush1.bf16.xpose.msra.mxu0 0
      %1562 = vmatprep.subr.bf16.mxu0 0
      %1563 = vmatpush1.bf16.xpose.msra.mxu0 0
      %1564 = vmatprep.subr.bf16.mxu0 0
      %1565 = vmatpush1.bf16.xpose.msra.mxu0 0
      %1566 = vmatprep.subr.bf16.mxu0 0
      %1567 = vmatpush1.bf16.xpose.msra.mxu0 0
      %1568 = vmatprep.subr.bf16.mxu0 0
      %1569 = vmatpush1.bf16.xpose.msra.mxu0 0
      %1570 = vmatprep.subr.bf16.mxu0 0
      %1571 = vmatpush1.bf16.xpose.msra.mxu0 0
      %1572 = vmatprep.subr.bf16.mxu0 0
      %1573 = vmatpush1.bf16.xpose.msra.mxu0 0
      %1574 = vmatprep.subr.bf16.mxu0 0
      %1575 = vmatpush1.bf16.xpose.msra.mxu0 0
      %1576 = vmatprep.subr.bf16.mxu0 0
      %1577 = vmatpush1.bf16.xpose.msra.mxu0 0
      %1578 = vmatprep.subr.bf16.mxu0 0
      %1579 = vmatpush1.bf16.xpose.msra.mxu0 0
      %1580 = vmatprep.subr.bf16.mxu0 0
      %1581 = vmatpush1.bf16.xpose.msra.mxu0 0
      %1582 = vmatprep.subr.bf16.mxu0 0
      %1583 = vmatpush1.bf16.xpose.msra.mxu0 0
      %1584 = vmatprep.subr.bf16.mxu0 0
      %1585 = vmatpush1.bf16.xpose.msra.mxu0 0
      %1586 = vmatprep.subr.bf16.mxu0 0
      %1587 = vmatpush1.bf16.xpose.msra.mxu0 0
      %1588 = vmatprep.mubr.bf16.mxu0 0
      %1589 = vmatmul.mubr.bf16.gmra.mrb[0].mxu0 %v1551
      %v1590 = vpop.f32.mrb[0].mxu0
      %v1591 = vadd.f32 %v968, %v1590
      %v1592 = vpop.f32.mrb[0].mxu0
      %v1593 = vpop.f32.mrb[0].mxu0
      %v1594 = vpop.f32.mrb[0].mxu0
      %1595 = vdwg.mxu0
      %v1597 = vsel %vm1089, %v1004, 0
      %v1600 = vsel %vm1089, %v1044, 0
      %1602 = vmatprep.subr.bf16.mxu0 0
      %1603 = vmatpush1.bf16.xpose.msra.mxu0 %v1600
      %1604 = vmatprep.subr.bf16.mxu0 0
      %1605 = vmatpush1.bf16.xpose.msra.mxu0 0
      %1606 = vmatprep.subr.bf16.mxu0 0
      %1607 = vmatpush1.bf16.xpose.msra.mxu0 0
      %1608 = vmatprep.subr.bf16.mxu0 0
      %1609 = vmatpush1.bf16.xpose.msra.mxu0 0
      %1610 = vmatprep.subr.bf16.mxu0 0
      %1611 = vmatpush1.bf16.xpose.msra.mxu0 0
      %1612 = vmatprep.subr.bf16.mxu0 0
      %1613 = vmatpush1.bf16.xpose.msra.mxu0 0
      %1614 = vmatprep.subr.bf16.mxu0 0
      %1615 = vmatpush1.bf16.xpose.msra.mxu0 0
      %1616 = vmatprep.subr.bf16.mxu0 0
      %1617 = vmatpush1.bf16.xpose.msra.mxu0 0
      %1618 = vmatprep.subr.bf16.mxu0 0
      %1619 = vmatpush1.bf16.xpose.msra.mxu0 0
      %1620 = vmatprep.subr.bf16.mxu0 0
      %1621 = vmatpush1.bf16.xpose.msra.mxu0 0
      %1622 = vmatprep.subr.bf16.mxu0 0
      %1623 = vmatpush1.bf16.xpose.msra.mxu0 0
      %1624 = vmatprep.subr.bf16.mxu0 0
      %1625 = vmatpush1.bf16.xpose.msra.mxu0 0
      %1626 = vmatprep.subr.bf16.mxu0 0
      %1627 = vmatpush1.bf16.xpose.msra.mxu0 0
      %1628 = vmatprep.subr.bf16.mxu0 0
      %1629 = vmatpush1.bf16.xpose.msra.mxu0 0
      %1630 = vmatprep.subr.bf16.mxu0 0
      %1631 = vmatpush1.bf16.xpose.msra.mxu0 0
      %1632 = vmatprep.subr.bf16.mxu0 0
      %1633 = vmatpush1.bf16.xpose.msra.mxu0 0
      %1634 = vmatprep.mubr.bf16.mxu0 0
      %1635 = vmatmul.mubr.bf16.gmra.mrb[0].mxu0 %v1597
      %v1636 = vpop.f32.mrb[0].mxu0
      %v1637 = vadd.f32 %v968, %v1636
      %v1638 = vpop.f32.mrb[0].mxu0
      %v1639 = vpop.f32.mrb[0].mxu0
      %v1640 = vpop.f32.mrb[0].mxu0
      %1641 = vdwg.mxu0
      %v1643 = vsel %vm1089, %v1005, 0
      %v1646 = vsel %vm1089, %v1045, 0
      %1648 = vmatprep.subr.bf16.mxu0 0
      %1649 = vmatpush1.bf16.xpose.msra.mxu0 %v1646
      %1650 = vmatprep.subr.bf16.mxu0 0
      %1651 = vmatpush1.bf16.xpose.msra.mxu0 0
      %1652 = vmatprep.subr.bf16.mxu0 0
      %1653 = vmatpush1.bf16.xpose.msra.mxu0 0
      %1654 = vmatprep.subr.bf16.mxu0 0
      %1655 = vmatpush1.bf16.xpose.msra.mxu0 0
      %1656 = vmatprep.subr.bf16.mxu0 0
      %1657 = vmatpush1.bf16.xpose.msra.mxu0 0
      %1658 = vmatprep.subr.bf16.mxu0 0
      %1659 = vmatpush1.bf16.xpose.msra.mxu0 0
      %1660 = vmatprep.subr.bf16.mxu0 0
      %1661 = vmatpush1.bf16.xpose.msra.mxu0 0
      %1662 = vmatprep.subr.bf16.mxu0 0
      %1663 = vmatpush1.bf16.xpose.msra.mxu0 0
      %1664 = vmatprep.subr.bf16.mxu0 0
      %1665 = vmatpush1.bf16.xpose.msra.mxu0 0
      %1666 = vmatprep.subr.bf16.mxu0 0
      %1667 = vmatpush1.bf16.xpose.msra.mxu0 0
      %1668 = vmatprep.subr.bf16.mxu0 0
      %1669 = vmatpush1.bf16.xpose.msra.mxu0 0
      %1670 = vmatprep.subr.bf16.mxu0 0
      %1671 = vmatpush1.bf16.xpose.msra.mxu0 0
      %1672 = vmatprep.subr.bf16.mxu0 0
      %1673 = vmatpush1.bf16.xpose.msra.mxu0 0
      %1674 = vmatprep.subr.bf16.mxu0 0
      %1675 = vmatpush1.bf16.xpose.msra.mxu0 0
      %1676 = vmatprep.subr.bf16.mxu0 0
      %1677 = vmatpush1.bf16.xpose.msra.mxu0 0
      %1678 = vmatprep.subr.bf16.mxu0 0
      %1679 = vmatpush1.bf16.xpose.msra.mxu0 0
      %1680 = vmatprep.mubr.bf16.mxu0 0
      %1681 = vmatmul.mubr.bf16.gmra.mrb[0].mxu0 %v1643
      %v1682 = vpop.f32.mrb[0].mxu0
      %v1683 = vadd.f32 %v968, %v1682
      %v1684 = vpop.f32.mrb[0].mxu0
      %v1685 = vpop.f32.mrb[0].mxu0
      %v1686 = vpop.f32.mrb[0].mxu0
      %1687 = vdwg.mxu0
      %v1689 = vsel %vm1089, %v1006, 0
      %v1692 = vsel %vm1089, %v1046, 0
      %1694 = vmatprep.subr.bf16.mxu0 0
      %1695 = vmatpush1.bf16.xpose.msra.mxu0 %v1692
      %1696 = vmatprep.subr.bf16.mxu0 0
      %1697 = vmatpush1.bf16.xpose.msra.mxu0 0
      %1698 = vmatprep.subr.bf16.mxu0 0
      %1699 = vmatpush1.bf16.xpose.msra.mxu0 0
      %1700 = vmatprep.subr.bf16.mxu0 0
      %1701 = vmatpush1.bf16.xpose.msra.mxu0 0
      %1702 = vmatprep.subr.bf16.mxu0 0
      %1703 = vmatpush1.bf16.xpose.msra.mxu0 0
      %1704 = vmatprep.subr.bf16.mxu0 0
      %1705 = vmatpush1.bf16.xpose.msra.mxu0 0
      %1706 = vmatprep.subr.bf16.mxu0 0
      %1707 = vmatpush1.bf16.xpose.msra.mxu0 0
      %1708 = vmatprep.subr.bf16.mxu0 0
      %1709 = vmatpush1.bf16.xpose.msra.mxu0 0
      %1710 = vmatprep.subr.bf16.mxu0 0
      %1711 = vmatpush1.bf16.xpose.msra.mxu0 0
      %1712 = vmatprep.subr.bf16.mxu0 0
      %1713 = vmatpush1.bf16.xpose.msra.mxu0 0
      %1714 = vmatprep.subr.bf16.mxu0 0
      %1715 = vmatpush1.bf16.xpose.msra.mxu0 0
      %1716 = vmatprep.subr.bf16.mxu0 0
      %1717 = vmatpush1.bf16.xpose.msra.mxu0 0
      %1718 = vmatprep.subr.bf16.mxu0 0
      %1719 = vmatpush1.bf16.xpose.msra.mxu0 0
      %1720 = vmatprep.subr.bf16.mxu0 0
      %1721 = vmatpush1.bf16.xpose.msra.mxu0 0
      %1722 = vmatprep.subr.bf16.mxu0 0
      %1723 = vmatpush1.bf16.xpose.msra.mxu0 0
      %1724 = vmatprep.subr.bf16.mxu0 0
      %1725 = vmatpush1.bf16.xpose.msra.mxu0 0
      %1726 = vmatprep.mubr.bf16.mxu0 0
      %1727 = vmatmul.mubr.bf16.gmra.mrb[0].mxu0 %v1689
      %v1728 = vpop.f32.mrb[0].mxu0
      %v1729 = vadd.f32 %v968, %v1728
      %v1730 = vpop.f32.mrb[0].mxu0
      %v1731 = vpop.f32.mrb[0].mxu0
      %v1732 = vpop.f32.mrb[0].mxu0
      %1733 = vdwg.mxu0
      %v1735 = vsel %vm1089, %v1007, 0
      %v1738 = vsel %vm1089, %v1047, 0
      %1740 = vmatprep.subr.bf16.mxu0 0
      %1741 = vmatpush1.bf16.xpose.msra.mxu0 %v1738
      %1742 = vmatprep.subr.bf16.mxu0 0
      %1743 = vmatpush1.bf16.xpose.msra.mxu0 0
      %1744 = vmatprep.subr.bf16.mxu0 0
      %1745 = vmatpush1.bf16.xpose.msra.mxu0 0
      %1746 = vmatprep.subr.bf16.mxu0 0
      %1747 = vmatpush1.bf16.xpose.msra.mxu0 0
      %1748 = vmatprep.subr.bf16.mxu0 0
      %1749 = vmatpush1.bf16.xpose.msra.mxu0 0
      %1750 = vmatprep.subr.bf16.mxu0 0
      %1751 = vmatpush1.bf16.xpose.msra.mxu0 0
      %1752 = vmatprep.subr.bf16.mxu0 0
      %1753 = vmatpush1.bf16.xpose.msra.mxu0 0
      %1754 = vmatprep.subr.bf16.mxu0 0
      %1755 = vmatpush1.bf16.xpose.msra.mxu0 0
      %1756 = vmatprep.subr.bf16.mxu0 0
      %1757 = vmatpush1.bf16.xpose.msra.mxu0 0
      %1758 = vmatprep.subr.bf16.mxu0 0
      %1759 = vmatpush1.bf16.xpose.msra.mxu0 0
      %1760 = vmatprep.subr.bf16.mxu0 0
      %1761 = vmatpush1.bf16.xpose.msra.mxu0 0
      %1762 = vmatprep.subr.bf16.mxu0 0
      %1763 = vmatpush1.bf16.xpose.msra.mxu0 0
      %1764 = vmatprep.subr.bf16.mxu0 0
      %1765 = vmatpush1.bf16.xpose.msra.mxu0 0
      %1766 = vmatprep.subr.bf16.mxu0 0
      %1767 = vmatpush1.bf16.xpose.msra.mxu0 0
      %1768 = vmatprep.subr.bf16.mxu0 0
      %1769 = vmatpush1.bf16.xpose.msra.mxu0 0
      %1770 = vmatprep.subr.bf16.mxu0 0
      %1771 = vmatpush1.bf16.xpose.msra.mxu0 0
      %1772 = vmatprep.mubr.bf16.mxu0 0
      %1773 = vmatmul.mubr.bf16.gmra.mrb[0].mxu0 %v1735
      %v1774 = vpop.f32.mrb[0].mxu0
      %v1775 = vadd.f32 %v968, %v1774
      %v1776 = vpop.f32.mrb[0].mxu0
      %v1777 = vpop.f32.mrb[0].mxu0
      %v1778 = vpop.f32.mrb[0].mxu0
      %1779 = vdwg.mxu0
      %v1781 = vsel %vm1089, %v1008, 0
      %v1784 = vsel %vm1089, %v1048, 0
      %1786 = vmatprep.subr.bf16.mxu0 0
      %1787 = vmatpush1.bf16.xpose.msra.mxu0 %v1784
      %1788 = vmatprep.subr.bf16.mxu0 0
      %1789 = vmatpush1.bf16.xpose.msra.mxu0 0
      %1790 = vmatprep.subr.bf16.mxu0 0
      %1791 = vmatpush1.bf16.xpose.msra.mxu0 0
      %1792 = vmatprep.subr.bf16.mxu0 0
      %1793 = vmatpush1.bf16.xpose.msra.mxu0 0
      %1794 = vmatprep.subr.bf16.mxu0 0
      %1795 = vmatpush1.bf16.xpose.msra.mxu0 0
      %1796 = vmatprep.subr.bf16.mxu0 0
      %1797 = vmatpush1.bf16.xpose.msra.mxu0 0
      %1798 = vmatprep.subr.bf16.mxu0 0
      %1799 = vmatpush1.bf16.xpose.msra.mxu0 0
      %1800 = vmatprep.subr.bf16.mxu0 0
      %1801 = vmatpush1.bf16.xpose.msra.mxu0 0
      %1802 = vmatprep.subr.bf16.mxu0 0
      %1803 = vmatpush1.bf16.xpose.msra.mxu0 0
      %1804 = vmatprep.subr.bf16.mxu0 0
      %1805 = vmatpush1.bf16.xpose.msra.mxu0 0
      %1806 = vmatprep.subr.bf16.mxu0 0
      %1807 = vmatpush1.bf16.xpose.msra.mxu0 0
      %1808 = vmatprep.subr.bf16.mxu0 0
      %1809 = vmatpush1.bf16.xpose.msra.mxu0 0
      %1810 = vmatprep.subr.bf16.mxu0 0
      %1811 = vmatpush1.bf16.xpose.msra.mxu0 0
      %1812 = vmatprep.subr.bf16.mxu0 0
      %1813 = vmatpush1.bf16.xpose.msra.mxu0 0
      %1814 = vmatprep.subr.bf16.mxu0 0
      %1815 = vmatpush1.bf16.xpose.msra.mxu0 0
      %1816 = vmatprep.subr.bf16.mxu0 0
      %1817 = vmatpush1.bf16.xpose.msra.mxu0 0
      %1818 = vmatprep.mubr.bf16.mxu0 0
      %1819 = vmatmul.mubr.bf16.gmra.mrb[0].mxu0 %v1781
      %v1820 = vpop.f32.mrb[0].mxu0
      %v1821 = vadd.f32 %v968, %v1820
      %v1822 = vpop.f32.mrb[0].mxu0
      %v1823 = vpop.f32.mrb[0].mxu0
      %v1824 = vpop.f32.mrb[0].mxu0
      %1825 = vdwg.mxu0
      %vm1826 = vcmask 64512
      %v1827 = vsel %vm1826, %v1131, -inf
      %1828 = vmax.xlane.f32.xlu0 %v1827
      %v1829 = vpop.xlane.xlu0 %1828
      %v1830 = vsel %vm1826, %v1177, -inf
      %1831 = vmax.xlane.f32.xlu0 %v1830
      %v1832 = vpop.xlane.xlu0 %1831
      %v1833 = vsel %vm1826, %v1223, -inf
      %1834 = vmax.xlane.f32.xlu0 %v1833
      %v1835 = vpop.xlane.xlu0 %1834
      %v1836 = vsel %vm1826, %v1269, -inf
      %1837 = vmax.xlane.f32.xlu0 %v1836
      %v1838 = vpop.xlane.xlu0 %1837
      %v1839 = vsel %vm1826, %v1315, -inf
      %1840 = vmax.xlane.f32.xlu0 %v1839
      %v1841 = vpop.xlane.xlu0 %1840
      %v1842 = vsel %vm1826, %v1361, -inf
      %1843 = vmax.xlane.f32.xlu0 %v1842
      %v1844 = vpop.xlane.xlu0 %1843
      %v1845 = vsel %vm1826, %v1407, -inf
      %1846 = vmax.xlane.f32.xlu0 %v1845
      %v1847 = vpop.xlane.xlu0 %1846
      %v1848 = vsel %vm1826, %v1453, -inf
      %1849 = vmax.xlane.f32.xlu0 %v1848
      %v1850 = vpop.xlane.xlu0 %1849
      %v1851 = vsel %vm1826, %v1499, -inf
      %1852 = vmax.xlane.f32.xlu0 %v1851
      %v1853 = vpop.xlane.xlu0 %1852
      %v1854 = vsel %vm1826, %v1545, -inf
      %1855 = vmax.xlane.f32.xlu0 %v1854
      %v1856 = vpop.xlane.xlu0 %1855
      %v1857 = vsel %vm1826, %v1591, -inf
      %1858 = vmax.xlane.f32.xlu0 %v1857
      %v1859 = vpop.xlane.xlu0 %1858
      %v1860 = vsel %vm1826, %v1637, -inf
      %1861 = vmax.xlane.f32.xlu0 %v1860
      %v1862 = vpop.xlane.xlu0 %1861
      %v1863 = vsel %vm1826, %v1683, -inf
      %1864 = vmax.xlane.f32.xlu0 %v1863
      %v1865 = vpop.xlane.xlu0 %1864
      %v1866 = vsel %vm1826, %v1729, -inf
      %1867 = vmax.xlane.f32.xlu0 %v1866
      %v1868 = vpop.xlane.xlu0 %1867
      %v1869 = vsel %vm1826, %v1775, -inf
      %1870 = vmax.xlane.f32.xlu0 %v1869
      %v1871 = vpop.xlane.xlu0 %1870
      %v1872 = vsel %vm1826, %v1821, -inf
      %1873 = vmax.xlane.f32.xlu0 %v1872
      %v1874 = vpop.xlane.xlu0 %1873
      %v1875 = vsub.f32 %v1131, %v1829
      %v1876 = vsub.f32 %v1177, %v1832
      %v1877 = vsub.f32 %v1223, %v1835
      %v1878 = vsub.f32 %v1269, %v1838
      %v1879 = vsub.f32 %v1315, %v1841
      %v1880 = vsub.f32 %v1361, %v1844
      %v1881 = vsub.f32 %v1407, %v1847
      %v1882 = vsub.f32 %v1453, %v1850
      %v1883 = vsub.f32 %v1499, %v1853
      %v1884 = vsub.f32 %v1545, %v1856
      %v1885 = vsub.f32 %v1591, %v1859
      %v1886 = vsub.f32 %v1637, %v1862
      %v1887 = vsub.f32 %v1683, %v1865
      %v1888 = vsub.f32 %v1729, %v1868
      %v1889 = vsub.f32 %v1775, %v1871
      %v1890 = vsub.f32 %v1821, %v1874
      %v1891 = vmul.f32 %v1875, 1.442695
      %v1892 = vpow.pop %v1891
      %v1893 = vmul.f32 %v1876, 1.442695
      %v1894 = vpow.pop %v1893
      %v1895 = vmul.f32 %v1877, 1.442695
      %v1896 = vpow.pop %v1895
      %v1897 = vmul.f32 %v1878, 1.442695
      %v1898 = vpow.pop %v1897
      %v1899 = vmul.f32 %v1879, 1.442695
      %v1900 = vpow.pop %v1899
      %v1901 = vmul.f32 %v1880, 1.442695
      %v1902 = vpow.pop %v1901
      %v1903 = vmul.f32 %v1881, 1.442695
      %v1904 = vpow.pop %v1903
      %v1905 = vmul.f32 %v1882, 1.442695
      %v1906 = vpow.pop %v1905
      %v1907 = vmul.f32 %v1883, 1.442695
      %v1908 = vpow.pop %v1907
      %v1909 = vmul.f32 %v1884, 1.442695
      %v1910 = vpow.pop %v1909
      %v1911 = vmul.f32 %v1885, 1.442695
      %v1912 = vpow.pop %v1911
      %v1913 = vmul.f32 %v1886, 1.442695
      %v1914 = vpow.pop %v1913
      %v1915 = vmul.f32 %v1887, 1.442695
      %v1916 = vpow.pop %v1915
      %v1917 = vmul.f32 %v1888, 1.442695
      %v1918 = vpow.pop %v1917
      %v1919 = vmul.f32 %v1889, 1.442695
      %v1920 = vpow.pop %v1919
      %v1921 = vmul.f32 %v1890, 1.442695
      %v1922 = vpow.pop %v1921
      %v1923 = vsel %vm1826, %v1892, 0.0
      %1924 = vadd.xlane.f32.xlu0 %v1923
      %v1925 = vpop.xlane.xlu0 %1924
      %v1926 = vsel %vm1826, %v1894, 0.0
      %1927 = vadd.xlane.f32.xlu0 %v1926
      %v1928 = vpop.xlane.xlu0 %1927
      %v1929 = vsel %vm1826, %v1896, 0.0
      %1930 = vadd.xlane.f32.xlu0 %v1929
      %v1931 = vpop.xlane.xlu0 %1930
      %v1932 = vsel %vm1826, %v1898, 0.0
      %1933 = vadd.xlane.f32.xlu0 %v1932
      %v1934 = vpop.xlane.xlu0 %1933
      %v1935 = vsel %vm1826, %v1900, 0.0
      %1936 = vadd.xlane.f32.xlu0 %v1935
      %v1937 = vpop.xlane.xlu0 %1936
      %v1938 = vsel %vm1826, %v1902, 0.0
      %1939 = vadd.xlane.f32.xlu0 %v1938
      %v1940 = vpop.xlane.xlu0 %1939
      %v1941 = vsel %vm1826, %v1904, 0.0
      %1942 = vadd.xlane.f32.xlu0 %v1941
      %v1943 = vpop.xlane.xlu0 %1942
      %v1944 = vsel %vm1826, %v1906, 0.0
      %1945 = vadd.xlane.f32.xlu0 %v1944
      %v1946 = vpop.xlane.xlu0 %1945
      %v1947 = vsel %vm1826, %v1908, 0.0
      %1948 = vadd.xlane.f32.xlu0 %v1947
      %v1949 = vpop.xlane.xlu0 %1948
      %v1950 = vsel %vm1826, %v1910, 0.0
      %1951 = vadd.xlane.f32.xlu0 %v1950
      %v1952 = vpop.xlane.xlu0 %1951
      %v1953 = vsel %vm1826, %v1912, 0.0
      %1954 = vadd.xlane.f32.xlu0 %v1953
      %v1955 = vpop.xlane.xlu0 %1954
      %v1956 = vsel %vm1826, %v1914, 0.0
      %1957 = vadd.xlane.f32.xlu0 %v1956
      %v1958 = vpop.xlane.xlu0 %1957
      %v1959 = vsel %vm1826, %v1916, 0.0
      %1960 = vadd.xlane.f32.xlu0 %v1959
      %v1961 = vpop.xlane.xlu0 %1960
      %v1962 = vsel %vm1826, %v1918, 0.0
      %1963 = vadd.xlane.f32.xlu0 %v1962
      %v1964 = vpop.xlane.xlu0 %1963
      %v1965 = vsel %vm1826, %v1920, 0.0
      %1966 = vadd.xlane.f32.xlu0 %v1965
      %v1967 = vpop.xlane.xlu0 %1966
      %v1968 = vsel %vm1826, %v1922, 0.0
      %1969 = vadd.xlane.f32.xlu0 %v1968
      %v1970 = vpop.xlane.xlu0 %1969
      %v1971 = vrcp.pop %v1925
      %v1972 = vrcp.pop %v1928
      %v1973 = vrcp.pop %v1931
      %v1974 = vrcp.pop %v1934
      %v1975 = vrcp.pop %v1937
      %v1976 = vrcp.pop %v1940
      %v1977 = vrcp.pop %v1943
      %v1978 = vrcp.pop %v1946
      %v1979 = vrcp.pop %v1949
      %v1980 = vrcp.pop %v1952
      %v1981 = vrcp.pop %v1955
      %v1982 = vrcp.pop %v1958
      %v1983 = vrcp.pop %v1961
      %v1984 = vrcp.pop %v1964
      %v1985 = vrcp.pop %v1967
      %v1986 = vrcp.pop %v1970
      %v1987 = vmul.f32 %v1892, %v1971
      %v1988 = vmul.f32 %v1894, %v1972
      %v1989 = vmul.f32 %v1896, %v1973
      %v1990 = vmul.f32 %v1898, %v1974
      %v1991 = vmul.f32 %v1900, %v1975
      %v1992 = vmul.f32 %v1902, %v1976
      %v1993 = vmul.f32 %v1904, %v1977
      %v1994 = vmul.f32 %v1906, %v1978
      %v1995 = vmul.f32 %v1908, %v1979
      %v1996 = vmul.f32 %v1910, %v1980
      %v1997 = vmul.f32 %v1912, %v1981
      %v1998 = vmul.f32 %v1914, %v1982
      %v1999 = vmul.f32 %v1916, %v1983
      %v2000 = vmul.f32 %v1918, %v1984
      %v2001 = vmul.f32 %v1920, %v1985
      %v2002 = vmul.f32 %v1922, %v1986
      %v2003 = vpack.c.bf16 %v1987, %v1987
      %v2004 = vpack.c.bf16 %v1988, %v1988
      %v2005 = vpack.c.bf16 %v1989, %v1989
      %v2006 = vpack.c.bf16 %v1990, %v1990
      %v2007 = vpack.c.bf16 %v1991, %v1991
      %v2008 = vpack.c.bf16 %v1992, %v1992
      %v2009 = vpack.c.bf16 %v1993, %v1993
      %v2010 = vpack.c.bf16 %v1994, %v1994
      %v2011 = vpack.c.bf16 %v1995, %v1995
      %v2012 = vpack.c.bf16 %v1996, %v1996
      %v2013 = vpack.c.bf16 %v1997, %v1997
      %v2014 = vpack.c.bf16 %v1998, %v1998
      %v2015 = vpack.c.bf16 %v1999, %v1999
      %v2016 = vpack.c.bf16 %v2000, %v2000
      %v2017 = vpack.c.bf16 %v2001, %v2001
      %v2018 = vpack.c.bf16 %v2002, %v2002
      %v2020 = vsel %vm1826, %v2003, 0
      %vm2022 = vcmask 1043456
      %v2024 = vsel %vm2022, %v1073, 0
      %2026 = vmatprep.subr.bf16.mxu0 0
      %2027 = vmatpush1.bf16.msra.mxu0 %v2024
      %2028 = vmatprep.subr.bf16.mxu0 0
      %2029 = vmatpush1.bf16.msra.mxu0 0
      %2030 = vmatprep.subr.bf16.mxu0 0
      %2031 = vmatpush1.bf16.msra.mxu0 0
      %2032 = vmatprep.subr.bf16.mxu0 0
      %2033 = vmatpush1.bf16.msra.mxu0 0
      %2034 = vmatprep.subr.bf16.mxu0 0
      %2035 = vmatpush1.bf16.msra.mxu0 0
      %2036 = vmatprep.subr.bf16.mxu0 0
      %2037 = vmatpush1.bf16.msra.mxu0 0
      %2038 = vmatprep.subr.bf16.mxu0 0
      %2039 = vmatpush1.bf16.msra.mxu0 0
      %2040 = vmatprep.subr.bf16.mxu0 0
      %2041 = vmatpush1.bf16.msra.mxu0 0
      %2042 = vmatprep.subr.bf16.mxu0 0
      %2043 = vmatpush1.bf16.msra.mxu0 0
      %2044 = vmatprep.subr.bf16.mxu0 0
      %2045 = vmatpush1.bf16.msra.mxu0 0
      %2046 = vmatprep.subr.bf16.mxu0 0
      %2047 = vmatpush1.bf16.msra.mxu0 0
      %2048 = vmatprep.subr.bf16.mxu0 0
      %2049 = vmatpush1.bf16.msra.mxu0 0
      %2050 = vmatprep.subr.bf16.mxu0 0
      %2051 = vmatpush1.bf16.msra.mxu0 0
      %2052 = vmatprep.subr.bf16.mxu0 0
      %2053 = vmatpush1.bf16.msra.mxu0 0
      %2054 = vmatprep.subr.bf16.mxu0 0
      %2055 = vmatpush1.bf16.msra.mxu0 0
      %2056 = vmatprep.subr.bf16.mxu0 0
      %2057 = vmatpush1.bf16.msra.mxu0 0
      %2058 = vmatprep.mubr.bf16.mxu0 0
      %2059 = vmatmul.mubr.bf16.gmra.mrb[0].mxu0 %v2020
      %v2060 = vpop.f32.mrb[0].mxu0
      %v2061 = vadd.f32 0.0, %v2060
      %v2062 = vpop.f32.mrb[0].mxu0
      %v2063 = vpop.f32.mrb[0].mxu0
      %v2064 = vpop.f32.mrb[0].mxu0
      %2065 = vdwg.mxu0
      %v2067 = vsel %vm1826, %v2004, 0
      %v2070 = vsel %vm2022, %v1074, 0
      %2072 = vmatprep.subr.bf16.mxu0 0
      %2073 = vmatpush1.bf16.msra.mxu0 %v2070
      %2074 = vmatprep.subr.bf16.mxu0 0
      %2075 = vmatpush1.bf16.msra.mxu0 0
      %2076 = vmatprep.subr.bf16.mxu0 0
      %2077 = vmatpush1.bf16.msra.mxu0 0
      %2078 = vmatprep.subr.bf16.mxu0 0
      %2079 = vmatpush1.bf16.msra.mxu0 0
      %2080 = vmatprep.subr.bf16.mxu0 0
      %2081 = vmatpush1.bf16.msra.mxu0 0
      %2082 = vmatprep.subr.bf16.mxu0 0
      %2083 = vmatpush1.bf16.msra.mxu0 0
      %2084 = vmatprep.subr.bf16.mxu0 0
      %2085 = vmatpush1.bf16.msra.mxu0 0
      %2086 = vmatprep.subr.bf16.mxu0 0
      %2087 = vmatpush1.bf16.msra.mxu0 0
      %2088 = vmatprep.subr.bf16.mxu0 0
      %2089 = vmatpush1.bf16.msra.mxu0 0
      %2090 = vmatprep.subr.bf16.mxu0 0
      %2091 = vmatpush1.bf16.msra.mxu0 0
      %2092 = vmatprep.subr.bf16.mxu0 0
      %2093 = vmatpush1.bf16.msra.mxu0 0
      %2094 = vmatprep.subr.bf16.mxu0 0
      %2095 = vmatpush1.bf16.msra.mxu0 0
      %2096 = vmatprep.subr.bf16.mxu0 0
      %2097 = vmatpush1.bf16.msra.mxu0 0
      %2098 = vmatprep.subr.bf16.mxu0 0
      %2099 = vmatpush1.bf16.msra.mxu0 0
      %2100 = vmatprep.subr.bf16.mxu0 0
      %2101 = vmatpush1.bf16.msra.mxu0 0
      %2102 = vmatprep.subr.bf16.mxu0 0
      %2103 = vmatpush1.bf16.msra.mxu0 0
      %2104 = vmatprep.mubr.bf16.mxu0 0
      %2105 = vmatmul.mubr.bf16.gmra.mrb[0].mxu0 %v2067
      %v2106 = vpop.f32.mrb[0].mxu0
      %v2107 = vadd.f32 0.0, %v2106
      %v2108 = vpop.f32.mrb[0].mxu0
      %v2109 = vpop.f32.mrb[0].mxu0
      %v2110 = vpop.f32.mrb[0].mxu0
      %2111 = vdwg.mxu0
      %v2113 = vsel %vm1826, %v2005, 0
      %v2116 = vsel %vm2022, %v1075, 0
      %2118 = vmatprep.subr.bf16.mxu0 0
      %2119 = vmatpush1.bf16.msra.mxu0 %v2116
      %2120 = vmatprep.subr.bf16.mxu0 0
      %2121 = vmatpush1.bf16.msra.mxu0 0
      %2122 = vmatprep.subr.bf16.mxu0 0
      %2123 = vmatpush1.bf16.msra.mxu0 0
      %2124 = vmatprep.subr.bf16.mxu0 0
      %2125 = vmatpush1.bf16.msra.mxu0 0
      %2126 = vmatprep.subr.bf16.mxu0 0
      %2127 = vmatpush1.bf16.msra.mxu0 0
      %2128 = vmatprep.subr.bf16.mxu0 0
      %2129 = vmatpush1.bf16.msra.mxu0 0
      %2130 = vmatprep.subr.bf16.mxu0 0
      %2131 = vmatpush1.bf16.msra.mxu0 0
      %2132 = vmatprep.subr.bf16.mxu0 0
      %2133 = vmatpush1.bf16.msra.mxu0 0
      %2134 = vmatprep.subr.bf16.mxu0 0
      %2135 = vmatpush1.bf16.msra.mxu0 0
      %2136 = vmatprep.subr.bf16.mxu0 0
      %2137 = vmatpush1.bf16.msra.mxu0 0
      %2138 = vmatprep.subr.bf16.mxu0 0
      %2139 = vmatpush1.bf16.msra.mxu0 0
      %2140 = vmatprep.subr.bf16.mxu0 0
      %2141 = vmatpush1.bf16.msra.mxu0 0
      %2142 = vmatprep.subr.bf16.mxu0 0
      %2143 = vmatpush1.bf16.msra.mxu0 0
      %2144 = vmatprep.subr.bf16.mxu0 0
      %2145 = vmatpush1.bf16.msra.mxu0 0
      %2146 = vmatprep.subr.bf16.mxu0 0
      %2147 = vmatpush1.bf16.msra.mxu0 0
      %2148 = vmatprep.subr.bf16.mxu0 0
      %2149 = vmatpush1.bf16.msra.mxu0 0
      %2150 = vmatprep.mubr.bf16.mxu0 0
      %2151 = vmatmul.mubr.bf16.gmra.mrb[0].mxu0 %v2113
      %v2152 = vpop.f32.mrb[0].mxu0
      %v2153 = vadd.f32 0.0, %v2152
      %v2154 = vpop.f32.mrb[0].mxu0
      %v2155 = vpop.f32.mrb[0].mxu0
      %v2156 = vpop.f32.mrb[0].mxu0
      %2157 = vdwg.mxu0
      %v2159 = vsel %vm1826, %v2006, 0
      %v2162 = vsel %vm2022, %v1076, 0
      %2164 = vmatprep.subr.bf16.mxu0 0
      %2165 = vmatpush1.bf16.msra.mxu0 %v2162
      %2166 = vmatprep.subr.bf16.mxu0 0
      %2167 = vmatpush1.bf16.msra.mxu0 0
      %2168 = vmatprep.subr.bf16.mxu0 0
      %2169 = vmatpush1.bf16.msra.mxu0 0
      %2170 = vmatprep.subr.bf16.mxu0 0
      %2171 = vmatpush1.bf16.msra.mxu0 0
      %2172 = vmatprep.subr.bf16.mxu0 0
      %2173 = vmatpush1.bf16.msra.mxu0 0
      %2174 = vmatprep.subr.bf16.mxu0 0
      %2175 = vmatpush1.bf16.msra.mxu0 0
      %2176 = vmatprep.subr.bf16.mxu0 0
      %2177 = vmatpush1.bf16.msra.mxu0 0
      %2178 = vmatprep.subr.bf16.mxu0 0
      %2179 = vmatpush1.bf16.msra.mxu0 0
      %2180 = vmatprep.subr.bf16.mxu0 0
      %2181 = vmatpush1.bf16.msra.mxu0 0
      %2182 = vmatprep.subr.bf16.mxu0 0
      %2183 = vmatpush1.bf16.msra.mxu0 0
      %2184 = vmatprep.subr.bf16.mxu0 0
      %2185 = vmatpush1.bf16.msra.mxu0 0
      %2186 = vmatprep.subr.bf16.mxu0 0
      %2187 = vmatpush1.bf16.msra.mxu0 0
      %2188 = vmatprep.subr.bf16.mxu0 0
      %2189 = vmatpush1.bf16.msra.mxu0 0
      %2190 = vmatprep.subr.bf16.mxu0 0
      %2191 = vmatpush1.bf16.msra.mxu0 0
      %2192 = vmatprep.subr.bf16.mxu0 0
      %2193 = vmatpush1.bf16.msra.mxu0 0
      %2194 = vmatprep.subr.bf16.mxu0 0
      %2195 = vmatpush1.bf16.msra.mxu0 0
      %2196 = vmatprep.mubr.bf16.mxu0 0
      %2197 = vmatmul.mubr.bf16.gmra.mrb[0].mxu0 %v2159
      %v2198 = vpop.f32.mrb[0].mxu0
      %v2199 = vadd.f32 0.0, %v2198
      %v2200 = vpop.f32.mrb[0].mxu0
      %v2201 = vpop.f32.mrb[0].mxu0
      %v2202 = vpop.f32.mrb[0].mxu0
      %2203 = vdwg.mxu0
      %v2205 = vsel %vm1826, %v2007, 0
      %v2208 = vsel %vm2022, %v1077, 0
      %2210 = vmatprep.subr.bf16.mxu0 0
      %2211 = vmatpush1.bf16.msra.mxu0 %v2208
      %2212 = vmatprep.subr.bf16.mxu0 0
      %2213 = vmatpush1.bf16.msra.mxu0 0
      %2214 = vmatprep.subr.bf16.mxu0 0
      %2215 = vmatpush1.bf16.msra.mxu0 0
      %2216 = vmatprep.subr.bf16.mxu0 0
      %2217 = vmatpush1.bf16.msra.mxu0 0
      %2218 = vmatprep.subr.bf16.mxu0 0
      %2219 = vmatpush1.bf16.msra.mxu0 0
      %2220 = vmatprep.subr.bf16.mxu0 0
      %2221 = vmatpush1.bf16.msra.mxu0 0
      %2222 = vmatprep.subr.bf16.mxu0 0
      %2223 = vmatpush1.bf16.msra.mxu0 0
      %2224 = vmatprep.subr.bf16.mxu0 0
      %2225 = vmatpush1.bf16.msra.mxu0 0
      %2226 = vmatprep.subr.bf16.mxu0 0
      %2227 = vmatpush1.bf16.msra.mxu0 0
      %2228 = vmatprep.subr.bf16.mxu0 0
      %2229 = vmatpush1.bf16.msra.mxu0 0
      %2230 = vmatprep.subr.bf16.mxu0 0
      %2231 = vmatpush1.bf16.msra.mxu0 0
      %2232 = vmatprep.subr.bf16.mxu0 0
      %2233 = vmatpush1.bf16.msra.mxu0 0
      %2234 = vmatprep.subr.bf16.mxu0 0
      %2235 = vmatpush1.bf16.msra.mxu0 0
      %2236 = vmatprep.subr.bf16.mxu0 0
      %2237 = vmatpush1.bf16.msra.mxu0 0
      %2238 = vmatprep.subr.bf16.mxu0 0
      %2239 = vmatpush1.bf16.msra.mxu0 0
      %2240 = vmatprep.subr.bf16.mxu0 0
      %2241 = vmatpush1.bf16.msra.mxu0 0
      %2242 = vmatprep.mubr.bf16.mxu0 0
      %2243 = vmatmul.mubr.bf16.gmra.mrb[0].mxu0 %v2205
      %v2244 = vpop.f32.mrb[0].mxu0
      %v2245 = vadd.f32 0.0, %v2244
      %v2246 = vpop.f32.mrb[0].mxu0
      %v2247 = vpop.f32.mrb[0].mxu0
      %v2248 = vpop.f32.mrb[0].mxu0
      %2249 = vdwg.mxu0
      %v2251 = vsel %vm1826, %v2008, 0
      %v2254 = vsel %vm2022, %v1078, 0
      %2256 = vmatprep.subr.bf16.mxu0 0
      %2257 = vmatpush1.bf16.msra.mxu0 %v2254
      %2258 = vmatprep.subr.bf16.mxu0 0
      %2259 = vmatpush1.bf16.msra.mxu0 0
      %2260 = vmatprep.subr.bf16.mxu0 0
      %2261 = vmatpush1.bf16.msra.mxu0 0
      %2262 = vmatprep.subr.bf16.mxu0 0
      %2263 = vmatpush1.bf16.msra.mxu0 0
      %2264 = vmatprep.subr.bf16.mxu0 0
      %2265 = vmatpush1.bf16.msra.mxu0 0
      %2266 = vmatprep.subr.bf16.mxu0 0
      %2267 = vmatpush1.bf16.msra.mxu0 0
      %2268 = vmatprep.subr.bf16.mxu0 0
      %2269 = vmatpush1.bf16.msra.mxu0 0
      %2270 = vmatprep.subr.bf16.mxu0 0
      %2271 = vmatpush1.bf16.msra.mxu0 0
      %2272 = vmatprep.subr.bf16.mxu0 0
      %2273 = vmatpush1.bf16.msra.mxu0 0
      %2274 = vmatprep.subr.bf16.mxu0 0
      %2275 = vmatpush1.bf16.msra.mxu0 0
      %2276 = vmatprep.subr.bf16.mxu0 0
      %2277 = vmatpush1.bf16.msra.mxu0 0
      %2278 = vmatprep.subr.bf16.mxu0 0
      %2279 = vmatpush1.bf16.msra.mxu0 0
      %2280 = vmatprep.subr.bf16.mxu0 0
      %2281 = vmatpush1.bf16.msra.mxu0 0
      %2282 = vmatprep.subr.bf16.mxu0 0
      %2283 = vmatpush1.bf16.msra.mxu0 0
      %2284 = vmatprep.subr.bf16.mxu0 0
      %2285 = vmatpush1.bf16.msra.mxu0 0
      %2286 = vmatprep.subr.bf16.mxu0 0
      %2287 = vmatpush1.bf16.msra.mxu0 0
      %2288 = vmatprep.mubr.bf16.mxu0 0
      %2289 = vmatmul.mubr.bf16.gmra.mrb[0].mxu0 %v2251
      %v2290 = vpop.f32.mrb[0].mxu0
      %v2291 = vadd.f32 0.0, %v2290
      %v2292 = vpop.f32.mrb[0].mxu0
      %v2293 = vpop.f32.mrb[0].mxu0
      %v2294 = vpop.f32.mrb[0].mxu0
      %2295 = vdwg.mxu0
      %v2297 = vsel %vm1826, %v2009, 0
      %v2300 = vsel %vm2022, %v1079, 0
      %2302 = vmatprep.subr.bf16.mxu0 0
      %2303 = vmatpush1.bf16.msra.mxu0 %v2300
      %2304 = vmatprep.subr.bf16.mxu0 0
      %2305 = vmatpush1.bf16.msra.mxu0 0
      %2306 = vmatprep.subr.bf16.mxu0 0
      %2307 = vmatpush1.bf16.msra.mxu0 0
      %2308 = vmatprep.subr.bf16.mxu0 0
      %2309 = vmatpush1.bf16.msra.mxu0 0
      %2310 = vmatprep.subr.bf16.mxu0 0
      %2311 = vmatpush1.bf16.msra.mxu0 0
      %2312 = vmatprep.subr.bf16.mxu0 0
      %2313 = vmatpush1.bf16.msra.mxu0 0
      %2314 = vmatprep.subr.bf16.mxu0 0
      %2315 = vmatpush1.bf16.msra.mxu0 0
      %2316 = vmatprep.subr.bf16.mxu0 0
      %2317 = vmatpush1.bf16.msra.mxu0 0
      %2318 = vmatprep.subr.bf16.mxu0 0
      %2319 = vmatpush1.bf16.msra.mxu0 0
      %2320 = vmatprep.subr.bf16.mxu0 0
      %2321 = vmatpush1.bf16.msra.mxu0 0
      %2322 = vmatprep.subr.bf16.mxu0 0
      %2323 = vmatpush1.bf16.msra.mxu0 0
      %2324 = vmatprep.subr.bf16.mxu0 0
      %2325 = vmatpush1.bf16.msra.mxu0 0
      %2326 = vmatprep.subr.bf16.mxu0 0
      %2327 = vmatpush1.bf16.msra.mxu0 0
      %2328 = vmatprep.subr.bf16.mxu0 0
      %2329 = vmatpush1.bf16.msra.mxu0 0
      %2330 = vmatprep.subr.bf16.mxu0 0
      %2331 = vmatpush1.bf16.msra.mxu0 0
      %2332 = vmatprep.subr.bf16.mxu0 0
      %2333 = vmatpush1.bf16.msra.mxu0 0
      %2334 = vmatprep.mubr.bf16.mxu0 0
      %2335 = vmatmul.mubr.bf16.gmra.mrb[0].mxu0 %v2297
      %v2336 = vpop.f32.mrb[0].mxu0
      %v2337 = vadd.f32 0.0, %v2336
      %v2338 = vpop.f32.mrb[0].mxu0
      %v2339 = vpop.f32.mrb[0].mxu0
      %v2340 = vpop.f32.mrb[0].mxu0
      %2341 = vdwg.mxu0
      %v2343 = vsel %vm1826, %v2010, 0
      %v2346 = vsel %vm2022, %v1080, 0
      %2348 = vmatprep.subr.bf16.mxu0 0
      %2349 = vmatpush1.bf16.msra.mxu0 %v2346
      %2350 = vmatprep.subr.bf16.mxu0 0
      %2351 = vmatpush1.bf16.msra.mxu0 0
      %2352 = vmatprep.subr.bf16.mxu0 0
      %2353 = vmatpush1.bf16.msra.mxu0 0
      %2354 = vmatprep.subr.bf16.mxu0 0
      %2355 = vmatpush1.bf16.msra.mxu0 0
      %2356 = vmatprep.subr.bf16.mxu0 0
      %2357 = vmatpush1.bf16.msra.mxu0 0
      %2358 = vmatprep.subr.bf16.mxu0 0
      %2359 = vmatpush1.bf16.msra.mxu0 0
      %2360 = vmatprep.subr.bf16.mxu0 0
      %2361 = vmatpush1.bf16.msra.mxu0 0
      %2362 = vmatprep.subr.bf16.mxu0 0
      %2363 = vmatpush1.bf16.msra.mxu0 0
      %2364 = vmatprep.subr.bf16.mxu0 0
      %2365 = vmatpush1.bf16.msra.mxu0 0
      %2366 = vmatprep.subr.bf16.mxu0 0
      %2367 = vmatpush1.bf16.msra.mxu0 0
      %2368 = vmatprep.subr.bf16.mxu0 0
      %2369 = vmatpush1.bf16.msra.mxu0 0
      %2370 = vmatprep.subr.bf16.mxu0 0
      %2371 = vmatpush1.bf16.msra.mxu0 0
      %2372 = vmatprep.subr.bf16.mxu0 0
      %2373 = vmatpush1.bf16.msra.mxu0 0
      %2374 = vmatprep.subr.bf16.mxu0 0
      %2375 = vmatpush1.bf16.msra.mxu0 0
      %2376 = vmatprep.subr.bf16.mxu0 0
      %2377 = vmatpush1.bf16.msra.mxu0 0
      %2378 = vmatprep.subr.bf16.mxu0 0
      %2379 = vmatpush1.bf16.msra.mxu0 0
      %2380 = vmatprep.mubr.bf16.mxu0 0
      %2381 = vmatmul.mubr.bf16.gmra.mrb[0].mxu0 %v2343
      %v2382 = vpop.f32.mrb[0].mxu0
      %v2383 = vadd.f32 0.0, %v2382
      %v2384 = vpop.f32.mrb[0].mxu0
      %v2385 = vpop.f32.mrb[0].mxu0
      %v2386 = vpop.f32.mrb[0].mxu0
      %2387 = vdwg.mxu0
      %v2389 = vsel %vm1826, %v2011, 0
      %v2392 = vsel %vm2022, %v1081, 0
      %2394 = vmatprep.subr.bf16.mxu0 0
      %2395 = vmatpush1.bf16.msra.mxu0 %v2392
      %2396 = vmatprep.subr.bf16.mxu0 0
      %2397 = vmatpush1.bf16.msra.mxu0 0
      %2398 = vmatprep.subr.bf16.mxu0 0
      %2399 = vmatpush1.bf16.msra.mxu0 0
      %2400 = vmatprep.subr.bf16.mxu0 0
      %2401 = vmatpush1.bf16.msra.mxu0 0
      %2402 = vmatprep.subr.bf16.mxu0 0
      %2403 = vmatpush1.bf16.msra.mxu0 0
      %2404 = vmatprep.subr.bf16.mxu0 0
      %2405 = vmatpush1.bf16.msra.mxu0 0
      %2406 = vmatprep.subr.bf16.mxu0 0
      %2407 = vmatpush1.bf16.msra.mxu0 0
      %2408 = vmatprep.subr.bf16.mxu0 0
      %2409 = vmatpush1.bf16.msra.mxu0 0
      %2410 = vmatprep.subr.bf16.mxu0 0
      %2411 = vmatpush1.bf16.msra.mxu0 0
      %2412 = vmatprep.subr.bf16.mxu0 0
      %2413 = vmatpush1.bf16.msra.mxu0 0
      %2414 = vmatprep.subr.bf16.mxu0 0
      %2415 = vmatpush1.bf16.msra.mxu0 0
      %2416 = vmatprep.subr.bf16.mxu0 0
      %2417 = vmatpush1.bf16.msra.mxu0 0
      %2418 = vmatprep.subr.bf16.mxu0 0
      %2419 = vmatpush1.bf16.msra.mxu0 0
      %2420 = vmatprep.subr.bf16.mxu0 0
      %2421 = vmatpush1.bf16.msra.mxu0 0
      %2422 = vmatprep.subr.bf16.mxu0 0
      %2423 = vmatpush1.bf16.msra.mxu0 0
      %2424 = vmatprep.subr.bf16.mxu0 0
      %2425 = vmatpush1.bf16.msra.mxu0 0
      %2426 = vmatprep.mubr.bf16.mxu0 0
      %2427 = vmatmul.mubr.bf16.gmra.mrb[0].mxu0 %v2389
      %v2428 = vpop.f32.mrb[0].mxu0
      %v2429 = vadd.f32 0.0, %v2428
      %v2430 = vpop.f32.mrb[0].mxu0
      %v2431 = vpop.f32.mrb[0].mxu0
      %v2432 = vpop.f32.mrb[0].mxu0
      %2433 = vdwg.mxu0
      %v2435 = vsel %vm1826, %v2012, 0
      %v2438 = vsel %vm2022, %v1082, 0
      %2440 = vmatprep.subr.bf16.mxu0 0
      %2441 = vmatpush1.bf16.msra.mxu0 %v2438
      %2442 = vmatprep.subr.bf16.mxu0 0
      %2443 = vmatpush1.bf16.msra.mxu0 0
      %2444 = vmatprep.subr.bf16.mxu0 0
      %2445 = vmatpush1.bf16.msra.mxu0 0
      %2446 = vmatprep.subr.bf16.mxu0 0
      %2447 = vmatpush1.bf16.msra.mxu0 0
      %2448 = vmatprep.subr.bf16.mxu0 0
      %2449 = vmatpush1.bf16.msra.mxu0 0
      %2450 = vmatprep.subr.bf16.mxu0 0
      %2451 = vmatpush1.bf16.msra.mxu0 0
      %2452 = vmatprep.subr.bf16.mxu0 0
      %2453 = vmatpush1.bf16.msra.mxu0 0
      %2454 = vmatprep.subr.bf16.mxu0 0
      %2455 = vmatpush1.bf16.msra.mxu0 0
      %2456 = vmatprep.subr.bf16.mxu0 0
      %2457 = vmatpush1.bf16.msra.mxu0 0
      %2458 = vmatprep.subr.bf16.mxu0 0
      %2459 = vmatpush1.bf16.msra.mxu0 0
      %2460 = vmatprep.subr.bf16.mxu0 0
      %2461 = vmatpush1.bf16.msra.mxu0 0
      %2462 = vmatprep.subr.bf16.mxu0 0
      %2463 = vmatpush1.bf16.msra.mxu0 0
      %2464 = vmatprep.subr.bf16.mxu0 0
      %2465 = vmatpush1.bf16.msra.mxu0 0
      %2466 = vmatprep.subr.bf16.mxu0 0
      %2467 = vmatpush1.bf16.msra.mxu0 0
      %2468 = vmatprep.subr.bf16.mxu0 0
      %2469 = vmatpush1.bf16.msra.mxu0 0
      %2470 = vmatprep.subr.bf16.mxu0 0
      %2471 = vmatpush1.bf16.msra.mxu0 0
      %2472 = vmatprep.mubr.bf16.mxu0 0
      %2473 = vmatmul.mubr.bf16.gmra.mrb[0].mxu0 %v2435
      %v2474 = vpop.f32.mrb[0].mxu0
      %v2475 = vadd.f32 0.0, %v2474
      %v2476 = vpop.f32.mrb[0].mxu0
      %v2477 = vpop.f32.mrb[0].mxu0
      %v2478 = vpop.f32.mrb[0].mxu0
      %2479 = vdwg.mxu0
      %v2481 = vsel %vm1826, %v2013, 0
      %v2484 = vsel %vm2022, %v1083, 0
      %2486 = vmatprep.subr.bf16.mxu0 0
      %2487 = vmatpush1.bf16.msra.mxu0 %v2484
      %2488 = vmatprep.subr.bf16.mxu0 0
      %2489 = vmatpush1.bf16.msra.mxu0 0
      %2490 = vmatprep.subr.bf16.mxu0 0
      %2491 = vmatpush1.bf16.msra.mxu0 0
      %2492 = vmatprep.subr.bf16.mxu0 0
      %2493 = vmatpush1.bf16.msra.mxu0 0
      %2494 = vmatprep.subr.bf16.mxu0 0
      %2495 = vmatpush1.bf16.msra.mxu0 0
      %2496 = vmatprep.subr.bf16.mxu0 0
      %2497 = vmatpush1.bf16.msra.mxu0 0
      %2498 = vmatprep.subr.bf16.mxu0 0
      %2499 = vmatpush1.bf16.msra.mxu0 0
      %2500 = vmatprep.subr.bf16.mxu0 0
      %2501 = vmatpush1.bf16.msra.mxu0 0
      %2502 = vmatprep.subr.bf16.mxu0 0
      %2503 = vmatpush1.bf16.msra.mxu0 0
      %2504 = vmatprep.subr.bf16.mxu0 0
      %2505 = vmatpush1.bf16.msra.mxu0 0
      %2506 = vmatprep.subr.bf16.mxu0 0
      %2507 = vmatpush1.bf16.msra.mxu0 0
      %2508 = vmatprep.subr.bf16.mxu0 0
      %2509 = vmatpush1.bf16.msra.mxu0 0
      %2510 = vmatprep.subr.bf16.mxu0 0
      %2511 = vmatpush1.bf16.msra.mxu0 0
      %2512 = vmatprep.subr.bf16.mxu0 0
      %2513 = vmatpush1.bf16.msra.mxu0 0
      %2514 = vmatprep.subr.bf16.mxu0 0
      %2515 = vmatpush1.bf16.msra.mxu0 0
      %2516 = vmatprep.subr.bf16.mxu0 0
      %2517 = vmatpush1.bf16.msra.mxu0 0
      %2518 = vmatprep.mubr.bf16.mxu0 0
      %2519 = vmatmul.mubr.bf16.gmra.mrb[0].mxu0 %v2481
      %v2520 = vpop.f32.mrb[0].mxu0
      %v2521 = vadd.f32 0.0, %v2520
      %v2522 = vpop.f32.mrb[0].mxu0
      %v2523 = vpop.f32.mrb[0].mxu0
      %v2524 = vpop.f32.mrb[0].mxu0
      %2525 = vdwg.mxu0
      %v2527 = vsel %vm1826, %v2014, 0
      %v2530 = vsel %vm2022, %v1084, 0
      %2532 = vmatprep.subr.bf16.mxu0 0
      %2533 = vmatpush1.bf16.msra.mxu0 %v2530
      %2534 = vmatprep.subr.bf16.mxu0 0
      %2535 = vmatpush1.bf16.msra.mxu0 0
      %2536 = vmatprep.subr.bf16.mxu0 0
      %2537 = vmatpush1.bf16.msra.mxu0 0
      %2538 = vmatprep.subr.bf16.mxu0 0
      %2539 = vmatpush1.bf16.msra.mxu0 0
      %2540 = vmatprep.subr.bf16.mxu0 0
      %2541 = vmatpush1.bf16.msra.mxu0 0
      %2542 = vmatprep.subr.bf16.mxu0 0
      %2543 = vmatpush1.bf16.msra.mxu0 0
      %2544 = vmatprep.subr.bf16.mxu0 0
      %2545 = vmatpush1.bf16.msra.mxu0 0
      %2546 = vmatprep.subr.bf16.mxu0 0
      %2547 = vmatpush1.bf16.msra.mxu0 0
      %2548 = vmatprep.subr.bf16.mxu0 0
      %2549 = vmatpush1.bf16.msra.mxu0 0
      %2550 = vmatprep.subr.bf16.mxu0 0
      %2551 = vmatpush1.bf16.msra.mxu0 0
      %2552 = vmatprep.subr.bf16.mxu0 0
      %2553 = vmatpush1.bf16.msra.mxu0 0
      %2554 = vmatprep.subr.bf16.mxu0 0
      %2555 = vmatpush1.bf16.msra.mxu0 0
      %2556 = vmatprep.subr.bf16.mxu0 0
      %2557 = vmatpush1.bf16.msra.mxu0 0
      %2558 = vmatprep.subr.bf16.mxu0 0
      %2559 = vmatpush1.bf16.msra.mxu0 0
      %2560 = vmatprep.subr.bf16.mxu0 0
      %2561 = vmatpush1.bf16.msra.mxu0 0
      %2562 = vmatprep.subr.bf16.mxu0 0
      %2563 = vmatpush1.bf16.msra.mxu0 0
      %2564 = vmatprep.mubr.bf16.mxu0 0
      %2565 = vmatmul.mubr.bf16.gmra.mrb[0].mxu0 %v2527
      %v2566 = vpop.f32.mrb[0].mxu0
      %v2567 = vadd.f32 0.0, %v2566
      %v2568 = vpop.f32.mrb[0].mxu0
      %v2569 = vpop.f32.mrb[0].mxu0
      %v2570 = vpop.f32.mrb[0].mxu0
      %2571 = vdwg.mxu0
      %v2573 = vsel %vm1826, %v2015, 0
      %v2576 = vsel %vm2022, %v1085, 0
      %2578 = vmatprep.subr.bf16.mxu0 0
      %2579 = vmatpush1.bf16.msra.mxu0 %v2576
      %2580 = vmatprep.subr.bf16.mxu0 0
      %2581 = vmatpush1.bf16.msra.mxu0 0
      %2582 = vmatprep.subr.bf16.mxu0 0
      %2583 = vmatpush1.bf16.msra.mxu0 0
      %2584 = vmatprep.subr.bf16.mxu0 0
      %2585 = vmatpush1.bf16.msra.mxu0 0
      %2586 = vmatprep.subr.bf16.mxu0 0
      %2587 = vmatpush1.bf16.msra.mxu0 0
      %2588 = vmatprep.subr.bf16.mxu0 0
      %2589 = vmatpush1.bf16.msra.mxu0 0
      %2590 = vmatprep.subr.bf16.mxu0 0
      %2591 = vmatpush1.bf16.msra.mxu0 0
      %2592 = vmatprep.subr.bf16.mxu0 0
      %2593 = vmatpush1.bf16.msra.mxu0 0
      %2594 = vmatprep.subr.bf16.mxu0 0
      %2595 = vmatpush1.bf16.msra.mxu0 0
      %2596 = vmatprep.subr.bf16.mxu0 0
      %2597 = vmatpush1.bf16.msra.mxu0 0
      %2598 = vmatprep.subr.bf16.mxu0 0
      %2599 = vmatpush1.bf16.msra.mxu0 0
      %2600 = vmatprep.subr.bf16.mxu0 0
      %2601 = vmatpush1.bf16.msra.mxu0 0
      %2602 = vmatprep.subr.bf16.mxu0 0
      %2603 = vmatpush1.bf16.msra.mxu0 0
      %2604 = vmatprep.subr.bf16.mxu0 0
      %2605 = vmatpush1.bf16.msra.mxu0 0
      %2606 = vmatprep.subr.bf16.mxu0 0
      %2607 = vmatpush1.bf16.msra.mxu0 0
      %2608 = vmatprep.subr.bf16.mxu0 0
      %2609 = vmatpush1.bf16.msra.mxu0 0
      %2610 = vmatprep.mubr.bf16.mxu0 0
      %2611 = vmatmul.mubr.bf16.gmra.mrb[0].mxu0 %v2573
      %v2612 = vpop.f32.mrb[0].mxu0
      %v2613 = vadd.f32 0.0, %v2612
      %v2614 = vpop.f32.mrb[0].mxu0
      %v2615 = vpop.f32.mrb[0].mxu0
      %v2616 = vpop.f32.mrb[0].mxu0
      %2617 = vdwg.mxu0
      %v2619 = vsel %vm1826, %v2016, 0
      %v2622 = vsel %vm2022, %v1086, 0
      %2624 = vmatprep.subr.bf16.mxu0 0
      %2625 = vmatpush1.bf16.msra.mxu0 %v2622
      %2626 = vmatprep.subr.bf16.mxu0 0
      %2627 = vmatpush1.bf16.msra.mxu0 0
      %2628 = vmatprep.subr.bf16.mxu0 0
      %2629 = vmatpush1.bf16.msra.mxu0 0
      %2630 = vmatprep.subr.bf16.mxu0 0
      %2631 = vmatpush1.bf16.msra.mxu0 0
      %2632 = vmatprep.subr.bf16.mxu0 0
      %2633 = vmatpush1.bf16.msra.mxu0 0
      %2634 = vmatprep.subr.bf16.mxu0 0
      %2635 = vmatpush1.bf16.msra.mxu0 0
      %2636 = vmatprep.subr.bf16.mxu0 0
      %2637 = vmatpush1.bf16.msra.mxu0 0
      %2638 = vmatprep.subr.bf16.mxu0 0
      %2639 = vmatpush1.bf16.msra.mxu0 0
      %2640 = vmatprep.subr.bf16.mxu0 0
      %2641 = vmatpush1.bf16.msra.mxu0 0
      %2642 = vmatprep.subr.bf16.mxu0 0
      %2643 = vmatpush1.bf16.msra.mxu0 0
      %2644 = vmatprep.subr.bf16.mxu0 0
      %2645 = vmatpush1.bf16.msra.mxu0 0
      %2646 = vmatprep.subr.bf16.mxu0 0
      %2647 = vmatpush1.bf16.msra.mxu0 0
      %2648 = vmatprep.subr.bf16.mxu0 0
      %2649 = vmatpush1.bf16.msra.mxu0 0
      %2650 = vmatprep.subr.bf16.mxu0 0
      %2651 = vmatpush1.bf16.msra.mxu0 0
      %2652 = vmatprep.subr.bf16.mxu0 0
      %2653 = vmatpush1.bf16.msra.mxu0 0
      %2654 = vmatprep.subr.bf16.mxu0 0
      %2655 = vmatpush1.bf16.msra.mxu0 0
      %2656 = vmatprep.mubr.bf16.mxu0 0
      %2657 = vmatmul.mubr.bf16.gmra.mrb[0].mxu0 %v2619
      %v2658 = vpop.f32.mrb[0].mxu0
      %v2659 = vadd.f32 0.0, %v2658
      %v2660 = vpop.f32.mrb[0].mxu0
      %v2661 = vpop.f32.mrb[0].mxu0
      %v2662 = vpop.f32.mrb[0].mxu0
      %2663 = vdwg.mxu0
      %v2665 = vsel %vm1826, %v2017, 0
      %v2668 = vsel %vm2022, %v1087, 0
      %2670 = vmatprep.subr.bf16.mxu0 0
      %2671 = vmatpush1.bf16.msra.mxu0 %v2668
      %2672 = vmatprep.subr.bf16.mxu0 0
      %2673 = vmatpush1.bf16.msra.mxu0 0
      %2674 = vmatprep.subr.bf16.mxu0 0
      %2675 = vmatpush1.bf16.msra.mxu0 0
      %2676 = vmatprep.subr.bf16.mxu0 0
      %2677 = vmatpush1.bf16.msra.mxu0 0
      %2678 = vmatprep.subr.bf16.mxu0 0
      %2679 = vmatpush1.bf16.msra.mxu0 0
      %2680 = vmatprep.subr.bf16.mxu0 0
      %2681 = vmatpush1.bf16.msra.mxu0 0
      %2682 = vmatprep.subr.bf16.mxu0 0
      %2683 = vmatpush1.bf16.msra.mxu0 0
      %2684 = vmatprep.subr.bf16.mxu0 0
      %2685 = vmatpush1.bf16.msra.mxu0 0
      %2686 = vmatprep.subr.bf16.mxu0 0
      %2687 = vmatpush1.bf16.msra.mxu0 0
      %2688 = vmatprep.subr.bf16.mxu0 0
      %2689 = vmatpush1.bf16.msra.mxu0 0
      %2690 = vmatprep.subr.bf16.mxu0 0
      %2691 = vmatpush1.bf16.msra.mxu0 0
      %2692 = vmatprep.subr.bf16.mxu0 0
      %2693 = vmatpush1.bf16.msra.mxu0 0
      %2694 = vmatprep.subr.bf16.mxu0 0
      %2695 = vmatpush1.bf16.msra.mxu0 0
      %2696 = vmatprep.subr.bf16.mxu0 0
      %2697 = vmatpush1.bf16.msra.mxu0 0
      %2698 = vmatprep.subr.bf16.mxu0 0
      %2699 = vmatpush1.bf16.msra.mxu0 0
      %2700 = vmatprep.subr.bf16.mxu0 0
      %2701 = vmatpush1.bf16.msra.mxu0 0
      %2702 = vmatprep.mubr.bf16.mxu0 0
      %2703 = vmatmul.mubr.bf16.gmra.mrb[0].mxu0 %v2665
      %v2704 = vpop.f32.mrb[0].mxu0
      %v2705 = vadd.f32 0.0, %v2704
      %v2706 = vpop.f32.mrb[0].mxu0
      %v2707 = vpop.f32.mrb[0].mxu0
      %v2708 = vpop.f32.mrb[0].mxu0
      %2709 = vdwg.mxu0
      %v2711 = vsel %vm1826, %v2018, 0
      %v2714 = vsel %vm2022, %v1088, 0
      %2716 = vmatprep.subr.bf16.mxu0 0
      %2717 = vmatpush1.bf16.msra.mxu0 %v2714
      %2718 = vmatprep.subr.bf16.mxu0 0
      %2719 = vmatpush1.bf16.msra.mxu0 0
      %2720 = vmatprep.subr.bf16.mxu0 0
      %2721 = vmatpush1.bf16.msra.mxu0 0
      %2722 = vmatprep.subr.bf16.mxu0 0
      %2723 = vmatpush1.bf16.msra.mxu0 0
      %2724 = vmatprep.subr.bf16.mxu0 0
      %2725 = vmatpush1.bf16.msra.mxu0 0
      %2726 = vmatprep.subr.bf16.mxu0 0
      %2727 = vmatpush1.bf16.msra.mxu0 0
      %2728 = vmatprep.subr.bf16.mxu0 0
      %2729 = vmatpush1.bf16.msra.mxu0 0
      %2730 = vmatprep.subr.bf16.mxu0 0
      %2731 = vmatpush1.bf16.msra.mxu0 0
      %2732 = vmatprep.subr.bf16.mxu0 0
      %2733 = vmatpush1.bf16.msra.mxu0 0
      %2734 = vmatprep.subr.bf16.mxu0 0
      %2735 = vmatpush1.bf16.msra.mxu0 0
      %2736 = vmatprep.subr.bf16.mxu0 0
      %2737 = vmatpush1.bf16.msra.mxu0 0
      %2738 = vmatprep.subr.bf16.mxu0 0
      %2739 = vmatpush1.bf16.msra.mxu0 0
      %2740 = vmatprep.subr.bf16.mxu0 0
      %2741 = vmatpush1.bf16.msra.mxu0 0
      %2742 = vmatprep.subr.bf16.mxu0 0
      %2743 = vmatpush1.bf16.msra.mxu0 0
      %2744 = vmatprep.subr.bf16.mxu0 0
      %2745 = vmatpush1.bf16.msra.mxu0 0
      %2746 = vmatprep.subr.bf16.mxu0 0
      %2747 = vmatpush1.bf16.msra.mxu0 0
      %2748 = vmatprep.mubr.bf16.mxu0 0
      %2749 = vmatmul.mubr.bf16.gmra.mrb[0].mxu0 %v2711
      %v2750 = vpop.f32.mrb[0].mxu0
      %v2751 = vadd.f32 0.0, %v2750
      %v2752 = vpop.f32.mrb[0].mxu0
      %v2753 = vpop.f32.mrb[0].mxu0
      %v2754 = vpop.f32.mrb[0].mxu0
      %2755 = vdwg.mxu0
      %v2756 = vpack.c.bf16 %v2107, %v2061
      %v2757 = vpack.c.bf16 %v2199, %v2153
      %v2758 = vpack.c.bf16 %v2291, %v2245
      %v2759 = vpack.c.bf16 %v2383, %v2337
      %v2760 = vpack.c.bf16 %v2475, %v2429
      %v2761 = vpack.c.bf16 %v2567, %v2521
      %v2762 = vpack.c.bf16 %v2659, %v2613
      %v2763 = vpack.c.bf16 %v2751, %v2705
      %2764 = vst.msk [vmem:[#allocation2] sm:$0xff] %vm1089, %v2756
      %2765 = vst.msk [vmem:[#allocation2 + $0x8] sm:$0xff] %vm1089, %v2757
      %2766 = vst.msk [vmem:[#allocation2 + $0x10] sm:$0xff] %vm1089, %v2758
      %2767 = vst.msk [vmem:[#allocation2 + $0x18] sm:$0xff] %vm1089, %v2759
      %2768 = vst.msk [vmem:[#allocation2 + $0x20] sm:$0xff] %vm1089, %v2760
      %2769 = vst.msk [vmem:[#allocation2 + $0x28] sm:$0xff] %vm1089, %v2761
      %2770 = vst.msk [vmem:[#allocation2 + $0x30] sm:$0xff] %vm1089, %v2762
      %2771 = vst.msk [vmem:[#allocation2 + $0x38] sm:$0xff] %vm1089, %v2763
      %2772 = vrot.lane.b32.xlu0 %v993, 96
      %v2773 = vpop.permute.xlu0 %2772
      %2774 = vrot.lane.b32.xlu0 %v1033, 96
      %v2775 = vpop.permute.xlu0 %2774
      %v2777 = vsel %vm1089, %v2773, 0
      %v2780 = vsel %vm1089, %v2775, 0
      %2782 = vmatprep.subr.bf16.mxu0 0
      %2783 = vmatpush1.bf16.xpose.msra.mxu0 %v2780
      %2784 = vmatprep.subr.bf16.mxu0 0
      %2785 = vmatpush1.bf16.xpose.msra.mxu0 0
      %2786 = vmatprep.subr.bf16.mxu0 0
      %2787 = vmatpush1.bf16.xpose.msra.mxu0 0
      %2788 = vmatprep.subr.bf16.mxu0 0
      %2789 = vmatpush1.bf16.xpose.msra.mxu0 0
      %2790 = vmatprep.subr.bf16.mxu0 0
      %2791 = vmatpush1.bf16.xpose.msra.mxu0 0
      %2792 = vmatprep.subr.bf16.mxu0 0
      %2793 = vmatpush1.bf16.xpose.msra.mxu0 0
      %2794 = vmatprep.subr.bf16.mxu0 0
      %2795 = vmatpush1.bf16.xpose.msra.mxu0 0
      %2796 = vmatprep.subr.bf16.mxu0 0
      %2797 = vmatpush1.bf16.xpose.msra.mxu0 0
      %2798 = vmatprep.subr.bf16.mxu0 0
      %2799 = vmatpush1.bf16.xpose.msra.mxu0 0
      %2800 = vmatprep.subr.bf16.mxu0 0
      %2801 = vmatpush1.bf16.xpose.msra.mxu0 0
      %2802 = vmatprep.subr.bf16.mxu0 0
      %2803 = vmatpush1.bf16.xpose.msra.mxu0 0
      %2804 = vmatprep.subr.bf16.mxu0 0
      %2805 = vmatpush1.bf16.xpose.msra.mxu0 0
      %2806 = vmatprep.subr.bf16.mxu0 0
      %2807 = vmatpush1.bf16.xpose.msra.mxu0 0
      %2808 = vmatprep.subr.bf16.mxu0 0
      %2809 = vmatpush1.bf16.xpose.msra.mxu0 0
      %2810 = vmatprep.subr.bf16.mxu0 0
      %2811 = vmatpush1.bf16.xpose.msra.mxu0 0
      %2812 = vmatprep.subr.bf16.mxu0 0
      %2813 = vmatpush1.bf16.xpose.msra.mxu0 0
      %2814 = vmatprep.mubr.bf16.mxu0 0
      %2815 = vmatmul.mubr.bf16.gmra.mrb[0].mxu0 %v2777
      %v2816 = vpop.f32.mrb[0].mxu0
      %v2817 = vadd.f32 %v968, %v2816
      %v2818 = vpop.f32.mrb[0].mxu0
      %v2819 = vpop.f32.mrb[0].mxu0
      %v2820 = vpop.f32.mrb[0].mxu0
      %2821 = vdwg.mxu0
      %2822 = vrot.lane.b32.xlu0 %v994, 96
      %v2823 = vpop.permute.xlu0 %2822
      %2824 = vrot.lane.b32.xlu0 %v1034, 96
      %v2825 = vpop.permute.xlu0 %2824
      %v2827 = vsel %vm1089, %v2823, 0
      %v2830 = vsel %vm1089, %v2825, 0
      %2832 = vmatprep.subr.bf16.mxu0 0
      %2833 = vmatpush1.bf16.xpose.msra.mxu0 %v2830
      %2834 = vmatprep.subr.bf16.mxu0 0
      %2835 = vmatpush1.bf16.xpose.msra.mxu0 0
      %2836 = vmatprep.subr.bf16.mxu0 0
      %2837 = vmatpush1.bf16.xpose.msra.mxu0 0
      %2838 = vmatprep.subr.bf16.mxu0 0
      %2839 = vmatpush1.bf16.xpose.msra.mxu0 0
      %2840 = vmatprep.subr.bf16.mxu0 0
      %2841 = vmatpush1.bf16.xpose.msra.mxu0 0
      %2842 = vmatprep.subr.bf16.mxu0 0
      %2843 = vmatpush1.bf16.xpose.msra.mxu0 0
      %2844 = vmatprep.subr.bf16.mxu0 0
      %2845 = vmatpush1.bf16.xpose.msra.mxu0 0
      %2846 = vmatprep.subr.bf16.mxu0 0
      %2847 = vmatpush1.bf16.xpose.msra.mxu0 0
      %2848 = vmatprep.subr.bf16.mxu0 0
      %2849 = vmatpush1.bf16.xpose.msra.mxu0 0
      %2850 = vmatprep.subr.bf16.mxu0 0
      %2851 = vmatpush1.bf16.xpose.msra.mxu0 0
      %2852 = vmatprep.subr.bf16.mxu0 0
      %2853 = vmatpush1.bf16.xpose.msra.mxu0 0
      %2854 = vmatprep.subr.bf16.mxu0 0
      %2855 = vmatpush1.bf16.xpose.msra.mxu0 0
      %2856 = vmatprep.subr.bf16.mxu0 0
      %2857 = vmatpush1.bf16.xpose.msra.mxu0 0
      %2858 = vmatprep.subr.bf16.mxu0 0
      %2859 = vmatpush1.bf16.xpose.msra.mxu0 0
      %2860 = vmatprep.subr.bf16.mxu0 0
      %2861 = vmatpush1.bf16.xpose.msra.mxu0 0
      %2862 = vmatprep.subr.bf16.mxu0 0
      %2863 = vmatpush1.bf16.xpose.msra.mxu0 0
      %2864 = vmatprep.mubr.bf16.mxu0 0
      %2865 = vmatmul.mubr.bf16.gmra.mrb[0].mxu0 %v2827
      %v2866 = vpop.f32.mrb[0].mxu0
      %v2867 = vadd.f32 %v968, %v2866
      %v2868 = vpop.f32.mrb[0].mxu0
      %v2869 = vpop.f32.mrb[0].mxu0
      %v2870 = vpop.f32.mrb[0].mxu0
      %2871 = vdwg.mxu0
      %2872 = vrot.lane.b32.xlu0 %v995, 96
      %v2873 = vpop.permute.xlu0 %2872
      %2874 = vrot.lane.b32.xlu0 %v1035, 96
      %v2875 = vpop.permute.xlu0 %2874
      %v2877 = vsel %vm1089, %v2873, 0
      %v2880 = vsel %vm1089, %v2875, 0
      %2882 = vmatprep.subr.bf16.mxu0 0
      %2883 = vmatpush1.bf16.xpose.msra.mxu0 %v2880
      %2884 = vmatprep.subr.bf16.mxu0 0
      %2885 = vmatpush1.bf16.xpose.msra.mxu0 0
      %2886 = vmatprep.subr.bf16.mxu0 0
      %2887 = vmatpush1.bf16.xpose.msra.mxu0 0
      %2888 = vmatprep.subr.bf16.mxu0 0
      %2889 = vmatpush1.bf16.xpose.msra.mxu0 0
      %2890 = vmatprep.subr.bf16.mxu0 0
      %2891 = vmatpush1.bf16.xpose.msra.mxu0 0
      %2892 = vmatprep.subr.bf16.mxu0 0
      %2893 = vmatpush1.bf16.xpose.msra.mxu0 0
      %2894 = vmatprep.subr.bf16.mxu0 0
      %2895 = vmatpush1.bf16.xpose.msra.mxu0 0
      %2896 = vmatprep.subr.bf16.mxu0 0
      %2897 = vmatpush1.bf16.xpose.msra.mxu0 0
      %2898 = vmatprep.subr.bf16.mxu0 0
      %2899 = vmatpush1.bf16.xpose.msra.mxu0 0
      %2900 = vmatprep.subr.bf16.mxu0 0
      %2901 = vmatpush1.bf16.xpose.msra.mxu0 0
      %2902 = vmatprep.subr.bf16.mxu0 0
      %2903 = vmatpush1.bf16.xpose.msra.mxu0 0
      %2904 = vmatprep.subr.bf16.mxu0 0
      %2905 = vmatpush1.bf16.xpose.msra.mxu0 0
      %2906 = vmatprep.subr.bf16.mxu0 0
      %2907 = vmatpush1.bf16.xpose.msra.mxu0 0
      %2908 = vmatprep.subr.bf16.mxu0 0
      %2909 = vmatpush1.bf16.xpose.msra.mxu0 0
      %2910 = vmatprep.subr.bf16.mxu0 0
      %2911 = vmatpush1.bf16.xpose.msra.mxu0 0
      %2912 = vmatprep.subr.bf16.mxu0 0
      %2913 = vmatpush1.bf16.xpose.msra.mxu0 0
      %2914 = vmatprep.mubr.bf16.mxu0 0
      %2915 = vmatmul.mubr.bf16.gmra.mrb[0].mxu0 %v2877
      %v2916 = vpop.f32.mrb[0].mxu0
      %v2917 = vadd.f32 %v968, %v2916
      %v2918 = vpop.f32.mrb[0].mxu0
      %v2919 = vpop.f32.mrb[0].mxu0
      %v2920 = vpop.f32.mrb[0].mxu0
      %2921 = vdwg.mxu0
      %2922 = vrot.lane.b32.xlu0 %v996, 96
      %v2923 = vpop.permute.xlu0 %2922
      %2924 = vrot.lane.b32.xlu0 %v1036, 96
      %v2925 = vpop.permute.xlu0 %2924
      %v2927 = vsel %vm1089, %v2923, 0
      %v2930 = vsel %vm1089, %v2925, 0
      %2932 = vmatprep.subr.bf16.mxu0 0
      %2933 = vmatpush1.bf16.xpose.msra.mxu0 %v2930
      %2934 = vmatprep.subr.bf16.mxu0 0
      %2935 = vmatpush1.bf16.xpose.msra.mxu0 0
      %2936 = vmatprep.subr.bf16.mxu0 0
      %2937 = vmatpush1.bf16.xpose.msra.mxu0 0
      %2938 = vmatprep.subr.bf16.mxu0 0
      %2939 = vmatpush1.bf16.xpose.msra.mxu0 0
      %2940 = vmatprep.subr.bf16.mxu0 0
      %2941 = vmatpush1.bf16.xpose.msra.mxu0 0
      %2942 = vmatprep.subr.bf16.mxu0 0
      %2943 = vmatpush1.bf16.xpose.msra.mxu0 0
      %2944 = vmatprep.subr.bf16.mxu0 0
      %2945 = vmatpush1.bf16.xpose.msra.mxu0 0
      %2946 = vmatprep.subr.bf16.mxu0 0
      %2947 = vmatpush1.bf16.xpose.msra.mxu0 0
      %2948 = vmatprep.subr.bf16.mxu0 0
      %2949 = vmatpush1.bf16.xpose.msra.mxu0 0
      %2950 = vmatprep.subr.bf16.mxu0 0
      %2951 = vmatpush1.bf16.xpose.msra.mxu0 0
      %2952 = vmatprep.subr.bf16.mxu0 0
      %2953 = vmatpush1.bf16.xpose.msra.mxu0 0
      %2954 = vmatprep.subr.bf16.mxu0 0
      %2955 = vmatpush1.bf16.xpose.msra.mxu0 0
      %2956 = vmatprep.subr.bf16.mxu0 0
      %2957 = vmatpush1.bf16.xpose.msra.mxu0 0
      %2958 = vmatprep.subr.bf16.mxu0 0
      %2959 = vmatpush1.bf16.xpose.msra.mxu0 0
      %2960 = vmatprep.subr.bf16.mxu0 0
      %2961 = vmatpush1.bf16.xpose.msra.mxu0 0
      %2962 = vmatprep.subr.bf16.mxu0 0
      %2963 = vmatpush1.bf16.xpose.msra.mxu0 0
      %2964 = vmatprep.mubr.bf16.mxu0 0
      %2965 = vmatmul.mubr.bf16.gmra.mrb[0].mxu0 %v2927
      %v2966 = vpop.f32.mrb[0].mxu0
      %v2967 = vadd.f32 %v968, %v2966
      %v2968 = vpop.f32.mrb[0].mxu0
      %v2969 = vpop.f32.mrb[0].mxu0
      %v2970 = vpop.f32.mrb[0].mxu0
      %2971 = vdwg.mxu0
      %2972 = vrot.lane.b32.xlu0 %v997, 96
      %v2973 = vpop.permute.xlu0 %2972
      %2974 = vrot.lane.b32.xlu0 %v1037, 96
      %v2975 = vpop.permute.xlu0 %2974
      %v2977 = vsel %vm1089, %v2973, 0
      %v2980 = vsel %vm1089, %v2975, 0
      %2982 = vmatprep.subr.bf16.mxu0 0
      %2983 = vmatpush1.bf16.xpose.msra.mxu0 %v2980
      %2984 = vmatprep.subr.bf16.mxu0 0
      %2985 = vmatpush1.bf16.xpose.msra.mxu0 0
      %2986 = vmatprep.subr.bf16.mxu0 0
      %2987 = vmatpush1.bf16.xpose.msra.mxu0 0
      %2988 = vmatprep.subr.bf16.mxu0 0
      %2989 = vmatpush1.bf16.xpose.msra.mxu0 0
      %2990 = vmatprep.subr.bf16.mxu0 0
      %2991 = vmatpush1.bf16.xpose.msra.mxu0 0
      %2992 = vmatprep.subr.bf16.mxu0 0
      %2993 = vmatpush1.bf16.xpose.msra.mxu0 0
      %2994 = vmatprep.subr.bf16.mxu0 0
      %2995 = vmatpush1.bf16.xpose.msra.mxu0 0
      %2996 = vmatprep.subr.bf16.mxu0 0
      %2997 = vmatpush1.bf16.xpose.msra.mxu0 0
      %2998 = vmatprep.subr.bf16.mxu0 0
      %2999 = vmatpush1.bf16.xpose.msra.mxu0 0
      %3000 = vmatprep.subr.bf16.mxu0 0
      %3001 = vmatpush1.bf16.xpose.msra.mxu0 0
      %3002 = vmatprep.subr.bf16.mxu0 0
      %3003 = vmatpush1.bf16.xpose.msra.mxu0 0
      %3004 = vmatprep.subr.bf16.mxu0 0
      %3005 = vmatpush1.bf16.xpose.msra.mxu0 0
      %3006 = vmatprep.subr.bf16.mxu0 0
      %3007 = vmatpush1.bf16.xpose.msra.mxu0 0
      %3008 = vmatprep.subr.bf16.mxu0 0
      %3009 = vmatpush1.bf16.xpose.msra.mxu0 0
      %3010 = vmatprep.subr.bf16.mxu0 0
      %3011 = vmatpush1.bf16.xpose.msra.mxu0 0
      %3012 = vmatprep.subr.bf16.mxu0 0
      %3013 = vmatpush1.bf16.xpose.msra.mxu0 0
      %3014 = vmatprep.mubr.bf16.mxu0 0
      %3015 = vmatmul.mubr.bf16.gmra.mrb[0].mxu0 %v2977
      %v3016 = vpop.f32.mrb[0].mxu0
      %v3017 = vadd.f32 %v968, %v3016
      %v3018 = vpop.f32.mrb[0].mxu0
      %v3019 = vpop.f32.mrb[0].mxu0
      %v3020 = vpop.f32.mrb[0].mxu0
      %3021 = vdwg.mxu0
      %3022 = vrot.lane.b32.xlu0 %v998, 96
      %v3023 = vpop.permute.xlu0 %3022
      %3024 = vrot.lane.b32.xlu0 %v1038, 96
      %v3025 = vpop.permute.xlu0 %3024
      %v3027 = vsel %vm1089, %v3023, 0
      %v3030 = vsel %vm1089, %v3025, 0
      %3032 = vmatprep.subr.bf16.mxu0 0
      %3033 = vmatpush1.bf16.xpose.msra.mxu0 %v3030
      %3034 = vmatprep.subr.bf16.mxu0 0
      %3035 = vmatpush1.bf16.xpose.msra.mxu0 0
      %3036 = vmatprep.subr.bf16.mxu0 0
      %3037 = vmatpush1.bf16.xpose.msra.mxu0 0
      %3038 = vmatprep.subr.bf16.mxu0 0
      %3039 = vmatpush1.bf16.xpose.msra.mxu0 0
      %3040 = vmatprep.subr.bf16.mxu0 0
      %3041 = vmatpush1.bf16.xpose.msra.mxu0 0
      %3042 = vmatprep.subr.bf16.mxu0 0
      %3043 = vmatpush1.bf16.xpose.msra.mxu0 0
      %3044 = vmatprep.subr.bf16.mxu0 0
      %3045 = vmatpush1.bf16.xpose.msra.mxu0 0
      %3046 = vmatprep.subr.bf16.mxu0 0
      %3047 = vmatpush1.bf16.xpose.msra.mxu0 0
      %3048 = vmatprep.subr.bf16.mxu0 0
      %3049 = vmatpush1.bf16.xpose.msra.mxu0 0
      %3050 = vmatprep.subr.bf16.mxu0 0
      %3051 = vmatpush1.bf16.xpose.msra.mxu0 0
      %3052 = vmatprep.subr.bf16.mxu0 0
      %3053 = vmatpush1.bf16.xpose.msra.mxu0 0
      %3054 = vmatprep.subr.bf16.mxu0 0
      %3055 = vmatpush1.bf16.xpose.msra.mxu0 0
      %3056 = vmatprep.subr.bf16.mxu0 0
      %3057 = vmatpush1.bf16.xpose.msra.mxu0 0
      %3058 = vmatprep.subr.bf16.mxu0 0
      %3059 = vmatpush1.bf16.xpose.msra.mxu0 0
      %3060 = vmatprep.subr.bf16.mxu0 0
      %3061 = vmatpush1.bf16.xpose.msra.mxu0 0
      %3062 = vmatprep.subr.bf16.mxu0 0
      %3063 = vmatpush1.bf16.xpose.msra.mxu0 0
      %3064 = vmatprep.mubr.bf16.mxu0 0
      %3065 = vmatmul.mubr.bf16.gmra.mrb[0].mxu0 %v3027
      %v3066 = vpop.f32.mrb[0].mxu0
      %v3067 = vadd.f32 %v968, %v3066
      %v3068 = vpop.f32.mrb[0].mxu0
      %v3069 = vpop.f32.mrb[0].mxu0
      %v3070 = vpop.f32.mrb[0].mxu0
      %3071 = vdwg.mxu0
      %3072 = vrot.lane.b32.xlu0 %v999, 96
      %v3073 = vpop.permute.xlu0 %3072
      %3074 = vrot.lane.b32.xlu0 %v1039, 96
      %v3075 = vpop.permute.xlu0 %3074
      %v3077 = vsel %vm1089, %v3073, 0
      %v3080 = vsel %vm1089, %v3075, 0
      %3082 = vmatprep.subr.bf16.mxu0 0
      %3083 = vmatpush1.bf16.xpose.msra.mxu0 %v3080
      %3084 = vmatprep.subr.bf16.mxu0 0
      %3085 = vmatpush1.bf16.xpose.msra.mxu0 0
      %3086 = vmatprep.subr.bf16.mxu0 0
      %3087 = vmatpush1.bf16.xpose.msra.mxu0 0
      %3088 = vmatprep.subr.bf16.mxu0 0
      %3089 = vmatpush1.bf16.xpose.msra.mxu0 0
      %3090 = vmatprep.subr.bf16.mxu0 0
      %3091 = vmatpush1.bf16.xpose.msra.mxu0 0
      %3092 = vmatprep.subr.bf16.mxu0 0
      %3093 = vmatpush1.bf16.xpose.msra.mxu0 0
      %3094 = vmatprep.subr.bf16.mxu0 0
      %3095 = vmatpush1.bf16.xpose.msra.mxu0 0
      %3096 = vmatprep.subr.bf16.mxu0 0
      %3097 = vmatpush1.bf16.xpose.msra.mxu0 0
      %3098 = vmatprep.subr.bf16.mxu0 0
      %3099 = vmatpush1.bf16.xpose.msra.mxu0 0
      %3100 = vmatprep.subr.bf16.mxu0 0
      %3101 = vmatpush1.bf16.xpose.msra.mxu0 0
      %3102 = vmatprep.subr.bf16.mxu0 0
      %3103 = vmatpush1.bf16.xpose.msra.mxu0 0
      %3104 = vmatprep.subr.bf16.mxu0 0
      %3105 = vmatpush1.bf16.xpose.msra.mxu0 0
      %3106 = vmatprep.subr.bf16.mxu0 0
      %3107 = vmatpush1.bf16.xpose.msra.mxu0 0
      %3108 = vmatprep.subr.bf16.mxu0 0
      %3109 = vmatpush1.bf16.xpose.msra.mxu0 0
      %3110 = vmatprep.subr.bf16.mxu0 0
      %3111 = vmatpush1.bf16.xpose.msra.mxu0 0
      %3112 = vmatprep.subr.bf16.mxu0 0
      %3113 = vmatpush1.bf16.xpose.msra.mxu0 0
      %3114 = vmatprep.mubr.bf16.mxu0 0
      %3115 = vmatmul.mubr.bf16.gmra.mrb[0].mxu0 %v3077
      %v3116 = vpop.f32.mrb[0].mxu0
      %v3117 = vadd.f32 %v968, %v3116
      %v3118 = vpop.f32.mrb[0].mxu0
      %v3119 = vpop.f32.mrb[0].mxu0
      %v3120 = vpop.f32.mrb[0].mxu0
      %3121 = vdwg.mxu0
      %3122 = vrot.lane.b32.xlu0 %v1000, 96
      %v3123 = vpop.permute.xlu0 %3122
      %3124 = vrot.lane.b32.xlu0 %v1040, 96
      %v3125 = vpop.permute.xlu0 %3124
      %v3127 = vsel %vm1089, %v3123, 0
      %v3130 = vsel %vm1089, %v3125, 0
      %3132 = vmatprep.subr.bf16.mxu0 0
      %3133 = vmatpush1.bf16.xpose.msra.mxu0 %v3130
      %3134 = vmatprep.subr.bf16.mxu0 0
      %3135 = vmatpush1.bf16.xpose.msra.mxu0 0
      %3136 = vmatprep.subr.bf16.mxu0 0
      %3137 = vmatpush1.bf16.xpose.msra.mxu0 0
      %3138 = vmatprep.subr.bf16.mxu0 0
      %3139 = vmatpush1.bf16.xpose.msra.mxu0 0
      %3140 = vmatprep.subr.bf16.mxu0 0
      %3141 = vmatpush1.bf16.xpose.msra.mxu0 0
      %3142 = vmatprep.subr.bf16.mxu0 0
      %3143 = vmatpush1.bf16.xpose.msra.mxu0 0
      %3144 = vmatprep.subr.bf16.mxu0 0
      %3145 = vmatpush1.bf16.xpose.msra.mxu0 0
      %3146 = vmatprep.subr.bf16.mxu0 0
      %3147 = vmatpush1.bf16.xpose.msra.mxu0 0
      %3148 = vmatprep.subr.bf16.mxu0 0
      %3149 = vmatpush1.bf16.xpose.msra.mxu0 0
      %3150 = vmatprep.subr.bf16.mxu0 0
      %3151 = vmatpush1.bf16.xpose.msra.mxu0 0
      %3152 = vmatprep.subr.bf16.mxu0 0
      %3153 = vmatpush1.bf16.xpose.msra.mxu0 0
      %3154 = vmatprep.subr.bf16.mxu0 0
      %3155 = vmatpush1.bf16.xpose.msra.mxu0 0
      %3156 = vmatprep.subr.bf16.mxu0 0
      %3157 = vmatpush1.bf16.xpose.msra.mxu0 0
      %3158 = vmatprep.subr.bf16.mxu0 0
      %3159 = vmatpush1.bf16.xpose.msra.mxu0 0
      %3160 = vmatprep.subr.bf16.mxu0 0
      %3161 = vmatpush1.bf16.xpose.msra.mxu0 0
      %3162 = vmatprep.subr.bf16.mxu0 0
      %3163 = vmatpush1.bf16.xpose.msra.mxu0 0
      %3164 = vmatprep.mubr.bf16.mxu0 0
      %3165 = vmatmul.mubr.bf16.gmra.mrb[0].mxu0 %v3127
      %v3166 = vpop.f32.mrb[0].mxu0
      %v3167 = vadd.f32 %v968, %v3166
      %v3168 = vpop.f32.mrb[0].mxu0
      %v3169 = vpop.f32.mrb[0].mxu0
      %v3170 = vpop.f32.mrb[0].mxu0
      %3171 = vdwg.mxu0
      %3172 = vrot.lane.b32.xlu0 %v1001, 96
      %v3173 = vpop.permute.xlu0 %3172
      %3174 = vrot.lane.b32.xlu0 %v1041, 96
      %v3175 = vpop.permute.xlu0 %3174
      %v3177 = vsel %vm1089, %v3173, 0
      %v3180 = vsel %vm1089, %v3175, 0
      %3182 = vmatprep.subr.bf16.mxu0 0
      %3183 = vmatpush1.bf16.xpose.msra.mxu0 %v3180
      %3184 = vmatprep.subr.bf16.mxu0 0
      %3185 = vmatpush1.bf16.xpose.msra.mxu0 0
      %3186 = vmatprep.subr.bf16.mxu0 0
      %3187 = vmatpush1.bf16.xpose.msra.mxu0 0
      %3188 = vmatprep.subr.bf16.mxu0 0
      %3189 = vmatpush1.bf16.xpose.msra.mxu0 0
      %3190 = vmatprep.subr.bf16.mxu0 0
      %3191 = vmatpush1.bf16.xpose.msra.mxu0 0
      %3192 = vmatprep.subr.bf16.mxu0 0
      %3193 = vmatpush1.bf16.xpose.msra.mxu0 0
      %3194 = vmatprep.subr.bf16.mxu0 0
      %3195 = vmatpush1.bf16.xpose.msra.mxu0 0
      %3196 = vmatprep.subr.bf16.mxu0 0
      %3197 = vmatpush1.bf16.xpose.msra.mxu0 0
      %3198 = vmatprep.subr.bf16.mxu0 0
      %3199 = vmatpush1.bf16.xpose.msra.mxu0 0
      %3200 = vmatprep.subr.bf16.mxu0 0
      %3201 = vmatpush1.bf16.xpose.msra.mxu0 0
      %3202 = vmatprep.subr.bf16.mxu0 0
      %3203 = vmatpush1.bf16.xpose.msra.mxu0 0
      %3204 = vmatprep.subr.bf16.mxu0 0
      %3205 = vmatpush1.bf16.xpose.msra.mxu0 0
      %3206 = vmatprep.subr.bf16.mxu0 0
      %3207 = vmatpush1.bf16.xpose.msra.mxu0 0
      %3208 = vmatprep.subr.bf16.mxu0 0
      %3209 = vmatpush1.bf16.xpose.msra.mxu0 0
      %3210 = vmatprep.subr.bf16.mxu0 0
      %3211 = vmatpush1.bf16.xpose.msra.mxu0 0
      %3212 = vmatprep.subr.bf16.mxu0 0
      %3213 = vmatpush1.bf16.xpose.msra.mxu0 0
      %3214 = vmatprep.mubr.bf16.mxu0 0
      %3215 = vmatmul.mubr.bf16.gmra.mrb[0].mxu0 %v3177
      %v3216 = vpop.f32.mrb[0].mxu0
      %v3217 = vadd.f32 %v968, %v3216
      %v3218 = vpop.f32.mrb[0].mxu0
      %v3219 = vpop.f32.mrb[0].mxu0
      %v3220 = vpop.f32.mrb[0].mxu0
      %3221 = vdwg.mxu0
      %3222 = vrot.lane.b32.xlu0 %v1002, 96
      %v3223 = vpop.permute.xlu0 %3222
      %3224 = vrot.lane.b32.xlu0 %v1042, 96
      %v3225 = vpop.permute.xlu0 %3224
      %v3227 = vsel %vm1089, %v3223, 0
      %v3230 = vsel %vm1089, %v3225, 0
      %3232 = vmatprep.subr.bf16.mxu0 0
      %3233 = vmatpush1.bf16.xpose.msra.mxu0 %v3230
      %3234 = vmatprep.subr.bf16.mxu0 0
      %3235 = vmatpush1.bf16.xpose.msra.mxu0 0
      %3236 = vmatprep.subr.bf16.mxu0 0
      %3237 = vmatpush1.bf16.xpose.msra.mxu0 0
      %3238 = vmatprep.subr.bf16.mxu0 0
      %3239 = vmatpush1.bf16.xpose.msra.mxu0 0
      %3240 = vmatprep.subr.bf16.mxu0 0
      %3241 = vmatpush1.bf16.xpose.msra.mxu0 0
      %3242 = vmatprep.subr.bf16.mxu0 0
      %3243 = vmatpush1.bf16.xpose.msra.mxu0 0
      %3244 = vmatprep.subr.bf16.mxu0 0
      %3245 = vmatpush1.bf16.xpose.msra.mxu0 0
      %3246 = vmatprep.subr.bf16.mxu0 0
      %3247 = vmatpush1.bf16.xpose.msra.mxu0 0
      %3248 = vmatprep.subr.bf16.mxu0 0
      %3249 = vmatpush1.bf16.xpose.msra.mxu0 0
      %3250 = vmatprep.subr.bf16.mxu0 0
      %3251 = vmatpush1.bf16.xpose.msra.mxu0 0
      %3252 = vmatprep.subr.bf16.mxu0 0
      %3253 = vmatpush1.bf16.xpose.msra.mxu0 0
      %3254 = vmatprep.subr.bf16.mxu0 0
      %3255 = vmatpush1.bf16.xpose.msra.mxu0 0
      %3256 = vmatprep.subr.bf16.mxu0 0
      %3257 = vmatpush1.bf16.xpose.msra.mxu0 0
      %3258 = vmatprep.subr.bf16.mxu0 0
      %3259 = vmatpush1.bf16.xpose.msra.mxu0 0
      %3260 = vmatprep.subr.bf16.mxu0 0
      %3261 = vmatpush1.bf16.xpose.msra.mxu0 0
      %3262 = vmatprep.subr.bf16.mxu0 0
      %3263 = vmatpush1.bf16.xpose.msra.mxu0 0
      %3264 = vmatprep.mubr.bf16.mxu0 0
      %3265 = vmatmul.mubr.bf16.gmra.mrb[0].mxu0 %v3227
      %v3266 = vpop.f32.mrb[0].mxu0
      %v3267 = vadd.f32 %v968, %v3266
      %v3268 = vpop.f32.mrb[0].mxu0
      %v3269 = vpop.f32.mrb[0].mxu0
      %v3270 = vpop.f32.mrb[0].mxu0
      %3271 = vdwg.mxu0
      %3272 = vrot.lane.b32.xlu0 %v1003, 96
      %v3273 = vpop.permute.xlu0 %3272
      %3274 = vrot.lane.b32.xlu0 %v1043, 96
      %v3275 = vpop.permute.xlu0 %3274
      %v3277 = vsel %vm1089, %v3273, 0
      %v3280 = vsel %vm1089, %v3275, 0
      %3282 = vmatprep.subr.bf16.mxu0 0
      %3283 = vmatpush1.bf16.xpose.msra.mxu0 %v3280
      %3284 = vmatprep.subr.bf16.mxu0 0
      %3285 = vmatpush1.bf16.xpose.msra.mxu0 0
      %3286 = vmatprep.subr.bf16.mxu0 0
      %3287 = vmatpush1.bf16.xpose.msra.mxu0 0
      %3288 = vmatprep.subr.bf16.mxu0 0
      %3289 = vmatpush1.bf16.xpose.msra.mxu0 0
      %3290 = vmatprep.subr.bf16.mxu0 0
      %3291 = vmatpush1.bf16.xpose.msra.mxu0 0
      %3292 = vmatprep.subr.bf16.mxu0 0
      %3293 = vmatpush1.bf16.xpose.msra.mxu0 0
      %3294 = vmatprep.subr.bf16.mxu0 0
      %3295 = vmatpush1.bf16.xpose.msra.mxu0 0
      %3296 = vmatprep.subr.bf16.mxu0 0
      %3297 = vmatpush1.bf16.xpose.msra.mxu0 0
      %3298 = vmatprep.subr.bf16.mxu0 0
      %3299 = vmatpush1.bf16.xpose.msra.mxu0 0
      %3300 = vmatprep.subr.bf16.mxu0 0
      %3301 = vmatpush1.bf16.xpose.msra.mxu0 0
      %3302 = vmatprep.subr.bf16.mxu0 0
      %3303 = vmatpush1.bf16.xpose.msra.mxu0 0
      %3304 = vmatprep.subr.bf16.mxu0 0
      %3305 = vmatpush1.bf16.xpose.msra.mxu0 0
      %3306 = vmatprep.subr.bf16.mxu0 0
      %3307 = vmatpush1.bf16.xpose.msra.mxu0 0
      %3308 = vmatprep.subr.bf16.mxu0 0
      %3309 = vmatpush1.bf16.xpose.msra.mxu0 0
      %3310 = vmatprep.subr.bf16.mxu0 0
      %3311 = vmatpush1.bf16.xpose.msra.mxu0 0
      %3312 = vmatprep.subr.bf16.mxu0 0
      %3313 = vmatpush1.bf16.xpose.msra.mxu0 0
      %3314 = vmatprep.mubr.bf16.mxu0 0
      %3315 = vmatmul.mubr.bf16.gmra.mrb[0].mxu0 %v3277
      %v3316 = vpop.f32.mrb[0].mxu0
      %v3317 = vadd.f32 %v968, %v3316
      %v3318 = vpop.f32.mrb[0].mxu0
      %v3319 = vpop.f32.mrb[0].mxu0
      %v3320 = vpop.f32.mrb[0].mxu0
      %3321 = vdwg.mxu0
      %3322 = vrot.lane.b32.xlu0 %v1004, 96
      %v3323 = vpop.permute.xlu0 %3322
      %3324 = vrot.lane.b32.xlu0 %v1044, 96
      %v3325 = vpop.permute.xlu0 %3324
      %v3327 = vsel %vm1089, %v3323, 0
      %v3330 = vsel %vm1089, %v3325, 0
      %3332 = vmatprep.subr.bf16.mxu0 0
      %3333 = vmatpush1.bf16.xpose.msra.mxu0 %v3330
      %3334 = vmatprep.subr.bf16.mxu0 0
      %3335 = vmatpush1.bf16.xpose.msra.mxu0 0
      %3336 = vmatprep.subr.bf16.mxu0 0
      %3337 = vmatpush1.bf16.xpose.msra.mxu0 0
      %3338 = vmatprep.subr.bf16.mxu0 0
      %3339 = vmatpush1.bf16.xpose.msra.mxu0 0
      %3340 = vmatprep.subr.bf16.mxu0 0
      %3341 = vmatpush1.bf16.xpose.msra.mxu0 0
      %3342 = vmatprep.subr.bf16.mxu0 0
      %3343 = vmatpush1.bf16.xpose.msra.mxu0 0
      %3344 = vmatprep.subr.bf16.mxu0 0
      %3345 = vmatpush1.bf16.xpose.msra.mxu0 0
      %3346 = vmatprep.subr.bf16.mxu0 0
      %3347 = vmatpush1.bf16.xpose.msra.mxu0 0
      %3348 = vmatprep.subr.bf16.mxu0 0
      %3349 = vmatpush1.bf16.xpose.msra.mxu0 0
      %3350 = vmatprep.subr.bf16.mxu0 0
      %3351 = vmatpush1.bf16.xpose.msra.mxu0 0
      %3352 = vmatprep.subr.bf16.mxu0 0
      %3353 = vmatpush1.bf16.xpose.msra.mxu0 0
      %3354 = vmatprep.subr.bf16.mxu0 0
      %3355 = vmatpush1.bf16.xpose.msra.mxu0 0
      %3356 = vmatprep.subr.bf16.mxu0 0
      %3357 = vmatpush1.bf16.xpose.msra.mxu0 0
      %3358 = vmatprep.subr.bf16.mxu0 0
      %3359 = vmatpush1.bf16.xpose.msra.mxu0 0
      %3360 = vmatprep.subr.bf16.mxu0 0
      %3361 = vmatpush1.bf16.xpose.msra.mxu0 0
      %3362 = vmatprep.subr.bf16.mxu0 0
      %3363 = vmatpush1.bf16.xpose.msra.mxu0 0
      %3364 = vmatprep.mubr.bf16.mxu0 0
      %3365 = vmatmul.mubr.bf16.gmra.mrb[0].mxu0 %v3327
      %v3366 = vpop.f32.mrb[0].mxu0
      %v3367 = vadd.f32 %v968, %v3366
      %v3368 = vpop.f32.mrb[0].mxu0
      %v3369 = vpop.f32.mrb[0].mxu0
      %v3370 = vpop.f32.mrb[0].mxu0
      %3371 = vdwg.mxu0
      %3372 = vrot.lane.b32.xlu0 %v1005, 96
      %v3373 = vpop.permute.xlu0 %3372
      %3374 = vrot.lane.b32.xlu0 %v1045, 96
      %v3375 = vpop.permute.xlu0 %3374
      %v3377 = vsel %vm1089, %v3373, 0
      %v3380 = vsel %vm1089, %v3375, 0
      %3382 = vmatprep.subr.bf16.mxu0 0
      %3383 = vmatpush1.bf16.xpose.msra.mxu0 %v3380
      %3384 = vmatprep.subr.bf16.mxu0 0
      %3385 = vmatpush1.bf16.xpose.msra.mxu0 0
      %3386 = vmatprep.subr.bf16.mxu0 0
      %3387 = vmatpush1.bf16.xpose.msra.mxu0 0
      %3388 = vmatprep.subr.bf16.mxu0 0
      %3389 = vmatpush1.bf16.xpose.msra.mxu0 0
      %3390 = vmatprep.subr.bf16.mxu0 0
      %3391 = vmatpush1.bf16.xpose.msra.mxu0 0
      %3392 = vmatprep.subr.bf16.mxu0 0
      %3393 = vmatpush1.bf16.xpose.msra.mxu0 0
      %3394 = vmatprep.subr.bf16.mxu0 0
      %3395 = vmatpush1.bf16.xpose.msra.mxu0 0
      %3396 = vmatprep.subr.bf16.mxu0 0
      %3397 = vmatpush1.bf16.xpose.msra.mxu0 0
      %3398 = vmatprep.subr.bf16.mxu0 0
      %3399 = vmatpush1.bf16.xpose.msra.mxu0 0
      %3400 = vmatprep.subr.bf16.mxu0 0
      %3401 = vmatpush1.bf16.xpose.msra.mxu0 0
      %3402 = vmatprep.subr.bf16.mxu0 0
      %3403 = vmatpush1.bf16.xpose.msra.mxu0 0
      %3404 = vmatprep.subr.bf16.mxu0 0
      %3405 = vmatpush1.bf16.xpose.msra.mxu0 0
      %3406 = vmatprep.subr.bf16.mxu0 0
      %3407 = vmatpush1.bf16.xpose.msra.mxu0 0
      %3408 = vmatprep.subr.bf16.mxu0 0
      %3409 = vmatpush1.bf16.xpose.msra.mxu0 0
      %3410 = vmatprep.subr.bf16.mxu0 0
      %3411 = vmatpush1.bf16.xpose.msra.mxu0 0
      %3412 = vmatprep.subr.bf16.mxu0 0
      %3413 = vmatpush1.bf16.xpose.msra.mxu0 0
      %3414 = vmatprep.mubr.bf16.mxu0 0
      %3415 = vmatmul.mubr.bf16.gmra.mrb[0].mxu0 %v3377
      %v3416 = vpop.f32.mrb[0].mxu0
      %v3417 = vadd.f32 %v968, %v3416
      %v3418 = vpop.f32.mrb[0].mxu0
      %v3419 = vpop.f32.mrb[0].mxu0
      %v3420 = vpop.f32.mrb[0].mxu0
      %3421 = vdwg.mxu0
      %3422 = vrot.lane.b32.xlu0 %v1006, 96
      %v3423 = vpop.permute.xlu0 %3422
      %3424 = vrot.lane.b32.xlu0 %v1046, 96
      %v3425 = vpop.permute.xlu0 %3424
      %v3427 = vsel %vm1089, %v3423, 0
      %v3430 = vsel %vm1089, %v3425, 0
      %3432 = vmatprep.subr.bf16.mxu0 0
      %3433 = vmatpush1.bf16.xpose.msra.mxu0 %v3430
      %3434 = vmatprep.subr.bf16.mxu0 0
      %3435 = vmatpush1.bf16.xpose.msra.mxu0 0
      %3436 = vmatprep.subr.bf16.mxu0 0
      %3437 = vmatpush1.bf16.xpose.msra.mxu0 0
      %3438 = vmatprep.subr.bf16.mxu0 0
      %3439 = vmatpush1.bf16.xpose.msra.mxu0 0
      %3440 = vmatprep.subr.bf16.mxu0 0
      %3441 = vmatpush1.bf16.xpose.msra.mxu0 0
      %3442 = vmatprep.subr.bf16.mxu0 0
      %3443 = vmatpush1.bf16.xpose.msra.mxu0 0
      %3444 = vmatprep.subr.bf16.mxu0 0
      %3445 = vmatpush1.bf16.xpose.msra.mxu0 0
      %3446 = vmatprep.subr.bf16.mxu0 0
      %3447 = vmatpush1.bf16.xpose.msra.mxu0 0
      %3448 = vmatprep.subr.bf16.mxu0 0
      %3449 = vmatpush1.bf16.xpose.msra.mxu0 0
      %3450 = vmatprep.subr.bf16.mxu0 0
      %3451 = vmatpush1.bf16.xpose.msra.mxu0 0
      %3452 = vmatprep.subr.bf16.mxu0 0
      %3453 = vmatpush1.bf16.xpose.msra.mxu0 0
      %3454 = vmatprep.subr.bf16.mxu0 0
      %3455 = vmatpush1.bf16.xpose.msra.mxu0 0
      %3456 = vmatprep.subr.bf16.mxu0 0
      %3457 = vmatpush1.bf16.xpose.msra.mxu0 0
      %3458 = vmatprep.subr.bf16.mxu0 0
      %3459 = vmatpush1.bf16.xpose.msra.mxu0 0
      %3460 = vmatprep.subr.bf16.mxu0 0
      %3461 = vmatpush1.bf16.xpose.msra.mxu0 0
      %3462 = vmatprep.subr.bf16.mxu0 0
      %3463 = vmatpush1.bf16.xpose.msra.mxu0 0
      %3464 = vmatprep.mubr.bf16.mxu0 0
      %3465 = vmatmul.mubr.bf16.gmra.mrb[0].mxu0 %v3427
      %v3466 = vpop.f32.mrb[0].mxu0
      %v3467 = vadd.f32 %v968, %v3466
      %v3468 = vpop.f32.mrb[0].mxu0
      %v3469 = vpop.f32.mrb[0].mxu0
      %v3470 = vpop.f32.mrb[0].mxu0
      %3471 = vdwg.mxu0
      %3472 = vrot.lane.b32.xlu0 %v1007, 96
      %v3473 = vpop.permute.xlu0 %3472
      %3474 = vrot.lane.b32.xlu0 %v1047, 96
      %v3475 = vpop.permute.xlu0 %3474
      %v3477 = vsel %vm1089, %v3473, 0
      %v3480 = vsel %vm1089, %v3475, 0
      %3482 = vmatprep.subr.bf16.mxu0 0
      %3483 = vmatpush1.bf16.xpose.msra.mxu0 %v3480
      %3484 = vmatprep.subr.bf16.mxu0 0
      %3485 = vmatpush1.bf16.xpose.msra.mxu0 0
      %3486 = vmatprep.subr.bf16.mxu0 0
      %3487 = vmatpush1.bf16.xpose.msra.mxu0 0
      %3488 = vmatprep.subr.bf16.mxu0 0
      %3489 = vmatpush1.bf16.xpose.msra.mxu0 0
      %3490 = vmatprep.subr.bf16.mxu0 0
      %3491 = vmatpush1.bf16.xpose.msra.mxu0 0
      %3492 = vmatprep.subr.bf16.mxu0 0
      %3493 = vmatpush1.bf16.xpose.msra.mxu0 0
      %3494 = vmatprep.subr.bf16.mxu0 0
      %3495 = vmatpush1.bf16.xpose.msra.mxu0 0
      %3496 = vmatprep.subr.bf16.mxu0 0
      %3497 = vmatpush1.bf16.xpose.msra.mxu0 0
      %3498 = vmatprep.subr.bf16.mxu0 0
      %3499 = vmatpush1.bf16.xpose.msra.mxu0 0
      %3500 = vmatprep.subr.bf16.mxu0 0
      %3501 = vmatpush1.bf16.xpose.msra.mxu0 0
      %3502 = vmatprep.subr.bf16.mxu0 0
      %3503 = vmatpush1.bf16.xpose.msra.mxu0 0
      %3504 = vmatprep.subr.bf16.mxu0 0
      %3505 = vmatpush1.bf16.xpose.msra.mxu0 0
      %3506 = vmatprep.subr.bf16.mxu0 0
      %3507 = vmatpush1.bf16.xpose.msra.mxu0 0
      %3508 = vmatprep.subr.bf16.mxu0 0
      %3509 = vmatpush1.bf16.xpose.msra.mxu0 0
      %3510 = vmatprep.subr.bf16.mxu0 0
      %3511 = vmatpush1.bf16.xpose.msra.mxu0 0
      %3512 = vmatprep.subr.bf16.mxu0 0
      %3513 = vmatpush1.bf16.xpose.msra.mxu0 0
      %3514 = vmatprep.mubr.bf16.mxu0 0
      %3515 = vmatmul.mubr.bf16.gmra.mrb[0].mxu0 %v3477
      %v3516 = vpop.f32.mrb[0].mxu0
      %v3517 = vadd.f32 %v968, %v3516
      %v3518 = vpop.f32.mrb[0].mxu0
      %v3519 = vpop.f32.mrb[0].mxu0
      %v3520 = vpop.f32.mrb[0].mxu0
      %3521 = vdwg.mxu0
      %3522 = vrot.lane.b32.xlu0 %v1008, 96
      %v3523 = vpop.permute.xlu0 %3522
      %3524 = vrot.lane.b32.xlu0 %v1048, 96
      %v3525 = vpop.permute.xlu0 %3524
      %v3527 = vsel %vm1089, %v3523, 0
      %v3530 = vsel %vm1089, %v3525, 0
      %3532 = vmatprep.subr.bf16.mxu0 0
      %3533 = vmatpush1.bf16.xpose.msra.mxu0 %v3530
      %3534 = vmatprep.subr.bf16.mxu0 0
      %3535 = vmatpush1.bf16.xpose.msra.mxu0 0
      %3536 = vmatprep.subr.bf16.mxu0 0
      %3537 = vmatpush1.bf16.xpose.msra.mxu0 0
      %3538 = vmatprep.subr.bf16.mxu0 0
      %3539 = vmatpush1.bf16.xpose.msra.mxu0 0
      %3540 = vmatprep.subr.bf16.mxu0 0
      %3541 = vmatpush1.bf16.xpose.msra.mxu0 0
      %3542 = vmatprep.subr.bf16.mxu0 0
      %3543 = vmatpush1.bf16.xpose.msra.mxu0 0
      %3544 = vmatprep.subr.bf16.mxu0 0
      %3545 = vmatpush1.bf16.xpose.msra.mxu0 0
      %3546 = vmatprep.subr.bf16.mxu0 0
      %3547 = vmatpush1.bf16.xpose.msra.mxu0 0
      %3548 = vmatprep.subr.bf16.mxu0 0
      %3549 = vmatpush1.bf16.xpose.msra.mxu0 0
      %3550 = vmatprep.subr.bf16.mxu0 0
      %3551 = vmatpush1.bf16.xpose.msra.mxu0 0
      %3552 = vmatprep.subr.bf16.mxu0 0
      %3553 = vmatpush1.bf16.xpose.msra.mxu0 0
      %3554 = vmatprep.subr.bf16.mxu0 0
      %3555 = vmatpush1.bf16.xpose.msra.mxu0 0
      %3556 = vmatprep.subr.bf16.mxu0 0
      %3557 = vmatpush1.bf16.xpose.msra.mxu0 0
      %3558 = vmatprep.subr.bf16.mxu0 0
      %3559 = vmatpush1.bf16.xpose.msra.mxu0 0
      %3560 = vmatprep.subr.bf16.mxu0 0
      %3561 = vmatpush1.bf16.xpose.msra.mxu0 0
      %3562 = vmatprep.subr.bf16.mxu0 0
      %3563 = vmatpush1.bf16.xpose.msra.mxu0 0
      %3564 = vmatprep.mubr.bf16.mxu0 0
      %3565 = vmatmul.mubr.bf16.gmra.mrb[0].mxu0 %v3527
      %v3566 = vpop.f32.mrb[0].mxu0
      %v3567 = vadd.f32 %v968, %v3566
      %v3568 = vpop.f32.mrb[0].mxu0
      %v3569 = vpop.f32.mrb[0].mxu0
      %v3570 = vpop.f32.mrb[0].mxu0
      %3571 = vdwg.mxu0
      %v3572 = vsel %vm1826, %v2817, -inf
      %3573 = vmax.xlane.f32.xlu0 %v3572
      %v3574 = vpop.xlane.xlu0 %3573
      %v3575 = vsel %vm1826, %v2867, -inf
      %3576 = vmax.xlane.f32.xlu0 %v3575
      %v3577 = vpop.xlane.xlu0 %3576
      %v3578 = vsel %vm1826, %v2917, -inf
      %3579 = vmax.xlane.f32.xlu0 %v3578
      %v3580 = vpop.xlane.xlu0 %3579
      %v3581 = vsel %vm1826, %v2967, -inf
      %3582 = vmax.xlane.f32.xlu0 %v3581
      %v3583 = vpop.xlane.xlu0 %3582
      %v3584 = vsel %vm1826, %v3017, -inf
      %3585 = vmax.xlane.f32.xlu0 %v3584
      %v3586 = vpop.xlane.xlu0 %3585
      %v3587 = vsel %vm1826, %v3067, -inf
      %3588 = vmax.xlane.f32.xlu0 %v3587
      %v3589 = vpop.xlane.xlu0 %3588
      %v3590 = vsel %vm1826, %v3117, -inf
      %3591 = vmax.xlane.f32.xlu0 %v3590
      %v3592 = vpop.xlane.xlu0 %3591
      %v3593 = vsel %vm1826, %v3167, -inf
      %3594 = vmax.xlane.f32.xlu0 %v3593
      %v3595 = vpop.xlane.xlu0 %3594
      %v3596 = vsel %vm1826, %v3217, -inf
      %3597 = vmax.xlane.f32.xlu0 %v3596
      %v3598 = vpop.xlane.xlu0 %3597
      %v3599 = vsel %vm1826, %v3267, -inf
      %3600 = vmax.xlane.f32.xlu0 %v3599
      %v3601 = vpop.xlane.xlu0 %3600
      %v3602 = vsel %vm1826, %v3317, -inf
      %3603 = vmax.xlane.f32.xlu0 %v3602
      %v3604 = vpop.xlane.xlu0 %3603
      %v3605 = vsel %vm1826, %v3367, -inf
      %3606 = vmax.xlane.f32.xlu0 %v3605
      %v3607 = vpop.xlane.xlu0 %3606
      %v3608 = vsel %vm1826, %v3417, -inf
      %3609 = vmax.xlane.f32.xlu0 %v3608
      %v3610 = vpop.xlane.xlu0 %3609
      %v3611 = vsel %vm1826, %v3467, -inf
      %3612 = vmax.xlane.f32.xlu0 %v3611
      %v3613 = vpop.xlane.xlu0 %3612
      %v3614 = vsel %vm1826, %v3517, -inf
      %3615 = vmax.xlane.f32.xlu0 %v3614
      %v3616 = vpop.xlane.xlu0 %3615
      %v3617 = vsel %vm1826, %v3567, -inf
      %3618 = vmax.xlane.f32.xlu0 %v3617
      %v3619 = vpop.xlane.xlu0 %3618
      %v3620 = vsub.f32 %v2817, %v3574
      %v3621 = vsub.f32 %v2867, %v3577
      %v3622 = vsub.f32 %v2917, %v3580
      %v3623 = vsub.f32 %v2967, %v3583
      %v3624 = vsub.f32 %v3017, %v3586
      %v3625 = vsub.f32 %v3067, %v3589
      %v3626 = vsub.f32 %v3117, %v3592
      %v3627 = vsub.f32 %v3167, %v3595
      %v3628 = vsub.f32 %v3217, %v3598
      %v3629 = vsub.f32 %v3267, %v3601
      %v3630 = vsub.f32 %v3317, %v3604
      %v3631 = vsub.f32 %v3367, %v3607
      %v3632 = vsub.f32 %v3417, %v3610
      %v3633 = vsub.f32 %v3467, %v3613
      %v3634 = vsub.f32 %v3517, %v3616
      %v3635 = vsub.f32 %v3567, %v3619
      %v3636 = vmul.f32 %v3620, 1.442695
      %v3637 = vpow.pop %v3636
      %v3638 = vmul.f32 %v3621, 1.442695
      %v3639 = vpow.pop %v3638
      %v3640 = vmul.f32 %v3622, 1.442695
      %v3641 = vpow.pop %v3640
      %v3642 = vmul.f32 %v3623, 1.442695
      %v3643 = vpow.pop %v3642
      %v3644 = vmul.f32 %v3624, 1.442695
      %v3645 = vpow.pop %v3644
      %v3646 = vmul.f32 %v3625, 1.442695
      %v3647 = vpow.pop %v3646
      %v3648 = vmul.f32 %v3626, 1.442695
      %v3649 = vpow.pop %v3648
      %v3650 = vmul.f32 %v3627, 1.442695
      %v3651 = vpow.pop %v3650
      %v3652 = vmul.f32 %v3628, 1.442695
      %v3653 = vpow.pop %v3652
      %v3654 = vmul.f32 %v3629, 1.442695
      %v3655 = vpow.pop %v3654
      %v3656 = vmul.f32 %v3630, 1.442695
      %v3657 = vpow.pop %v3656
      %v3658 = vmul.f32 %v3631, 1.442695
      %v3659 = vpow.pop %v3658
      %v3660 = vmul.f32 %v3632, 1.442695
      %v3661 = vpow.pop %v3660
      %v3662 = vmul.f32 %v3633, 1.442695
      %v3663 = vpow.pop %v3662
      %v3664 = vmul.f32 %v3634, 1.442695
      %v3665 = vpow.pop %v3664
      %v3666 = vmul.f32 %v3635, 1.442695
      %v3667 = vpow.pop %v3666
      %v3668 = vsel %vm1826, %v3637, 0.0
      %3669 = vadd.xlane.f32.xlu0 %v3668
      %v3670 = vpop.xlane.xlu0 %3669
      %v3671 = vsel %vm1826, %v3639, 0.0
      %3672 = vadd.xlane.f32.xlu0 %v3671
      %v3673 = vpop.xlane.xlu0 %3672
      %v3674 = vsel %vm1826, %v3641, 0.0
      %3675 = vadd.xlane.f32.xlu0 %v3674
      %v3676 = vpop.xlane.xlu0 %3675
      %v3677 = vsel %vm1826, %v3643, 0.0
      %3678 = vadd.xlane.f32.xlu0 %v3677
      %v3679 = vpop.xlane.xlu0 %3678
      %v3680 = vsel %vm1826, %v3645, 0.0
      %3681 = vadd.xlane.f32.xlu0 %v3680
      %v3682 = vpop.xlane.xlu0 %3681
      %v3683 = vsel %vm1826, %v3647, 0.0
      %3684 = vadd.xlane.f32.xlu0 %v3683
      %v3685 = vpop.xlane.xlu0 %3684
      %v3686 = vsel %vm1826, %v3649, 0.0
      %3687 = vadd.xlane.f32.xlu0 %v3686
      %v3688 = vpop.xlane.xlu0 %3687
      %v3689 = vsel %vm1826, %v3651, 0.0
      %3690 = vadd.xlane.f32.xlu0 %v3689
      %v3691 = vpop.xlane.xlu0 %3690
      %v3692 = vsel %vm1826, %v3653, 0.0
      %3693 = vadd.xlane.f32.xlu0 %v3692
      %v3694 = vpop.xlane.xlu0 %3693
      %v3695 = vsel %vm1826, %v3655, 0.0
      %3696 = vadd.xlane.f32.xlu0 %v3695
      %v3697 = vpop.xlane.xlu0 %3696
      %v3698 = vsel %vm1826, %v3657, 0.0
      %3699 = vadd.xlane.f32.xlu0 %v3698
      %v3700 = vpop.xlane.xlu0 %3699
      %v3701 = vsel %vm1826, %v3659, 0.0
      %3702 = vadd.xlane.f32.xlu0 %v3701
      %v3703 = vpop.xlane.xlu0 %3702
      %v3704 = vsel %vm1826, %v3661, 0.0
      %3705 = vadd.xlane.f32.xlu0 %v3704
      %v3706 = vpop.xlane.xlu0 %3705
      %v3707 = vsel %vm1826, %v3663, 0.0
      %3708 = vadd.xlane.f32.xlu0 %v3707
      %v3709 = vpop.xlane.xlu0 %3708
      %v3710 = vsel %vm1826, %v3665, 0.0
      %3711 = vadd.xlane.f32.xlu0 %v3710
      %v3712 = vpop.xlane.xlu0 %3711
      %v3713 = vsel %vm1826, %v3667, 0.0
      %3714 = vadd.xlane.f32.xlu0 %v3713
      %v3715 = vpop.xlane.xlu0 %3714
      %v3716 = vrcp.pop %v3670
      %v3717 = vrcp.pop %v3673
      %v3718 = vrcp.pop %v3676
      %v3719 = vrcp.pop %v3679
      %v3720 = vrcp.pop %v3682
      %v3721 = vrcp.pop %v3685
      %v3722 = vrcp.pop %v3688
      %v3723 = vrcp.pop %v3691
      %v3724 = vrcp.pop %v3694
      %v3725 = vrcp.pop %v3697
      %v3726 = vrcp.pop %v3700
      %v3727 = vrcp.pop %v3703
      %v3728 = vrcp.pop %v3706
      %v3729 = vrcp.pop %v3709
      %v3730 = vrcp.pop %v3712
      %v3731 = vrcp.pop %v3715
      %v3732 = vmul.f32 %v3637, %v3716
      %v3733 = vmul.f32 %v3639, %v3717
      %v3734 = vmul.f32 %v3641, %v3718
      %v3735 = vmul.f32 %v3643, %v3719
      %v3736 = vmul.f32 %v3645, %v3720
      %v3737 = vmul.f32 %v3647, %v3721
      %v3738 = vmul.f32 %v3649, %v3722
      %v3739 = vmul.f32 %v3651, %v3723
      %v3740 = vmul.f32 %v3653, %v3724
      %v3741 = vmul.f32 %v3655, %v3725
      %v3742 = vmul.f32 %v3657, %v3726
      %v3743 = vmul.f32 %v3659, %v3727
      %v3744 = vmul.f32 %v3661, %v3728
      %v3745 = vmul.f32 %v3663, %v3729
      %v3746 = vmul.f32 %v3665, %v3730
      %v3747 = vmul.f32 %v3667, %v3731
      %v3748 = vpack.c.bf16 %v3732, %v3732
      %v3749 = vpack.c.bf16 %v3733, %v3733
      %v3750 = vpack.c.bf16 %v3734, %v3734
      %v3751 = vpack.c.bf16 %v3735, %v3735
      %v3752 = vpack.c.bf16 %v3736, %v3736
      %v3753 = vpack.c.bf16 %v3737, %v3737
      %v3754 = vpack.c.bf16 %v3738, %v3738
      %v3755 = vpack.c.bf16 %v3739, %v3739
      %v3756 = vpack.c.bf16 %v3740, %v3740
      %v3757 = vpack.c.bf16 %v3741, %v3741
      %v3758 = vpack.c.bf16 %v3742, %v3742
      %v3759 = vpack.c.bf16 %v3743, %v3743
      %v3760 = vpack.c.bf16 %v3744, %v3744
      %v3761 = vpack.c.bf16 %v3745, %v3745
      %v3762 = vpack.c.bf16 %v3746, %v3746
      %v3763 = vpack.c.bf16 %v3747, %v3747
      %3764 = vrot.lane.b32.xlu0 %v1073, 96
      %v3765 = vpop.permute.xlu0 %3764
      %v3767 = vsel %vm1826, %v3748, 0
      %v3770 = vsel %vm2022, %v3765, 0
      %3772 = vmatprep.subr.bf16.mxu0 0
      %3773 = vmatpush1.bf16.msra.mxu0 %v3770
      %3774 = vmatprep.subr.bf16.mxu0 0
      %3775 = vmatpush1.bf16.msra.mxu0 0
      %3776 = vmatprep.subr.bf16.mxu0 0
      %3777 = vmatpush1.bf16.msra.mxu0 0
      %3778 = vmatprep.subr.bf16.mxu0 0
      %3779 = vmatpush1.bf16.msra.mxu0 0
      %3780 = vmatprep.subr.bf16.mxu0 0
      %3781 = vmatpush1.bf16.msra.mxu0 0
      %3782 = vmatprep.subr.bf16.mxu0 0
      %3783 = vmatpush1.bf16.msra.mxu0 0
      %3784 = vmatprep.subr.bf16.mxu0 0
      %3785 = vmatpush1.bf16.msra.mxu0 0
      %3786 = vmatprep.subr.bf16.mxu0 0
      %3787 = vmatpush1.bf16.msra.mxu0 0
      %3788 = vmatprep.subr.bf16.mxu0 0
      %3789 = vmatpush1.bf16.msra.mxu0 0
      %3790 = vmatprep.subr.bf16.mxu0 0
      %3791 = vmatpush1.bf16.msra.mxu0 0
      %3792 = vmatprep.subr.bf16.mxu0 0
      %3793 = vmatpush1.bf16.msra.mxu0 0
      %3794 = vmatprep.subr.bf16.mxu0 0
      %3795 = vmatpush1.bf16.msra.mxu0 0
      %3796 = vmatprep.subr.bf16.mxu0 0
      %3797 = vmatpush1.bf16.msra.mxu0 0
      %3798 = vmatprep.subr.bf16.mxu0 0
      %3799 = vmatpush1.bf16.msra.mxu0 0
      %3800 = vmatprep.subr.bf16.mxu0 0
      %3801 = vmatpush1.bf16.msra.mxu0 0
      %3802 = vmatprep.subr.bf16.mxu0 0
      %3803 = vmatpush1.bf16.msra.mxu0 0
      %3804 = vmatprep.mubr.bf16.mxu0 0
      %3805 = vmatmul.mubr.bf16.gmra.mrb[0].mxu0 %v3767
      %v3806 = vpop.f32.mrb[0].mxu0
      %v3807 = vadd.f32 0.0, %v3806
      %v3808 = vpop.f32.mrb[0].mxu0
      %v3809 = vpop.f32.mrb[0].mxu0
      %v3810 = vpop.f32.mrb[0].mxu0
      %3811 = vdwg.mxu0
      %3812 = vrot.lane.b32.xlu0 %v1074, 96
      %v3813 = vpop.permute.xlu0 %3812
      %v3815 = vsel %vm1826, %v3749, 0
      %v3818 = vsel %vm2022, %v3813, 0
      %3820 = vmatprep.subr.bf16.mxu0 0
      %3821 = vmatpush1.bf16.msra.mxu0 %v3818
      %3822 = vmatprep.subr.bf16.mxu0 0
      %3823 = vmatpush1.bf16.msra.mxu0 0
      %3824 = vmatprep.subr.bf16.mxu0 0
      %3825 = vmatpush1.bf16.msra.mxu0 0
      %3826 = vmatprep.subr.bf16.mxu0 0
      %3827 = vmatpush1.bf16.msra.mxu0 0
      %3828 = vmatprep.subr.bf16.mxu0 0
      %3829 = vmatpush1.bf16.msra.mxu0 0
      %3830 = vmatprep.subr.bf16.mxu0 0
      %3831 = vmatpush1.bf16.msra.mxu0 0
      %3832 = vmatprep.subr.bf16.mxu0 0
      %3833 = vmatpush1.bf16.msra.mxu0 0
      %3834 = vmatprep.subr.bf16.mxu0 0
      %3835 = vmatpush1.bf16.msra.mxu0 0
      %3836 = vmatprep.subr.bf16.mxu0 0
      %3837 = vmatpush1.bf16.msra.mxu0 0
      %3838 = vmatprep.subr.bf16.mxu0 0
      %3839 = vmatpush1.bf16.msra.mxu0 0
      %3840 = vmatprep.subr.bf16.mxu0 0
      %3841 = vmatpush1.bf16.msra.mxu0 0
      %3842 = vmatprep.subr.bf16.mxu0 0
      %3843 = vmatpush1.bf16.msra.mxu0 0
      %3844 = vmatprep.subr.bf16.mxu0 0
      %3845 = vmatpush1.bf16.msra.mxu0 0
      %3846 = vmatprep.subr.bf16.mxu0 0
      %3847 = vmatpush1.bf16.msra.mxu0 0
      %3848 = vmatprep.subr.bf16.mxu0 0
      %3849 = vmatpush1.bf16.msra.mxu0 0
      %3850 = vmatprep.subr.bf16.mxu0 0
      %3851 = vmatpush1.bf16.msra.mxu0 0
      %3852 = vmatprep.mubr.bf16.mxu0 0
      %3853 = vmatmul.mubr.bf16.gmra.mrb[0].mxu0 %v3815
      %v3854 = vpop.f32.mrb[0].mxu0
      %v3855 = vadd.f32 0.0, %v3854
      %v3856 = vpop.f32.mrb[0].mxu0
      %v3857 = vpop.f32.mrb[0].mxu0
      %v3858 = vpop.f32.mrb[0].mxu0
      %3859 = vdwg.mxu0
      %3860 = vrot.lane.b32.xlu0 %v1075, 96
      %v3861 = vpop.permute.xlu0 %3860
      %v3863 = vsel %vm1826, %v3750, 0
      %v3866 = vsel %vm2022, %v3861, 0
      %3868 = vmatprep.subr.bf16.mxu0 0
      %3869 = vmatpush1.bf16.msra.mxu0 %v3866
      %3870 = vmatprep.subr.bf16.mxu0 0
      %3871 = vmatpush1.bf16.msra.mxu0 0
      %3872 = vmatprep.subr.bf16.mxu0 0
      %3873 = vmatpush1.bf16.msra.mxu0 0
      %3874 = vmatprep.subr.bf16.mxu0 0
      %3875 = vmatpush1.bf16.msra.mxu0 0
      %3876 = vmatprep.subr.bf16.mxu0 0
      %3877 = vmatpush1.bf16.msra.mxu0 0
      %3878 = vmatprep.subr.bf16.mxu0 0
      %3879 = vmatpush1.bf16.msra.mxu0 0
      %3880 = vmatprep.subr.bf16.mxu0 0
      %3881 = vmatpush1.bf16.msra.mxu0 0
      %3882 = vmatprep.subr.bf16.mxu0 0
      %3883 = vmatpush1.bf16.msra.mxu0 0
      %3884 = vmatprep.subr.bf16.mxu0 0
      %3885 = vmatpush1.bf16.msra.mxu0 0
      %3886 = vmatprep.subr.bf16.mxu0 0
      %3887 = vmatpush1.bf16.msra.mxu0 0
      %3888 = vmatprep.subr.bf16.mxu0 0
      %3889 = vmatpush1.bf16.msra.mxu0 0
      %3890 = vmatprep.subr.bf16.mxu0 0
      %3891 = vmatpush1.bf16.msra.mxu0 0
      %3892 = vmatprep.subr.bf16.mxu0 0
      %3893 = vmatpush1.bf16.msra.mxu0 0
      %3894 = vmatprep.subr.bf16.mxu0 0
      %3895 = vmatpush1.bf16.msra.mxu0 0
      %3896 = vmatprep.subr.bf16.mxu0 0
      %3897 = vmatpush1.bf16.msra.mxu0 0
      %3898 = vmatprep.subr.bf16.mxu0 0
      %3899 = vmatpush1.bf16.msra.mxu0 0
      %3900 = vmatprep.mubr.bf16.mxu0 0
      %3901 = vmatmul.mubr.bf16.gmra.mrb[0].mxu0 %v3863
      %v3902 = vpop.f32.mrb[0].mxu0
      %v3903 = vadd.f32 0.0, %v3902
      %v3904 = vpop.f32.mrb[0].mxu0
      %v3905 = vpop.f32.mrb[0].mxu0
      %v3906 = vpop.f32.mrb[0].mxu0
      %3907 = vdwg.mxu0
      %3908 = vrot.lane.b32.xlu0 %v1076, 96
      %v3909 = vpop.permute.xlu0 %3908
      %v3911 = vsel %vm1826, %v3751, 0
      %v3914 = vsel %vm2022, %v3909, 0
      %3916 = vmatprep.subr.bf16.mxu0 0
      %3917 = vmatpush1.bf16.msra.mxu0 %v3914
      %3918 = vmatprep.subr.bf16.mxu0 0
      %3919 = vmatpush1.bf16.msra.mxu0 0
      %3920 = vmatprep.subr.bf16.mxu0 0
      %3921 = vmatpush1.bf16.msra.mxu0 0
      %3922 = vmatprep.subr.bf16.mxu0 0
      %3923 = vmatpush1.bf16.msra.mxu0 0
      %3924 = vmatprep.subr.bf16.mxu0 0
      %3925 = vmatpush1.bf16.msra.mxu0 0
      %3926 = vmatprep.subr.bf16.mxu0 0
      %3927 = vmatpush1.bf16.msra.mxu0 0
      %3928 = vmatprep.subr.bf16.mxu0 0
      %3929 = vmatpush1.bf16.msra.mxu0 0
      %3930 = vmatprep.subr.bf16.mxu0 0
      %3931 = vmatpush1.bf16.msra.mxu0 0
      %3932 = vmatprep.subr.bf16.mxu0 0
      %3933 = vmatpush1.bf16.msra.mxu0 0
      %3934 = vmatprep.subr.bf16.mxu0 0
      %3935 = vmatpush1.bf16.msra.mxu0 0
      %3936 = vmatprep.subr.bf16.mxu0 0
      %3937 = vmatpush1.bf16.msra.mxu0 0
      %3938 = vmatprep.subr.bf16.mxu0 0
      %3939 = vmatpush1.bf16.msra.mxu0 0
      %3940 = vmatprep.subr.bf16.mxu0 0
      %3941 = vmatpush1.bf16.msra.mxu0 0
      %3942 = vmatprep.subr.bf16.mxu0 0
      %3943 = vmatpush1.bf16.msra.mxu0 0
      %3944 = vmatprep.subr.bf16.mxu0 0
      %3945 = vmatpush1.bf16.msra.mxu0 0
      %3946 = vmatprep.subr.bf16.mxu0 0
      %3947 = vmatpush1.bf16.msra.mxu0 0
      %3948 = vmatprep.mubr.bf16.mxu0 0
      %3949 = vmatmul.mubr.bf16.gmra.mrb[0].mxu0 %v3911
      %v3950 = vpop.f32.mrb[0].mxu0
      %v3951 = vadd.f32 0.0, %v3950
      %v3952 = vpop.f32.mrb[0].mxu0
      %v3953 = vpop.f32.mrb[0].mxu0
      %v3954 = vpop.f32.mrb[0].mxu0
      %3955 = vdwg.mxu0
      %3956 = vrot.lane.b32.xlu0 %v1077, 96
      %v3957 = vpop.permute.xlu0 %3956
      %v3959 = vsel %vm1826, %v3752, 0
      %v3962 = vsel %vm2022, %v3957, 0
      %3964 = vmatprep.subr.bf16.mxu0 0
      %3965 = vmatpush1.bf16.msra.mxu0 %v3962
      %3966 = vmatprep.subr.bf16.mxu0 0
      %3967 = vmatpush1.bf16.msra.mxu0 0
      %3968 = vmatprep.subr.bf16.mxu0 0
      %3969 = vmatpush1.bf16.msra.mxu0 0
      %3970 = vmatprep.subr.bf16.mxu0 0
      %3971 = vmatpush1.bf16.msra.mxu0 0
      %3972 = vmatprep.subr.bf16.mxu0 0
      %3973 = vmatpush1.bf16.msra.mxu0 0
      %3974 = vmatprep.subr.bf16.mxu0 0
      %3975 = vmatpush1.bf16.msra.mxu0 0
      %3976 = vmatprep.subr.bf16.mxu0 0
      %3977 = vmatpush1.bf16.msra.mxu0 0
      %3978 = vmatprep.subr.bf16.mxu0 0
      %3979 = vmatpush1.bf16.msra.mxu0 0
      %3980 = vmatprep.subr.bf16.mxu0 0
      %3981 = vmatpush1.bf16.msra.mxu0 0
      %3982 = vmatprep.subr.bf16.mxu0 0
      %3983 = vmatpush1.bf16.msra.mxu0 0
      %3984 = vmatprep.subr.bf16.mxu0 0
      %3985 = vmatpush1.bf16.msra.mxu0 0
      %3986 = vmatprep.subr.bf16.mxu0 0
      %3987 = vmatpush1.bf16.msra.mxu0 0
      %3988 = vmatprep.subr.bf16.mxu0 0
      %3989 = vmatpush1.bf16.msra.mxu0 0
      %3990 = vmatprep.subr.bf16.mxu0 0
      %3991 = vmatpush1.bf16.msra.mxu0 0
      %3992 = vmatprep.subr.bf16.mxu0 0
      %3993 = vmatpush1.bf16.msra.mxu0 0
      %3994 = vmatprep.subr.bf16.mxu0 0
      %3995 = vmatpush1.bf16.msra.mxu0 0
      %3996 = vmatprep.mubr.bf16.mxu0 0
      %3997 = vmatmul.mubr.bf16.gmra.mrb[0].mxu0 %v3959
      %v3998 = vpop.f32.mrb[0].mxu0
      %v3999 = vadd.f32 0.0, %v3998
      %v4000 = vpop.f32.mrb[0].mxu0
      %v4001 = vpop.f32.mrb[0].mxu0
      %v4002 = vpop.f32.mrb[0].mxu0
      %4003 = vdwg.mxu0
      %4004 = vrot.lane.b32.xlu0 %v1078, 96
      %v4005 = vpop.permute.xlu0 %4004
      %v4007 = vsel %vm1826, %v3753, 0
      %v4010 = vsel %vm2022, %v4005, 0
      %4012 = vmatprep.subr.bf16.mxu0 0
      %4013 = vmatpush1.bf16.msra.mxu0 %v4010
      %4014 = vmatprep.subr.bf16.mxu0 0
      %4015 = vmatpush1.bf16.msra.mxu0 0
      %4016 = vmatprep.subr.bf16.mxu0 0
      %4017 = vmatpush1.bf16.msra.mxu0 0
      %4018 = vmatprep.subr.bf16.mxu0 0
      %4019 = vmatpush1.bf16.msra.mxu0 0
      %4020 = vmatprep.subr.bf16.mxu0 0
      %4021 = vmatpush1.bf16.msra.mxu0 0
      %4022 = vmatprep.subr.bf16.mxu0 0
      %4023 = vmatpush1.bf16.msra.mxu0 0
      %4024 = vmatprep.subr.bf16.mxu0 0
      %4025 = vmatpush1.bf16.msra.mxu0 0
      %4026 = vmatprep.subr.bf16.mxu0 0
      %4027 = vmatpush1.bf16.msra.mxu0 0
      %4028 = vmatprep.subr.bf16.mxu0 0
      %4029 = vmatpush1.bf16.msra.mxu0 0
      %4030 = vmatprep.subr.bf16.mxu0 0
      %4031 = vmatpush1.bf16.msra.mxu0 0
      %4032 = vmatprep.subr.bf16.mxu0 0
      %4033 = vmatpush1.bf16.msra.mxu0 0
      %4034 = vmatprep.subr.bf16.mxu0 0
      %4035 = vmatpush1.bf16.msra.mxu0 0
      %4036 = vmatprep.subr.bf16.mxu0 0
      %4037 = vmatpush1.bf16.msra.mxu0 0
      %4038 = vmatprep.subr.bf16.mxu0 0
      %4039 = vmatpush1.bf16.msra.mxu0 0
      %4040 = vmatprep.subr.bf16.mxu0 0
      %4041 = vmatpush1.bf16.msra.mxu0 0
      %4042 = vmatprep.subr.bf16.mxu0 0
      %4043 = vmatpush1.bf16.msra.mxu0 0
      %4044 = vmatprep.mubr.bf16.mxu0 0
      %4045 = vmatmul.mubr.bf16.gmra.mrb[0].mxu0 %v4007
      %v4046 = vpop.f32.mrb[0].mxu0
      %v4047 = vadd.f32 0.0, %v4046
      %v4048 = vpop.f32.mrb[0].mxu0
      %v4049 = vpop.f32.mrb[0].mxu0
      %v4050 = vpop.f32.mrb[0].mxu0
      %4051 = vdwg.mxu0
      %4052 = vrot.lane.b32.xlu0 %v1079, 96
      %v4053 = vpop.permute.xlu0 %4052
      %v4055 = vsel %vm1826, %v3754, 0
      %v4058 = vsel %vm2022, %v4053, 0
      %4060 = vmatprep.subr.bf16.mxu0 0
      %4061 = vmatpush1.bf16.msra.mxu0 %v4058
      %4062 = vmatprep.subr.bf16.mxu0 0
      %4063 = vmatpush1.bf16.msra.mxu0 0
      %4064 = vmatprep.subr.bf16.mxu0 0
      %4065 = vmatpush1.bf16.msra.mxu0 0
      %4066 = vmatprep.subr.bf16.mxu0 0
      %4067 = vmatpush1.bf16.msra.mxu0 0
      %4068 = vmatprep.subr.bf16.mxu0 0
      %4069 = vmatpush1.bf16.msra.mxu0 0
      %4070 = vmatprep.subr.bf16.mxu0 0
      %4071 = vmatpush1.bf16.msra.mxu0 0
      %4072 = vmatprep.subr.bf16.mxu0 0
      %4073 = vmatpush1.bf16.msra.mxu0 0
      %4074 = vmatprep.subr.bf16.mxu0 0
      %4075 = vmatpush1.bf16.msra.mxu0 0
      %4076 = vmatprep.subr.bf16.mxu0 0
      %4077 = vmatpush1.bf16.msra.mxu0 0
      %4078 = vmatprep.subr.bf16.mxu0 0
      %4079 = vmatpush1.bf16.msra.mxu0 0
      %4080 = vmatprep.subr.bf16.mxu0 0
      %4081 = vmatpush1.bf16.msra.mxu0 0
      %4082 = vmatprep.subr.bf16.mxu0 0
      %4083 = vmatpush1.bf16.msra.mxu0 0
      %4084 = vmatprep.subr.bf16.mxu0 0
      %4085 = vmatpush1.bf16.msra.mxu0 0
      %4086 = vmatprep.subr.bf16.mxu0 0
      %4087 = vmatpush1.bf16.msra.mxu0 0
      %4088 = vmatprep.subr.bf16.mxu0 0
      %4089 = vmatpush1.bf16.msra.mxu0 0
      %4090 = vmatprep.subr.bf16.mxu0 0
      %4091 = vmatpush1.bf16.msra.mxu0 0
      %4092 = vmatprep.mubr.bf16.mxu0 0
      %4093 = vmatmul.mubr.bf16.gmra.mrb[0].mxu0 %v4055
      %v4094 = vpop.f32.mrb[0].mxu0
      %v4095 = vadd.f32 0.0, %v4094
      %v4096 = vpop.f32.mrb[0].mxu0
      %v4097 = vpop.f32.mrb[0].mxu0
      %v4098 = vpop.f32.mrb[0].mxu0
      %4099 = vdwg.mxu0
      %4100 = vrot.lane.b32.xlu0 %v1080, 96
      %v4101 = vpop.permute.xlu0 %4100
      %v4103 = vsel %vm1826, %v3755, 0
      %v4106 = vsel %vm2022, %v4101, 0
      %4108 = vmatprep.subr.bf16.mxu0 0
      %4109 = vmatpush1.bf16.msra.mxu0 %v4106
      %4110 = vmatprep.subr.bf16.mxu0 0
      %4111 = vmatpush1.bf16.msra.mxu0 0
      %4112 = vmatprep.subr.bf16.mxu0 0
      %4113 = vmatpush1.bf16.msra.mxu0 0
      %4114 = vmatprep.subr.bf16.mxu0 0
      %4115 = vmatpush1.bf16.msra.mxu0 0
      %4116 = vmatprep.subr.bf16.mxu0 0
      %4117 = vmatpush1.bf16.msra.mxu0 0
      %4118 = vmatprep.subr.bf16.mxu0 0
      %4119 = vmatpush1.bf16.msra.mxu0 0
      %4120 = vmatprep.subr.bf16.mxu0 0
      %4121 = vmatpush1.bf16.msra.mxu0 0
      %4122 = vmatprep.subr.bf16.mxu0 0
      %4123 = vmatpush1.bf16.msra.mxu0 0
      %4124 = vmatprep.subr.bf16.mxu0 0
      %4125 = vmatpush1.bf16.msra.mxu0 0
      %4126 = vmatprep.subr.bf16.mxu0 0
      %4127 = vmatpush1.bf16.msra.mxu0 0
      %4128 = vmatprep.subr.bf16.mxu0 0
      %4129 = vmatpush1.bf16.msra.mxu0 0
      %4130 = vmatprep.subr.bf16.mxu0 0
      %4131 = vmatpush1.bf16.msra.mxu0 0
      %4132 = vmatprep.subr.bf16.mxu0 0
      %4133 = vmatpush1.bf16.msra.mxu0 0
      %4134 = vmatprep.subr.bf16.mxu0 0
      %4135 = vmatpush1.bf16.msra.mxu0 0
      %4136 = vmatprep.subr.bf16.mxu0 0
      %4137 = vmatpush1.bf16.msra.mxu0 0
      %4138 = vmatprep.subr.bf16.mxu0 0
      %4139 = vmatpush1.bf16.msra.mxu0 0
      %4140 = vmatprep.mubr.bf16.mxu0 0
      %4141 = vmatmul.mubr.bf16.gmra.mrb[0].mxu0 %v4103
      %v4142 = vpop.f32.mrb[0].mxu0
      %v4143 = vadd.f32 0.0, %v4142
      %v4144 = vpop.f32.mrb[0].mxu0
      %v4145 = vpop.f32.mrb[0].mxu0
      %v4146 = vpop.f32.mrb[0].mxu0
      %4147 = vdwg.mxu0
      %4148 = vrot.lane.b32.xlu0 %v1081, 96
      %v4149 = vpop.permute.xlu0 %4148
      %v4151 = vsel %vm1826, %v3756, 0
      %v4154 = vsel %vm2022, %v4149, 0
      %4156 = vmatprep.subr.bf16.mxu0 0
      %4157 = vmatpush1.bf16.msra.mxu0 %v4154
      %4158 = vmatprep.subr.bf16.mxu0 0
      %4159 = vmatpush1.bf16.msra.mxu0 0
      %4160 = vmatprep.subr.bf16.mxu0 0
      %4161 = vmatpush1.bf16.msra.mxu0 0
      %4162 = vmatprep.subr.bf16.mxu0 0
      %4163 = vmatpush1.bf16.msra.mxu0 0
      %4164 = vmatprep.subr.bf16.mxu0 0
      %4165 = vmatpush1.bf16.msra.mxu0 0
      %4166 = vmatprep.subr.bf16.mxu0 0
      %4167 = vmatpush1.bf16.msra.mxu0 0
      %4168 = vmatprep.subr.bf16.mxu0 0
      %4169 = vmatpush1.bf16.msra.mxu0 0
      %4170 = vmatprep.subr.bf16.mxu0 0
      %4171 = vmatpush1.bf16.msra.mxu0 0
      %4172 = vmatprep.subr.bf16.mxu0 0
      %4173 = vmatpush1.bf16.msra.mxu0 0
      %4174 = vmatprep.subr.bf16.mxu0 0
      %4175 = vmatpush1.bf16.msra.mxu0 0
      %4176 = vmatprep.subr.bf16.mxu0 0
      %4177 = vmatpush1.bf16.msra.mxu0 0
      %4178 = vmatprep.subr.bf16.mxu0 0
      %4179 = vmatpush1.bf16.msra.mxu0 0
      %4180 = vmatprep.subr.bf16.mxu0 0
      %4181 = vmatpush1.bf16.msra.mxu0 0
      %4182 = vmatprep.subr.bf16.mxu0 0
      %4183 = vmatpush1.bf16.msra.mxu0 0
      %4184 = vmatprep.subr.bf16.mxu0 0
      %4185 = vmatpush1.bf16.msra.mxu0 0
      %4186 = vmatprep.subr.bf16.mxu0 0
      %4187 = vmatpush1.bf16.msra.mxu0 0
      %4188 = vmatprep.mubr.bf16.mxu0 0
      %4189 = vmatmul.mubr.bf16.gmra.mrb[0].mxu0 %v4151
      %v4190 = vpop.f32.mrb[0].mxu0
      %v4191 = vadd.f32 0.0, %v4190
      %v4192 = vpop.f32.mrb[0].mxu0
      %v4193 = vpop.f32.mrb[0].mxu0
      %v4194 = vpop.f32.mrb[0].mxu0
      %4195 = vdwg.mxu0
      %4196 = vrot.lane.b32.xlu0 %v1082, 96
      %v4197 = vpop.permute.xlu0 %4196
      %v4199 = vsel %vm1826, %v3757, 0
      %v4202 = vsel %vm2022, %v4197, 0
      %4204 = vmatprep.subr.bf16.mxu0 0
      %4205 = vmatpush1.bf16.msra.mxu0 %v4202
      %4206 = vmatprep.subr.bf16.mxu0 0
      %4207 = vmatpush1.bf16.msra.mxu0 0
      %4208 = vmatprep.subr.bf16.mxu0 0
      %4209 = vmatpush1.bf16.msra.mxu0 0
      %4210 = vmatprep.subr.bf16.mxu0 0
      %4211 = vmatpush1.bf16.msra.mxu0 0
      %4212 = vmatprep.subr.bf16.mxu0 0
      %4213 = vmatpush1.bf16.msra.mxu0 0
      %4214 = vmatprep.subr.bf16.mxu0 0
      %4215 = vmatpush1.bf16.msra.mxu0 0
      %4216 = vmatprep.subr.bf16.mxu0 0
      %4217 = vmatpush1.bf16.msra.mxu0 0
      %4218 = vmatprep.subr.bf16.mxu0 0
      %4219 = vmatpush1.bf16.msra.mxu0 0
      %4220 = vmatprep.subr.bf16.mxu0 0
      %4221 = vmatpush1.bf16.msra.mxu0 0
      %4222 = vmatprep.subr.bf16.mxu0 0
      %4223 = vmatpush1.bf16.msra.mxu0 0
      %4224 = vmatprep.subr.bf16.mxu0 0
      %4225 = vmatpush1.bf16.msra.mxu0 0
      %4226 = vmatprep.subr.bf16.mxu0 0
      %4227 = vmatpush1.bf16.msra.mxu0 0
      %4228 = vmatprep.subr.bf16.mxu0 0
      %4229 = vmatpush1.bf16.msra.mxu0 0
      %4230 = vmatprep.subr.bf16.mxu0 0
      %4231 = vmatpush1.bf16.msra.mxu0 0
      %4232 = vmatprep.subr.bf16.mxu0 0
      %4233 = vmatpush1.bf16.msra.mxu0 0
      %4234 = vmatprep.subr.bf16.mxu0 0
      %4235 = vmatpush1.bf16.msra.mxu0 0
      %4236 = vmatprep.mubr.bf16.mxu0 0
      %4237 = vmatmul.mubr.bf16.gmra.mrb[0].mxu0 %v4199
      %v4238 = vpop.f32.mrb[0].mxu0
      %v4239 = vadd.f32 0.0, %v4238
      %v4240 = vpop.f32.mrb[0].mxu0
      %v4241 = vpop.f32.mrb[0].mxu0
      %v4242 = vpop.f32.mrb[0].mxu0
      %4243 = vdwg.mxu0
      %4244 = vrot.lane.b32.xlu0 %v1083, 96
      %v4245 = vpop.permute.xlu0 %4244
      %v4247 = vsel %vm1826, %v3758, 0
      %v4250 = vsel %vm2022, %v4245, 0
      %4252 = vmatprep.subr.bf16.mxu0 0
      %4253 = vmatpush1.bf16.msra.mxu0 %v4250
      %4254 = vmatprep.subr.bf16.mxu0 0
      %4255 = vmatpush1.bf16.msra.mxu0 0
      %4256 = vmatprep.subr.bf16.mxu0 0
      %4257 = vmatpush1.bf16.msra.mxu0 0
      %4258 = vmatprep.subr.bf16.mxu0 0
      %4259 = vmatpush1.bf16.msra.mxu0 0
      %4260 = vmatprep.subr.bf16.mxu0 0
      %4261 = vmatpush1.bf16.msra.mxu0 0
      %4262 = vmatprep.subr.bf16.mxu0 0
      %4263 = vmatpush1.bf16.msra.mxu0 0
      %4264 = vmatprep.subr.bf16.mxu0 0
      %4265 = vmatpush1.bf16.msra.mxu0 0
      %4266 = vmatprep.subr.bf16.mxu0 0
      %4267 = vmatpush1.bf16.msra.mxu0 0
      %4268 = vmatprep.subr.bf16.mxu0 0
      %4269 = vmatpush1.bf16.msra.mxu0 0
      %4270 = vmatprep.subr.bf16.mxu0 0
      %4271 = vmatpush1.bf16.msra.mxu0 0
      %4272 = vmatprep.subr.bf16.mxu0 0
      %4273 = vmatpush1.bf16.msra.mxu0 0
      %4274 = vmatprep.subr.bf16.mxu0 0
      %4275 = vmatpush1.bf16.msra.mxu0 0
      %4276 = vmatprep.subr.bf16.mxu0 0
      %4277 = vmatpush1.bf16.msra.mxu0 0
      %4278 = vmatprep.subr.bf16.mxu0 0
      %4279 = vmatpush1.bf16.msra.mxu0 0
      %4280 = vmatprep.subr.bf16.mxu0 0
      %4281 = vmatpush1.bf16.msra.mxu0 0
      %4282 = vmatprep.subr.bf16.mxu0 0
      %4283 = vmatpush1.bf16.msra.mxu0 0
      %4284 = vmatprep.mubr.bf16.mxu0 0
      %4285 = vmatmul.mubr.bf16.gmra.mrb[0].mxu0 %v4247
      %v4286 = vpop.f32.mrb[0].mxu0
      %v4287 = vadd.f32 0.0, %v4286
      %v4288 = vpop.f32.mrb[0].mxu0
      %v4289 = vpop.f32.mrb[0].mxu0
      %v4290 = vpop.f32.mrb[0].mxu0
      %4291 = vdwg.mxu0
      %4292 = vrot.lane.b32.xlu0 %v1084, 96
      %v4293 = vpop.permute.xlu0 %4292
      %v4295 = vsel %vm1826, %v3759, 0
      %v4298 = vsel %vm2022, %v4293, 0
      %4300 = vmatprep.subr.bf16.mxu0 0
      %4301 = vmatpush1.bf16.msra.mxu0 %v4298
      %4302 = vmatprep.subr.bf16.mxu0 0
      %4303 = vmatpush1.bf16.msra.mxu0 0
      %4304 = vmatprep.subr.bf16.mxu0 0
      %4305 = vmatpush1.bf16.msra.mxu0 0
      %4306 = vmatprep.subr.bf16.mxu0 0
      %4307 = vmatpush1.bf16.msra.mxu0 0
      %4308 = vmatprep.subr.bf16.mxu0 0
      %4309 = vmatpush1.bf16.msra.mxu0 0
      %4310 = vmatprep.subr.bf16.mxu0 0
      %4311 = vmatpush1.bf16.msra.mxu0 0
      %4312 = vmatprep.subr.bf16.mxu0 0
      %4313 = vmatpush1.bf16.msra.mxu0 0
      %4314 = vmatprep.subr.bf16.mxu0 0
      %4315 = vmatpush1.bf16.msra.mxu0 0
      %4316 = vmatprep.subr.bf16.mxu0 0
      %4317 = vmatpush1.bf16.msra.mxu0 0
      %4318 = vmatprep.subr.bf16.mxu0 0
      %4319 = vmatpush1.bf16.msra.mxu0 0
      %4320 = vmatprep.subr.bf16.mxu0 0
      %4321 = vmatpush1.bf16.msra.mxu0 0
      %4322 = vmatprep.subr.bf16.mxu0 0
      %4323 = vmatpush1.bf16.msra.mxu0 0
      %4324 = vmatprep.subr.bf16.mxu0 0
      %4325 = vmatpush1.bf16.msra.mxu0 0
      %4326 = vmatprep.subr.bf16.mxu0 0
      %4327 = vmatpush1.bf16.msra.mxu0 0
      %4328 = vmatprep.subr.bf16.mxu0 0
      %4329 = vmatpush1.bf16.msra.mxu0 0
      %4330 = vmatprep.subr.bf16.mxu0 0
      %4331 = vmatpush1.bf16.msra.mxu0 0
      %4332 = vmatprep.mubr.bf16.mxu0 0
      %4333 = vmatmul.mubr.bf16.gmra.mrb[0].mxu0 %v4295
      %v4334 = vpop.f32.mrb[0].mxu0
      %v4335 = vadd.f32 0.0, %v4334
      %v4336 = vpop.f32.mrb[0].mxu0
      %v4337 = vpop.f32.mrb[0].mxu0
      %v4338 = vpop.f32.mrb[0].mxu0
      %4339 = vdwg.mxu0
      %4340 = vrot.lane.b32.xlu0 %v1085, 96
      %v4341 = vpop.permute.xlu0 %4340
      %v4343 = vsel %vm1826, %v3760, 0
      %v4346 = vsel %vm2022, %v4341, 0
      %4348 = vmatprep.subr.bf16.mxu0 0
      %4349 = vmatpush1.bf16.msra.mxu0 %v4346
      %4350 = vmatprep.subr.bf16.mxu0 0
      %4351 = vmatpush1.bf16.msra.mxu0 0
      %4352 = vmatprep.subr.bf16.mxu0 0
      %4353 = vmatpush1.bf16.msra.mxu0 0
      %4354 = vmatprep.subr.bf16.mxu0 0
      %4355 = vmatpush1.bf16.msra.mxu0 0
      %4356 = vmatprep.subr.bf16.mxu0 0
      %4357 = vmatpush1.bf16.msra.mxu0 0
      %4358 = vmatprep.subr.bf16.mxu0 0
      %4359 = vmatpush1.bf16.msra.mxu0 0
      %4360 = vmatprep.subr.bf16.mxu0 0
      %4361 = vmatpush1.bf16.msra.mxu0 0
      %4362 = vmatprep.subr.bf16.mxu0 0
      %4363 = vmatpush1.bf16.msra.mxu0 0
      %4364 = vmatprep.subr.bf16.mxu0 0
      %4365 = vmatpush1.bf16.msra.mxu0 0
      %4366 = vmatprep.subr.bf16.mxu0 0
      %4367 = vmatpush1.bf16.msra.mxu0 0
      %4368 = vmatprep.subr.bf16.mxu0 0
      %4369 = vmatpush1.bf16.msra.mxu0 0
      %4370 = vmatprep.subr.bf16.mxu0 0
      %4371 = vmatpush1.bf16.msra.mxu0 0
      %4372 = vmatprep.subr.bf16.mxu0 0
      %4373 = vmatpush1.bf16.msra.mxu0 0
      %4374 = vmatprep.subr.bf16.mxu0 0
      %4375 = vmatpush1.bf16.msra.mxu0 0
      %4376 = vmatprep.subr.bf16.mxu0 0
      %4377 = vmatpush1.bf16.msra.mxu0 0
      %4378 = vmatprep.subr.bf16.mxu0 0
      %4379 = vmatpush1.bf16.msra.mxu0 0
      %4380 = vmatprep.mubr.bf16.mxu0 0
      %4381 = vmatmul.mubr.bf16.gmra.mrb[0].mxu0 %v4343
      %v4382 = vpop.f32.mrb[0].mxu0
      %v4383 = vadd.f32 0.0, %v4382
      %v4384 = vpop.f32.mrb[0].mxu0
      %v4385 = vpop.f32.mrb[0].mxu0
      %v4386 = vpop.f32.mrb[0].mxu0
      %4387 = vdwg.mxu0
      %4388 = vrot.lane.b32.xlu0 %v1086, 96
      %v4389 = vpop.permute.xlu0 %4388
      %v4391 = vsel %vm1826, %v3761, 0
      %v4394 = vsel %vm2022, %v4389, 0
      %4396 = vmatprep.subr.bf16.mxu0 0
      %4397 = vmatpush1.bf16.msra.mxu0 %v4394
      %4398 = vmatprep.subr.bf16.mxu0 0
      %4399 = vmatpush1.bf16.msra.mxu0 0
      %4400 = vmatprep.subr.bf16.mxu0 0
      %4401 = vmatpush1.bf16.msra.mxu0 0
      %4402 = vmatprep.subr.bf16.mxu0 0
      %4403 = vmatpush1.bf16.msra.mxu0 0
      %4404 = vmatprep.subr.bf16.mxu0 0
      %4405 = vmatpush1.bf16.msra.mxu0 0
      %4406 = vmatprep.subr.bf16.mxu0 0
      %4407 = vmatpush1.bf16.msra.mxu0 0
      %4408 = vmatprep.subr.bf16.mxu0 0
      %4409 = vmatpush1.bf16.msra.mxu0 0
      %4410 = vmatprep.subr.bf16.mxu0 0
      %4411 = vmatpush1.bf16.msra.mxu0 0
      %4412 = vmatprep.subr.bf16.mxu0 0
      %4413 = vmatpush1.bf16.msra.mxu0 0
      %4414 = vmatprep.subr.bf16.mxu0 0
      %4415 = vmatpush1.bf16.msra.mxu0 0
      %4416 = vmatprep.subr.bf16.mxu0 0
      %4417 = vmatpush1.bf16.msra.mxu0 0
      %4418 = vmatprep.subr.bf16.mxu0 0
      %4419 = vmatpush1.bf16.msra.mxu0 0
      %4420 = vmatprep.subr.bf16.mxu0 0
      %4421 = vmatpush1.bf16.msra.mxu0 0
      %4422 = vmatprep.subr.bf16.mxu0 0
      %4423 = vmatpush1.bf16.msra.mxu0 0
      %4424 = vmatprep.subr.bf16.mxu0 0
      %4425 = vmatpush1.bf16.msra.mxu0 0
      %4426 = vmatprep.subr.bf16.mxu0 0
      %4427 = vmatpush1.bf16.msra.mxu0 0
      %4428 = vmatprep.mubr.bf16.mxu0 0
      %4429 = vmatmul.mubr.bf16.gmra.mrb[0].mxu0 %v4391
      %v4430 = vpop.f32.mrb[0].mxu0
      %v4431 = vadd.f32 0.0, %v4430
      %v4432 = vpop.f32.mrb[0].mxu0
      %v4433 = vpop.f32.mrb[0].mxu0
      %v4434 = vpop.f32.mrb[0].mxu0
      %4435 = vdwg.mxu0
      %4436 = vrot.lane.b32.xlu0 %v1087, 96
      %v4437 = vpop.permute.xlu0 %4436
      %v4439 = vsel %vm1826, %v3762, 0
      %v4442 = vsel %vm2022, %v4437, 0
      %4444 = vmatprep.subr.bf16.mxu0 0
      %4445 = vmatpush1.bf16.msra.mxu0 %v4442
      %4446 = vmatprep.subr.bf16.mxu0 0
      %4447 = vmatpush1.bf16.msra.mxu0 0
      %4448 = vmatprep.subr.bf16.mxu0 0
      %4449 = vmatpush1.bf16.msra.mxu0 0
      %4450 = vmatprep.subr.bf16.mxu0 0
      %4451 = vmatpush1.bf16.msra.mxu0 0
      %4452 = vmatprep.subr.bf16.mxu0 0
      %4453 = vmatpush1.bf16.msra.mxu0 0
      %4454 = vmatprep.subr.bf16.mxu0 0
      %4455 = vmatpush1.bf16.msra.mxu0 0
      %4456 = vmatprep.subr.bf16.mxu0 0
      %4457 = vmatpush1.bf16.msra.mxu0 0
      %4458 = vmatprep.subr.bf16.mxu0 0
      %4459 = vmatpush1.bf16.msra.mxu0 0
      %4460 = vmatprep.subr.bf16.mxu0 0
      %4461 = vmatpush1.bf16.msra.mxu0 0
      %4462 = vmatprep.subr.bf16.mxu0 0
      %4463 = vmatpush1.bf16.msra.mxu0 0
      %4464 = vmatprep.subr.bf16.mxu0 0
      %4465 = vmatpush1.bf16.msra.mxu0 0
      %4466 = vmatprep.subr.bf16.mxu0 0
      %4467 = vmatpush1.bf16.msra.mxu0 0
      %4468 = vmatprep.subr.bf16.mxu0 0
      %4469 = vmatpush1.bf16.msra.mxu0 0
      %4470 = vmatprep.subr.bf16.mxu0 0
      %4471 = vmatpush1.bf16.msra.mxu0 0
      %4472 = vmatprep.subr.bf16.mxu0 0
      %4473 = vmatpush1.bf16.msra.mxu0 0
      %4474 = vmatprep.subr.bf16.mxu0 0
      %4475 = vmatpush1.bf16.msra.mxu0 0
      %4476 = vmatprep.mubr.bf16.mxu0 0
      %4477 = vmatmul.mubr.bf16.gmra.mrb[0].mxu0 %v4439
      %v4478 = vpop.f32.mrb[0].mxu0
      %v4479 = vadd.f32 0.0, %v4478
      %v4480 = vpop.f32.mrb[0].mxu0
      %v4481 = vpop.f32.mrb[0].mxu0
      %v4482 = vpop.f32.mrb[0].mxu0
      %4483 = vdwg.mxu0
      %4484 = vrot.lane.b32.xlu0 %v1088, 96
      %v4485 = vpop.permute.xlu0 %4484
      %v4487 = vsel %vm1826, %v3763, 0
      %v4490 = vsel %vm2022, %v4485, 0
      %4492 = vmatprep.subr.bf16.mxu0 0
      %4493 = vmatpush1.bf16.msra.mxu0 %v4490
      %4494 = vmatprep.subr.bf16.mxu0 0
      %4495 = vmatpush1.bf16.msra.mxu0 0
      %4496 = vmatprep.subr.bf16.mxu0 0
      %4497 = vmatpush1.bf16.msra.mxu0 0
      %4498 = vmatprep.subr.bf16.mxu0 0
      %4499 = vmatpush1.bf16.msra.mxu0 0
      %4500 = vmatprep.subr.bf16.mxu0 0
      %4501 = vmatpush1.bf16.msra.mxu0 0
      %4502 = vmatprep.subr.bf16.mxu0 0
      %4503 = vmatpush1.bf16.msra.mxu0 0
      %4504 = vmatprep.subr.bf16.mxu0 0
      %4505 = vmatpush1.bf16.msra.mxu0 0
      %4506 = vmatprep.subr.bf16.mxu0 0
      %4507 = vmatpush1.bf16.msra.mxu0 0
      %4508 = vmatprep.subr.bf16.mxu0 0
      %4509 = vmatpush1.bf16.msra.mxu0 0
      %4510 = vmatprep.subr.bf16.mxu0 0
      %4511 = vmatpush1.bf16.msra.mxu0 0
      %4512 = vmatprep.subr.bf16.mxu0 0
      %4513 = vmatpush1.bf16.msra.mxu0 0
      %4514 = vmatprep.subr.bf16.mxu0 0
      %4515 = vmatpush1.bf16.msra.mxu0 0
      %4516 = vmatprep.subr.bf16.mxu0 0
      %4517 = vmatpush1.bf16.msra.mxu0 0
      %4518 = vmatprep.subr.bf16.mxu0 0
      %4519 = vmatpush1.bf16.msra.mxu0 0
      %4520 = vmatprep.subr.bf16.mxu0 0
      %4521 = vmatpush1.bf16.msra.mxu0 0
      %4522 = vmatprep.subr.bf16.mxu0 0
      %4523 = vmatpush1.bf16.msra.mxu0 0
      %4524 = vmatprep.mubr.bf16.mxu0 0
      %4525 = vmatmul.mubr.bf16.gmra.mrb[0].mxu0 %v4487
      %v4526 = vpop.f32.mrb[0].mxu0
      %v4527 = vadd.f32 0.0, %v4526
      %v4528 = vpop.f32.mrb[0].mxu0
      %v4529 = vpop.f32.mrb[0].mxu0
      %v4530 = vpop.f32.mrb[0].mxu0
      %4531 = vdwg.mxu0
      %v4532 = vpack.c.bf16 %v3855, %v3807
      %v4533 = vpack.c.bf16 %v3951, %v3903
      %v4534 = vpack.c.bf16 %v4047, %v3999
      %v4535 = vpack.c.bf16 %v4143, %v4095
      %v4536 = vpack.c.bf16 %v4239, %v4191
      %v4537 = vpack.c.bf16 %v4335, %v4287
      %v4538 = vpack.c.bf16 %v4431, %v4383
      %v4539 = vpack.c.bf16 %v4527, %v4479
      %4548 = vrot.lane.b32.xlu0 %v4532, 32
      %v4549 = vpop.permute.xlu0 %4548
      %4550 = vrot.lane.b32.xlu0 %v4533, 32
      %v4551 = vpop.permute.xlu0 %4550
      %4552 = vrot.lane.b32.xlu0 %v4534, 32
      %v4553 = vpop.permute.xlu0 %4552
      %4554 = vrot.lane.b32.xlu0 %v4535, 32
      %v4555 = vpop.permute.xlu0 %4554
      %4556 = vrot.lane.b32.xlu0 %v4536, 32
      %v4557 = vpop.permute.xlu0 %4556
      %4558 = vrot.lane.b32.xlu0 %v4537, 32
      %v4559 = vpop.permute.xlu0 %4558
      %4560 = vrot.lane.b32.xlu0 %v4538, 32
      %v4561 = vpop.permute.xlu0 %4560
      %4562 = vrot.lane.b32.xlu0 %v4539, 32
      %v4563 = vpop.permute.xlu0 %4562
      %vm4572 = vcmask 523520
      %4573 = vst.msk [vmem:[#allocation2] sm:$0xff] %vm4572, %v4549
      %4574 = vst.msk [vmem:[#allocation2 + $0x8] sm:$0xff] %vm4572, %v4551
      %4575 = vst.msk [vmem:[#allocation2 + $0x10] sm:$0xff] %vm4572, %v4553
      %4576 = vst.msk [vmem:[#allocation2 + $0x18] sm:$0xff] %vm4572, %v4555
      %4577 = vst.msk [vmem:[#allocation2 + $0x20] sm:$0xff] %vm4572, %v4557
      %4578 = vst.msk [vmem:[#allocation2 + $0x28] sm:$0xff] %vm4572, %v4559
      %4579 = vst.msk [vmem:[#allocation2 + $0x30] sm:$0xff] %vm4572, %v4561
      %4580 = vst.msk [vmem:[#allocation2 + $0x38] sm:$0xff] %vm4572, %v4563
      %4581 = vrot.lane.b32.xlu0 %v993, 64
      %v4582 = vpop.permute.xlu0 %4581
      %4583 = vrot.lane.b32.xlu0 %v1033, 64
      %v4584 = vpop.permute.xlu0 %4583
      %v4586 = vsel %vm1089, %v4582, 0
      %v4589 = vsel %vm1089, %v4584, 0
      %4591 = vmatprep.subr.bf16.mxu0 0
      %4592 = vmatpush1.bf16.xpose.msra.mxu0 %v4589
      %4593 = vmatprep.subr.bf16.mxu0 0
      %4594 = vmatpush1.bf16.xpose.msra.mxu0 0
      %4595 = vmatprep.subr.bf16.mxu0 0
      %4596 = vmatpush1.bf16.xpose.msra.mxu0 0
      %4597 = vmatprep.subr.bf16.mxu0 0
      %4598 = vmatpush1.bf16.xpose.msra.mxu0 0
      %4599 = vmatprep.subr.bf16.mxu0 0
      %4600 = vmatpush1.bf16.xpose.msra.mxu0 0
      %4601 = vmatprep.subr.bf16.mxu0 0
      %4602 = vmatpush1.bf16.xpose.msra.mxu0 0
      %4603 = vmatprep.subr.bf16.mxu0 0
      %4604 = vmatpush1.bf16.xpose.msra.mxu0 0
      %4605 = vmatprep.subr.bf16.mxu0 0
      %4606 = vmatpush1.bf16.xpose.msra.mxu0 0
      %4607 = vmatprep.subr.bf16.mxu0 0
      %4608 = vmatpush1.bf16.xpose.msra.mxu0 0
      %4609 = vmatprep.subr.bf16.mxu0 0
      %4610 = vmatpush1.bf16.xpose.msra.mxu0 0
      %4611 = vmatprep.subr.bf16.mxu0 0
      %4612 = vmatpush1.bf16.xpose.msra.mxu0 0
      %4613 = vmatprep.subr.bf16.mxu0 0
      %4614 = vmatpush1.bf16.xpose.msra.mxu0 0
      %4615 = vmatprep.subr.bf16.mxu0 0
      %4616 = vmatpush1.bf16.xpose.msra.mxu0 0
      %4617 = vmatprep.subr.bf16.mxu0 0
      %4618 = vmatpush1.bf16.xpose.msra.mxu0 0
      %4619 = vmatprep.subr.bf16.mxu0 0
      %4620 = vmatpush1.bf16.xpose.msra.mxu0 0
      %4621 = vmatprep.subr.bf16.mxu0 0
      %4622 = vmatpush1.bf16.xpose.msra.mxu0 0
      %4623 = vmatprep.mubr.bf16.mxu0 0
      %4624 = vmatmul.mubr.bf16.gmra.mrb[0].mxu0 %v4586
      %v4625 = vpop.f32.mrb[0].mxu0
      %v4626 = vadd.f32 %v968, %v4625
      %v4627 = vpop.f32.mrb[0].mxu0
      %v4628 = vpop.f32.mrb[0].mxu0
      %v4629 = vpop.f32.mrb[0].mxu0
      %4630 = vdwg.mxu0
      %4631 = vrot.lane.b32.xlu0 %v994, 64
      %v4632 = vpop.permute.xlu0 %4631
      %4633 = vrot.lane.b32.xlu0 %v1034, 64
      %v4634 = vpop.permute.xlu0 %4633
      %v4636 = vsel %vm1089, %v4632, 0
      %v4639 = vsel %vm1089, %v4634, 0
      %4641 = vmatprep.subr.bf16.mxu0 0
      %4642 = vmatpush1.bf16.xpose.msra.mxu0 %v4639
      %4643 = vmatprep.subr.bf16.mxu0 0
      %4644 = vmatpush1.bf16.xpose.msra.mxu0 0
      %4645 = vmatprep.subr.bf16.mxu0 0
      %4646 = vmatpush1.bf16.xpose.msra.mxu0 0
      %4647 = vmatprep.subr.bf16.mxu0 0
      %4648 = vmatpush1.bf16.xpose.msra.mxu0 0
      %4649 = vmatprep.subr.bf16.mxu0 0
      %4650 = vmatpush1.bf16.xpose.msra.mxu0 0
      %4651 = vmatprep.subr.bf16.mxu0 0
      %4652 = vmatpush1.bf16.xpose.msra.mxu0 0
      %4653 = vmatprep.subr.bf16.mxu0 0
      %4654 = vmatpush1.bf16.xpose.msra.mxu0 0
      %4655 = vmatprep.subr.bf16.mxu0 0
      %4656 = vmatpush1.bf16.xpose.msra.mxu0 0
      %4657 = vmatprep.subr.bf16.mxu0 0
      %4658 = vmatpush1.bf16.xpose.msra.mxu0 0
      %4659 = vmatprep.subr.bf16.mxu0 0
      %4660 = vmatpush1.bf16.xpose.msra.mxu0 0
      %4661 = vmatprep.subr.bf16.mxu0 0
      %4662 = vmatpush1.bf16.xpose.msra.mxu0 0
      %4663 = vmatprep.subr.bf16.mxu0 0
      %4664 = vmatpush1.bf16.xpose.msra.mxu0 0
      %4665 = vmatprep.subr.bf16.mxu0 0
      %4666 = vmatpush1.bf16.xpose.msra.mxu0 0
      %4667 = vmatprep.subr.bf16.mxu0 0
      %4668 = vmatpush1.bf16.xpose.msra.mxu0 0
      %4669 = vmatprep.subr.bf16.mxu0 0
      %4670 = vmatpush1.bf16.xpose.msra.mxu0 0
      %4671 = vmatprep.subr.bf16.mxu0 0
      %4672 = vmatpush1.bf16.xpose.msra.mxu0 0
      %4673 = vmatprep.mubr.bf16.mxu0 0
      %4674 = vmatmul.mubr.bf16.gmra.mrb[0].mxu0 %v4636
      %v4675 = vpop.f32.mrb[0].mxu0
      %v4676 = vadd.f32 %v968, %v4675
      %v4677 = vpop.f32.mrb[0].mxu0
      %v4678 = vpop.f32.mrb[0].mxu0
      %v4679 = vpop.f32.mrb[0].mxu0
      %4680 = vdwg.mxu0
      %4681 = vrot.lane.b32.xlu0 %v995, 64
      %v4682 = vpop.permute.xlu0 %4681
      %4683 = vrot.lane.b32.xlu0 %v1035, 64
      %v4684 = vpop.permute.xlu0 %4683
      %v4686 = vsel %vm1089, %v4682, 0
      %v4689 = vsel %vm1089, %v4684, 0
      %4691 = vmatprep.subr.bf16.mxu0 0
      %4692 = vmatpush1.bf16.xpose.msra.mxu0 %v4689
      %4693 = vmatprep.subr.bf16.mxu0 0
      %4694 = vmatpush1.bf16.xpose.msra.mxu0 0
      %4695 = vmatprep.subr.bf16.mxu0 0
      %4696 = vmatpush1.bf16.xpose.msra.mxu0 0
      %4697 = vmatprep.subr.bf16.mxu0 0
      %4698 = vmatpush1.bf16.xpose.msra.mxu0 0
      %4699 = vmatprep.subr.bf16.mxu0 0
      %4700 = vmatpush1.bf16.xpose.msra.mxu0 0
      %4701 = vmatprep.subr.bf16.mxu0 0
      %4702 = vmatpush1.bf16.xpose.msra.mxu0 0
      %4703 = vmatprep.subr.bf16.mxu0 0
      %4704 = vmatpush1.bf16.xpose.msra.mxu0 0
      %4705 = vmatprep.subr.bf16.mxu0 0
      %4706 = vmatpush1.bf16.xpose.msra.mxu0 0
      %4707 = vmatprep.subr.bf16.mxu0 0
      %4708 = vmatpush1.bf16.xpose.msra.mxu0 0
      %4709 = vmatprep.subr.bf16.mxu0 0
      %4710 = vmatpush1.bf16.xpose.msra.mxu0 0
      %4711 = vmatprep.subr.bf16.mxu0 0
      %4712 = vmatpush1.bf16.xpose.msra.mxu0 0
      %4713 = vmatprep.subr.bf16.mxu0 0
      %4714 = vmatpush1.bf16.xpose.msra.mxu0 0
      %4715 = vmatprep.subr.bf16.mxu0 0
      %4716 = vmatpush1.bf16.xpose.msra.mxu0 0
      %4717 = vmatprep.subr.bf16.mxu0 0
      %4718 = vmatpush1.bf16.xpose.msra.mxu0 0
      %4719 = vmatprep.subr.bf16.mxu0 0
      %4720 = vmatpush1.bf16.xpose.msra.mxu0 0
      %4721 = vmatprep.subr.bf16.mxu0 0
      %4722 = vmatpush1.bf16.xpose.msra.mxu0 0
      %4723 = vmatprep.mubr.bf16.mxu0 0
      %4724 = vmatmul.mubr.bf16.gmra.mrb[0].mxu0 %v4686
      %v4725 = vpop.f32.mrb[0].mxu0
      %v4726 = vadd.f32 %v968, %v4725
      %v4727 = vpop.f32.mrb[0].mxu0
      %v4728 = vpop.f32.mrb[0].mxu0
      %v4729 = vpop.f32.mrb[0].mxu0
      %4730 = vdwg.mxu0
      %4731 = vrot.lane.b32.xlu0 %v996, 64
      %v4732 = vpop.permute.xlu0 %4731
      %4733 = vrot.lane.b32.xlu0 %v1036, 64
      %v4734 = vpop.permute.xlu0 %4733
      %v4736 = vsel %vm1089, %v4732, 0
      %v4739 = vsel %vm1089, %v4734, 0
      %4741 = vmatprep.subr.bf16.mxu0 0
      %4742 = vmatpush1.bf16.xpose.msra.mxu0 %v4739
      %4743 = vmatprep.subr.bf16.mxu0 0
      %4744 = vmatpush1.bf16.xpose.msra.mxu0 0
      %4745 = vmatprep.subr.bf16.mxu0 0
      %4746 = vmatpush1.bf16.xpose.msra.mxu0 0
      %4747 = vmatprep.subr.bf16.mxu0 0
      %4748 = vmatpush1.bf16.xpose.msra.mxu0 0
      %4749 = vmatprep.subr.bf16.mxu0 0
      %4750 = vmatpush1.bf16.xpose.msra.mxu0 0
      %4751 = vmatprep.subr.bf16.mxu0 0
      %4752 = vmatpush1.bf16.xpose.msra.mxu0 0
      %4753 = vmatprep.subr.bf16.mxu0 0
      %4754 = vmatpush1.bf16.xpose.msra.mxu0 0
      %4755 = vmatprep.subr.bf16.mxu0 0
      %4756 = vmatpush1.bf16.xpose.msra.mxu0 0
      %4757 = vmatprep.subr.bf16.mxu0 0
      %4758 = vmatpush1.bf16.xpose.msra.mxu0 0
      %4759 = vmatprep.subr.bf16.mxu0 0
      %4760 = vmatpush1.bf16.xpose.msra.mxu0 0
      %4761 = vmatprep.subr.bf16.mxu0 0
      %4762 = vmatpush1.bf16.xpose.msra.mxu0 0
      %4763 = vmatprep.subr.bf16.mxu0 0
      %4764 = vmatpush1.bf16.xpose.msra.mxu0 0
      %4765 = vmatprep.subr.bf16.mxu0 0
      %4766 = vmatpush1.bf16.xpose.msra.mxu0 0
      %4767 = vmatprep.subr.bf16.mxu0 0
      %4768 = vmatpush1.bf16.xpose.msra.mxu0 0
      %4769 = vmatprep.subr.bf16.mxu0 0
      %4770 = vmatpush1.bf16.xpose.msra.mxu0 0
      %4771 = vmatprep.subr.bf16.mxu0 0
      %4772 = vmatpush1.bf16.xpose.msra.mxu0 0
      %4773 = vmatprep.mubr.bf16.mxu0 0
      %4774 = vmatmul.mubr.bf16.gmra.mrb[0].mxu0 %v4736
      %v4775 = vpop.f32.mrb[0].mxu0
      %v4776 = vadd.f32 %v968, %v4775
      %v4777 = vpop.f32.mrb[0].mxu0
      %v4778 = vpop.f32.mrb[0].mxu0
      %v4779 = vpop.f32.mrb[0].mxu0
      %4780 = vdwg.mxu0
      %4781 = vrot.lane.b32.xlu0 %v997, 64
      %v4782 = vpop.permute.xlu0 %4781
      %4783 = vrot.lane.b32.xlu0 %v1037, 64
      %v4784 = vpop.permute.xlu0 %4783
      %v4786 = vsel %vm1089, %v4782, 0
      %v4789 = vsel %vm1089, %v4784, 0
      %4791 = vmatprep.subr.bf16.mxu0 0
      %4792 = vmatpush1.bf16.xpose.msra.mxu0 %v4789
      %4793 = vmatprep.subr.bf16.mxu0 0
      %4794 = vmatpush1.bf16.xpose.msra.mxu0 0
      %4795 = vmatprep.subr.bf16.mxu0 0
      %4796 = vmatpush1.bf16.xpose.msra.mxu0 0
      %4797 = vmatprep.subr.bf16.mxu0 0
      %4798 = vmatpush1.bf16.xpose.msra.mxu0 0
      %4799 = vmatprep.subr.bf16.mxu0 0
      %4800 = vmatpush1.bf16.xpose.msra.mxu0 0
      %4801 = vmatprep.subr.bf16.mxu0 0
      %4802 = vmatpush1.bf16.xpose.msra.mxu0 0
      %4803 = vmatprep.subr.bf16.mxu0 0
      %4804 = vmatpush1.bf16.xpose.msra.mxu0 0
      %4805 = vmatprep.subr.bf16.mxu0 0
      %4806 = vmatpush1.bf16.xpose.msra.mxu0 0
      %4807 = vmatprep.subr.bf16.mxu0 0
      %4808 = vmatpush1.bf16.xpose.msra.mxu0 0
      %4809 = vmatprep.subr.bf16.mxu0 0
      %4810 = vmatpush1.bf16.xpose.msra.mxu0 0
      %4811 = vmatprep.subr.bf16.mxu0 0
      %4812 = vmatpush1.bf16.xpose.msra.mxu0 0
      %4813 = vmatprep.subr.bf16.mxu0 0
      %4814 = vmatpush1.bf16.xpose.msra.mxu0 0
      %4815 = vmatprep.subr.bf16.mxu0 0
      %4816 = vmatpush1.bf16.xpose.msra.mxu0 0
      %4817 = vmatprep.subr.bf16.mxu0 0
      %4818 = vmatpush1.bf16.xpose.msra.mxu0 0
      %4819 = vmatprep.subr.bf16.mxu0 0
      %4820 = vmatpush1.bf16.xpose.msra.mxu0 0
      %4821 = vmatprep.subr.bf16.mxu0 0
      %4822 = vmatpush1.bf16.xpose.msra.mxu0 0
      %4823 = vmatprep.mubr.bf16.mxu0 0
      %4824 = vmatmul.mubr.bf16.gmra.mrb[0].mxu0 %v4786
      %v4825 = vpop.f32.mrb[0].mxu0
      %v4826 = vadd.f32 %v968, %v4825
      %v4827 = vpop.f32.mrb[0].mxu0
      %v4828 = vpop.f32.mrb[0].mxu0
      %v4829 = vpop.f32.mrb[0].mxu0
      %4830 = vdwg.mxu0
      %4831 = vrot.lane.b32.xlu0 %v998, 64
      %v4832 = vpop.permute.xlu0 %4831
      %4833 = vrot.lane.b32.xlu0 %v1038, 64
      %v4834 = vpop.permute.xlu0 %4833
      %v4836 = vsel %vm1089, %v4832, 0
      %v4839 = vsel %vm1089, %v4834, 0
      %4841 = vmatprep.subr.bf16.mxu0 0
      %4842 = vmatpush1.bf16.xpose.msra.mxu0 %v4839
      %4843 = vmatprep.subr.bf16.mxu0 0
      %4844 = vmatpush1.bf16.xpose.msra.mxu0 0
      %4845 = vmatprep.subr.bf16.mxu0 0
      %4846 = vmatpush1.bf16.xpose.msra.mxu0 0
      %4847 = vmatprep.subr.bf16.mxu0 0
      %4848 = vmatpush1.bf16.xpose.msra.mxu0 0
      %4849 = vmatprep.subr.bf16.mxu0 0
      %4850 = vmatpush1.bf16.xpose.msra.mxu0 0
      %4851 = vmatprep.subr.bf16.mxu0 0
      %4852 = vmatpush1.bf16.xpose.msra.mxu0 0
      %4853 = vmatprep.subr.bf16.mxu0 0
      %4854 = vmatpush1.bf16.xpose.msra.mxu0 0
      %4855 = vmatprep.subr.bf16.mxu0 0
      %4856 = vmatpush1.bf16.xpose.msra.mxu0 0
      %4857 = vmatprep.subr.bf16.mxu0 0
      %4858 = vmatpush1.bf16.xpose.msra.mxu0 0
      %4859 = vmatprep.subr.bf16.mxu0 0
      %4860 = vmatpush1.bf16.xpose.msra.mxu0 0
      %4861 = vmatprep.subr.bf16.mxu0 0
      %4862 = vmatpush1.bf16.xpose.msra.mxu0 0
      %4863 = vmatprep.subr.bf16.mxu0 0
      %4864 = vmatpush1.bf16.xpose.msra.mxu0 0
      %4865 = vmatprep.subr.bf16.mxu0 0
      %4866 = vmatpush1.bf16.xpose.msra.mxu0 0
      %4867 = vmatprep.subr.bf16.mxu0 0
      %4868 = vmatpush1.bf16.xpose.msra.mxu0 0
      %4869 = vmatprep.subr.bf16.mxu0 0
      %4870 = vmatpush1.bf16.xpose.msra.mxu0 0
      %4871 = vmatprep.subr.bf16.mxu0 0
      %4872 = vmatpush1.bf16.xpose.msra.mxu0 0
      %4873 = vmatprep.mubr.bf16.mxu0 0
      %4874 = vmatmul.mubr.bf16.gmra.mrb[0].mxu0 %v4836
      %v4875 = vpop.f32.mrb[0].mxu0
      %v4876 = vadd.f32 %v968, %v4875
      %v4877 = vpop.f32.mrb[0].mxu0
      %v4878 = vpop.f32.mrb[0].mxu0
      %v4879 = vpop.f32.mrb[0].mxu0
      %4880 = vdwg.mxu0
      %4881 = vrot.lane.b32.xlu0 %v999, 64
      %v4882 = vpop.permute.xlu0 %4881
      %4883 = vrot.lane.b32.xlu0 %v1039, 64
      %v4884 = vpop.permute.xlu0 %4883
      %v4886 = vsel %vm1089, %v4882, 0
      %v4889 = vsel %vm1089, %v4884, 0
      %4891 = vmatprep.subr.bf16.mxu0 0
      %4892 = vmatpush1.bf16.xpose.msra.mxu0 %v4889
      %4893 = vmatprep.subr.bf16.mxu0 0
      %4894 = vmatpush1.bf16.xpose.msra.mxu0 0
      %4895 = vmatprep.subr.bf16.mxu0 0
      %4896 = vmatpush1.bf16.xpose.msra.mxu0 0
      %4897 = vmatprep.subr.bf16.mxu0 0
      %4898 = vmatpush1.bf16.xpose.msra.mxu0 0
      %4899 = vmatprep.subr.bf16.mxu0 0
      %4900 = vmatpush1.bf16.xpose.msra.mxu0 0
      %4901 = vmatprep.subr.bf16.mxu0 0
      %4902 = vmatpush1.bf16.xpose.msra.mxu0 0
      %4903 = vmatprep.subr.bf16.mxu0 0
      %4904 = vmatpush1.bf16.xpose.msra.mxu0 0
      %4905 = vmatprep.subr.bf16.mxu0 0
      %4906 = vmatpush1.bf16.xpose.msra.mxu0 0
      %4907 = vmatprep.subr.bf16.mxu0 0
      %4908 = vmatpush1.bf16.xpose.msra.mxu0 0
      %4909 = vmatprep.subr.bf16.mxu0 0
      %4910 = vmatpush1.bf16.xpose.msra.mxu0 0
      %4911 = vmatprep.subr.bf16.mxu0 0
      %4912 = vmatpush1.bf16.xpose.msra.mxu0 0
      %4913 = vmatprep.subr.bf16.mxu0 0
      %4914 = vmatpush1.bf16.xpose.msra.mxu0 0
      %4915 = vmatprep.subr.bf16.mxu0 0
      %4916 = vmatpush1.bf16.xpose.msra.mxu0 0
      %4917 = vmatprep.subr.bf16.mxu0 0
      %4918 = vmatpush1.bf16.xpose.msra.mxu0 0
      %4919 = vmatprep.subr.bf16.mxu0 0
      %4920 = vmatpush1.bf16.xpose.msra.mxu0 0
      %4921 = vmatprep.subr.bf16.mxu0 0
      %4922 = vmatpush1.bf16.xpose.msra.mxu0 0
      %4923 = vmatprep.mubr.bf16.mxu0 0
      %4924 = vmatmul.mubr.bf16.gmra.mrb[0].mxu0 %v4886
      %v4925 = vpop.f32.mrb[0].mxu0
      %v4926 = vadd.f32 %v968, %v4925
      %v4927 = vpop.f32.mrb[0].mxu0
      %v4928 = vpop.f32.mrb[0].mxu0
      %v4929 = vpop.f32.mrb[0].mxu0
      %4930 = vdwg.mxu0
      %4931 = vrot.lane.b32.xlu0 %v1000, 64
      %v4932 = vpop.permute.xlu0 %4931
      %4933 = vrot.lane.b32.xlu0 %v1040, 64
      %v4934 = vpop.permute.xlu0 %4933
      %v4936 = vsel %vm1089, %v4932, 0
      %v4939 = vsel %vm1089, %v4934, 0
      %4941 = vmatprep.subr.bf16.mxu0 0
      %4942 = vmatpush1.bf16.xpose.msra.mxu0 %v4939
      %4943 = vmatprep.subr.bf16.mxu0 0
      %4944 = vmatpush1.bf16.xpose.msra.mxu0 0
      %4945 = vmatprep.subr.bf16.mxu0 0
      %4946 = vmatpush1.bf16.xpose.msra.mxu0 0
      %4947 = vmatprep.subr.bf16.mxu0 0
      %4948 = vmatpush1.bf16.xpose.msra.mxu0 0
      %4949 = vmatprep.subr.bf16.mxu0 0
      %4950 = vmatpush1.bf16.xpose.msra.mxu0 0
      %4951 = vmatprep.subr.bf16.mxu0 0
      %4952 = vmatpush1.bf16.xpose.msra.mxu0 0
      %4953 = vmatprep.subr.bf16.mxu0 0
      %4954 = vmatpush1.bf16.xpose.msra.mxu0 0
      %4955 = vmatprep.subr.bf16.mxu0 0
      %4956 = vmatpush1.bf16.xpose.msra.mxu0 0
      %4957 = vmatprep.subr.bf16.mxu0 0
      %4958 = vmatpush1.bf16.xpose.msra.mxu0 0
      %4959 = vmatprep.subr.bf16.mxu0 0
      %4960 = vmatpush1.bf16.xpose.msra.mxu0 0
      %4961 = vmatprep.subr.bf16.mxu0 0
      %4962 = vmatpush1.bf16.xpose.msra.mxu0 0
      %4963 = vmatprep.subr.bf16.mxu0 0
      %4964 = vmatpush1.bf16.xpose.msra.mxu0 0
      %4965 = vmatprep.subr.bf16.mxu0 0
      %4966 = vmatpush1.bf16.xpose.msra.mxu0 0
      %4967 = vmatprep.subr.bf16.mxu0 0
      %4968 = vmatpush1.bf16.xpose.msra.mxu0 0
      %4969 = vmatprep.subr.bf16.mxu0 0
      %4970 = vmatpush1.bf16.xpose.msra.mxu0 0
      %4971 = vmatprep.subr.bf16.mxu0 0
      %4972 = vmatpush1.bf16.xpose.msra.mxu0 0
      %4973 = vmatprep.mubr.bf16.mxu0 0
      %4974 = vmatmul.mubr.bf16.gmra.mrb[0].mxu0 %v4936
      %v4975 = vpop.f32.mrb[0].mxu0
      %v4976 = vadd.f32 %v968, %v4975
      %v4977 = vpop.f32.mrb[0].mxu0
      %v4978 = vpop.f32.mrb[0].mxu0
      %v4979 = vpop.f32.mrb[0].mxu0
      %4980 = vdwg.mxu0
      %4981 = vrot.lane.b32.xlu0 %v1001, 64
      %v4982 = vpop.permute.xlu0 %4981
      %4983 = vrot.lane.b32.xlu0 %v1041, 64
      %v4984 = vpop.permute.xlu0 %4983
      %v4986 = vsel %vm1089, %v4982, 0
      %v4989 = vsel %vm1089, %v4984, 0
      %4991 = vmatprep.subr.bf16.mxu0 0
      %4992 = vmatpush1.bf16.xpose.msra.mxu0 %v4989
      %4993 = vmatprep.subr.bf16.mxu0 0
      %4994 = vmatpush1.bf16.xpose.msra.mxu0 0
      %4995 = vmatprep.subr.bf16.mxu0 0
      %4996 = vmatpush1.bf16.xpose.msra.mxu0 0
      %4997 = vmatprep.subr.bf16.mxu0 0
      %4998 = vmatpush1.bf16.xpose.msra.mxu0 0
      %4999 = vmatprep.subr.bf16.mxu0 0
      %5000 = vmatpush1.bf16.xpose.msra.mxu0 0
      %5001 = vmatprep.subr.bf16.mxu0 0
      %5002 = vmatpush1.bf16.xpose.msra.mxu0 0
      %5003 = vmatprep.subr.bf16.mxu0 0
      %5004 = vmatpush1.bf16.xpose.msra.mxu0 0
      %5005 = vmatprep.subr.bf16.mxu0 0
      %5006 = vmatpush1.bf16.xpose.msra.mxu0 0
      %5007 = vmatprep.subr.bf16.mxu0 0
      %5008 = vmatpush1.bf16.xpose.msra.mxu0 0
      %5009 = vmatprep.subr.bf16.mxu0 0
      %5010 = vmatpush1.bf16.xpose.msra.mxu0 0
      %5011 = vmatprep.subr.bf16.mxu0 0
      %5012 = vmatpush1.bf16.xpose.msra.mxu0 0
      %5013 = vmatprep.subr.bf16.mxu0 0
      %5014 = vmatpush1.bf16.xpose.msra.mxu0 0
      %5015 = vmatprep.subr.bf16.mxu0 0
      %5016 = vmatpush1.bf16.xpose.msra.mxu0 0
      %5017 = vmatprep.subr.bf16.mxu0 0
      %5018 = vmatpush1.bf16.xpose.msra.mxu0 0
      %5019 = vmatprep.subr.bf16.mxu0 0
      %5020 = vmatpush1.bf16.xpose.msra.mxu0 0
      %5021 = vmatprep.subr.bf16.mxu0 0
      %5022 = vmatpush1.bf16.xpose.msra.mxu0 0
      %5023 = vmatprep.mubr.bf16.mxu0 0
      %5024 = vmatmul.mubr.bf16.gmra.mrb[0].mxu0 %v4986
      %v5025 = vpop.f32.mrb[0].mxu0
      %v5026 = vadd.f32 %v968, %v5025
      %v5027 = vpop.f32.mrb[0].mxu0
      %v5028 = vpop.f32.mrb[0].mxu0
      %v5029 = vpop.f32.mrb[0].mxu0
      %5030 = vdwg.mxu0
      %5031 = vrot.lane.b32.xlu0 %v1002, 64
      %v5032 = vpop.permute.xlu0 %5031
      %5033 = vrot.lane.b32.xlu0 %v1042, 64
      %v5034 = vpop.permute.xlu0 %5033
      %v5036 = vsel %vm1089, %v5032, 0
      %v5039 = vsel %vm1089, %v5034, 0
      %5041 = vmatprep.subr.bf16.mxu0 0
      %5042 = vmatpush1.bf16.xpose.msra.mxu0 %v5039
      %5043 = vmatprep.subr.bf16.mxu0 0
      %5044 = vmatpush1.bf16.xpose.msra.mxu0 0
      %5045 = vmatprep.subr.bf16.mxu0 0
      %5046 = vmatpush1.bf16.xpose.msra.mxu0 0
      %5047 = vmatprep.subr.bf16.mxu0 0
      %5048 = vmatpush1.bf16.xpose.msra.mxu0 0
      %5049 = vmatprep.subr.bf16.mxu0 0
      %5050 = vmatpush1.bf16.xpose.msra.mxu0 0
      %5051 = vmatprep.subr.bf16.mxu0 0
      %5052 = vmatpush1.bf16.xpose.msra.mxu0 0
      %5053 = vmatprep.subr.bf16.mxu0 0
      %5054 = vmatpush1.bf16.xpose.msra.mxu0 0
      %5055 = vmatprep.subr.bf16.mxu0 0
      %5056 = vmatpush1.bf16.xpose.msra.mxu0 0
      %5057 = vmatprep.subr.bf16.mxu0 0
      %5058 = vmatpush1.bf16.xpose.msra.mxu0 0
      %5059 = vmatprep.subr.bf16.mxu0 0
      %5060 = vmatpush1.bf16.xpose.msra.mxu0 0
      %5061 = vmatprep.subr.bf16.mxu0 0
      %5062 = vmatpush1.bf16.xpose.msra.mxu0 0
      %5063 = vmatprep.subr.bf16.mxu0 0
      %5064 = vmatpush1.bf16.xpose.msra.mxu0 0
      %5065 = vmatprep.subr.bf16.mxu0 0
      %5066 = vmatpush1.bf16.xpose.msra.mxu0 0
      %5067 = vmatprep.subr.bf16.mxu0 0
      %5068 = vmatpush1.bf16.xpose.msra.mxu0 0
      %5069 = vmatprep.subr.bf16.mxu0 0
      %5070 = vmatpush1.bf16.xpose.msra.mxu0 0
      %5071 = vmatprep.subr.bf16.mxu0 0
      %5072 = vmatpush1.bf16.xpose.msra.mxu0 0
      %5073 = vmatprep.mubr.bf16.mxu0 0
      %5074 = vmatmul.mubr.bf16.gmra.mrb[0].mxu0 %v5036
      %v5075 = vpop.f32.mrb[0].mxu0
      %v5076 = vadd.f32 %v968, %v5075
      %v5077 = vpop.f32.mrb[0].mxu0
      %v5078 = vpop.f32.mrb[0].mxu0
      %v5079 = vpop.f32.mrb[0].mxu0
      %5080 = vdwg.mxu0
      %5081 = vrot.lane.b32.xlu0 %v1003, 64
      %v5082 = vpop.permute.xlu0 %5081
      %5083 = vrot.lane.b32.xlu0 %v1043, 64
      %v5084 = vpop.permute.xlu0 %5083
      %v5086 = vsel %vm1089, %v5082, 0
      %v5089 = vsel %vm1089, %v5084, 0
      %5091 = vmatprep.subr.bf16.mxu0 0
      %5092 = vmatpush1.bf16.xpose.msra.mxu0 %v5089
      %5093 = vmatprep.subr.bf16.mxu0 0
      %5094 = vmatpush1.bf16.xpose.msra.mxu0 0
      %5095 = vmatprep.subr.bf16.mxu0 0
      %5096 = vmatpush1.bf16.xpose.msra.mxu0 0
      %5097 = vmatprep.subr.bf16.mxu0 0
      %5098 = vmatpush1.bf16.xpose.msra.mxu0 0
      %5099 = vmatprep.subr.bf16.mxu0 0
      %5100 = vmatpush1.bf16.xpose.msra.mxu0 0
      %5101 = vmatprep.subr.bf16.mxu0 0
      %5102 = vmatpush1.bf16.xpose.msra.mxu0 0
      %5103 = vmatprep.subr.bf16.mxu0 0
      %5104 = vmatpush1.bf16.xpose.msra.mxu0 0
      %5105 = vmatprep.subr.bf16.mxu0 0
      %5106 = vmatpush1.bf16.xpose.msra.mxu0 0
      %5107 = vmatprep.subr.bf16.mxu0 0
      %5108 = vmatpush1.bf16.xpose.msra.mxu0 0
      %5109 = vmatprep.subr.bf16.mxu0 0
      %5110 = vmatpush1.bf16.xpose.msra.mxu0 0
      %5111 = vmatprep.subr.bf16.mxu0 0
      %5112 = vmatpush1.bf16.xpose.msra.mxu0 0
      %5113 = vmatprep.subr.bf16.mxu0 0
      %5114 = vmatpush1.bf16.xpose.msra.mxu0 0
      %5115 = vmatprep.subr.bf16.mxu0 0
      %5116 = vmatpush1.bf16.xpose.msra.mxu0 0
      %5117 = vmatprep.subr.bf16.mxu0 0
      %5118 = vmatpush1.bf16.xpose.msra.mxu0 0
      %5119 = vmatprep.subr.bf16.mxu0 0
      %5120 = vmatpush1.bf16.xpose.msra.mxu0 0
      %5121 = vmatprep.subr.bf16.mxu0 0
      %5122 = vmatpush1.bf16.xpose.msra.mxu0 0
      %5123 = vmatprep.mubr.bf16.mxu0 0
      %5124 = vmatmul.mubr.bf16.gmra.mrb[0].mxu0 %v5086
      %v5125 = vpop.f32.mrb[0].mxu0
      %v5126 = vadd.f32 %v968, %v5125
      %v5127 = vpop.f32.mrb[0].mxu0
      %v5128 = vpop.f32.mrb[0].mxu0
      %v5129 = vpop.f32.mrb[0].mxu0
      %5130 = vdwg.mxu0
      %5131 = vrot.lane.b32.xlu0 %v1004, 64
      %v5132 = vpop.permute.xlu0 %5131
      %5133 = vrot.lane.b32.xlu0 %v1044, 64
      %v5134 = vpop.permute.xlu0 %5133
      %v5136 = vsel %vm1089, %v5132, 0
      %v5139 = vsel %vm1089, %v5134, 0
      %5141 = vmatprep.subr.bf16.mxu0 0
      %5142 = vmatpush1.bf16.xpose.msra.mxu0 %v5139
      %5143 = vmatprep.subr.bf16.mxu0 0
      %5144 = vmatpush1.bf16.xpose.msra.mxu0 0
      %5145 = vmatprep.subr.bf16.mxu0 0
      %5146 = vmatpush1.bf16.xpose.msra.mxu0 0
      %5147 = vmatprep.subr.bf16.mxu0 0
      %5148 = vmatpush1.bf16.xpose.msra.mxu0 0
      %5149 = vmatprep.subr.bf16.mxu0 0
      %5150 = vmatpush1.bf16.xpose.msra.mxu0 0
      %5151 = vmatprep.subr.bf16.mxu0 0
      %5152 = vmatpush1.bf16.xpose.msra.mxu0 0
      %5153 = vmatprep.subr.bf16.mxu0 0
      %5154 = vmatpush1.bf16.xpose.msra.mxu0 0
      %5155 = vmatprep.subr.bf16.mxu0 0
      %5156 = vmatpush1.bf16.xpose.msra.mxu0 0
      %5157 = vmatprep.subr.bf16.mxu0 0
      %5158 = vmatpush1.bf16.xpose.msra.mxu0 0
      %5159 = vmatprep.subr.bf16.mxu0 0
      %5160 = vmatpush1.bf16.xpose.msra.mxu0 0
      %5161 = vmatprep.subr.bf16.mxu0 0
      %5162 = vmatpush1.bf16.xpose.msra.mxu0 0
      %5163 = vmatprep.subr.bf16.mxu0 0
      %5164 = vmatpush1.bf16.xpose.msra.mxu0 0
      %5165 = vmatprep.subr.bf16.mxu0 0
      %5166 = vmatpush1.bf16.xpose.msra.mxu0 0
      %5167 = vmatprep.subr.bf16.mxu0 0
      %5168 = vmatpush1.bf16.xpose.msra.mxu0 0
      %5169 = vmatprep.subr.bf16.mxu0 0
      %5170 = vmatpush1.bf16.xpose.msra.mxu0 0
      %5171 = vmatprep.subr.bf16.mxu0 0
      %5172 = vmatpush1.bf16.xpose.msra.mxu0 0
      %5173 = vmatprep.mubr.bf16.mxu0 0
      %5174 = vmatmul.mubr.bf16.gmra.mrb[0].mxu0 %v5136
      %v5175 = vpop.f32.mrb[0].mxu0
      %v5176 = vadd.f32 %v968, %v5175
      %v5177 = vpop.f32.mrb[0].mxu0
      %v5178 = vpop.f32.mrb[0].mxu0
      %v5179 = vpop.f32.mrb[0].mxu0
      %5180 = vdwg.mxu0
      %5181 = vrot.lane.b32.xlu0 %v1005, 64
      %v5182 = vpop.permute.xlu0 %5181
      %5183 = vrot.lane.b32.xlu0 %v1045, 64
      %v5184 = vpop.permute.xlu0 %5183
      %v5186 = vsel %vm1089, %v5182, 0
      %v5189 = vsel %vm1089, %v5184, 0
      %5191 = vmatprep.subr.bf16.mxu0 0
      %5192 = vmatpush1.bf16.xpose.msra.mxu0 %v5189
      %5193 = vmatprep.subr.bf16.mxu0 0
      %5194 = vmatpush1.bf16.xpose.msra.mxu0 0
      %5195 = vmatprep.subr.bf16.mxu0 0
      %5196 = vmatpush1.bf16.xpose.msra.mxu0 0
      %5197 = vmatprep.subr.bf16.mxu0 0
      %5198 = vmatpush1.bf16.xpose.msra.mxu0 0
      %5199 = vmatprep.subr.bf16.mxu0 0
      %5200 = vmatpush1.bf16.xpose.msra.mxu0 0
      %5201 = vmatprep.subr.bf16.mxu0 0
      %5202 = vmatpush1.bf16.xpose.msra.mxu0 0
      %5203 = vmatprep.subr.bf16.mxu0 0
      %5204 = vmatpush1.bf16.xpose.msra.mxu0 0
      %5205 = vmatprep.subr.bf16.mxu0 0
      %5206 = vmatpush1.bf16.xpose.msra.mxu0 0
      %5207 = vmatprep.subr.bf16.mxu0 0
      %5208 = vmatpush1.bf16.xpose.msra.mxu0 0
      %5209 = vmatprep.subr.bf16.mxu0 0
      %5210 = vmatpush1.bf16.xpose.msra.mxu0 0
      %5211 = vmatprep.subr.bf16.mxu0 0
      %5212 = vmatpush1.bf16.xpose.msra.mxu0 0
      %5213 = vmatprep.subr.bf16.mxu0 0
      %5214 = vmatpush1.bf16.xpose.msra.mxu0 0
      %5215 = vmatprep.subr.bf16.mxu0 0
      %5216 = vmatpush1.bf16.xpose.msra.mxu0 0
      %5217 = vmatprep.subr.bf16.mxu0 0
      %5218 = vmatpush1.bf16.xpose.msra.mxu0 0
      %5219 = vmatprep.subr.bf16.mxu0 0
      %5220 = vmatpush1.bf16.xpose.msra.mxu0 0
      %5221 = vmatprep.subr.bf16.mxu0 0
      %5222 = vmatpush1.bf16.xpose.msra.mxu0 0
      %5223 = vmatprep.mubr.bf16.mxu0 0
      %5224 = vmatmul.mubr.bf16.gmra.mrb[0].mxu0 %v5186
      %v5225 = vpop.f32.mrb[0].mxu0
      %v5226 = vadd.f32 %v968, %v5225
      %v5227 = vpop.f32.mrb[0].mxu0
      %v5228 = vpop.f32.mrb[0].mxu0
      %v5229 = vpop.f32.mrb[0].mxu0
      %5230 = vdwg.mxu0
      %5231 = vrot.lane.b32.xlu0 %v1006, 64
      %v5232 = vpop.permute.xlu0 %5231
      %5233 = vrot.lane.b32.xlu0 %v1046, 64
      %v5234 = vpop.permute.xlu0 %5233
      %v5236 = vsel %vm1089, %v5232, 0
      %v5239 = vsel %vm1089, %v5234, 0
      %5241 = vmatprep.subr.bf16.mxu0 0
      %5242 = vmatpush1.bf16.xpose.msra.mxu0 %v5239
      %5243 = vmatprep.subr.bf16.mxu0 0
      %5244 = vmatpush1.bf16.xpose.msra.mxu0 0
      %5245 = vmatprep.subr.bf16.mxu0 0
      %5246 = vmatpush1.bf16.xpose.msra.mxu0 0
      %5247 = vmatprep.subr.bf16.mxu0 0
      %5248 = vmatpush1.bf16.xpose.msra.mxu0 0
      %5249 = vmatprep.subr.bf16.mxu0 0
      %5250 = vmatpush1.bf16.xpose.msra.mxu0 0
      %5251 = vmatprep.subr.bf16.mxu0 0
      %5252 = vmatpush1.bf16.xpose.msra.mxu0 0
      %5253 = vmatprep.subr.bf16.mxu0 0
      %5254 = vmatpush1.bf16.xpose.msra.mxu0 0
      %5255 = vmatprep.subr.bf16.mxu0 0
      %5256 = vmatpush1.bf16.xpose.msra.mxu0 0
      %5257 = vmatprep.subr.bf16.mxu0 0
      %5258 = vmatpush1.bf16.xpose.msra.mxu0 0
      %5259 = vmatprep.subr.bf16.mxu0 0
      %5260 = vmatpush1.bf16.xpose.msra.mxu0 0
      %5261 = vmatprep.subr.bf16.mxu0 0
      %5262 = vmatpush1.bf16.xpose.msra.mxu0 0
      %5263 = vmatprep.subr.bf16.mxu0 0
      %5264 = vmatpush1.bf16.xpose.msra.mxu0 0
      %5265 = vmatprep.subr.bf16.mxu0 0
      %5266 = vmatpush1.bf16.xpose.msra.mxu0 0
      %5267 = vmatprep.subr.bf16.mxu0 0
      %5268 = vmatpush1.bf16.xpose.msra.mxu0 0
      %5269 = vmatprep.subr.bf16.mxu0 0
      %5270 = vmatpush1.bf16.xpose.msra.mxu0 0
      %5271 = vmatprep.subr.bf16.mxu0 0
      %5272 = vmatpush1.bf16.xpose.msra.mxu0 0
      %5273 = vmatprep.mubr.bf16.mxu0 0
      %5274 = vmatmul.mubr.bf16.gmra.mrb[0].mxu0 %v5236
      %v5275 = vpop.f32.mrb[0].mxu0
      %v5276 = vadd.f32 %v968, %v5275
      %v5277 = vpop.f32.mrb[0].mxu0
      %v5278 = vpop.f32.mrb[0].mxu0
      %v5279 = vpop.f32.mrb[0].mxu0
      %5280 = vdwg.mxu0
      %5281 = vrot.lane.b32.xlu0 %v1007, 64
      %v5282 = vpop.permute.xlu0 %5281
      %5283 = vrot.lane.b32.xlu0 %v1047, 64
      %v5284 = vpop.permute.xlu0 %5283
      %v5286 = vsel %vm1089, %v5282, 0
      %v5289 = vsel %vm1089, %v5284, 0
      %5291 = vmatprep.subr.bf16.mxu0 0
      %5292 = vmatpush1.bf16.xpose.msra.mxu0 %v5289
      %5293 = vmatprep.subr.bf16.mxu0 0
      %5294 = vmatpush1.bf16.xpose.msra.mxu0 0
      %5295 = vmatprep.subr.bf16.mxu0 0
      %5296 = vmatpush1.bf16.xpose.msra.mxu0 0
      %5297 = vmatprep.subr.bf16.mxu0 0
      %5298 = vmatpush1.bf16.xpose.msra.mxu0 0
      %5299 = vmatprep.subr.bf16.mxu0 0
      %5300 = vmatpush1.bf16.xpose.msra.mxu0 0
      %5301 = vmatprep.subr.bf16.mxu0 0
      %5302 = vmatpush1.bf16.xpose.msra.mxu0 0
      %5303 = vmatprep.subr.bf16.mxu0 0
      %5304 = vmatpush1.bf16.xpose.msra.mxu0 0
      %5305 = vmatprep.subr.bf16.mxu0 0
      %5306 = vmatpush1.bf16.xpose.msra.mxu0 0
      %5307 = vmatprep.subr.bf16.mxu0 0
      %5308 = vmatpush1.bf16.xpose.msra.mxu0 0
      %5309 = vmatprep.subr.bf16.mxu0 0
      %5310 = vmatpush1.bf16.xpose.msra.mxu0 0
      %5311 = vmatprep.subr.bf16.mxu0 0
      %5312 = vmatpush1.bf16.xpose.msra.mxu0 0
      %5313 = vmatprep.subr.bf16.mxu0 0
      %5314 = vmatpush1.bf16.xpose.msra.mxu0 0
      %5315 = vmatprep.subr.bf16.mxu0 0
      %5316 = vmatpush1.bf16.xpose.msra.mxu0 0
      %5317 = vmatprep.subr.bf16.mxu0 0
      %5318 = vmatpush1.bf16.xpose.msra.mxu0 0
      %5319 = vmatprep.subr.bf16.mxu0 0
      %5320 = vmatpush1.bf16.xpose.msra.mxu0 0
      %5321 = vmatprep.subr.bf16.mxu0 0
      %5322 = vmatpush1.bf16.xpose.msra.mxu0 0
      %5323 = vmatprep.mubr.bf16.mxu0 0
      %5324 = vmatmul.mubr.bf16.gmra.mrb[0].mxu0 %v5286
      %v5325 = vpop.f32.mrb[0].mxu0
      %v5326 = vadd.f32 %v968, %v5325
      %v5327 = vpop.f32.mrb[0].mxu0
      %v5328 = vpop.f32.mrb[0].mxu0
      %v5329 = vpop.f32.mrb[0].mxu0
      %5330 = vdwg.mxu0
      %5331 = vrot.lane.b32.xlu0 %v1008, 64
      %v5332 = vpop.permute.xlu0 %5331
      %5333 = vrot.lane.b32.xlu0 %v1048, 64
      %v5334 = vpop.permute.xlu0 %5333
      %v5336 = vsel %vm1089, %v5332, 0
      %v5339 = vsel %vm1089, %v5334, 0
      %5341 = vmatprep.subr.bf16.mxu0 0
      %5342 = vmatpush1.bf16.xpose.msra.mxu0 %v5339
      %5343 = vmatprep.subr.bf16.mxu0 0
      %5344 = vmatpush1.bf16.xpose.msra.mxu0 0
      %5345 = vmatprep.subr.bf16.mxu0 0
      %5346 = vmatpush1.bf16.xpose.msra.mxu0 0
      %5347 = vmatprep.subr.bf16.mxu0 0
      %5348 = vmatpush1.bf16.xpose.msra.mxu0 0
      %5349 = vmatprep.subr.bf16.mxu0 0
      %5350 = vmatpush1.bf16.xpose.msra.mxu0 0
      %5351 = vmatprep.subr.bf16.mxu0 0
      %5352 = vmatpush1.bf16.xpose.msra.mxu0 0
      %5353 = vmatprep.subr.bf16.mxu0 0
      %5354 = vmatpush1.bf16.xpose.msra.mxu0 0
      %5355 = vmatprep.subr.bf16.mxu0 0
      %5356 = vmatpush1.bf16.xpose.msra.mxu0 0
      %5357 = vmatprep.subr.bf16.mxu0 0
      %5358 = vmatpush1.bf16.xpose.msra.mxu0 0
      %5359 = vmatprep.subr.bf16.mxu0 0
      %5360 = vmatpush1.bf16.xpose.msra.mxu0 0
      %5361 = vmatprep.subr.bf16.mxu0 0
      %5362 = vmatpush1.bf16.xpose.msra.mxu0 0
      %5363 = vmatprep.subr.bf16.mxu0 0
      %5364 = vmatpush1.bf16.xpose.msra.mxu0 0
      %5365 = vmatprep.subr.bf16.mxu0 0
      %5366 = vmatpush1.bf16.xpose.msra.mxu0 0
      %5367 = vmatprep.subr.bf16.mxu0 0
      %5368 = vmatpush1.bf16.xpose.msra.mxu0 0
      %5369 = vmatprep.subr.bf16.mxu0 0
      %5370 = vmatpush1.bf16.xpose.msra.mxu0 0
      %5371 = vmatprep.subr.bf16.mxu0 0
      %5372 = vmatpush1.bf16.xpose.msra.mxu0 0
      %5373 = vmatprep.mubr.bf16.mxu0 0
      %5374 = vmatmul.mubr.bf16.gmra.mrb[0].mxu0 %v5336
      %v5375 = vpop.f32.mrb[0].mxu0
      %v5376 = vadd.f32 %v968, %v5375
      %v5377 = vpop.f32.mrb[0].mxu0
      %v5378 = vpop.f32.mrb[0].mxu0
      %v5379 = vpop.f32.mrb[0].mxu0
      %5380 = vdwg.mxu0
      %v5381 = vsel %vm1826, %v4626, -inf
      %5382 = vmax.xlane.f32.xlu0 %v5381
      %v5383 = vpop.xlane.xlu0 %5382
      %v5384 = vsel %vm1826, %v4676, -inf
      %5385 = vmax.xlane.f32.xlu0 %v5384
      %v5386 = vpop.xlane.xlu0 %5385
      %v5387 = vsel %vm1826, %v4726, -inf
      %5388 = vmax.xlane.f32.xlu0 %v5387
      %v5389 = vpop.xlane.xlu0 %5388
      %v5390 = vsel %vm1826, %v4776, -inf
      %5391 = vmax.xlane.f32.xlu0 %v5390
      %v5392 = vpop.xlane.xlu0 %5391
      %v5393 = vsel %vm1826, %v4826, -inf
      %5394 = vmax.xlane.f32.xlu0 %v5393
      %v5395 = vpop.xlane.xlu0 %5394
      %v5396 = vsel %vm1826, %v4876, -inf
      %5397 = vmax.xlane.f32.xlu0 %v5396
      %v5398 = vpop.xlane.xlu0 %5397
      %v5399 = vsel %vm1826, %v4926, -inf
      %5400 = vmax.xlane.f32.xlu0 %v5399
      %v5401 = vpop.xlane.xlu0 %5400
      %v5402 = vsel %vm1826, %v4976, -inf
      %5403 = vmax.xlane.f32.xlu0 %v5402
      %v5404 = vpop.xlane.xlu0 %5403
      %v5405 = vsel %vm1826, %v5026, -inf
      %5406 = vmax.xlane.f32.xlu0 %v5405
      %v5407 = vpop.xlane.xlu0 %5406
      %v5408 = vsel %vm1826, %v5076, -inf
      %5409 = vmax.xlane.f32.xlu0 %v5408
      %v5410 = vpop.xlane.xlu0 %5409
      %v5411 = vsel %vm1826, %v5126, -inf
      %5412 = vmax.xlane.f32.xlu0 %v5411
      %v5413 = vpop.xlane.xlu0 %5412
      %v5414 = vsel %vm1826, %v5176, -inf
      %5415 = vmax.xlane.f32.xlu0 %v5414
      %v5416 = vpop.xlane.xlu0 %5415
      %v5417 = vsel %vm1826, %v5226, -inf
      %5418 = vmax.xlane.f32.xlu0 %v5417
      %v5419 = vpop.xlane.xlu0 %5418
      %v5420 = vsel %vm1826, %v5276, -inf
      %5421 = vmax.xlane.f32.xlu0 %v5420
      %v5422 = vpop.xlane.xlu0 %5421
      %v5423 = vsel %vm1826, %v5326, -inf
      %5424 = vmax.xlane.f32.xlu0 %v5423
      %v5425 = vpop.xlane.xlu0 %5424
      %v5426 = vsel %vm1826, %v5376, -inf
      %5427 = vmax.xlane.f32.xlu0 %v5426
      %v5428 = vpop.xlane.xlu0 %5427
      %v5429 = vsub.f32 %v4626, %v5383
      %v5430 = vsub.f32 %v4676, %v5386
      %v5431 = vsub.f32 %v4726, %v5389
      %v5432 = vsub.f32 %v4776, %v5392
      %v5433 = vsub.f32 %v4826, %v5395
      %v5434 = vsub.f32 %v4876, %v5398
      %v5435 = vsub.f32 %v4926, %v5401
      %v5436 = vsub.f32 %v4976, %v5404
      %v5437 = vsub.f32 %v5026, %v5407
      %v5438 = vsub.f32 %v5076, %v5410
      %v5439 = vsub.f32 %v5126, %v5413
      %v5440 = vsub.f32 %v5176, %v5416
      %v5441 = vsub.f32 %v5226, %v5419
      %v5442 = vsub.f32 %v5276, %v5422
      %v5443 = vsub.f32 %v5326, %v5425
      %v5444 = vsub.f32 %v5376, %v5428
      %v5445 = vmul.f32 %v5429, 1.442695
      %v5446 = vpow.pop %v5445
      %v5447 = vmul.f32 %v5430, 1.442695
      %v5448 = vpow.pop %v5447
      %v5449 = vmul.f32 %v5431, 1.442695
      %v5450 = vpow.pop %v5449
      %v5451 = vmul.f32 %v5432, 1.442695
      %v5452 = vpow.pop %v5451
      %v5453 = vmul.f32 %v5433, 1.442695
      %v5454 = vpow.pop %v5453
      %v5455 = vmul.f32 %v5434, 1.442695
      %v5456 = vpow.pop %v5455
      %v5457 = vmul.f32 %v5435, 1.442695
      %v5458 = vpow.pop %v5457
      %v5459 = vmul.f32 %v5436, 1.442695
      %v5460 = vpow.pop %v5459
      %v5461 = vmul.f32 %v5437, 1.442695
      %v5462 = vpow.pop %v5461
      %v5463 = vmul.f32 %v5438, 1.442695
      %v5464 = vpow.pop %v5463
      %v5465 = vmul.f32 %v5439, 1.442695
      %v5466 = vpow.pop %v5465
      %v5467 = vmul.f32 %v5440, 1.442695
      %v5468 = vpow.pop %v5467
      %v5469 = vmul.f32 %v5441, 1.442695
      %v5470 = vpow.pop %v5469
      %v5471 = vmul.f32 %v5442, 1.442695
      %v5472 = vpow.pop %v5471
      %v5473 = vmul.f32 %v5443, 1.442695
      %v5474 = vpow.pop %v5473
      %v5475 = vmul.f32 %v5444, 1.442695
      %v5476 = vpow.pop %v5475
      %v5477 = vsel %vm1826, %v5446, 0.0
      %5478 = vadd.xlane.f32.xlu0 %v5477
      %v5479 = vpop.xlane.xlu0 %5478
      %v5480 = vsel %vm1826, %v5448, 0.0
      %5481 = vadd.xlane.f32.xlu0 %v5480
      %v5482 = vpop.xlane.xlu0 %5481
      %v5483 = vsel %vm1826, %v5450, 0.0
      %5484 = vadd.xlane.f32.xlu0 %v5483
      %v5485 = vpop.xlane.xlu0 %5484
      %v5486 = vsel %vm1826, %v5452, 0.0
      %5487 = vadd.xlane.f32.xlu0 %v5486
      %v5488 = vpop.xlane.xlu0 %5487
      %v5489 = vsel %vm1826, %v5454, 0.0
      %5490 = vadd.xlane.f32.xlu0 %v5489
      %v5491 = vpop.xlane.xlu0 %5490
      %v5492 = vsel %vm1826, %v5456, 0.0
      %5493 = vadd.xlane.f32.xlu0 %v5492
      %v5494 = vpop.xlane.xlu0 %5493
      %v5495 = vsel %vm1826, %v5458, 0.0
      %5496 = vadd.xlane.f32.xlu0 %v5495
      %v5497 = vpop.xlane.xlu0 %5496
      %v5498 = vsel %vm1826, %v5460, 0.0
      %5499 = vadd.xlane.f32.xlu0 %v5498
      %v5500 = vpop.xlane.xlu0 %5499
      %v5501 = vsel %vm1826, %v5462, 0.0
      %5502 = vadd.xlane.f32.xlu0 %v5501
      %v5503 = vpop.xlane.xlu0 %5502
      %v5504 = vsel %vm1826, %v5464, 0.0
      %5505 = vadd.xlane.f32.xlu0 %v5504
      %v5506 = vpop.xlane.xlu0 %5505
      %v5507 = vsel %vm1826, %v5466, 0.0
      %5508 = vadd.xlane.f32.xlu0 %v5507
      %v5509 = vpop.xlane.xlu0 %5508
      %v5510 = vsel %vm1826, %v5468, 0.0
      %5511 = vadd.xlane.f32.xlu0 %v5510
      %v5512 = vpop.xlane.xlu0 %5511
      %v5513 = vsel %vm1826, %v5470, 0.0
      %5514 = vadd.xlane.f32.xlu0 %v5513
      %v5515 = vpop.xlane.xlu0 %5514
      %v5516 = vsel %vm1826, %v5472, 0.0
      %5517 = vadd.xlane.f32.xlu0 %v5516
      %v5518 = vpop.xlane.xlu0 %5517
      %v5519 = vsel %vm1826, %v5474, 0.0
      %5520 = vadd.xlane.f32.xlu0 %v5519
      %v5521 = vpop.xlane.xlu0 %5520
      %v5522 = vsel %vm1826, %v5476, 0.0
      %5523 = vadd.xlane.f32.xlu0 %v5522
      %v5524 = vpop.xlane.xlu0 %5523
      %v5525 = vrcp.pop %v5479
      %v5526 = vrcp.pop %v5482
      %v5527 = vrcp.pop %v5485
      %v5528 = vrcp.pop %v5488
      %v5529 = vrcp.pop %v5491
      %v5530 = vrcp.pop %v5494
      %v5531 = vrcp.pop %v5497
      %v5532 = vrcp.pop %v5500
      %v5533 = vrcp.pop %v5503
      %v5534 = vrcp.pop %v5506
      %v5535 = vrcp.pop %v5509
      %v5536 = vrcp.pop %v5512
      %v5537 = vrcp.pop %v5515
      %v5538 = vrcp.pop %v5518
      %v5539 = vrcp.pop %v5521
      %v5540 = vrcp.pop %v5524
      %v5541 = vmul.f32 %v5446, %v5525
      %v5542 = vmul.f32 %v5448, %v5526
      %v5543 = vmul.f32 %v5450, %v5527
      %v5544 = vmul.f32 %v5452, %v5528
      %v5545 = vmul.f32 %v5454, %v5529
      %v5546 = vmul.f32 %v5456, %v5530
      %v5547 = vmul.f32 %v5458, %v5531
      %v5548 = vmul.f32 %v5460, %v5532
      %v5549 = vmul.f32 %v5462, %v5533
      %v5550 = vmul.f32 %v5464, %v5534
      %v5551 = vmul.f32 %v5466, %v5535
      %v5552 = vmul.f32 %v5468, %v5536
      %v5553 = vmul.f32 %v5470, %v5537
      %v5554 = vmul.f32 %v5472, %v5538
      %v5555 = vmul.f32 %v5474, %v5539
      %v5556 = vmul.f32 %v5476, %v5540
      %v5557 = vpack.c.bf16 %v5541, %v5541
      %v5558 = vpack.c.bf16 %v5542, %v5542
      %v5559 = vpack.c.bf16 %v5543, %v5543
      %v5560 = vpack.c.bf16 %v5544, %v5544
      %v5561 = vpack.c.bf16 %v5545, %v5545
      %v5562 = vpack.c.bf16 %v5546, %v5546
      %v5563 = vpack.c.bf16 %v5547, %v5547
      %v5564 = vpack.c.bf16 %v5548, %v5548
      %v5565 = vpack.c.bf16 %v5549, %v5549
      %v5566 = vpack.c.bf16 %v5550, %v5550
      %v5567 = vpack.c.bf16 %v5551, %v5551
      %v5568 = vpack.c.bf16 %v5552, %v5552
      %v5569 = vpack.c.bf16 %v5553, %v5553
      %v5570 = vpack.c.bf16 %v5554, %v5554
      %v5571 = vpack.c.bf16 %v5555, %v5555
      %v5572 = vpack.c.bf16 %v5556, %v5556
      %5573 = vrot.lane.b32.xlu0 %v1073, 64
      %v5574 = vpop.permute.xlu0 %5573
      %v5576 = vsel %vm1826, %v5557, 0
      %v5579 = vsel %vm2022, %v5574, 0
      %5581 = vmatprep.subr.bf16.mxu0 0
      %5582 = vmatpush1.bf16.msra.mxu0 %v5579
      %5583 = vmatprep.subr.bf16.mxu0 0
      %5584 = vmatpush1.bf16.msra.mxu0 0
      %5585 = vmatprep.subr.bf16.mxu0 0
      %5586 = vmatpush1.bf16.msra.mxu0 0
      %5587 = vmatprep.subr.bf16.mxu0 0
      %5588 = vmatpush1.bf16.msra.mxu0 0
      %5589 = vmatprep.subr.bf16.mxu0 0
      %5590 = vmatpush1.bf16.msra.mxu0 0
      %5591 = vmatprep.subr.bf16.mxu0 0
      %5592 = vmatpush1.bf16.msra.mxu0 0
      %5593 = vmatprep.subr.bf16.mxu0 0
      %5594 = vmatpush1.bf16.msra.mxu0 0
      %5595 = vmatprep.subr.bf16.mxu0 0
      %5596 = vmatpush1.bf16.msra.mxu0 0
      %5597 = vmatprep.subr.bf16.mxu0 0
      %5598 = vmatpush1.bf16.msra.mxu0 0
      %5599 = vmatprep.subr.bf16.mxu0 0
      %5600 = vmatpush1.bf16.msra.mxu0 0
      %5601 = vmatprep.subr.bf16.mxu0 0
      %5602 = vmatpush1.bf16.msra.mxu0 0
      %5603 = vmatprep.subr.bf16.mxu0 0
      %5604 = vmatpush1.bf16.msra.mxu0 0
      %5605 = vmatprep.subr.bf16.mxu0 0
      %5606 = vmatpush1.bf16.msra.mxu0 0
      %5607 = vmatprep.subr.bf16.mxu0 0
      %5608 = vmatpush1.bf16.msra.mxu0 0
      %5609 = vmatprep.subr.bf16.mxu0 0
      %5610 = vmatpush1.bf16.msra.mxu0 0
      %5611 = vmatprep.subr.bf16.mxu0 0
      %5612 = vmatpush1.bf16.msra.mxu0 0
      %5613 = vmatprep.mubr.bf16.mxu0 0
      %5614 = vmatmul.mubr.bf16.gmra.mrb[0].mxu0 %v5576
      %v5615 = vpop.f32.mrb[0].mxu0
      %v5616 = vadd.f32 0.0, %v5615
      %v5617 = vpop.f32.mrb[0].mxu0
      %v5618 = vpop.f32.mrb[0].mxu0
      %v5619 = vpop.f32.mrb[0].mxu0
      %5620 = vdwg.mxu0
      %5621 = vrot.lane.b32.xlu0 %v1074, 64
      %v5622 = vpop.permute.xlu0 %5621
      %v5624 = vsel %vm1826, %v5558, 0
      %v5627 = vsel %vm2022, %v5622, 0
      %5629 = vmatprep.subr.bf16.mxu0 0
      %5630 = vmatpush1.bf16.msra.mxu0 %v5627
      %5631 = vmatprep.subr.bf16.mxu0 0
      %5632 = vmatpush1.bf16.msra.mxu0 0
      %5633 = vmatprep.subr.bf16.mxu0 0
      %5634 = vmatpush1.bf16.msra.mxu0 0
      %5635 = vmatprep.subr.bf16.mxu0 0
      %5636 = vmatpush1.bf16.msra.mxu0 0
      %5637 = vmatprep.subr.bf16.mxu0 0
      %5638 = vmatpush1.bf16.msra.mxu0 0
      %5639 = vmatprep.subr.bf16.mxu0 0
      %5640 = vmatpush1.bf16.msra.mxu0 0
      %5641 = vmatprep.subr.bf16.mxu0 0
      %5642 = vmatpush1.bf16.msra.mxu0 0
      %5643 = vmatprep.subr.bf16.mxu0 0
      %5644 = vmatpush1.bf16.msra.mxu0 0
      %5645 = vmatprep.subr.bf16.mxu0 0
      %5646 = vmatpush1.bf16.msra.mxu0 0
      %5647 = vmatprep.subr.bf16.mxu0 0
      %5648 = vmatpush1.bf16.msra.mxu0 0
      %5649 = vmatprep.subr.bf16.mxu0 0
      %5650 = vmatpush1.bf16.msra.mxu0 0
      %5651 = vmatprep.subr.bf16.mxu0 0
      %5652 = vmatpush1.bf16.msra.mxu0 0
      %5653 = vmatprep.subr.bf16.mxu0 0
      %5654 = vmatpush1.bf16.msra.mxu0 0
      %5655 = vmatprep.subr.bf16.mxu0 0
      %5656 = vmatpush1.bf16.msra.mxu0 0
      %5657 = vmatprep.subr.bf16.mxu0 0
      %5658 = vmatpush1.bf16.msra.mxu0 0
      %5659 = vmatprep.subr.bf16.mxu0 0
      %5660 = vmatpush1.bf16.msra.mxu0 0
      %5661 = vmatprep.mubr.bf16.mxu0 0
      %5662 = vmatmul.mubr.bf16.gmra.mrb[0].mxu0 %v5624
      %v5663 = vpop.f32.mrb[0].mxu0
      %v5664 = vadd.f32 0.0, %v5663
      %v5665 = vpop.f32.mrb[0].mxu0
      %v5666 = vpop.f32.mrb[0].mxu0
      %v5667 = vpop.f32.mrb[0].mxu0
      %5668 = vdwg.mxu0
      %5669 = vrot.lane.b32.xlu0 %v1075, 64
      %v5670 = vpop.permute.xlu0 %5669
      %v5672 = vsel %vm1826, %v5559, 0
      %v5675 = vsel %vm2022, %v5670, 0
      %5677 = vmatprep.subr.bf16.mxu0 0
      %5678 = vmatpush1.bf16.msra.mxu0 %v5675
      %5679 = vmatprep.subr.bf16.mxu0 0
      %5680 = vmatpush1.bf16.msra.mxu0 0
      %5681 = vmatprep.subr.bf16.mxu0 0
      %5682 = vmatpush1.bf16.msra.mxu0 0
      %5683 = vmatprep.subr.bf16.mxu0 0
      %5684 = vmatpush1.bf16.msra.mxu0 0
      %5685 = vmatprep.subr.bf16.mxu0 0
      %5686 = vmatpush1.bf16.msra.mxu0 0
      %5687 = vmatprep.subr.bf16.mxu0 0
      %5688 = vmatpush1.bf16.msra.mxu0 0
      %5689 = vmatprep.subr.bf16.mxu0 0
      %5690 = vmatpush1.bf16.msra.mxu0 0
      %5691 = vmatprep.subr.bf16.mxu0 0
      %5692 = vmatpush1.bf16.msra.mxu0 0
      %5693 = vmatprep.subr.bf16.mxu0 0
      %5694 = vmatpush1.bf16.msra.mxu0 0
      %5695 = vmatprep.subr.bf16.mxu0 0
      %5696 = vmatpush1.bf16.msra.mxu0 0
      %5697 = vmatprep.subr.bf16.mxu0 0
      %5698 = vmatpush1.bf16.msra.mxu0 0
      %5699 = vmatprep.subr.bf16.mxu0 0
      %5700 = vmatpush1.bf16.msra.mxu0 0
      %5701 = vmatprep.subr.bf16.mxu0 0
      %5702 = vmatpush1.bf16.msra.mxu0 0
      %5703 = vmatprep.subr.bf16.mxu0 0
      %5704 = vmatpush1.bf16.msra.mxu0 0
      %5705 = vmatprep.subr.bf16.mxu0 0
      %5706 = vmatpush1.bf16.msra.mxu0 0
      %5707 = vmatprep.subr.bf16.mxu0 0
      %5708 = vmatpush1.bf16.msra.mxu0 0
      %5709 = vmatprep.mubr.bf16.mxu0 0
      %5710 = vmatmul.mubr.bf16.gmra.mrb[0].mxu0 %v5672
      %v5711 = vpop.f32.mrb[0].mxu0
      %v5712 = vadd.f32 0.0, %v5711
      %v5713 = vpop.f32.mrb[0].mxu0
      %v5714 = vpop.f32.mrb[0].mxu0
      %v5715 = vpop.f32.mrb[0].mxu0
      %5716 = vdwg.mxu0
      %5717 = vrot.lane.b32.xlu0 %v1076, 64
      %v5718 = vpop.permute.xlu0 %5717
      %v5720 = vsel %vm1826, %v5560, 0
      %v5723 = vsel %vm2022, %v5718, 0
      %5725 = vmatprep.subr.bf16.mxu0 0
      %5726 = vmatpush1.bf16.msra.mxu0 %v5723
      %5727 = vmatprep.subr.bf16.mxu0 0
      %5728 = vmatpush1.bf16.msra.mxu0 0
      %5729 = vmatprep.subr.bf16.mxu0 0
      %5730 = vmatpush1.bf16.msra.mxu0 0
      %5731 = vmatprep.subr.bf16.mxu0 0
      %5732 = vmatpush1.bf16.msra.mxu0 0
      %5733 = vmatprep.subr.bf16.mxu0 0
      %5734 = vmatpush1.bf16.msra.mxu0 0
      %5735 = vmatprep.subr.bf16.mxu0 0
      %5736 = vmatpush1.bf16.msra.mxu0 0
      %5737 = vmatprep.subr.bf16.mxu0 0
      %5738 = vmatpush1.bf16.msra.mxu0 0
      %5739 = vmatprep.subr.bf16.mxu0 0
      %5740 = vmatpush1.bf16.msra.mxu0 0
      %5741 = vmatprep.subr.bf16.mxu0 0
      %5742 = vmatpush1.bf16.msra.mxu0 0
      %5743 = vmatprep.subr.bf16.mxu0 0
      %5744 = vmatpush1.bf16.msra.mxu0 0
      %5745 = vmatprep.subr.bf16.mxu0 0
      %5746 = vmatpush1.bf16.msra.mxu0 0
      %5747 = vmatprep.subr.bf16.mxu0 0
      %5748 = vmatpush1.bf16.msra.mxu0 0
      %5749 = vmatprep.subr.bf16.mxu0 0
      %5750 = vmatpush1.bf16.msra.mxu0 0
      %5751 = vmatprep.subr.bf16.mxu0 0
      %5752 = vmatpush1.bf16.msra.mxu0 0
      %5753 = vmatprep.subr.bf16.mxu0 0
      %5754 = vmatpush1.bf16.msra.mxu0 0
      %5755 = vmatprep.subr.bf16.mxu0 0
      %5756 = vmatpush1.bf16.msra.mxu0 0
      %5757 = vmatprep.mubr.bf16.mxu0 0
      %5758 = vmatmul.mubr.bf16.gmra.mrb[0].mxu0 %v5720
      %v5759 = vpop.f32.mrb[0].mxu0
      %v5760 = vadd.f32 0.0, %v5759
      %v5761 = vpop.f32.mrb[0].mxu0
      %v5762 = vpop.f32.mrb[0].mxu0
      %v5763 = vpop.f32.mrb[0].mxu0
      %5764 = vdwg.mxu0
      %5765 = vrot.lane.b32.xlu0 %v1077, 64
      %v5766 = vpop.permute.xlu0 %5765
      %v5768 = vsel %vm1826, %v5561, 0
      %v5771 = vsel %vm2022, %v5766, 0
      %5773 = vmatprep.subr.bf16.mxu0 0
      %5774 = vmatpush1.bf16.msra.mxu0 %v5771
      %5775 = vmatprep.subr.bf16.mxu0 0
      %5776 = vmatpush1.bf16.msra.mxu0 0
      %5777 = vmatprep.subr.bf16.mxu0 0
      %5778 = vmatpush1.bf16.msra.mxu0 0
      %5779 = vmatprep.subr.bf16.mxu0 0
      %5780 = vmatpush1.bf16.msra.mxu0 0
      %5781 = vmatprep.subr.bf16.mxu0 0
      %5782 = vmatpush1.bf16.msra.mxu0 0
      %5783 = vmatprep.subr.bf16.mxu0 0
      %5784 = vmatpush1.bf16.msra.mxu0 0
      %5785 = vmatprep.subr.bf16.mxu0 0
      %5786 = vmatpush1.bf16.msra.mxu0 0
      %5787 = vmatprep.subr.bf16.mxu0 0
      %5788 = vmatpush1.bf16.msra.mxu0 0
      %5789 = vmatprep.subr.bf16.mxu0 0
      %5790 = vmatpush1.bf16.msra.mxu0 0
      %5791 = vmatprep.subr.bf16.mxu0 0
      %5792 = vmatpush1.bf16.msra.mxu0 0
      %5793 = vmatprep.subr.bf16.mxu0 0
      %5794 = vmatpush1.bf16.msra.mxu0 0
      %5795 = vmatprep.subr.bf16.mxu0 0
      %5796 = vmatpush1.bf16.msra.mxu0 0
      %5797 = vmatprep.subr.bf16.mxu0 0
      %5798 = vmatpush1.bf16.msra.mxu0 0
      %5799 = vmatprep.subr.bf16.mxu0 0
      %5800 = vmatpush1.bf16.msra.mxu0 0
      %5801 = vmatprep.subr.bf16.mxu0 0
      %5802 = vmatpush1.bf16.msra.mxu0 0
      %5803 = vmatprep.subr.bf16.mxu0 0
      %5804 = vmatpush1.bf16.msra.mxu0 0
      %5805 = vmatprep.mubr.bf16.mxu0 0
      %5806 = vmatmul.mubr.bf16.gmra.mrb[0].mxu0 %v5768
      %v5807 = vpop.f32.mrb[0].mxu0
      %v5808 = vadd.f32 0.0, %v5807
      %v5809 = vpop.f32.mrb[0].mxu0
      %v5810 = vpop.f32.mrb[0].mxu0
      %v5811 = vpop.f32.mrb[0].mxu0
      %5812 = vdwg.mxu0
      %5813 = vrot.lane.b32.xlu0 %v1078, 64
      %v5814 = vpop.permute.xlu0 %5813
      %v5816 = vsel %vm1826, %v5562, 0
      %v5819 = vsel %vm2022, %v5814, 0
      %5821 = vmatprep.subr.bf16.mxu0 0
      %5822 = vmatpush1.bf16.msra.mxu0 %v5819
      %5823 = vmatprep.subr.bf16.mxu0 0
      %5824 = vmatpush1.bf16.msra.mxu0 0
      %5825 = vmatprep.subr.bf16.mxu0 0
      %5826 = vmatpush1.bf16.msra.mxu0 0
      %5827 = vmatprep.subr.bf16.mxu0 0
      %5828 = vmatpush1.bf16.msra.mxu0 0
      %5829 = vmatprep.subr.bf16.mxu0 0
      %5830 = vmatpush1.bf16.msra.mxu0 0
      %5831 = vmatprep.subr.bf16.mxu0 0
      %5832 = vmatpush1.bf16.msra.mxu0 0
      %5833 = vmatprep.subr.bf16.mxu0 0
      %5834 = vmatpush1.bf16.msra.mxu0 0
      %5835 = vmatprep.subr.bf16.mxu0 0
      %5836 = vmatpush1.bf16.msra.mxu0 0
      %5837 = vmatprep.subr.bf16.mxu0 0
      %5838 = vmatpush1.bf16.msra.mxu0 0
      %5839 = vmatprep.subr.bf16.mxu0 0
      %5840 = vmatpush1.bf16.msra.mxu0 0
      %5841 = vmatprep.subr.bf16.mxu0 0
      %5842 = vmatpush1.bf16.msra.mxu0 0
      %5843 = vmatprep.subr.bf16.mxu0 0
      %5844 = vmatpush1.bf16.msra.mxu0 0
      %5845 = vmatprep.subr.bf16.mxu0 0
      %5846 = vmatpush1.bf16.msra.mxu0 0
      %5847 = vmatprep.subr.bf16.mxu0 0
      %5848 = vmatpush1.bf16.msra.mxu0 0
      %5849 = vmatprep.subr.bf16.mxu0 0
      %5850 = vmatpush1.bf16.msra.mxu0 0
      %5851 = vmatprep.subr.bf16.mxu0 0
      %5852 = vmatpush1.bf16.msra.mxu0 0
      %5853 = vmatprep.mubr.bf16.mxu0 0
      %5854 = vmatmul.mubr.bf16.gmra.mrb[0].mxu0 %v5816
      %v5855 = vpop.f32.mrb[0].mxu0
      %v5856 = vadd.f32 0.0, %v5855
      %v5857 = vpop.f32.mrb[0].mxu0
      %v5858 = vpop.f32.mrb[0].mxu0
      %v5859 = vpop.f32.mrb[0].mxu0
      %5860 = vdwg.mxu0
      %5861 = vrot.lane.b32.xlu0 %v1079, 64
      %v5862 = vpop.permute.xlu0 %5861
      %v5864 = vsel %vm1826, %v5563, 0
      %v5867 = vsel %vm2022, %v5862, 0
      %5869 = vmatprep.subr.bf16.mxu0 0
      %5870 = vmatpush1.bf16.msra.mxu0 %v5867
      %5871 = vmatprep.subr.bf16.mxu0 0
      %5872 = vmatpush1.bf16.msra.mxu0 0
      %5873 = vmatprep.subr.bf16.mxu0 0
      %5874 = vmatpush1.bf16.msra.mxu0 0
      %5875 = vmatprep.subr.bf16.mxu0 0
      %5876 = vmatpush1.bf16.msra.mxu0 0
      %5877 = vmatprep.subr.bf16.mxu0 0
      %5878 = vmatpush1.bf16.msra.mxu0 0
      %5879 = vmatprep.subr.bf16.mxu0 0
      %5880 = vmatpush1.bf16.msra.mxu0 0
      %5881 = vmatprep.subr.bf16.mxu0 0
      %5882 = vmatpush1.bf16.msra.mxu0 0
      %5883 = vmatprep.subr.bf16.mxu0 0
      %5884 = vmatpush1.bf16.msra.mxu0 0
      %5885 = vmatprep.subr.bf16.mxu0 0
      %5886 = vmatpush1.bf16.msra.mxu0 0
      %5887 = vmatprep.subr.bf16.mxu0 0
      %5888 = vmatpush1.bf16.msra.mxu0 0
      %5889 = vmatprep.subr.bf16.mxu0 0
      %5890 = vmatpush1.bf16.msra.mxu0 0
      %5891 = vmatprep.subr.bf16.mxu0 0
      %5892 = vmatpush1.bf16.msra.mxu0 0
      %5893 = vmatprep.subr.bf16.mxu0 0
      %5894 = vmatpush1.bf16.msra.mxu0 0
      %5895 = vmatprep.subr.bf16.mxu0 0
      %5896 = vmatpush1.bf16.msra.mxu0 0
      %5897 = vmatprep.subr.bf16.mxu0 0
      %5898 = vmatpush1.bf16.msra.mxu0 0
      %5899 = vmatprep.subr.bf16.mxu0 0
      %5900 = vmatpush1.bf16.msra.mxu0 0
      %5901 = vmatprep.mubr.bf16.mxu0 0
      %5902 = vmatmul.mubr.bf16.gmra.mrb[0].mxu0 %v5864
      %v5903 = vpop.f32.mrb[0].mxu0
      %v5904 = vadd.f32 0.0, %v5903
      %v5905 = vpop.f32.mrb[0].mxu0
      %v5906 = vpop.f32.mrb[0].mxu0
      %v5907 = vpop.f32.mrb[0].mxu0
      %5908 = vdwg.mxu0
      %5909 = vrot.lane.b32.xlu0 %v1080, 64
      %v5910 = vpop.permute.xlu0 %5909
      %v5912 = vsel %vm1826, %v5564, 0
      %v5915 = vsel %vm2022, %v5910, 0
      %5917 = vmatprep.subr.bf16.mxu0 0
      %5918 = vmatpush1.bf16.msra.mxu0 %v5915
      %5919 = vmatprep.subr.bf16.mxu0 0
      %5920 = vmatpush1.bf16.msra.mxu0 0
      %5921 = vmatprep.subr.bf16.mxu0 0
      %5922 = vmatpush1.bf16.msra.mxu0 0
      %5923 = vmatprep.subr.bf16.mxu0 0
      %5924 = vmatpush1.bf16.msra.mxu0 0
      %5925 = vmatprep.subr.bf16.mxu0 0
      %5926 = vmatpush1.bf16.msra.mxu0 0
      %5927 = vmatprep.subr.bf16.mxu0 0
      %5928 = vmatpush1.bf16.msra.mxu0 0
      %5929 = vmatprep.subr.bf16.mxu0 0
      %5930 = vmatpush1.bf16.msra.mxu0 0
      %5931 = vmatprep.subr.bf16.mxu0 0
      %5932 = vmatpush1.bf16.msra.mxu0 0
      %5933 = vmatprep.subr.bf16.mxu0 0
      %5934 = vmatpush1.bf16.msra.mxu0 0
      %5935 = vmatprep.subr.bf16.mxu0 0
      %5936 = vmatpush1.bf16.msra.mxu0 0
      %5937 = vmatprep.subr.bf16.mxu0 0
      %5938 = vmatpush1.bf16.msra.mxu0 0
      %5939 = vmatprep.subr.bf16.mxu0 0
      %5940 = vmatpush1.bf16.msra.mxu0 0
      %5941 = vmatprep.subr.bf16.mxu0 0
      %5942 = vmatpush1.bf16.msra.mxu0 0
      %5943 = vmatprep.subr.bf16.mxu0 0
      %5944 = vmatpush1.bf16.msra.mxu0 0
      %5945 = vmatprep.subr.bf16.mxu0 0
      %5946 = vmatpush1.bf16.msra.mxu0 0
      %5947 = vmatprep.subr.bf16.mxu0 0
      %5948 = vmatpush1.bf16.msra.mxu0 0
      %5949 = vmatprep.mubr.bf16.mxu0 0
      %5950 = vmatmul.mubr.bf16.gmra.mrb[0].mxu0 %v5912
      %v5951 = vpop.f32.mrb[0].mxu0
      %v5952 = vadd.f32 0.0, %v5951
      %v5953 = vpop.f32.mrb[0].mxu0
      %v5954 = vpop.f32.mrb[0].mxu0
      %v5955 = vpop.f32.mrb[0].mxu0
      %5956 = vdwg.mxu0
      %5957 = vrot.lane.b32.xlu0 %v1081, 64
      %v5958 = vpop.permute.xlu0 %5957
      %v5960 = vsel %vm1826, %v5565, 0
      %v5963 = vsel %vm2022, %v5958, 0
      %5965 = vmatprep.subr.bf16.mxu0 0
      %5966 = vmatpush1.bf16.msra.mxu0 %v5963
      %5967 = vmatprep.subr.bf16.mxu0 0
      %5968 = vmatpush1.bf16.msra.mxu0 0
      %5969 = vmatprep.subr.bf16.mxu0 0
      %5970 = vmatpush1.bf16.msra.mxu0 0
      %5971 = vmatprep.subr.bf16.mxu0 0
      %5972 = vmatpush1.bf16.msra.mxu0 0
      %5973 = vmatprep.subr.bf16.mxu0 0
      %5974 = vmatpush1.bf16.msra.mxu0 0
      %5975 = vmatprep.subr.bf16.mxu0 0
      %5976 = vmatpush1.bf16.msra.mxu0 0
      %5977 = vmatprep.subr.bf16.mxu0 0
      %5978 = vmatpush1.bf16.msra.mxu0 0
      %5979 = vmatprep.subr.bf16.mxu0 0
      %5980 = vmatpush1.bf16.msra.mxu0 0
      %5981 = vmatprep.subr.bf16.mxu0 0
      %5982 = vmatpush1.bf16.msra.mxu0 0
      %5983 = vmatprep.subr.bf16.mxu0 0
      %5984 = vmatpush1.bf16.msra.mxu0 0
      %5985 = vmatprep.subr.bf16.mxu0 0
      %5986 = vmatpush1.bf16.msra.mxu0 0
      %5987 = vmatprep.subr.bf16.mxu0 0
      %5988 = vmatpush1.bf16.msra.mxu0 0
      %5989 = vmatprep.subr.bf16.mxu0 0
      %5990 = vmatpush1.bf16.msra.mxu0 0
      %5991 = vmatprep.subr.bf16.mxu0 0
      %5992 = vmatpush1.bf16.msra.mxu0 0
      %5993 = vmatprep.subr.bf16.mxu0 0
      %5994 = vmatpush1.bf16.msra.mxu0 0
      %5995 = vmatprep.subr.bf16.mxu0 0
      %5996 = vmatpush1.bf16.msra.mxu0 0
      %5997 = vmatprep.mubr.bf16.mxu0 0
      %5998 = vmatmul.mubr.bf16.gmra.mrb[0].mxu0 %v5960
      %v5999 = vpop.f32.mrb[0].mxu0
      %v6000 = vadd.f32 0.0, %v5999
      %v6001 = vpop.f32.mrb[0].mxu0
      %v6002 = vpop.f32.mrb[0].mxu0
      %v6003 = vpop.f32.mrb[0].mxu0
      %6004 = vdwg.mxu0
      %6005 = vrot.lane.b32.xlu0 %v1082, 64
      %v6006 = vpop.permute.xlu0 %6005
      %v6008 = vsel %vm1826, %v5566, 0
      %v6011 = vsel %vm2022, %v6006, 0
      %6013 = vmatprep.subr.bf16.mxu0 0
      %6014 = vmatpush1.bf16.msra.mxu0 %v6011
      %6015 = vmatprep.subr.bf16.mxu0 0
      %6016 = vmatpush1.bf16.msra.mxu0 0
      %6017 = vmatprep.subr.bf16.mxu0 0
      %6018 = vmatpush1.bf16.msra.mxu0 0
      %6019 = vmatprep.subr.bf16.mxu0 0
      %6020 = vmatpush1.bf16.msra.mxu0 0
      %6021 = vmatprep.subr.bf16.mxu0 0
      %6022 = vmatpush1.bf16.msra.mxu0 0
      %6023 = vmatprep.subr.bf16.mxu0 0
      %6024 = vmatpush1.bf16.msra.mxu0 0
      %6025 = vmatprep.subr.bf16.mxu0 0
      %6026 = vmatpush1.bf16.msra.mxu0 0
      %6027 = vmatprep.subr.bf16.mxu0 0
      %6028 = vmatpush1.bf16.msra.mxu0 0
      %6029 = vmatprep.subr.bf16.mxu0 0
      %6030 = vmatpush1.bf16.msra.mxu0 0
      %6031 = vmatprep.subr.bf16.mxu0 0
      %6032 = vmatpush1.bf16.msra.mxu0 0
      %6033 = vmatprep.subr.bf16.mxu0 0
      %6034 = vmatpush1.bf16.msra.mxu0 0
      %6035 = vmatprep.subr.bf16.mxu0 0
      %6036 = vmatpush1.bf16.msra.mxu0 0
      %6037 = vmatprep.subr.bf16.mxu0 0
      %6038 = vmatpush1.bf16.msra.mxu0 0
      %6039 = vmatprep.subr.bf16.mxu0 0
      %6040 = vmatpush1.bf16.msra.mxu0 0
      %6041 = vmatprep.subr.bf16.mxu0 0
      %6042 = vmatpush1.bf16.msra.mxu0 0
      %6043 = vmatprep.subr.bf16.mxu0 0
      %6044 = vmatpush1.bf16.msra.mxu0 0
      %6045 = vmatprep.mubr.bf16.mxu0 0
      %6046 = vmatmul.mubr.bf16.gmra.mrb[0].mxu0 %v6008
      %v6047 = vpop.f32.mrb[0].mxu0
      %v6048 = vadd.f32 0.0, %v6047
      %v6049 = vpop.f32.mrb[0].mxu0
      %v6050 = vpop.f32.mrb[0].mxu0
      %v6051 = vpop.f32.mrb[0].mxu0
      %6052 = vdwg.mxu0
      %6053 = vrot.lane.b32.xlu0 %v1083, 64
      %v6054 = vpop.permute.xlu0 %6053
      %v6056 = vsel %vm1826, %v5567, 0
      %v6059 = vsel %vm2022, %v6054, 0
      %6061 = vmatprep.subr.bf16.mxu0 0
      %6062 = vmatpush1.bf16.msra.mxu0 %v6059
      %6063 = vmatprep.subr.bf16.mxu0 0
      %6064 = vmatpush1.bf16.msra.mxu0 0
      %6065 = vmatprep.subr.bf16.mxu0 0
      %6066 = vmatpush1.bf16.msra.mxu0 0
      %6067 = vmatprep.subr.bf16.mxu0 0
      %6068 = vmatpush1.bf16.msra.mxu0 0
      %6069 = vmatprep.subr.bf16.mxu0 0
      %6070 = vmatpush1.bf16.msra.mxu0 0
      %6071 = vmatprep.subr.bf16.mxu0 0
      %6072 = vmatpush1.bf16.msra.mxu0 0
      %6073 = vmatprep.subr.bf16.mxu0 0
      %6074 = vmatpush1.bf16.msra.mxu0 0
      %6075 = vmatprep.subr.bf16.mxu0 0
      %6076 = vmatpush1.bf16.msra.mxu0 0
      %6077 = vmatprep.subr.bf16.mxu0 0
      %6078 = vmatpush1.bf16.msra.mxu0 0
      %6079 = vmatprep.subr.bf16.mxu0 0
      %6080 = vmatpush1.bf16.msra.mxu0 0
      %6081 = vmatprep.subr.bf16.mxu0 0
      %6082 = vmatpush1.bf16.msra.mxu0 0
      %6083 = vmatprep.subr.bf16.mxu0 0
      %6084 = vmatpush1.bf16.msra.mxu0 0
      %6085 = vmatprep.subr.bf16.mxu0 0
      %6086 = vmatpush1.bf16.msra.mxu0 0
      %6087 = vmatprep.subr.bf16.mxu0 0
      %6088 = vmatpush1.bf16.msra.mxu0 0
      %6089 = vmatprep.subr.bf16.mxu0 0
      %6090 = vmatpush1.bf16.msra.mxu0 0
      %6091 = vmatprep.subr.bf16.mxu0 0
      %6092 = vmatpush1.bf16.msra.mxu0 0
      %6093 = vmatprep.mubr.bf16.mxu0 0
      %6094 = vmatmul.mubr.bf16.gmra.mrb[0].mxu0 %v6056
      %v6095 = vpop.f32.mrb[0].mxu0
      %v6096 = vadd.f32 0.0, %v6095
      %v6097 = vpop.f32.mrb[0].mxu0
      %v6098 = vpop.f32.mrb[0].mxu0
      %v6099 = vpop.f32.mrb[0].mxu0
      %6100 = vdwg.mxu0
      %6101 = vrot.lane.b32.xlu0 %v1084, 64
      %v6102 = vpop.permute.xlu0 %6101
      %v6104 = vsel %vm1826, %v5568, 0
      %v6107 = vsel %vm2022, %v6102, 0
      %6109 = vmatprep.subr.bf16.mxu0 0
      %6110 = vmatpush1.bf16.msra.mxu0 %v6107
      %6111 = vmatprep.subr.bf16.mxu0 0
      %6112 = vmatpush1.bf16.msra.mxu0 0
      %6113 = vmatprep.subr.bf16.mxu0 0
      %6114 = vmatpush1.bf16.msra.mxu0 0
      %6115 = vmatprep.subr.bf16.mxu0 0
      %6116 = vmatpush1.bf16.msra.mxu0 0
      %6117 = vmatprep.subr.bf16.mxu0 0
      %6118 = vmatpush1.bf16.msra.mxu0 0
      %6119 = vmatprep.subr.bf16.mxu0 0
      %6120 = vmatpush1.bf16.msra.mxu0 0
      %6121 = vmatprep.subr.bf16.mxu0 0
      %6122 = vmatpush1.bf16.msra.mxu0 0
      %6123 = vmatprep.subr.bf16.mxu0 0
      %6124 = vmatpush1.bf16.msra.mxu0 0
      %6125 = vmatprep.subr.bf16.mxu0 0
      %6126 = vmatpush1.bf16.msra.mxu0 0
      %6127 = vmatprep.subr.bf16.mxu0 0
      %6128 = vmatpush1.bf16.msra.mxu0 0
      %6129 = vmatprep.subr.bf16.mxu0 0
      %6130 = vmatpush1.bf16.msra.mxu0 0
      %6131 = vmatprep.subr.bf16.mxu0 0
      %6132 = vmatpush1.bf16.msra.mxu0 0
      %6133 = vmatprep.subr.bf16.mxu0 0
      %6134 = vmatpush1.bf16.msra.mxu0 0
      %6135 = vmatprep.subr.bf16.mxu0 0
      %6136 = vmatpush1.bf16.msra.mxu0 0
      %6137 = vmatprep.subr.bf16.mxu0 0
      %6138 = vmatpush1.bf16.msra.mxu0 0
      %6139 = vmatprep.subr.bf16.mxu0 0
      %6140 = vmatpush1.bf16.msra.mxu0 0
      %6141 = vmatprep.mubr.bf16.mxu0 0
      %6142 = vmatmul.mubr.bf16.gmra.mrb[0].mxu0 %v6104
      %v6143 = vpop.f32.mrb[0].mxu0
      %v6144 = vadd.f32 0.0, %v6143
      %v6145 = vpop.f32.mrb[0].mxu0
      %v6146 = vpop.f32.mrb[0].mxu0
      %v6147 = vpop.f32.mrb[0].mxu0
      %6148 = vdwg.mxu0
      %6149 = vrot.lane.b32.xlu0 %v1085, 64
      %v6150 = vpop.permute.xlu0 %6149
      %v6152 = vsel %vm1826, %v5569, 0
      %v6155 = vsel %vm2022, %v6150, 0
      %6157 = vmatprep.subr.bf16.mxu0 0
      %6158 = vmatpush1.bf16.msra.mxu0 %v6155
      %6159 = vmatprep.subr.bf16.mxu0 0
      %6160 = vmatpush1.bf16.msra.mxu0 0
      %6161 = vmatprep.subr.bf16.mxu0 0
      %6162 = vmatpush1.bf16.msra.mxu0 0
      %6163 = vmatprep.subr.bf16.mxu0 0
      %6164 = vmatpush1.bf16.msra.mxu0 0
      %6165 = vmatprep.subr.bf16.mxu0 0
      %6166 = vmatpush1.bf16.msra.mxu0 0
      %6167 = vmatprep.subr.bf16.mxu0 0
      %6168 = vmatpush1.bf16.msra.mxu0 0
      %6169 = vmatprep.subr.bf16.mxu0 0
      %6170 = vmatpush1.bf16.msra.mxu0 0
      %6171 = vmatprep.subr.bf16.mxu0 0
      %6172 = vmatpush1.bf16.msra.mxu0 0
      %6173 = vmatprep.subr.bf16.mxu0 0
      %6174 = vmatpush1.bf16.msra.mxu0 0
      %6175 = vmatprep.subr.bf16.mxu0 0
      %6176 = vmatpush1.bf16.msra.mxu0 0
      %6177 = vmatprep.subr.bf16.mxu0 0
      %6178 = vmatpush1.bf16.msra.mxu0 0
      %6179 = vmatprep.subr.bf16.mxu0 0
      %6180 = vmatpush1.bf16.msra.mxu0 0
      %6181 = vmatprep.subr.bf16.mxu0 0
      %6182 = vmatpush1.bf16.msra.mxu0 0
      %6183 = vmatprep.subr.bf16.mxu0 0
      %6184 = vmatpush1.bf16.msra.mxu0 0
      %6185 = vmatprep.subr.bf16.mxu0 0
      %6186 = vmatpush1.bf16.msra.mxu0 0
      %6187 = vmatprep.subr.bf16.mxu0 0
      %6188 = vmatpush1.bf16.msra.mxu0 0
      %6189 = vmatprep.mubr.bf16.mxu0 0
      %6190 = vmatmul.mubr.bf16.gmra.mrb[0].mxu0 %v6152
      %v6191 = vpop.f32.mrb[0].mxu0
      %v6192 = vadd.f32 0.0, %v6191
      %v6193 = vpop.f32.mrb[0].mxu0
      %v6194 = vpop.f32.mrb[0].mxu0
      %v6195 = vpop.f32.mrb[0].mxu0
      %6196 = vdwg.mxu0
      %6197 = vrot.lane.b32.xlu0 %v1086, 64
      %v6198 = vpop.permute.xlu0 %6197
      %v6200 = vsel %vm1826, %v5570, 0
      %v6203 = vsel %vm2022, %v6198, 0
      %6205 = vmatprep.subr.bf16.mxu0 0
      %6206 = vmatpush1.bf16.msra.mxu0 %v6203
      %6207 = vmatprep.subr.bf16.mxu0 0
      %6208 = vmatpush1.bf16.msra.mxu0 0
      %6209 = vmatprep.subr.bf16.mxu0 0
      %6210 = vmatpush1.bf16.msra.mxu0 0
      %6211 = vmatprep.subr.bf16.mxu0 0
      %6212 = vmatpush1.bf16.msra.mxu0 0
      %6213 = vmatprep.subr.bf16.mxu0 0
      %6214 = vmatpush1.bf16.msra.mxu0 0
      %6215 = vmatprep.subr.bf16.mxu0 0
      %6216 = vmatpush1.bf16.msra.mxu0 0
      %6217 = vmatprep.subr.bf16.mxu0 0
      %6218 = vmatpush1.bf16.msra.mxu0 0
      %6219 = vmatprep.subr.bf16.mxu0 0
      %6220 = vmatpush1.bf16.msra.mxu0 0
      %6221 = vmatprep.subr.bf16.mxu0 0
      %6222 = vmatpush1.bf16.msra.mxu0 0
      %6223 = vmatprep.subr.bf16.mxu0 0
      %6224 = vmatpush1.bf16.msra.mxu0 0
      %6225 = vmatprep.subr.bf16.mxu0 0
      %6226 = vmatpush1.bf16.msra.mxu0 0
      %6227 = vmatprep.subr.bf16.mxu0 0
      %6228 = vmatpush1.bf16.msra.mxu0 0
      %6229 = vmatprep.subr.bf16.mxu0 0
      %6230 = vmatpush1.bf16.msra.mxu0 0
      %6231 = vmatprep.subr.bf16.mxu0 0
      %6232 = vmatpush1.bf16.msra.mxu0 0
      %6233 = vmatprep.subr.bf16.mxu0 0
      %6234 = vmatpush1.bf16.msra.mxu0 0
      %6235 = vmatprep.subr.bf16.mxu0 0
      %6236 = vmatpush1.bf16.msra.mxu0 0
      %6237 = vmatprep.mubr.bf16.mxu0 0
      %6238 = vmatmul.mubr.bf16.gmra.mrb[0].mxu0 %v6200
      %v6239 = vpop.f32.mrb[0].mxu0
      %v6240 = vadd.f32 0.0, %v6239
      %v6241 = vpop.f32.mrb[0].mxu0
      %v6242 = vpop.f32.mrb[0].mxu0
      %v6243 = vpop.f32.mrb[0].mxu0
      %6244 = vdwg.mxu0
      %6245 = vrot.lane.b32.xlu0 %v1087, 64
      %v6246 = vpop.permute.xlu0 %6245
      %v6248 = vsel %vm1826, %v5571, 0
      %v6251 = vsel %vm2022, %v6246, 0
      %6253 = vmatprep.subr.bf16.mxu0 0
      %6254 = vmatpush1.bf16.msra.mxu0 %v6251
      %6255 = vmatprep.subr.bf16.mxu0 0
      %6256 = vmatpush1.bf16.msra.mxu0 0
      %6257 = vmatprep.subr.bf16.mxu0 0
      %6258 = vmatpush1.bf16.msra.mxu0 0
      %6259 = vmatprep.subr.bf16.mxu0 0
      %6260 = vmatpush1.bf16.msra.mxu0 0
      %6261 = vmatprep.subr.bf16.mxu0 0
      %6262 = vmatpush1.bf16.msra.mxu0 0
      %6263 = vmatprep.subr.bf16.mxu0 0
      %6264 = vmatpush1.bf16.msra.mxu0 0
      %6265 = vmatprep.subr.bf16.mxu0 0
      %6266 = vmatpush1.bf16.msra.mxu0 0
      %6267 = vmatprep.subr.bf16.mxu0 0
      %6268 = vmatpush1.bf16.msra.mxu0 0
      %6269 = vmatprep.subr.bf16.mxu0 0
      %6270 = vmatpush1.bf16.msra.mxu0 0
      %6271 = vmatprep.subr.bf16.mxu0 0
      %6272 = vmatpush1.bf16.msra.mxu0 0
      %6273 = vmatprep.subr.bf16.mxu0 0
      %6274 = vmatpush1.bf16.msra.mxu0 0
      %6275 = vmatprep.subr.bf16.mxu0 0
      %6276 = vmatpush1.bf16.msra.mxu0 0
      %6277 = vmatprep.subr.bf16.mxu0 0
      %6278 = vmatpush1.bf16.msra.mxu0 0
      %6279 = vmatprep.subr.bf16.mxu0 0
      %6280 = vmatpush1.bf16.msra.mxu0 0
      %6281 = vmatprep.subr.bf16.mxu0 0
      %6282 = vmatpush1.bf16.msra.mxu0 0
      %6283 = vmatprep.subr.bf16.mxu0 0
      %6284 = vmatpush1.bf16.msra.mxu0 0
      %6285 = vmatprep.mubr.bf16.mxu0 0
      %6286 = vmatmul.mubr.bf16.gmra.mrb[0].mxu0 %v6248
      %v6287 = vpop.f32.mrb[0].mxu0
      %v6288 = vadd.f32 0.0, %v6287
      %v6289 = vpop.f32.mrb[0].mxu0
      %v6290 = vpop.f32.mrb[0].mxu0
      %v6291 = vpop.f32.mrb[0].mxu0
      %6292 = vdwg.mxu0
      %6293 = vrot.lane.b32.xlu0 %v1088, 64
      %v6294 = vpop.permute.xlu0 %6293
      %v6296 = vsel %vm1826, %v5572, 0
      %v6299 = vsel %vm2022, %v6294, 0
      %6301 = vmatprep.subr.bf16.mxu0 0
      %6302 = vmatpush1.bf16.msra.mxu0 %v6299
      %6303 = vmatprep.subr.bf16.mxu0 0
      %6304 = vmatpush1.bf16.msra.mxu0 0
      %6305 = vmatprep.subr.bf16.mxu0 0
      %6306 = vmatpush1.bf16.msra.mxu0 0
      %6307 = vmatprep.subr.bf16.mxu0 0
      %6308 = vmatpush1.bf16.msra.mxu0 0
      %6309 = vmatprep.subr.bf16.mxu0 0
      %6310 = vmatpush1.bf16.msra.mxu0 0
      %6311 = vmatprep.subr.bf16.mxu0 0
      %6312 = vmatpush1.bf16.msra.mxu0 0
      %6313 = vmatprep.subr.bf16.mxu0 0
      %6314 = vmatpush1.bf16.msra.mxu0 0
      %6315 = vmatprep.subr.bf16.mxu0 0
      %6316 = vmatpush1.bf16.msra.mxu0 0
      %6317 = vmatprep.subr.bf16.mxu0 0
      %6318 = vmatpush1.bf16.msra.mxu0 0
      %6319 = vmatprep.subr.bf16.mxu0 0
      %6320 = vmatpush1.bf16.msra.mxu0 0
      %6321 = vmatprep.subr.bf16.mxu0 0
      %6322 = vmatpush1.bf16.msra.mxu0 0
      %6323 = vmatprep.subr.bf16.mxu0 0
      %6324 = vmatpush1.bf16.msra.mxu0 0
      %6325 = vmatprep.subr.bf16.mxu0 0
      %6326 = vmatpush1.bf16.msra.mxu0 0
      %6327 = vmatprep.subr.bf16.mxu0 0
      %6328 = vmatpush1.bf16.msra.mxu0 0
      %6329 = vmatprep.subr.bf16.mxu0 0
      %6330 = vmatpush1.bf16.msra.mxu0 0
      %6331 = vmatprep.subr.bf16.mxu0 0
      %6332 = vmatpush1.bf16.msra.mxu0 0
      %6333 = vmatprep.mubr.bf16.mxu0 0
      %6334 = vmatmul.mubr.bf16.gmra.mrb[0].mxu0 %v6296
      %v6335 = vpop.f32.mrb[0].mxu0
      %v6336 = vadd.f32 0.0, %v6335
      %v6337 = vpop.f32.mrb[0].mxu0
      %v6338 = vpop.f32.mrb[0].mxu0
      %v6339 = vpop.f32.mrb[0].mxu0
      %6340 = vdwg.mxu0
      %v6341 = vpack.c.bf16 %v5664, %v5616
      %v6342 = vpack.c.bf16 %v5760, %v5712
      %v6343 = vpack.c.bf16 %v5856, %v5808
      %v6344 = vpack.c.bf16 %v5952, %v5904
      %v6345 = vpack.c.bf16 %v6048, %v6000
      %v6346 = vpack.c.bf16 %v6144, %v6096
      %v6347 = vpack.c.bf16 %v6240, %v6192
      %v6348 = vpack.c.bf16 %v6336, %v6288
      %6357 = vrot.lane.b32.xlu0 %v6341, 64
      %v6358 = vpop.permute.xlu0 %6357
      %6359 = vrot.lane.b32.xlu0 %v6342, 64
      %v6360 = vpop.permute.xlu0 %6359
      %6361 = vrot.lane.b32.xlu0 %v6343, 64
      %v6362 = vpop.permute.xlu0 %6361
      %6363 = vrot.lane.b32.xlu0 %v6344, 64
      %v6364 = vpop.permute.xlu0 %6363
      %6365 = vrot.lane.b32.xlu0 %v6345, 64
      %v6366 = vpop.permute.xlu0 %6365
      %6367 = vrot.lane.b32.xlu0 %v6346, 64
      %v6368 = vpop.permute.xlu0 %6367
      %6369 = vrot.lane.b32.xlu0 %v6347, 64
      %v6370 = vpop.permute.xlu0 %6369
      %6371 = vrot.lane.b32.xlu0 %v6348, 64
      %v6372 = vpop.permute.xlu0 %6371
      %vm6381 = vcmask 785920
      %6382 = vst.msk [vmem:[#allocation2] sm:$0xff] %vm6381, %v6358
      %6383 = vst.msk [vmem:[#allocation2 + $0x8] sm:$0xff] %vm6381, %v6360
      %6384 = vst.msk [vmem:[#allocation2 + $0x10] sm:$0xff] %vm6381, %v6362
      %6385 = vst.msk [vmem:[#allocation2 + $0x18] sm:$0xff] %vm6381, %v6364
      %6386 = vst.msk [vmem:[#allocation2 + $0x20] sm:$0xff] %vm6381, %v6366
      %6387 = vst.msk [vmem:[#allocation2 + $0x28] sm:$0xff] %vm6381, %v6368
      %6388 = vst.msk [vmem:[#allocation2 + $0x30] sm:$0xff] %vm6381, %v6370
      %6389 = vst.msk [vmem:[#allocation2 + $0x38] sm:$0xff] %vm6381, %v6372
      %6390 = vrot.lane.b32.xlu0 %v993, 32
      %v6391 = vpop.permute.xlu0 %6390
      %6392 = vrot.lane.b32.xlu0 %v1033, 32
      %v6393 = vpop.permute.xlu0 %6392
      %v6395 = vsel %vm1089, %v6391, 0
      %v6398 = vsel %vm1089, %v6393, 0
      %6400 = vmatprep.subr.bf16.mxu0 0
      %6401 = vmatpush1.bf16.xpose.msra.mxu0 %v6398
      %6402 = vmatprep.subr.bf16.mxu0 0
      %6403 = vmatpush1.bf16.xpose.msra.mxu0 0
      %6404 = vmatprep.subr.bf16.mxu0 0
      %6405 = vmatpush1.bf16.xpose.msra.mxu0 0
      %6406 = vmatprep.subr.bf16.mxu0 0
      %6407 = vmatpush1.bf16.xpose.msra.mxu0 0
      %6408 = vmatprep.subr.bf16.mxu0 0
      %6409 = vmatpush1.bf16.xpose.msra.mxu0 0
      %6410 = vmatprep.subr.bf16.mxu0 0
      %6411 = vmatpush1.bf16.xpose.msra.mxu0 0
      %6412 = vmatprep.subr.bf16.mxu0 0
      %6413 = vmatpush1.bf16.xpose.msra.mxu0 0
      %6414 = vmatprep.subr.bf16.mxu0 0
      %6415 = vmatpush1.bf16.xpose.msra.mxu0 0
      %6416 = vmatprep.subr.bf16.mxu0 0
      %6417 = vmatpush1.bf16.xpose.msra.mxu0 0
      %6418 = vmatprep.subr.bf16.mxu0 0
      %6419 = vmatpush1.bf16.xpose.msra.mxu0 0
      %6420 = vmatprep.subr.bf16.mxu0 0
      %6421 = vmatpush1.bf16.xpose.msra.mxu0 0
      %6422 = vmatprep.subr.bf16.mxu0 0
      %6423 = vmatpush1.bf16.xpose.msra.mxu0 0
      %6424 = vmatprep.subr.bf16.mxu0 0
      %6425 = vmatpush1.bf16.xpose.msra.mxu0 0
      %6426 = vmatprep.subr.bf16.mxu0 0
      %6427 = vmatpush1.bf16.xpose.msra.mxu0 0
      %6428 = vmatprep.subr.bf16.mxu0 0
      %6429 = vmatpush1.bf16.xpose.msra.mxu0 0
      %6430 = vmatprep.subr.bf16.mxu0 0
      %6431 = vmatpush1.bf16.xpose.msra.mxu0 0
      %6432 = vmatprep.mubr.bf16.mxu0 0
      %6433 = vmatmul.mubr.bf16.gmra.mrb[0].mxu0 %v6395
      %v6434 = vpop.f32.mrb[0].mxu0
      %v6435 = vadd.f32 %v968, %v6434
      %v6436 = vpop.f32.mrb[0].mxu0
      %v6437 = vpop.f32.mrb[0].mxu0
      %v6438 = vpop.f32.mrb[0].mxu0
      %6439 = vdwg.mxu0
      %6440 = vrot.lane.b32.xlu0 %v994, 32
      %v6441 = vpop.permute.xlu0 %6440
      %6442 = vrot.lane.b32.xlu0 %v1034, 32
      %v6443 = vpop.permute.xlu0 %6442
      %v6445 = vsel %vm1089, %v6441, 0
      %v6448 = vsel %vm1089, %v6443, 0
      %6450 = vmatprep.subr.bf16.mxu0 0
      %6451 = vmatpush1.bf16.xpose.msra.mxu0 %v6448
      %6452 = vmatprep.subr.bf16.mxu0 0
      %6453 = vmatpush1.bf16.xpose.msra.mxu0 0
      %6454 = vmatprep.subr.bf16.mxu0 0
      %6455 = vmatpush1.bf16.xpose.msra.mxu0 0
      %6456 = vmatprep.subr.bf16.mxu0 0
      %6457 = vmatpush1.bf16.xpose.msra.mxu0 0
      %6458 = vmatprep.subr.bf16.mxu0 0
      %6459 = vmatpush1.bf16.xpose.msra.mxu0 0
      %6460 = vmatprep.subr.bf16.mxu0 0
      %6461 = vmatpush1.bf16.xpose.msra.mxu0 0
      %6462 = vmatprep.subr.bf16.mxu0 0
      %6463 = vmatpush1.bf16.xpose.msra.mxu0 0
      %6464 = vmatprep.subr.bf16.mxu0 0
      %6465 = vmatpush1.bf16.xpose.msra.mxu0 0
      %6466 = vmatprep.subr.bf16.mxu0 0
      %6467 = vmatpush1.bf16.xpose.msra.mxu0 0
      %6468 = vmatprep.subr.bf16.mxu0 0
      %6469 = vmatpush1.bf16.xpose.msra.mxu0 0
      %6470 = vmatprep.subr.bf16.mxu0 0
      %6471 = vmatpush1.bf16.xpose.msra.mxu0 0
      %6472 = vmatprep.subr.bf16.mxu0 0
      %6473 = vmatpush1.bf16.xpose.msra.mxu0 0
      %6474 = vmatprep.subr.bf16.mxu0 0
      %6475 = vmatpush1.bf16.xpose.msra.mxu0 0
      %6476 = vmatprep.subr.bf16.mxu0 0
      %6477 = vmatpush1.bf16.xpose.msra.mxu0 0
      %6478 = vmatprep.subr.bf16.mxu0 0
      %6479 = vmatpush1.bf16.xpose.msra.mxu0 0
      %6480 = vmatprep.subr.bf16.mxu0 0
      %6481 = vmatpush1.bf16.xpose.msra.mxu0 0
      %6482 = vmatprep.mubr.bf16.mxu0 0
      %6483 = vmatmul.mubr.bf16.gmra.mrb[0].mxu0 %v6445
      %v6484 = vpop.f32.mrb[0].mxu0
      %v6485 = vadd.f32 %v968, %v6484
      %v6486 = vpop.f32.mrb[0].mxu0
      %v6487 = vpop.f32.mrb[0].mxu0
      %v6488 = vpop.f32.mrb[0].mxu0
      %6489 = vdwg.mxu0
      %6490 = vrot.lane.b32.xlu0 %v995, 32
      %v6491 = vpop.permute.xlu0 %6490
      %6492 = vrot.lane.b32.xlu0 %v1035, 32
      %v6493 = vpop.permute.xlu0 %6492
      %v6495 = vsel %vm1089, %v6491, 0
      %v6498 = vsel %vm1089, %v6493, 0
      %6500 = vmatprep.subr.bf16.mxu0 0
      %6501 = vmatpush1.bf16.xpose.msra.mxu0 %v6498
      %6502 = vmatprep.subr.bf16.mxu0 0
      %6503 = vmatpush1.bf16.xpose.msra.mxu0 0
      %6504 = vmatprep.subr.bf16.mxu0 0
      %6505 = vmatpush1.bf16.xpose.msra.mxu0 0
      %6506 = vmatprep.subr.bf16.mxu0 0
      %6507 = vmatpush1.bf16.xpose.msra.mxu0 0
      %6508 = vmatprep.subr.bf16.mxu0 0
      %6509 = vmatpush1.bf16.xpose.msra.mxu0 0
      %6510 = vmatprep.subr.bf16.mxu0 0
      %6511 = vmatpush1.bf16.xpose.msra.mxu0 0
      %6512 = vmatprep.subr.bf16.mxu0 0
      %6513 = vmatpush1.bf16.xpose.msra.mxu0 0
      %6514 = vmatprep.subr.bf16.mxu0 0
      %6515 = vmatpush1.bf16.xpose.msra.mxu0 0
      %6516 = vmatprep.subr.bf16.mxu0 0
      %6517 = vmatpush1.bf16.xpose.msra.mxu0 0
      %6518 = vmatprep.subr.bf16.mxu0 0
      %6519 = vmatpush1.bf16.xpose.msra.mxu0 0
      %6520 = vmatprep.subr.bf16.mxu0 0
      %6521 = vmatpush1.bf16.xpose.msra.mxu0 0
      %6522 = vmatprep.subr.bf16.mxu0 0
      %6523 = vmatpush1.bf16.xpose.msra.mxu0 0
      %6524 = vmatprep.subr.bf16.mxu0 0
      %6525 = vmatpush1.bf16.xpose.msra.mxu0 0
      %6526 = vmatprep.subr.bf16.mxu0 0
      %6527 = vmatpush1.bf16.xpose.msra.mxu0 0
      %6528 = vmatprep.subr.bf16.mxu0 0
      %6529 = vmatpush1.bf16.xpose.msra.mxu0 0
      %6530 = vmatprep.subr.bf16.mxu0 0
      %6531 = vmatpush1.bf16.xpose.msra.mxu0 0
      %6532 = vmatprep.mubr.bf16.mxu0 0
      %6533 = vmatmul.mubr.bf16.gmra.mrb[0].mxu0 %v6495
      %v6534 = vpop.f32.mrb[0].mxu0
      %v6535 = vadd.f32 %v968, %v6534
      %v6536 = vpop.f32.mrb[0].mxu0
      %v6537 = vpop.f32.mrb[0].mxu0
      %v6538 = vpop.f32.mrb[0].mxu0
      %6539 = vdwg.mxu0
      %6540 = vrot.lane.b32.xlu0 %v996, 32
      %v6541 = vpop.permute.xlu0 %6540
      %6542 = vrot.lane.b32.xlu0 %v1036, 32
      %v6543 = vpop.permute.xlu0 %6542
      %v6545 = vsel %vm1089, %v6541, 0
      %v6548 = vsel %vm1089, %v6543, 0
      %6550 = vmatprep.subr.bf16.mxu0 0
      %6551 = vmatpush1.bf16.xpose.msra.mxu0 %v6548
      %6552 = vmatprep.subr.bf16.mxu0 0
      %6553 = vmatpush1.bf16.xpose.msra.mxu0 0
      %6554 = vmatprep.subr.bf16.mxu0 0
      %6555 = vmatpush1.bf16.xpose.msra.mxu0 0
      %6556 = vmatprep.subr.bf16.mxu0 0
      %6557 = vmatpush1.bf16.xpose.msra.mxu0 0
      %6558 = vmatprep.subr.bf16.mxu0 0
      %6559 = vmatpush1.bf16.xpose.msra.mxu0 0
      %6560 = vmatprep.subr.bf16.mxu0 0
      %6561 = vmatpush1.bf16.xpose.msra.mxu0 0
      %6562 = vmatprep.subr.bf16.mxu0 0
      %6563 = vmatpush1.bf16.xpose.msra.mxu0 0
      %6564 = vmatprep.subr.bf16.mxu0 0
      %6565 = vmatpush1.bf16.xpose.msra.mxu0 0
      %6566 = vmatprep.subr.bf16.mxu0 0
      %6567 = vmatpush1.bf16.xpose.msra.mxu0 0
      %6568 = vmatprep.subr.bf16.mxu0 0
      %6569 = vmatpush1.bf16.xpose.msra.mxu0 0
      %6570 = vmatprep.subr.bf16.mxu0 0
      %6571 = vmatpush1.bf16.xpose.msra.mxu0 0
      %6572 = vmatprep.subr.bf16.mxu0 0
      %6573 = vmatpush1.bf16.xpose.msra.mxu0 0
      %6574 = vmatprep.subr.bf16.mxu0 0
      %6575 = vmatpush1.bf16.xpose.msra.mxu0 0
      %6576 = vmatprep.subr.bf16.mxu0 0
      %6577 = vmatpush1.bf16.xpose.msra.mxu0 0
      %6578 = vmatprep.subr.bf16.mxu0 0
      %6579 = vmatpush1.bf16.xpose.msra.mxu0 0
      %6580 = vmatprep.subr.bf16.mxu0 0
      %6581 = vmatpush1.bf16.xpose.msra.mxu0 0
      %6582 = vmatprep.mubr.bf16.mxu0 0
      %6583 = vmatmul.mubr.bf16.gmra.mrb[0].mxu0 %v6545
      %v6584 = vpop.f32.mrb[0].mxu0
      %v6585 = vadd.f32 %v968, %v6584
      %v6586 = vpop.f32.mrb[0].mxu0
      %v6587 = vpop.f32.mrb[0].mxu0
      %v6588 = vpop.f32.mrb[0].mxu0
      %6589 = vdwg.mxu0
      %6590 = vrot.lane.b32.xlu0 %v997, 32
      %v6591 = vpop.permute.xlu0 %6590
      %6592 = vrot.lane.b32.xlu0 %v1037, 32
      %v6593 = vpop.permute.xlu0 %6592
      %v6595 = vsel %vm1089, %v6591, 0
      %v6598 = vsel %vm1089, %v6593, 0
      %6600 = vmatprep.subr.bf16.mxu0 0
      %6601 = vmatpush1.bf16.xpose.msra.mxu0 %v6598
      %6602 = vmatprep.subr.bf16.mxu0 0
      %6603 = vmatpush1.bf16.xpose.msra.mxu0 0
      %6604 = vmatprep.subr.bf16.mxu0 0
      %6605 = vmatpush1.bf16.xpose.msra.mxu0 0
      %6606 = vmatprep.subr.bf16.mxu0 0
      %6607 = vmatpush1.bf16.xpose.msra.mxu0 0
      %6608 = vmatprep.subr.bf16.mxu0 0
      %6609 = vmatpush1.bf16.xpose.msra.mxu0 0
      %6610 = vmatprep.subr.bf16.mxu0 0
      %6611 = vmatpush1.bf16.xpose.msra.mxu0 0
      %6612 = vmatprep.subr.bf16.mxu0 0
      %6613 = vmatpush1.bf16.xpose.msra.mxu0 0
      %6614 = vmatprep.subr.bf16.mxu0 0
      %6615 = vmatpush1.bf16.xpose.msra.mxu0 0
      %6616 = vmatprep.subr.bf16.mxu0 0
      %6617 = vmatpush1.bf16.xpose.msra.mxu0 0
      %6618 = vmatprep.subr.bf16.mxu0 0
      %6619 = vmatpush1.bf16.xpose.msra.mxu0 0
      %6620 = vmatprep.subr.bf16.mxu0 0
      %6621 = vmatpush1.bf16.xpose.msra.mxu0 0
      %6622 = vmatprep.subr.bf16.mxu0 0
      %6623 = vmatpush1.bf16.xpose.msra.mxu0 0
      %6624 = vmatprep.subr.bf16.mxu0 0
      %6625 = vmatpush1.bf16.xpose.msra.mxu0 0
      %6626 = vmatprep.subr.bf16.mxu0 0
      %6627 = vmatpush1.bf16.xpose.msra.mxu0 0
      %6628 = vmatprep.subr.bf16.mxu0 0
      %6629 = vmatpush1.bf16.xpose.msra.mxu0 0
      %6630 = vmatprep.subr.bf16.mxu0 0
      %6631 = vmatpush1.bf16.xpose.msra.mxu0 0
      %6632 = vmatprep.mubr.bf16.mxu0 0
      %6633 = vmatmul.mubr.bf16.gmra.mrb[0].mxu0 %v6595
      %v6634 = vpop.f32.mrb[0].mxu0
      %v6635 = vadd.f32 %v968, %v6634
      %v6636 = vpop.f32.mrb[0].mxu0
      %v6637 = vpop.f32.mrb[0].mxu0
      %v6638 = vpop.f32.mrb[0].mxu0
      %6639 = vdwg.mxu0
      %6640 = vrot.lane.b32.xlu0 %v998, 32
      %v6641 = vpop.permute.xlu0 %6640
      %6642 = vrot.lane.b32.xlu0 %v1038, 32
      %v6643 = vpop.permute.xlu0 %6642
      %v6645 = vsel %vm1089, %v6641, 0
      %v6648 = vsel %vm1089, %v6643, 0
      %6650 = vmatprep.subr.bf16.mxu0 0
      %6651 = vmatpush1.bf16.xpose.msra.mxu0 %v6648
      %6652 = vmatprep.subr.bf16.mxu0 0
      %6653 = vmatpush1.bf16.xpose.msra.mxu0 0
      %6654 = vmatprep.subr.bf16.mxu0 0
      %6655 = vmatpush1.bf16.xpose.msra.mxu0 0
      %6656 = vmatprep.subr.bf16.mxu0 0
      %6657 = vmatpush1.bf16.xpose.msra.mxu0 0
      %6658 = vmatprep.subr.bf16.mxu0 0
      %6659 = vmatpush1.bf16.xpose.msra.mxu0 0
      %6660 = vmatprep.subr.bf16.mxu0 0
      %6661 = vmatpush1.bf16.xpose.msra.mxu0 0
      %6662 = vmatprep.subr.bf16.mxu0 0
      %6663 = vmatpush1.bf16.xpose.msra.mxu0 0
      %6664 = vmatprep.subr.bf16.mxu0 0
      %6665 = vmatpush1.bf16.xpose.msra.mxu0 0
      %6666 = vmatprep.subr.bf16.mxu0 0
      %6667 = vmatpush1.bf16.xpose.msra.mxu0 0
      %6668 = vmatprep.subr.bf16.mxu0 0
      %6669 = vmatpush1.bf16.xpose.msra.mxu0 0
      %6670 = vmatprep.subr.bf16.mxu0 0
      %6671 = vmatpush1.bf16.xpose.msra.mxu0 0
      %6672 = vmatprep.subr.bf16.mxu0 0
      %6673 = vmatpush1.bf16.xpose.msra.mxu0 0
      %6674 = vmatprep.subr.bf16.mxu0 0
      %6675 = vmatpush1.bf16.xpose.msra.mxu0 0
      %6676 = vmatprep.subr.bf16.mxu0 0
      %6677 = vmatpush1.bf16.xpose.msra.mxu0 0
      %6678 = vmatprep.subr.bf16.mxu0 0
      %6679 = vmatpush1.bf16.xpose.msra.mxu0 0
      %6680 = vmatprep.subr.bf16.mxu0 0
      %6681 = vmatpush1.bf16.xpose.msra.mxu0 0
      %6682 = vmatprep.mubr.bf16.mxu0 0
      %6683 = vmatmul.mubr.bf16.gmra.mrb[0].mxu0 %v6645
      %v6684 = vpop.f32.mrb[0].mxu0
      %v6685 = vadd.f32 %v968, %v6684
      %v6686 = vpop.f32.mrb[0].mxu0
      %v6687 = vpop.f32.mrb[0].mxu0
      %v6688 = vpop.f32.mrb[0].mxu0
      %6689 = vdwg.mxu0
      %6690 = vrot.lane.b32.xlu0 %v999, 32
      %v6691 = vpop.permute.xlu0 %6690
      %6692 = vrot.lane.b32.xlu0 %v1039, 32
      %v6693 = vpop.permute.xlu0 %6692
      %v6695 = vsel %vm1089, %v6691, 0
      %v6698 = vsel %vm1089, %v6693, 0
      %6700 = vmatprep.subr.bf16.mxu0 0
      %6701 = vmatpush1.bf16.xpose.msra.mxu0 %v6698
      %6702 = vmatprep.subr.bf16.mxu0 0
      %6703 = vmatpush1.bf16.xpose.msra.mxu0 0
      %6704 = vmatprep.subr.bf16.mxu0 0
      %6705 = vmatpush1.bf16.xpose.msra.mxu0 0
      %6706 = vmatprep.subr.bf16.mxu0 0
      %6707 = vmatpush1.bf16.xpose.msra.mxu0 0
      %6708 = vmatprep.subr.bf16.mxu0 0
      %6709 = vmatpush1.bf16.xpose.msra.mxu0 0
      %6710 = vmatprep.subr.bf16.mxu0 0
      %6711 = vmatpush1.bf16.xpose.msra.mxu0 0
      %6712 = vmatprep.subr.bf16.mxu0 0
      %6713 = vmatpush1.bf16.xpose.msra.mxu0 0
      %6714 = vmatprep.subr.bf16.mxu0 0
      %6715 = vmatpush1.bf16.xpose.msra.mxu0 0
      %6716 = vmatprep.subr.bf16.mxu0 0
      %6717 = vmatpush1.bf16.xpose.msra.mxu0 0
      %6718 = vmatprep.subr.bf16.mxu0 0
      %6719 = vmatpush1.bf16.xpose.msra.mxu0 0
      %6720 = vmatprep.subr.bf16.mxu0 0
      %6721 = vmatpush1.bf16.xpose.msra.mxu0 0
      %6722 = vmatprep.subr.bf16.mxu0 0
      %6723 = vmatpush1.bf16.xpose.msra.mxu0 0
      %6724 = vmatprep.subr.bf16.mxu0 0
      %6725 = vmatpush1.bf16.xpose.msra.mxu0 0
      %6726 = vmatprep.subr.bf16.mxu0 0
      %6727 = vmatpush1.bf16.xpose.msra.mxu0 0
      %6728 = vmatprep.subr.bf16.mxu0 0
      %6729 = vmatpush1.bf16.xpose.msra.mxu0 0
      %6730 = vmatprep.subr.bf16.mxu0 0
      %6731 = vmatpush1.bf16.xpose.msra.mxu0 0
      %6732 = vmatprep.mubr.bf16.mxu0 0
      %6733 = vmatmul.mubr.bf16.gmra.mrb[0].mxu0 %v6695
      %v6734 = vpop.f32.mrb[0].mxu0
      %v6735 = vadd.f32 %v968, %v6734
      %v6736 = vpop.f32.mrb[0].mxu0
      %v6737 = vpop.f32.mrb[0].mxu0
      %v6738 = vpop.f32.mrb[0].mxu0
      %6739 = vdwg.mxu0
      %6740 = vrot.lane.b32.xlu0 %v1000, 32
      %v6741 = vpop.permute.xlu0 %6740
      %6742 = vrot.lane.b32.xlu0 %v1040, 32
      %v6743 = vpop.permute.xlu0 %6742
      %v6745 = vsel %vm1089, %v6741, 0
      %v6748 = vsel %vm1089, %v6743, 0
      %6750 = vmatprep.subr.bf16.mxu0 0
      %6751 = vmatpush1.bf16.xpose.msra.mxu0 %v6748
      %6752 = vmatprep.subr.bf16.mxu0 0
      %6753 = vmatpush1.bf16.xpose.msra.mxu0 0
      %6754 = vmatprep.subr.bf16.mxu0 0
      %6755 = vmatpush1.bf16.xpose.msra.mxu0 0
      %6756 = vmatprep.subr.bf16.mxu0 0
      %6757 = vmatpush1.bf16.xpose.msra.mxu0 0
      %6758 = vmatprep.subr.bf16.mxu0 0
      %6759 = vmatpush1.bf16.xpose.msra.mxu0 0
      %6760 = vmatprep.subr.bf16.mxu0 0
      %6761 = vmatpush1.bf16.xpose.msra.mxu0 0
      %6762 = vmatprep.subr.bf16.mxu0 0
      %6763 = vmatpush1.bf16.xpose.msra.mxu0 0
      %6764 = vmatprep.subr.bf16.mxu0 0
      %6765 = vmatpush1.bf16.xpose.msra.mxu0 0
      %6766 = vmatprep.subr.bf16.mxu0 0
      %6767 = vmatpush1.bf16.xpose.msra.mxu0 0
      %6768 = vmatprep.subr.bf16.mxu0 0
      %6769 = vmatpush1.bf16.xpose.msra.mxu0 0
      %6770 = vmatprep.subr.bf16.mxu0 0
      %6771 = vmatpush1.bf16.xpose.msra.mxu0 0
      %6772 = vmatprep.subr.bf16.mxu0 0
      %6773 = vmatpush1.bf16.xpose.msra.mxu0 0
      %6774 = vmatprep.subr.bf16.mxu0 0
      %6775 = vmatpush1.bf16.xpose.msra.mxu0 0
      %6776 = vmatprep.subr.bf16.mxu0 0
      %6777 = vmatpush1.bf16.xpose.msra.mxu0 0
      %6778 = vmatprep.subr.bf16.mxu0 0
      %6779 = vmatpush1.bf16.xpose.msra.mxu0 0
      %6780 = vmatprep.subr.bf16.mxu0 0
      %6781 = vmatpush1.bf16.xpose.msra.mxu0 0
      %6782 = vmatprep.mubr.bf16.mxu0 0
      %6783 = vmatmul.mubr.bf16.gmra.mrb[0].mxu0 %v6745
      %v6784 = vpop.f32.mrb[0].mxu0
      %v6785 = vadd.f32 %v968, %v6784
      %v6786 = vpop.f32.mrb[0].mxu0
      %v6787 = vpop.f32.mrb[0].mxu0
      %v6788 = vpop.f32.mrb[0].mxu0
      %6789 = vdwg.mxu0
      %6790 = vrot.lane.b32.xlu0 %v1001, 32
      %v6791 = vpop.permute.xlu0 %6790
      %6792 = vrot.lane.b32.xlu0 %v1041, 32
      %v6793 = vpop.permute.xlu0 %6792
      %v6795 = vsel %vm1089, %v6791, 0
      %v6798 = vsel %vm1089, %v6793, 0
      %6800 = vmatprep.subr.bf16.mxu0 0
      %6801 = vmatpush1.bf16.xpose.msra.mxu0 %v6798
      %6802 = vmatprep.subr.bf16.mxu0 0
      %6803 = vmatpush1.bf16.xpose.msra.mxu0 0
      %6804 = vmatprep.subr.bf16.mxu0 0
      %6805 = vmatpush1.bf16.xpose.msra.mxu0 0
      %6806 = vmatprep.subr.bf16.mxu0 0
      %6807 = vmatpush1.bf16.xpose.msra.mxu0 0
      %6808 = vmatprep.subr.bf16.mxu0 0
      %6809 = vmatpush1.bf16.xpose.msra.mxu0 0
      %6810 = vmatprep.subr.bf16.mxu0 0
      %6811 = vmatpush1.bf16.xpose.msra.mxu0 0
      %6812 = vmatprep.subr.bf16.mxu0 0
      %6813 = vmatpush1.bf16.xpose.msra.mxu0 0
      %6814 = vmatprep.subr.bf16.mxu0 0
      %6815 = vmatpush1.bf16.xpose.msra.mxu0 0
      %6816 = vmatprep.subr.bf16.mxu0 0
      %6817 = vmatpush1.bf16.xpose.msra.mxu0 0
      %6818 = vmatprep.subr.bf16.mxu0 0
      %6819 = vmatpush1.bf16.xpose.msra.mxu0 0
      %6820 = vmatprep.subr.bf16.mxu0 0
      %6821 = vmatpush1.bf16.xpose.msra.mxu0 0
      %6822 = vmatprep.subr.bf16.mxu0 0
      %6823 = vmatpush1.bf16.xpose.msra.mxu0 0
      %6824 = vmatprep.subr.bf16.mxu0 0
      %6825 = vmatpush1.bf16.xpose.msra.mxu0 0
      %6826 = vmatprep.subr.bf16.mxu0 0
      %6827 = vmatpush1.bf16.xpose.msra.mxu0 0
      %6828 = vmatprep.subr.bf16.mxu0 0
      %6829 = vmatpush1.bf16.xpose.msra.mxu0 0
      %6830 = vmatprep.subr.bf16.mxu0 0
      %6831 = vmatpush1.bf16.xpose.msra.mxu0 0
      %6832 = vmatprep.mubr.bf16.mxu0 0
      %6833 = vmatmul.mubr.bf16.gmra.mrb[0].mxu0 %v6795
      %v6834 = vpop.f32.mrb[0].mxu0
      %v6835 = vadd.f32 %v968, %v6834
      %v6836 = vpop.f32.mrb[0].mxu0
      %v6837 = vpop.f32.mrb[0].mxu0
      %v6838 = vpop.f32.mrb[0].mxu0
      %6839 = vdwg.mxu0
      %6840 = vrot.lane.b32.xlu0 %v1002, 32
      %v6841 = vpop.permute.xlu0 %6840
      %6842 = vrot.lane.b32.xlu0 %v1042, 32
      %v6843 = vpop.permute.xlu0 %6842
      %v6845 = vsel %vm1089, %v6841, 0
      %v6848 = vsel %vm1089, %v6843, 0
      %6850 = vmatprep.subr.bf16.mxu0 0
      %6851 = vmatpush1.bf16.xpose.msra.mxu0 %v6848
      %6852 = vmatprep.subr.bf16.mxu0 0
      %6853 = vmatpush1.bf16.xpose.msra.mxu0 0
      %6854 = vmatprep.subr.bf16.mxu0 0
      %6855 = vmatpush1.bf16.xpose.msra.mxu0 0
      %6856 = vmatprep.subr.bf16.mxu0 0
      %6857 = vmatpush1.bf16.xpose.msra.mxu0 0
      %6858 = vmatprep.subr.bf16.mxu0 0
      %6859 = vmatpush1.bf16.xpose.msra.mxu0 0
      %6860 = vmatprep.subr.bf16.mxu0 0
      %6861 = vmatpush1.bf16.xpose.msra.mxu0 0
      %6862 = vmatprep.subr.bf16.mxu0 0
      %6863 = vmatpush1.bf16.xpose.msra.mxu0 0
      %6864 = vmatprep.subr.bf16.mxu0 0
      %6865 = vmatpush1.bf16.xpose.msra.mxu0 0
      %6866 = vmatprep.subr.bf16.mxu0 0
      %6867 = vmatpush1.bf16.xpose.msra.mxu0 0
      %6868 = vmatprep.subr.bf16.mxu0 0
      %6869 = vmatpush1.bf16.xpose.msra.mxu0 0
      %6870 = vmatprep.subr.bf16.mxu0 0
      %6871 = vmatpush1.bf16.xpose.msra.mxu0 0
      %6872 = vmatprep.subr.bf16.mxu0 0
      %6873 = vmatpush1.bf16.xpose.msra.mxu0 0
      %6874 = vmatprep.subr.bf16.mxu0 0
      %6875 = vmatpush1.bf16.xpose.msra.mxu0 0
      %6876 = vmatprep.subr.bf16.mxu0 0
      %6877 = vmatpush1.bf16.xpose.msra.mxu0 0
      %6878 = vmatprep.subr.bf16.mxu0 0
      %6879 = vmatpush1.bf16.xpose.msra.mxu0 0
      %6880 = vmatprep.subr.bf16.mxu0 0
      %6881 = vmatpush1.bf16.xpose.msra.mxu0 0
      %6882 = vmatprep.mubr.bf16.mxu0 0
      %6883 = vmatmul.mubr.bf16.gmra.mrb[0].mxu0 %v6845
      %v6884 = vpop.f32.mrb[0].mxu0
      %v6885 = vadd.f32 %v968, %v6884
      %v6886 = vpop.f32.mrb[0].mxu0
      %v6887 = vpop.f32.mrb[0].mxu0
      %v6888 = vpop.f32.mrb[0].mxu0
      %6889 = vdwg.mxu0
      %6890 = vrot.lane.b32.xlu0 %v1003, 32
      %v6891 = vpop.permute.xlu0 %6890
      %6892 = vrot.lane.b32.xlu0 %v1043, 32
      %v6893 = vpop.permute.xlu0 %6892
      %v6895 = vsel %vm1089, %v6891, 0
      %v6898 = vsel %vm1089, %v6893, 0
      %6900 = vmatprep.subr.bf16.mxu0 0
      %6901 = vmatpush1.bf16.xpose.msra.mxu0 %v6898
      %6902 = vmatprep.subr.bf16.mxu0 0
      %6903 = vmatpush1.bf16.xpose.msra.mxu0 0
      %6904 = vmatprep.subr.bf16.mxu0 0
      %6905 = vmatpush1.bf16.xpose.msra.mxu0 0
      %6906 = vmatprep.subr.bf16.mxu0 0
      %6907 = vmatpush1.bf16.xpose.msra.mxu0 0
      %6908 = vmatprep.subr.bf16.mxu0 0
      %6909 = vmatpush1.bf16.xpose.msra.mxu0 0
      %6910 = vmatprep.subr.bf16.mxu0 0
      %6911 = vmatpush1.bf16.xpose.msra.mxu0 0
      %6912 = vmatprep.subr.bf16.mxu0 0
      %6913 = vmatpush1.bf16.xpose.msra.mxu0 0
      %6914 = vmatprep.subr.bf16.mxu0 0
      %6915 = vmatpush1.bf16.xpose.msra.mxu0 0
      %6916 = vmatprep.subr.bf16.mxu0 0
      %6917 = vmatpush1.bf16.xpose.msra.mxu0 0
      %6918 = vmatprep.subr.bf16.mxu0 0
      %6919 = vmatpush1.bf16.xpose.msra.mxu0 0
      %6920 = vmatprep.subr.bf16.mxu0 0
      %6921 = vmatpush1.bf16.xpose.msra.mxu0 0
      %6922 = vmatprep.subr.bf16.mxu0 0
      %6923 = vmatpush1.bf16.xpose.msra.mxu0 0
      %6924 = vmatprep.subr.bf16.mxu0 0
      %6925 = vmatpush1.bf16.xpose.msra.mxu0 0
      %6926 = vmatprep.subr.bf16.mxu0 0
      %6927 = vmatpush1.bf16.xpose.msra.mxu0 0
      %6928 = vmatprep.subr.bf16.mxu0 0
      %6929 = vmatpush1.bf16.xpose.msra.mxu0 0
      %6930 = vmatprep.subr.bf16.mxu0 0
      %6931 = vmatpush1.bf16.xpose.msra.mxu0 0
      %6932 = vmatprep.mubr.bf16.mxu0 0
      %6933 = vmatmul.mubr.bf16.gmra.mrb[0].mxu0 %v6895
      %v6934 = vpop.f32.mrb[0].mxu0
      %v6935 = vadd.f32 %v968, %v6934
      %v6936 = vpop.f32.mrb[0].mxu0
      %v6937 = vpop.f32.mrb[0].mxu0
      %v6938 = vpop.f32.mrb[0].mxu0
      %6939 = vdwg.mxu0
      %6940 = vrot.lane.b32.xlu0 %v1004, 32
      %v6941 = vpop.permute.xlu0 %6940
      %6942 = vrot.lane.b32.xlu0 %v1044, 32
      %v6943 = vpop.permute.xlu0 %6942
      %v6945 = vsel %vm1089, %v6941, 0
      %v6948 = vsel %vm1089, %v6943, 0
      %6950 = vmatprep.subr.bf16.mxu0 0
      %6951 = vmatpush1.bf16.xpose.msra.mxu0 %v6948
      %6952 = vmatprep.subr.bf16.mxu0 0
      %6953 = vmatpush1.bf16.xpose.msra.mxu0 0
      %6954 = vmatprep.subr.bf16.mxu0 0
      %6955 = vmatpush1.bf16.xpose.msra.mxu0 0
      %6956 = vmatprep.subr.bf16.mxu0 0
      %6957 = vmatpush1.bf16.xpose.msra.mxu0 0
      %6958 = vmatprep.subr.bf16.mxu0 0
      %6959 = vmatpush1.bf16.xpose.msra.mxu0 0
      %6960 = vmatprep.subr.bf16.mxu0 0
      %6961 = vmatpush1.bf16.xpose.msra.mxu0 0
      %6962 = vmatprep.subr.bf16.mxu0 0
      %6963 = vmatpush1.bf16.xpose.msra.mxu0 0
      %6964 = vmatprep.subr.bf16.mxu0 0
      %6965 = vmatpush1.bf16.xpose.msra.mxu0 0
      %6966 = vmatprep.subr.bf16.mxu0 0
      %6967 = vmatpush1.bf16.xpose.msra.mxu0 0
      %6968 = vmatprep.subr.bf16.mxu0 0
      %6969 = vmatpush1.bf16.xpose.msra.mxu0 0
      %6970 = vmatprep.subr.bf16.mxu0 0
      %6971 = vmatpush1.bf16.xpose.msra.mxu0 0
      %6972 = vmatprep.subr.bf16.mxu0 0
      %6973 = vmatpush1.bf16.xpose.msra.mxu0 0
      %6974 = vmatprep.subr.bf16.mxu0 0
      %6975 = vmatpush1.bf16.xpose.msra.mxu0 0
      %6976 = vmatprep.subr.bf16.mxu0 0
      %6977 = vmatpush1.bf16.xpose.msra.mxu0 0
      %6978 = vmatprep.subr.bf16.mxu0 0
      %6979 = vmatpush1.bf16.xpose.msra.mxu0 0
      %6980 = vmatprep.subr.bf16.mxu0 0
      %6981 = vmatpush1.bf16.xpose.msra.mxu0 0
      %6982 = vmatprep.mubr.bf16.mxu0 0
      %6983 = vmatmul.mubr.bf16.gmra.mrb[0].mxu0 %v6945
      %v6984 = vpop.f32.mrb[0].mxu0
      %v6985 = vadd.f32 %v968, %v6984
      %v6986 = vpop.f32.mrb[0].mxu0
      %v6987 = vpop.f32.mrb[0].mxu0
      %v6988 = vpop.f32.mrb[0].mxu0
      %6989 = vdwg.mxu0
      %6990 = vrot.lane.b32.xlu0 %v1005, 32
      %v6991 = vpop.permute.xlu0 %6990
      %6992 = vrot.lane.b32.xlu0 %v1045, 32
      %v6993 = vpop.permute.xlu0 %6992
      %v6995 = vsel %vm1089, %v6991, 0
      %v6998 = vsel %vm1089, %v6993, 0
      %7000 = vmatprep.subr.bf16.mxu0 0
      %7001 = vmatpush1.bf16.xpose.msra.mxu0 %v6998
      %7002 = vmatprep.subr.bf16.mxu0 0
      %7003 = vmatpush1.bf16.xpose.msra.mxu0 0
      %7004 = vmatprep.subr.bf16.mxu0 0
      %7005 = vmatpush1.bf16.xpose.msra.mxu0 0
      %7006 = vmatprep.subr.bf16.mxu0 0
      %7007 = vmatpush1.bf16.xpose.msra.mxu0 0
      %7008 = vmatprep.subr.bf16.mxu0 0
      %7009 = vmatpush1.bf16.xpose.msra.mxu0 0
      %7010 = vmatprep.subr.bf16.mxu0 0
      %7011 = vmatpush1.bf16.xpose.msra.mxu0 0
      %7012 = vmatprep.subr.bf16.mxu0 0
      %7013 = vmatpush1.bf16.xpose.msra.mxu0 0
      %7014 = vmatprep.subr.bf16.mxu0 0
      %7015 = vmatpush1.bf16.xpose.msra.mxu0 0
      %7016 = vmatprep.subr.bf16.mxu0 0
      %7017 = vmatpush1.bf16.xpose.msra.mxu0 0
      %7018 = vmatprep.subr.bf16.mxu0 0
      %7019 = vmatpush1.bf16.xpose.msra.mxu0 0
      %7020 = vmatprep.subr.bf16.mxu0 0
      %7021 = vmatpush1.bf16.xpose.msra.mxu0 0
      %7022 = vmatprep.subr.bf16.mxu0 0
      %7023 = vmatpush1.bf16.xpose.msra.mxu0 0
      %7024 = vmatprep.subr.bf16.mxu0 0
      %7025 = vmatpush1.bf16.xpose.msra.mxu0 0
      %7026 = vmatprep.subr.bf16.mxu0 0
      %7027 = vmatpush1.bf16.xpose.msra.mxu0 0
      %7028 = vmatprep.subr.bf16.mxu0 0
      %7029 = vmatpush1.bf16.xpose.msra.mxu0 0
      %7030 = vmatprep.subr.bf16.mxu0 0
      %7031 = vmatpush1.bf16.xpose.msra.mxu0 0
      %7032 = vmatprep.mubr.bf16.mxu0 0
      %7033 = vmatmul.mubr.bf16.gmra.mrb[0].mxu0 %v6995
      %v7034 = vpop.f32.mrb[0].mxu0
      %v7035 = vadd.f32 %v968, %v7034
      %v7036 = vpop.f32.mrb[0].mxu0
      %v7037 = vpop.f32.mrb[0].mxu0
      %v7038 = vpop.f32.mrb[0].mxu0
      %7039 = vdwg.mxu0
      %7040 = vrot.lane.b32.xlu0 %v1006, 32
      %v7041 = vpop.permute.xlu0 %7040
      %7042 = vrot.lane.b32.xlu0 %v1046, 32
      %v7043 = vpop.permute.xlu0 %7042
      %v7045 = vsel %vm1089, %v7041, 0
      %v7048 = vsel %vm1089, %v7043, 0
      %7050 = vmatprep.subr.bf16.mxu0 0
      %7051 = vmatpush1.bf16.xpose.msra.mxu0 %v7048
      %7052 = vmatprep.subr.bf16.mxu0 0
      %7053 = vmatpush1.bf16.xpose.msra.mxu0 0
      %7054 = vmatprep.subr.bf16.mxu0 0
      %7055 = vmatpush1.bf16.xpose.msra.mxu0 0
      %7056 = vmatprep.subr.bf16.mxu0 0
      %7057 = vmatpush1.bf16.xpose.msra.mxu0 0
      %7058 = vmatprep.subr.bf16.mxu0 0
      %7059 = vmatpush1.bf16.xpose.msra.mxu0 0
      %7060 = vmatprep.subr.bf16.mxu0 0
      %7061 = vmatpush1.bf16.xpose.msra.mxu0 0
      %7062 = vmatprep.subr.bf16.mxu0 0
      %7063 = vmatpush1.bf16.xpose.msra.mxu0 0
      %7064 = vmatprep.subr.bf16.mxu0 0
      %7065 = vmatpush1.bf16.xpose.msra.mxu0 0
      %7066 = vmatprep.subr.bf16.mxu0 0
      %7067 = vmatpush1.bf16.xpose.msra.mxu0 0
      %7068 = vmatprep.subr.bf16.mxu0 0
      %7069 = vmatpush1.bf16.xpose.msra.mxu0 0
      %7070 = vmatprep.subr.bf16.mxu0 0
      %7071 = vmatpush1.bf16.xpose.msra.mxu0 0
      %7072 = vmatprep.subr.bf16.mxu0 0
      %7073 = vmatpush1.bf16.xpose.msra.mxu0 0
      %7074 = vmatprep.subr.bf16.mxu0 0
      %7075 = vmatpush1.bf16.xpose.msra.mxu0 0
      %7076 = vmatprep.subr.bf16.mxu0 0
      %7077 = vmatpush1.bf16.xpose.msra.mxu0 0
      %7078 = vmatprep.subr.bf16.mxu0 0
      %7079 = vmatpush1.bf16.xpose.msra.mxu0 0
      %7080 = vmatprep.subr.bf16.mxu0 0
      %7081 = vmatpush1.bf16.xpose.msra.mxu0 0
      %7082 = vmatprep.mubr.bf16.mxu0 0
      %7083 = vmatmul.mubr.bf16.gmra.mrb[0].mxu0 %v7045
      %v7084 = vpop.f32.mrb[0].mxu0
      %v7085 = vadd.f32 %v968, %v7084
      %v7086 = vpop.f32.mrb[0].mxu0
      %v7087 = vpop.f32.mrb[0].mxu0
      %v7088 = vpop.f32.mrb[0].mxu0
      %7089 = vdwg.mxu0
      %7090 = vrot.lane.b32.xlu0 %v1007, 32
      %v7091 = vpop.permute.xlu0 %7090
      %7092 = vrot.lane.b32.xlu0 %v1047, 32
      %v7093 = vpop.permute.xlu0 %7092
      %v7095 = vsel %vm1089, %v7091, 0
      %v7098 = vsel %vm1089, %v7093, 0
      %7100 = vmatprep.subr.bf16.mxu0 0
      %7101 = vmatpush1.bf16.xpose.msra.mxu0 %v7098
      %7102 = vmatprep.subr.bf16.mxu0 0
      %7103 = vmatpush1.bf16.xpose.msra.mxu0 0
      %7104 = vmatprep.subr.bf16.mxu0 0
      %7105 = vmatpush1.bf16.xpose.msra.mxu0 0
      %7106 = vmatprep.subr.bf16.mxu0 0
      %7107 = vmatpush1.bf16.xpose.msra.mxu0 0
      %7108 = vmatprep.subr.bf16.mxu0 0
      %7109 = vmatpush1.bf16.xpose.msra.mxu0 0
      %7110 = vmatprep.subr.bf16.mxu0 0
      %7111 = vmatpush1.bf16.xpose.msra.mxu0 0
      %7112 = vmatprep.subr.bf16.mxu0 0
      %7113 = vmatpush1.bf16.xpose.msra.mxu0 0
      %7114 = vmatprep.subr.bf16.mxu0 0
      %7115 = vmatpush1.bf16.xpose.msra.mxu0 0
      %7116 = vmatprep.subr.bf16.mxu0 0
      %7117 = vmatpush1.bf16.xpose.msra.mxu0 0
      %7118 = vmatprep.subr.bf16.mxu0 0
      %7119 = vmatpush1.bf16.xpose.msra.mxu0 0
      %7120 = vmatprep.subr.bf16.mxu0 0
      %7121 = vmatpush1.bf16.xpose.msra.mxu0 0
      %7122 = vmatprep.subr.bf16.mxu0 0
      %7123 = vmatpush1.bf16.xpose.msra.mxu0 0
      %7124 = vmatprep.subr.bf16.mxu0 0
      %7125 = vmatpush1.bf16.xpose.msra.mxu0 0
      %7126 = vmatprep.subr.bf16.mxu0 0
      %7127 = vmatpush1.bf16.xpose.msra.mxu0 0
      %7128 = vmatprep.subr.bf16.mxu0 0
      %7129 = vmatpush1.bf16.xpose.msra.mxu0 0
      %7130 = vmatprep.subr.bf16.mxu0 0
      %7131 = vmatpush1.bf16.xpose.msra.mxu0 0
      %7132 = vmatprep.mubr.bf16.mxu0 0
      %7133 = vmatmul.mubr.bf16.gmra.mrb[0].mxu0 %v7095
      %v7134 = vpop.f32.mrb[0].mxu0
      %v7135 = vadd.f32 %v968, %v7134
      %v7136 = vpop.f32.mrb[0].mxu0
      %v7137 = vpop.f32.mrb[0].mxu0
      %v7138 = vpop.f32.mrb[0].mxu0
      %7139 = vdwg.mxu0
      %7140 = vrot.lane.b32.xlu0 %v1008, 32
      %v7141 = vpop.permute.xlu0 %7140
      %7142 = vrot.lane.b32.xlu0 %v1048, 32
      %v7143 = vpop.permute.xlu0 %7142
      %v7145 = vsel %vm1089, %v7141, 0
      %v7148 = vsel %vm1089, %v7143, 0
      %7150 = vmatprep.subr.bf16.mxu0 0
      %7151 = vmatpush1.bf16.xpose.msra.mxu0 %v7148
      %7152 = vmatprep.subr.bf16.mxu0 0
      %7153 = vmatpush1.bf16.xpose.msra.mxu0 0
      %7154 = vmatprep.subr.bf16.mxu0 0
      %7155 = vmatpush1.bf16.xpose.msra.mxu0 0
      %7156 = vmatprep.subr.bf16.mxu0 0
      %7157 = vmatpush1.bf16.xpose.msra.mxu0 0
      %7158 = vmatprep.subr.bf16.mxu0 0
      %7159 = vmatpush1.bf16.xpose.msra.mxu0 0
      %7160 = vmatprep.subr.bf16.mxu0 0
      %7161 = vmatpush1.bf16.xpose.msra.mxu0 0
      %7162 = vmatprep.subr.bf16.mxu0 0
      %7163 = vmatpush1.bf16.xpose.msra.mxu0 0
      %7164 = vmatprep.subr.bf16.mxu0 0
      %7165 = vmatpush1.bf16.xpose.msra.mxu0 0
      %7166 = vmatprep.subr.bf16.mxu0 0
      %7167 = vmatpush1.bf16.xpose.msra.mxu0 0
      %7168 = vmatprep.subr.bf16.mxu0 0
      %7169 = vmatpush1.bf16.xpose.msra.mxu0 0
      %7170 = vmatprep.subr.bf16.mxu0 0
      %7171 = vmatpush1.bf16.xpose.msra.mxu0 0
      %7172 = vmatprep.subr.bf16.mxu0 0
      %7173 = vmatpush1.bf16.xpose.msra.mxu0 0
      %7174 = vmatprep.subr.bf16.mxu0 0
      %7175 = vmatpush1.bf16.xpose.msra.mxu0 0
      %7176 = vmatprep.subr.bf16.mxu0 0
      %7177 = vmatpush1.bf16.xpose.msra.mxu0 0
      %7178 = vmatprep.subr.bf16.mxu0 0
      %7179 = vmatpush1.bf16.xpose.msra.mxu0 0
      %7180 = vmatprep.subr.bf16.mxu0 0
      %7181 = vmatpush1.bf16.xpose.msra.mxu0 0
      %7182 = vmatprep.mubr.bf16.mxu0 0
      %7183 = vmatmul.mubr.bf16.gmra.mrb[0].mxu0 %v7145
      %v7184 = vpop.f32.mrb[0].mxu0
      %v7185 = vadd.f32 %v968, %v7184
      %v7186 = vpop.f32.mrb[0].mxu0
      %v7187 = vpop.f32.mrb[0].mxu0
      %v7188 = vpop.f32.mrb[0].mxu0
      %7189 = vdwg.mxu0
      %v7190 = vsel %vm1826, %v6435, -inf
      %7191 = vmax.xlane.f32.xlu0 %v7190
      %v7192 = vpop.xlane.xlu0 %7191
      %v7193 = vsel %vm1826, %v6485, -inf
      %7194 = vmax.xlane.f32.xlu0 %v7193
      %v7195 = vpop.xlane.xlu0 %7194
      %v7196 = vsel %vm1826, %v6535, -inf
      %7197 = vmax.xlane.f32.xlu0 %v7196
      %v7198 = vpop.xlane.xlu0 %7197
      %v7199 = vsel %vm1826, %v6585, -inf
      %7200 = vmax.xlane.f32.xlu0 %v7199
      %v7201 = vpop.xlane.xlu0 %7200
      %v7202 = vsel %vm1826, %v6635, -inf
      %7203 = vmax.xlane.f32.xlu0 %v7202
      %v7204 = vpop.xlane.xlu0 %7203
      %v7205 = vsel %vm1826, %v6685, -inf
      %7206 = vmax.xlane.f32.xlu0 %v7205
      %v7207 = vpop.xlane.xlu0 %7206
      %v7208 = vsel %vm1826, %v6735, -inf
      %7209 = vmax.xlane.f32.xlu0 %v7208
      %v7210 = vpop.xlane.xlu0 %7209
      %v7211 = vsel %vm1826, %v6785, -inf
      %7212 = vmax.xlane.f32.xlu0 %v7211
      %v7213 = vpop.xlane.xlu0 %7212
      %v7214 = vsel %vm1826, %v6835, -inf
      %7215 = vmax.xlane.f32.xlu0 %v7214
      %v7216 = vpop.xlane.xlu0 %7215
      %v7217 = vsel %vm1826, %v6885, -inf
      %7218 = vmax.xlane.f32.xlu0 %v7217
      %v7219 = vpop.xlane.xlu0 %7218
      %v7220 = vsel %vm1826, %v6935, -inf
      %7221 = vmax.xlane.f32.xlu0 %v7220
      %v7222 = vpop.xlane.xlu0 %7221
      %v7223 = vsel %vm1826, %v6985, -inf
      %7224 = vmax.xlane.f32.xlu0 %v7223
      %v7225 = vpop.xlane.xlu0 %7224
      %v7226 = vsel %vm1826, %v7035, -inf
      %7227 = vmax.xlane.f32.xlu0 %v7226
      %v7228 = vpop.xlane.xlu0 %7227
      %v7229 = vsel %vm1826, %v7085, -inf
      %7230 = vmax.xlane.f32.xlu0 %v7229
      %v7231 = vpop.xlane.xlu0 %7230
      %v7232 = vsel %vm1826, %v7135, -inf
      %7233 = vmax.xlane.f32.xlu0 %v7232
      %v7234 = vpop.xlane.xlu0 %7233
      %v7235 = vsel %vm1826, %v7185, -inf
      %7236 = vmax.xlane.f32.xlu0 %v7235
      %v7237 = vpop.xlane.xlu0 %7236
      %v7238 = vsub.f32 %v6435, %v7192
      %v7239 = vsub.f32 %v6485, %v7195
      %v7240 = vsub.f32 %v6535, %v7198
      %v7241 = vsub.f32 %v6585, %v7201
      %v7242 = vsub.f32 %v6635, %v7204
      %v7243 = vsub.f32 %v6685, %v7207
      %v7244 = vsub.f32 %v6735, %v7210
      %v7245 = vsub.f32 %v6785, %v7213
      %v7246 = vsub.f32 %v6835, %v7216
      %v7247 = vsub.f32 %v6885, %v7219
      %v7248 = vsub.f32 %v6935, %v7222
      %v7249 = vsub.f32 %v6985, %v7225
      %v7250 = vsub.f32 %v7035, %v7228
      %v7251 = vsub.f32 %v7085, %v7231
      %v7252 = vsub.f32 %v7135, %v7234
      %v7253 = vsub.f32 %v7185, %v7237
      %v7254 = vmul.f32 %v7238, 1.442695
      %v7255 = vpow.pop %v7254
      %v7256 = vmul.f32 %v7239, 1.442695
      %v7257 = vpow.pop %v7256
      %v7258 = vmul.f32 %v7240, 1.442695
      %v7259 = vpow.pop %v7258
      %v7260 = vmul.f32 %v7241, 1.442695
      %v7261 = vpow.pop %v7260
      %v7262 = vmul.f32 %v7242, 1.442695
      %v7263 = vpow.pop %v7262
      %v7264 = vmul.f32 %v7243, 1.442695
      %v7265 = vpow.pop %v7264
      %v7266 = vmul.f32 %v7244, 1.442695
      %v7267 = vpow.pop %v7266
      %v7268 = vmul.f32 %v7245, 1.442695
      %v7269 = vpow.pop %v7268
      %v7270 = vmul.f32 %v7246, 1.442695
      %v7271 = vpow.pop %v7270
      %v7272 = vmul.f32 %v7247, 1.442695
      %v7273 = vpow.pop %v7272
      %v7274 = vmul.f32 %v7248, 1.442695
      %v7275 = vpow.pop %v7274
      %v7276 = vmul.f32 %v7249, 1.442695
      %v7277 = vpow.pop %v7276
      %v7278 = vmul.f32 %v7250, 1.442695
      %v7279 = vpow.pop %v7278
      %v7280 = vmul.f32 %v7251, 1.442695
      %v7281 = vpow.pop %v7280
      %v7282 = vmul.f32 %v7252, 1.442695
      %v7283 = vpow.pop %v7282
      %v7284 = vmul.f32 %v7253, 1.442695
      %v7285 = vpow.pop %v7284
      %v7286 = vsel %vm1826, %v7255, 0.0
      %7287 = vadd.xlane.f32.xlu0 %v7286
      %v7288 = vpop.xlane.xlu0 %7287
      %v7289 = vsel %vm1826, %v7257, 0.0
      %7290 = vadd.xlane.f32.xlu0 %v7289
      %v7291 = vpop.xlane.xlu0 %7290
      %v7292 = vsel %vm1826, %v7259, 0.0
      %7293 = vadd.xlane.f32.xlu0 %v7292
      %v7294 = vpop.xlane.xlu0 %7293
      %v7295 = vsel %vm1826, %v7261, 0.0
      %7296 = vadd.xlane.f32.xlu0 %v7295
      %v7297 = vpop.xlane.xlu0 %7296
      %v7298 = vsel %vm1826, %v7263, 0.0
      %7299 = vadd.xlane.f32.xlu0 %v7298
      %v7300 = vpop.xlane.xlu0 %7299
      %v7301 = vsel %vm1826, %v7265, 0.0
      %7302 = vadd.xlane.f32.xlu0 %v7301
      %v7303 = vpop.xlane.xlu0 %7302
      %v7304 = vsel %vm1826, %v7267, 0.0
      %7305 = vadd.xlane.f32.xlu0 %v7304
      %v7306 = vpop.xlane.xlu0 %7305
      %v7307 = vsel %vm1826, %v7269, 0.0
      %7308 = vadd.xlane.f32.xlu0 %v7307
      %v7309 = vpop.xlane.xlu0 %7308
      %v7310 = vsel %vm1826, %v7271, 0.0
      %7311 = vadd.xlane.f32.xlu0 %v7310
      %v7312 = vpop.xlane.xlu0 %7311
      %v7313 = vsel %vm1826, %v7273, 0.0
      %7314 = vadd.xlane.f32.xlu0 %v7313
      %v7315 = vpop.xlane.xlu0 %7314
      %v7316 = vsel %vm1826, %v7275, 0.0
      %7317 = vadd.xlane.f32.xlu0 %v7316
      %v7318 = vpop.xlane.xlu0 %7317
      %v7319 = vsel %vm1826, %v7277, 0.0
      %7320 = vadd.xlane.f32.xlu0 %v7319
      %v7321 = vpop.xlane.xlu0 %7320
      %v7322 = vsel %vm1826, %v7279, 0.0
      %7323 = vadd.xlane.f32.xlu0 %v7322
      %v7324 = vpop.xlane.xlu0 %7323
      %v7325 = vsel %vm1826, %v7281, 0.0
      %7326 = vadd.xlane.f32.xlu0 %v7325
      %v7327 = vpop.xlane.xlu0 %7326
      %v7328 = vsel %vm1826, %v7283, 0.0
      %7329 = vadd.xlane.f32.xlu0 %v7328
      %v7330 = vpop.xlane.xlu0 %7329
      %v7331 = vsel %vm1826, %v7285, 0.0
      %7332 = vadd.xlane.f32.xlu0 %v7331
      %v7333 = vpop.xlane.xlu0 %7332
      %v7334 = vrcp.pop %v7288
      %v7335 = vrcp.pop %v7291
      %v7336 = vrcp.pop %v7294
      %v7337 = vrcp.pop %v7297
      %v7338 = vrcp.pop %v7300
      %v7339 = vrcp.pop %v7303
      %v7340 = vrcp.pop %v7306
      %v7341 = vrcp.pop %v7309
      %v7342 = vrcp.pop %v7312
      %v7343 = vrcp.pop %v7315
      %v7344 = vrcp.pop %v7318
      %v7345 = vrcp.pop %v7321
      %v7346 = vrcp.pop %v7324
      %v7347 = vrcp.pop %v7327
      %v7348 = vrcp.pop %v7330
      %v7349 = vrcp.pop %v7333
      %v7350 = vmul.f32 %v7255, %v7334
      %v7351 = vmul.f32 %v7257, %v7335
      %v7352 = vmul.f32 %v7259, %v7336
      %v7353 = vmul.f32 %v7261, %v7337
      %v7354 = vmul.f32 %v7263, %v7338
      %v7355 = vmul.f32 %v7265, %v7339
      %v7356 = vmul.f32 %v7267, %v7340
      %v7357 = vmul.f32 %v7269, %v7341
      %v7358 = vmul.f32 %v7271, %v7342
      %v7359 = vmul.f32 %v7273, %v7343
      %v7360 = vmul.f32 %v7275, %v7344
      %v7361 = vmul.f32 %v7277, %v7345
      %v7362 = vmul.f32 %v7279, %v7346
      %v7363 = vmul.f32 %v7281, %v7347
      %v7364 = vmul.f32 %v7283, %v7348
      %v7365 = vmul.f32 %v7285, %v7349
      %v7366 = vpack.c.bf16 %v7350, %v7350
      %v7367 = vpack.c.bf16 %v7351, %v7351
      %v7368 = vpack.c.bf16 %v7352, %v7352
      %v7369 = vpack.c.bf16 %v7353, %v7353
      %v7370 = vpack.c.bf16 %v7354, %v7354
      %v7371 = vpack.c.bf16 %v7355, %v7355
      %v7372 = vpack.c.bf16 %v7356, %v7356
      %v7373 = vpack.c.bf16 %v7357, %v7357
      %v7374 = vpack.c.bf16 %v7358, %v7358
      %v7375 = vpack.c.bf16 %v7359, %v7359
      %v7376 = vpack.c.bf16 %v7360, %v7360
      %v7377 = vpack.c.bf16 %v7361, %v7361
      %v7378 = vpack.c.bf16 %v7362, %v7362
      %v7379 = vpack.c.bf16 %v7363, %v7363
      %v7380 = vpack.c.bf16 %v7364, %v7364
      %v7381 = vpack.c.bf16 %v7365, %v7365
      %7382 = vrot.lane.b32.xlu0 %v1073, 32
      %v7383 = vpop.permute.xlu0 %7382
      %v7385 = vsel %vm1826, %v7366, 0
      %v7388 = vsel %vm2022, %v7383, 0
      %7390 = vmatprep.subr.bf16.mxu0 0
      %7391 = vmatpush1.bf16.msra.mxu0 %v7388
      %7392 = vmatprep.subr.bf16.mxu0 0
      %7393 = vmatpush1.bf16.msra.mxu0 0
      %7394 = vmatprep.subr.bf16.mxu0 0
      %7395 = vmatpush1.bf16.msra.mxu0 0
      %7396 = vmatprep.subr.bf16.mxu0 0
      %7397 = vmatpush1.bf16.msra.mxu0 0
      %7398 = vmatprep.subr.bf16.mxu0 0
      %7399 = vmatpush1.bf16.msra.mxu0 0
      %7400 = vmatprep.subr.bf16.mxu0 0
      %7401 = vmatpush1.bf16.msra.mxu0 0
      %7402 = vmatprep.subr.bf16.mxu0 0
      %7403 = vmatpush1.bf16.msra.mxu0 0
      %7404 = vmatprep.subr.bf16.mxu0 0
      %7405 = vmatpush1.bf16.msra.mxu0 0
      %7406 = vmatprep.subr.bf16.mxu0 0
      %7407 = vmatpush1.bf16.msra.mxu0 0
      %7408 = vmatprep.subr.bf16.mxu0 0
      %7409 = vmatpush1.bf16.msra.mxu0 0
      %7410 = vmatprep.subr.bf16.mxu0 0
      %7411 = vmatpush1.bf16.msra.mxu0 0
      %7412 = vmatprep.subr.bf16.mxu0 0
      %7413 = vmatpush1.bf16.msra.mxu0 0
      %7414 = vmatprep.subr.bf16.mxu0 0
      %7415 = vmatpush1.bf16.msra.mxu0 0
      %7416 = vmatprep.subr.bf16.mxu0 0
      %7417 = vmatpush1.bf16.msra.mxu0 0
      %7418 = vmatprep.subr.bf16.mxu0 0
      %7419 = vmatpush1.bf16.msra.mxu0 0
      %7420 = vmatprep.subr.bf16.mxu0 0
      %7421 = vmatpush1.bf16.msra.mxu0 0
      %7422 = vmatprep.mubr.bf16.mxu0 0
      %7423 = vmatmul.mubr.bf16.gmra.mrb[0].mxu0 %v7385
      %v7424 = vpop.f32.mrb[0].mxu0
      %v7425 = vadd.f32 0.0, %v7424
      %v7426 = vpop.f32.mrb[0].mxu0
      %v7427 = vpop.f32.mrb[0].mxu0
      %v7428 = vpop.f32.mrb[0].mxu0
      %7429 = vdwg.mxu0
      %7430 = vrot.lane.b32.xlu0 %v1074, 32
      %v7431 = vpop.permute.xlu0 %7430
      %v7433 = vsel %vm1826, %v7367, 0
      %v7436 = vsel %vm2022, %v7431, 0
      %7438 = vmatprep.subr.bf16.mxu0 0
      %7439 = vmatpush1.bf16.msra.mxu0 %v7436
      %7440 = vmatprep.subr.bf16.mxu0 0
      %7441 = vmatpush1.bf16.msra.mxu0 0
      %7442 = vmatprep.subr.bf16.mxu0 0
      %7443 = vmatpush1.bf16.msra.mxu0 0
      %7444 = vmatprep.subr.bf16.mxu0 0
      %7445 = vmatpush1.bf16.msra.mxu0 0
      %7446 = vmatprep.subr.bf16.mxu0 0
      %7447 = vmatpush1.bf16.msra.mxu0 0
      %7448 = vmatprep.subr.bf16.mxu0 0
      %7449 = vmatpush1.bf16.msra.mxu0 0
      %7450 = vmatprep.subr.bf16.mxu0 0
      %7451 = vmatpush1.bf16.msra.mxu0 0
      %7452 = vmatprep.subr.bf16.mxu0 0
      %7453 = vmatpush1.bf16.msra.mxu0 0
      %7454 = vmatprep.subr.bf16.mxu0 0
      %7455 = vmatpush1.bf16.msra.mxu0 0
      %7456 = vmatprep.subr.bf16.mxu0 0
      %7457 = vmatpush1.bf16.msra.mxu0 0
      %7458 = vmatprep.subr.bf16.mxu0 0
      %7459 = vmatpush1.bf16.msra.mxu0 0
      %7460 = vmatprep.subr.bf16.mxu0 0
      %7461 = vmatpush1.bf16.msra.mxu0 0
      %7462 = vmatprep.subr.bf16.mxu0 0
      %7463 = vmatpush1.bf16.msra.mxu0 0
      %7464 = vmatprep.subr.bf16.mxu0 0
      %7465 = vmatpush1.bf16.msra.mxu0 0
      %7466 = vmatprep.subr.bf16.mxu0 0
      %7467 = vmatpush1.bf16.msra.mxu0 0
      %7468 = vmatprep.subr.bf16.mxu0 0
      %7469 = vmatpush1.bf16.msra.mxu0 0
      %7470 = vmatprep.mubr.bf16.mxu0 0
      %7471 = vmatmul.mubr.bf16.gmra.mrb[0].mxu0 %v7433
      %v7472 = vpop.f32.mrb[0].mxu0
      %v7473 = vadd.f32 0.0, %v7472
      %v7474 = vpop.f32.mrb[0].mxu0
      %v7475 = vpop.f32.mrb[0].mxu0
      %v7476 = vpop.f32.mrb[0].mxu0
      %7477 = vdwg.mxu0
      %7478 = vrot.lane.b32.xlu0 %v1075, 32
      %v7479 = vpop.permute.xlu0 %7478
      %v7481 = vsel %vm1826, %v7368, 0
      %v7484 = vsel %vm2022, %v7479, 0
      %7486 = vmatprep.subr.bf16.mxu0 0
      %7487 = vmatpush1.bf16.msra.mxu0 %v7484
      %7488 = vmatprep.subr.bf16.mxu0 0
      %7489 = vmatpush1.bf16.msra.mxu0 0
      %7490 = vmatprep.subr.bf16.mxu0 0
      %7491 = vmatpush1.bf16.msra.mxu0 0
      %7492 = vmatprep.subr.bf16.mxu0 0
      %7493 = vmatpush1.bf16.msra.mxu0 0
      %7494 = vmatprep.subr.bf16.mxu0 0
      %7495 = vmatpush1.bf16.msra.mxu0 0
      %7496 = vmatprep.subr.bf16.mxu0 0
      %7497 = vmatpush1.bf16.msra.mxu0 0
      %7498 = vmatprep.subr.bf16.mxu0 0
      %7499 = vmatpush1.bf16.msra.mxu0 0
      %7500 = vmatprep.subr.bf16.mxu0 0
      %7501 = vmatpush1.bf16.msra.mxu0 0
      %7502 = vmatprep.subr.bf16.mxu0 0
      %7503 = vmatpush1.bf16.msra.mxu0 0
      %7504 = vmatprep.subr.bf16.mxu0 0
      %7505 = vmatpush1.bf16.msra.mxu0 0
      %7506 = vmatprep.subr.bf16.mxu0 0
      %7507 = vmatpush1.bf16.msra.mxu0 0
      %7508 = vmatprep.subr.bf16.mxu0 0
      %7509 = vmatpush1.bf16.msra.mxu0 0
      %7510 = vmatprep.subr.bf16.mxu0 0
      %7511 = vmatpush1.bf16.msra.mxu0 0
      %7512 = vmatprep.subr.bf16.mxu0 0
      %7513 = vmatpush1.bf16.msra.mxu0 0
      %7514 = vmatprep.subr.bf16.mxu0 0
      %7515 = vmatpush1.bf16.msra.mxu0 0
      %7516 = vmatprep.subr.bf16.mxu0 0
      %7517 = vmatpush1.bf16.msra.mxu0 0
      %7518 = vmatprep.mubr.bf16.mxu0 0
      %7519 = vmatmul.mubr.bf16.gmra.mrb[0].mxu0 %v7481
      %v7520 = vpop.f32.mrb[0].mxu0
      %v7521 = vadd.f32 0.0, %v7520
      %v7522 = vpop.f32.mrb[0].mxu0
      %v7523 = vpop.f32.mrb[0].mxu0
      %v7524 = vpop.f32.mrb[0].mxu0
      %7525 = vdwg.mxu0
      %7526 = vrot.lane.b32.xlu0 %v1076, 32
      %v7527 = vpop.permute.xlu0 %7526
      %v7529 = vsel %vm1826, %v7369, 0
      %v7532 = vsel %vm2022, %v7527, 0
      %7534 = vmatprep.subr.bf16.mxu0 0
      %7535 = vmatpush1.bf16.msra.mxu0 %v7532
      %7536 = vmatprep.subr.bf16.mxu0 0
      %7537 = vmatpush1.bf16.msra.mxu0 0
      %7538 = vmatprep.subr.bf16.mxu0 0
      %7539 = vmatpush1.bf16.msra.mxu0 0
      %7540 = vmatprep.subr.bf16.mxu0 0
      %7541 = vmatpush1.bf16.msra.mxu0 0
      %7542 = vmatprep.subr.bf16.mxu0 0
      %7543 = vmatpush1.bf16.msra.mxu0 0
      %7544 = vmatprep.subr.bf16.mxu0 0
      %7545 = vmatpush1.bf16.msra.mxu0 0
      %7546 = vmatprep.subr.bf16.mxu0 0
      %7547 = vmatpush1.bf16.msra.mxu0 0
      %7548 = vmatprep.subr.bf16.mxu0 0
      %7549 = vmatpush1.bf16.msra.mxu0 0
      %7550 = vmatprep.subr.bf16.mxu0 0
      %7551 = vmatpush1.bf16.msra.mxu0 0
      %7552 = vmatprep.subr.bf16.mxu0 0
      %7553 = vmatpush1.bf16.msra.mxu0 0
      %7554 = vmatprep.subr.bf16.mxu0 0
      %7555 = vmatpush1.bf16.msra.mxu0 0
      %7556 = vmatprep.subr.bf16.mxu0 0
      %7557 = vmatpush1.bf16.msra.mxu0 0
      %7558 = vmatprep.subr.bf16.mxu0 0
      %7559 = vmatpush1.bf16.msra.mxu0 0
      %7560 = vmatprep.subr.bf16.mxu0 0
      %7561 = vmatpush1.bf16.msra.mxu0 0
      %7562 = vmatprep.subr.bf16.mxu0 0
      %7563 = vmatpush1.bf16.msra.mxu0 0
      %7564 = vmatprep.subr.bf16.mxu0 0
      %7565 = vmatpush1.bf16.msra.mxu0 0
      %7566 = vmatprep.mubr.bf16.mxu0 0
      %7567 = vmatmul.mubr.bf16.gmra.mrb[0].mxu0 %v7529
      %v7568 = vpop.f32.mrb[0].mxu0
      %v7569 = vadd.f32 0.0, %v7568
      %v7570 = vpop.f32.mrb[0].mxu0
      %v7571 = vpop.f32.mrb[0].mxu0
      %v7572 = vpop.f32.mrb[0].mxu0
      %7573 = vdwg.mxu0
      %7574 = vrot.lane.b32.xlu0 %v1077, 32
      %v7575 = vpop.permute.xlu0 %7574
      %v7577 = vsel %vm1826, %v7370, 0
      %v7580 = vsel %vm2022, %v7575, 0
      %7582 = vmatprep.subr.bf16.mxu0 0
      %7583 = vmatpush1.bf16.msra.mxu0 %v7580
      %7584 = vmatprep.subr.bf16.mxu0 0
      %7585 = vmatpush1.bf16.msra.mxu0 0
      %7586 = vmatprep.subr.bf16.mxu0 0
      %7587 = vmatpush1.bf16.msra.mxu0 0
      %7588 = vmatprep.subr.bf16.mxu0 0
      %7589 = vmatpush1.bf16.msra.mxu0 0
      %7590 = vmatprep.subr.bf16.mxu0 0
      %7591 = vmatpush1.bf16.msra.mxu0 0
      %7592 = vmatprep.subr.bf16.mxu0 0
      %7593 = vmatpush1.bf16.msra.mxu0 0
      %7594 = vmatprep.subr.bf16.mxu0 0
      %7595 = vmatpush1.bf16.msra.mxu0 0
      %7596 = vmatprep.subr.bf16.mxu0 0
      %7597 = vmatpush1.bf16.msra.mxu0 0
      %7598 = vmatprep.subr.bf16.mxu0 0
      %7599 = vmatpush1.bf16.msra.mxu0 0
      %7600 = vmatprep.subr.bf16.mxu0 0
      %7601 = vmatpush1.bf16.msra.mxu0 0
      %7602 = vmatprep.subr.bf16.mxu0 0
      %7603 = vmatpush1.bf16.msra.mxu0 0
      %7604 = vmatprep.subr.bf16.mxu0 0
      %7605 = vmatpush1.bf16.msra.mxu0 0
      %7606 = vmatprep.subr.bf16.mxu0 0
      %7607 = vmatpush1.bf16.msra.mxu0 0
      %7608 = vmatprep.subr.bf16.mxu0 0
      %7609 = vmatpush1.bf16.msra.mxu0 0
      %7610 = vmatprep.subr.bf16.mxu0 0
      %7611 = vmatpush1.bf16.msra.mxu0 0
      %7612 = vmatprep.subr.bf16.mxu0 0
      %7613 = vmatpush1.bf16.msra.mxu0 0
      %7614 = vmatprep.mubr.bf16.mxu0 0
      %7615 = vmatmul.mubr.bf16.gmra.mrb[0].mxu0 %v7577
      %v7616 = vpop.f32.mrb[0].mxu0
      %v7617 = vadd.f32 0.0, %v7616
      %v7618 = vpop.f32.mrb[0].mxu0
      %v7619 = vpop.f32.mrb[0].mxu0
      %v7620 = vpop.f32.mrb[0].mxu0
      %7621 = vdwg.mxu0
      %7622 = vrot.lane.b32.xlu0 %v1078, 32
      %v7623 = vpop.permute.xlu0 %7622
      %v7625 = vsel %vm1826, %v7371, 0
      %v7628 = vsel %vm2022, %v7623, 0
      %7630 = vmatprep.subr.bf16.mxu0 0
      %7631 = vmatpush1.bf16.msra.mxu0 %v7628
      %7632 = vmatprep.subr.bf16.mxu0 0
      %7633 = vmatpush1.bf16.msra.mxu0 0
      %7634 = vmatprep.subr.bf16.mxu0 0
      %7635 = vmatpush1.bf16.msra.mxu0 0
      %7636 = vmatprep.subr.bf16.mxu0 0
      %7637 = vmatpush1.bf16.msra.mxu0 0
      %7638 = vmatprep.subr.bf16.mxu0 0
      %7639 = vmatpush1.bf16.msra.mxu0 0
      %7640 = vmatprep.subr.bf16.mxu0 0
      %7641 = vmatpush1.bf16.msra.mxu0 0
      %7642 = vmatprep.subr.bf16.mxu0 0
      %7643 = vmatpush1.bf16.msra.mxu0 0
      %7644 = vmatprep.subr.bf16.mxu0 0
      %7645 = vmatpush1.bf16.msra.mxu0 0
      %7646 = vmatprep.subr.bf16.mxu0 0
      %7647 = vmatpush1.bf16.msra.mxu0 0
      %7648 = vmatprep.subr.bf16.mxu0 0
      %7649 = vmatpush1.bf16.msra.mxu0 0
      %7650 = vmatprep.subr.bf16.mxu0 0
      %7651 = vmatpush1.bf16.msra.mxu0 0
      %7652 = vmatprep.subr.bf16.mxu0 0
      %7653 = vmatpush1.bf16.msra.mxu0 0
      %7654 = vmatprep.subr.bf16.mxu0 0
      %7655 = vmatpush1.bf16.msra.mxu0 0
      %7656 = vmatprep.subr.bf16.mxu0 0
      %7657 = vmatpush1.bf16.msra.mxu0 0
      %7658 = vmatprep.subr.bf16.mxu0 0
      %7659 = vmatpush1.bf16.msra.mxu0 0
      %7660 = vmatprep.subr.bf16.mxu0 0
      %7661 = vmatpush1.bf16.msra.mxu0 0
      %7662 = vmatprep.mubr.bf16.mxu0 0
      %7663 = vmatmul.mubr.bf16.gmra.mrb[0].mxu0 %v7625
      %v7664 = vpop.f32.mrb[0].mxu0
      %v7665 = vadd.f32 0.0, %v7664
      %v7666 = vpop.f32.mrb[0].mxu0
      %v7667 = vpop.f32.mrb[0].mxu0
      %v7668 = vpop.f32.mrb[0].mxu0
      %7669 = vdwg.mxu0
      %7670 = vrot.lane.b32.xlu0 %v1079, 32
      %v7671 = vpop.permute.xlu0 %7670
      %v7673 = vsel %vm1826, %v7372, 0
      %v7676 = vsel %vm2022, %v7671, 0
      %7678 = vmatprep.subr.bf16.mxu0 0
      %7679 = vmatpush1.bf16.msra.mxu0 %v7676
      %7680 = vmatprep.subr.bf16.mxu0 0
      %7681 = vmatpush1.bf16.msra.mxu0 0
      %7682 = vmatprep.subr.bf16.mxu0 0
      %7683 = vmatpush1.bf16.msra.mxu0 0
      %7684 = vmatprep.subr.bf16.mxu0 0
      %7685 = vmatpush1.bf16.msra.mxu0 0
      %7686 = vmatprep.subr.bf16.mxu0 0
      %7687 = vmatpush1.bf16.msra.mxu0 0
      %7688 = vmatprep.subr.bf16.mxu0 0
      %7689 = vmatpush1.bf16.msra.mxu0 0
      %7690 = vmatprep.subr.bf16.mxu0 0
      %7691 = vmatpush1.bf16.msra.mxu0 0
      %7692 = vmatprep.subr.bf16.mxu0 0
      %7693 = vmatpush1.bf16.msra.mxu0 0
      %7694 = vmatprep.subr.bf16.mxu0 0
      %7695 = vmatpush1.bf16.msra.mxu0 0
      %7696 = vmatprep.subr.bf16.mxu0 0
      %7697 = vmatpush1.bf16.msra.mxu0 0
      %7698 = vmatprep.subr.bf16.mxu0 0
      %7699 = vmatpush1.bf16.msra.mxu0 0
      %7700 = vmatprep.subr.bf16.mxu0 0
      %7701 = vmatpush1.bf16.msra.mxu0 0
      %7702 = vmatprep.subr.bf16.mxu0 0
      %7703 = vmatpush1.bf16.msra.mxu0 0
      %7704 = vmatprep.subr.bf16.mxu0 0
      %7705 = vmatpush1.bf16.msra.mxu0 0
      %7706 = vmatprep.subr.bf16.mxu0 0
      %7707 = vmatpush1.bf16.msra.mxu0 0
      %7708 = vmatprep.subr.bf16.mxu0 0
      %7709 = vmatpush1.bf16.msra.mxu0 0
      %7710 = vmatprep.mubr.bf16.mxu0 0
      %7711 = vmatmul.mubr.bf16.gmra.mrb[0].mxu0 %v7673
      %v7712 = vpop.f32.mrb[0].mxu0
      %v7713 = vadd.f32 0.0, %v7712
      %v7714 = vpop.f32.mrb[0].mxu0
      %v7715 = vpop.f32.mrb[0].mxu0
      %v7716 = vpop.f32.mrb[0].mxu0
      %7717 = vdwg.mxu0
      %7718 = vrot.lane.b32.xlu0 %v1080, 32
      %v7719 = vpop.permute.xlu0 %7718
      %v7721 = vsel %vm1826, %v7373, 0
      %v7724 = vsel %vm2022, %v7719, 0
      %7726 = vmatprep.subr.bf16.mxu0 0
      %7727 = vmatpush1.bf16.msra.mxu0 %v7724
      %7728 = vmatprep.subr.bf16.mxu0 0
      %7729 = vmatpush1.bf16.msra.mxu0 0
      %7730 = vmatprep.subr.bf16.mxu0 0
      %7731 = vmatpush1.bf16.msra.mxu0 0
      %7732 = vmatprep.subr.bf16.mxu0 0
      %7733 = vmatpush1.bf16.msra.mxu0 0
      %7734 = vmatprep.subr.bf16.mxu0 0
      %7735 = vmatpush1.bf16.msra.mxu0 0
      %7736 = vmatprep.subr.bf16.mxu0 0
      %7737 = vmatpush1.bf16.msra.mxu0 0
      %7738 = vmatprep.subr.bf16.mxu0 0
      %7739 = vmatpush1.bf16.msra.mxu0 0
      %7740 = vmatprep.subr.bf16.mxu0 0
      %7741 = vmatpush1.bf16.msra.mxu0 0
      %7742 = vmatprep.subr.bf16.mxu0 0
      %7743 = vmatpush1.bf16.msra.mxu0 0
      %7744 = vmatprep.subr.bf16.mxu0 0
      %7745 = vmatpush1.bf16.msra.mxu0 0
      %7746 = vmatprep.subr.bf16.mxu0 0
      %7747 = vmatpush1.bf16.msra.mxu0 0
      %7748 = vmatprep.subr.bf16.mxu0 0
      %7749 = vmatpush1.bf16.msra.mxu0 0
      %7750 = vmatprep.subr.bf16.mxu0 0
      %7751 = vmatpush1.bf16.msra.mxu0 0
      %7752 = vmatprep.subr.bf16.mxu0 0
      %7753 = vmatpush1.bf16.msra.mxu0 0
      %7754 = vmatprep.subr.bf16.mxu0 0
      %7755 = vmatpush1.bf16.msra.mxu0 0
      %7756 = vmatprep.subr.bf16.mxu0 0
      %7757 = vmatpush1.bf16.msra.mxu0 0
      %7758 = vmatprep.mubr.bf16.mxu0 0
      %7759 = vmatmul.mubr.bf16.gmra.mrb[0].mxu0 %v7721
      %v7760 = vpop.f32.mrb[0].mxu0
      %v7761 = vadd.f32 0.0, %v7760
      %v7762 = vpop.f32.mrb[0].mxu0
      %v7763 = vpop.f32.mrb[0].mxu0
      %v7764 = vpop.f32.mrb[0].mxu0
      %7765 = vdwg.mxu0
      %7766 = vrot.lane.b32.xlu0 %v1081, 32
      %v7767 = vpop.permute.xlu0 %7766
      %v7769 = vsel %vm1826, %v7374, 0
      %v7772 = vsel %vm2022, %v7767, 0
      %7774 = vmatprep.subr.bf16.mxu0 0
      %7775 = vmatpush1.bf16.msra.mxu0 %v7772
      %7776 = vmatprep.subr.bf16.mxu0 0
      %7777 = vmatpush1.bf16.msra.mxu0 0
      %7778 = vmatprep.subr.bf16.mxu0 0
      %7779 = vmatpush1.bf16.msra.mxu0 0
      %7780 = vmatprep.subr.bf16.mxu0 0
      %7781 = vmatpush1.bf16.msra.mxu0 0
      %7782 = vmatprep.subr.bf16.mxu0 0
      %7783 = vmatpush1.bf16.msra.mxu0 0
      %7784 = vmatprep.subr.bf16.mxu0 0
      %7785 = vmatpush1.bf16.msra.mxu0 0
      %7786 = vmatprep.subr.bf16.mxu0 0
      %7787 = vmatpush1.bf16.msra.mxu0 0
      %7788 = vmatprep.subr.bf16.mxu0 0
      %7789 = vmatpush1.bf16.msra.mxu0 0
      %7790 = vmatprep.subr.bf16.mxu0 0
      %7791 = vmatpush1.bf16.msra.mxu0 0
      %7792 = vmatprep.subr.bf16.mxu0 0
      %7793 = vmatpush1.bf16.msra.mxu0 0
      %7794 = vmatprep.subr.bf16.mxu0 0
      %7795 = vmatpush1.bf16.msra.mxu0 0
      %7796 = vmatprep.subr.bf16.mxu0 0
      %7797 = vmatpush1.bf16.msra.mxu0 0
      %7798 = vmatprep.subr.bf16.mxu0 0
      %7799 = vmatpush1.bf16.msra.mxu0 0
      %7800 = vmatprep.subr.bf16.mxu0 0
      %7801 = vmatpush1.bf16.msra.mxu0 0
      %7802 = vmatprep.subr.bf16.mxu0 0
      %7803 = vmatpush1.bf16.msra.mxu0 0
      %7804 = vmatprep.subr.bf16.mxu0 0
      %7805 = vmatpush1.bf16.msra.mxu0 0
      %7806 = vmatprep.mubr.bf16.mxu0 0
      %7807 = vmatmul.mubr.bf16.gmra.mrb[0].mxu0 %v7769
      %v7808 = vpop.f32.mrb[0].mxu0
      %v7809 = vadd.f32 0.0, %v7808
      %v7810 = vpop.f32.mrb[0].mxu0
      %v7811 = vpop.f32.mrb[0].mxu0
      %v7812 = vpop.f32.mrb[0].mxu0
      %7813 = vdwg.mxu0
      %7814 = vrot.lane.b32.xlu0 %v1082, 32
      %v7815 = vpop.permute.xlu0 %7814
      %v7817 = vsel %vm1826, %v7375, 0
      %v7820 = vsel %vm2022, %v7815, 0
      %7822 = vmatprep.subr.bf16.mxu0 0
      %7823 = vmatpush1.bf16.msra.mxu0 %v7820
      %7824 = vmatprep.subr.bf16.mxu0 0
      %7825 = vmatpush1.bf16.msra.mxu0 0
      %7826 = vmatprep.subr.bf16.mxu0 0
      %7827 = vmatpush1.bf16.msra.mxu0 0
      %7828 = vmatprep.subr.bf16.mxu0 0
      %7829 = vmatpush1.bf16.msra.mxu0 0
      %7830 = vmatprep.subr.bf16.mxu0 0
      %7831 = vmatpush1.bf16.msra.mxu0 0
      %7832 = vmatprep.subr.bf16.mxu0 0
      %7833 = vmatpush1.bf16.msra.mxu0 0
      %7834 = vmatprep.subr.bf16.mxu0 0
      %7835 = vmatpush1.bf16.msra.mxu0 0
      %7836 = vmatprep.subr.bf16.mxu0 0
      %7837 = vmatpush1.bf16.msra.mxu0 0
      %7838 = vmatprep.subr.bf16.mxu0 0
      %7839 = vmatpush1.bf16.msra.mxu0 0
      %7840 = vmatprep.subr.bf16.mxu0 0
      %7841 = vmatpush1.bf16.msra.mxu0 0
      %7842 = vmatprep.subr.bf16.mxu0 0
      %7843 = vmatpush1.bf16.msra.mxu0 0
      %7844 = vmatprep.subr.bf16.mxu0 0
      %7845 = vmatpush1.bf16.msra.mxu0 0
      %7846 = vmatprep.subr.bf16.mxu0 0
      %7847 = vmatpush1.bf16.msra.mxu0 0
      %7848 = vmatprep.subr.bf16.mxu0 0
      %7849 = vmatpush1.bf16.msra.mxu0 0
      %7850 = vmatprep.subr.bf16.mxu0 0
      %7851 = vmatpush1.bf16.msra.mxu0 0
      %7852 = vmatprep.subr.bf16.mxu0 0
      %7853 = vmatpush1.bf16.msra.mxu0 0
      %7854 = vmatprep.mubr.bf16.mxu0 0
      %7855 = vmatmul.mubr.bf16.gmra.mrb[0].mxu0 %v7817
      %v7856 = vpop.f32.mrb[0].mxu0
      %v7857 = vadd.f32 0.0, %v7856
      %v7858 = vpop.f32.mrb[0].mxu0
      %v7859 = vpop.f32.mrb[0].mxu0
      %v7860 = vpop.f32.mrb[0].mxu0
      %7861 = vdwg.mxu0
      %7862 = vrot.lane.b32.xlu0 %v1083, 32
      %v7863 = vpop.permute.xlu0 %7862
      %v7865 = vsel %vm1826, %v7376, 0
      %v7868 = vsel %vm2022, %v7863, 0
      %7870 = vmatprep.subr.bf16.mxu0 0
      %7871 = vmatpush1.bf16.msra.mxu0 %v7868
      %7872 = vmatprep.subr.bf16.mxu0 0
      %7873 = vmatpush1.bf16.msra.mxu0 0
      %7874 = vmatprep.subr.bf16.mxu0 0
      %7875 = vmatpush1.bf16.msra.mxu0 0
      %7876 = vmatprep.subr.bf16.mxu0 0
      %7877 = vmatpush1.bf16.msra.mxu0 0
      %7878 = vmatprep.subr.bf16.mxu0 0
      %7879 = vmatpush1.bf16.msra.mxu0 0
      %7880 = vmatprep.subr.bf16.mxu0 0
      %7881 = vmatpush1.bf16.msra.mxu0 0
      %7882 = vmatprep.subr.bf16.mxu0 0
      %7883 = vmatpush1.bf16.msra.mxu0 0
      %7884 = vmatprep.subr.bf16.mxu0 0
      %7885 = vmatpush1.bf16.msra.mxu0 0
      %7886 = vmatprep.subr.bf16.mxu0 0
      %7887 = vmatpush1.bf16.msra.mxu0 0
      %7888 = vmatprep.subr.bf16.mxu0 0
      %7889 = vmatpush1.bf16.msra.mxu0 0
      %7890 = vmatprep.subr.bf16.mxu0 0
      %7891 = vmatpush1.bf16.msra.mxu0 0
      %7892 = vmatprep.subr.bf16.mxu0 0
      %7893 = vmatpush1.bf16.msra.mxu0 0
      %7894 = vmatprep.subr.bf16.mxu0 0
      %7895 = vmatpush1.bf16.msra.mxu0 0
      %7896 = vmatprep.subr.bf16.mxu0 0
      %7897 = vmatpush1.bf16.msra.mxu0 0
      %7898 = vmatprep.subr.bf16.mxu0 0
      %7899 = vmatpush1.bf16.msra.mxu0 0
      %7900 = vmatprep.subr.bf16.mxu0 0
      %7901 = vmatpush1.bf16.msra.mxu0 0
      %7902 = vmatprep.mubr.bf16.mxu0 0
      %7903 = vmatmul.mubr.bf16.gmra.mrb[0].mxu0 %v7865
      %v7904 = vpop.f32.mrb[0].mxu0
      %v7905 = vadd.f32 0.0, %v7904
      %v7906 = vpop.f32.mrb[0].mxu0
      %v7907 = vpop.f32.mrb[0].mxu0
      %v7908 = vpop.f32.mrb[0].mxu0
      %7909 = vdwg.mxu0
      %7910 = vrot.lane.b32.xlu0 %v1084, 32
      %v7911 = vpop.permute.xlu0 %7910
      %v7913 = vsel %vm1826, %v7377, 0
      %v7916 = vsel %vm2022, %v7911, 0
      %7918 = vmatprep.subr.bf16.mxu0 0
      %7919 = vmatpush1.bf16.msra.mxu0 %v7916
      %7920 = vmatprep.subr.bf16.mxu0 0
      %7921 = vmatpush1.bf16.msra.mxu0 0
      %7922 = vmatprep.subr.bf16.mxu0 0
      %7923 = vmatpush1.bf16.msra.mxu0 0
      %7924 = vmatprep.subr.bf16.mxu0 0
      %7925 = vmatpush1.bf16.msra.mxu0 0
      %7926 = vmatprep.subr.bf16.mxu0 0
      %7927 = vmatpush1.bf16.msra.mxu0 0
      %7928 = vmatprep.subr.bf16.mxu0 0
      %7929 = vmatpush1.bf16.msra.mxu0 0
      %7930 = vmatprep.subr.bf16.mxu0 0
      %7931 = vmatpush1.bf16.msra.mxu0 0
      %7932 = vmatprep.subr.bf16.mxu0 0
      %7933 = vmatpush1.bf16.msra.mxu0 0
      %7934 = vmatprep.subr.bf16.mxu0 0
      %7935 = vmatpush1.bf16.msra.mxu0 0
      %7936 = vmatprep.subr.bf16.mxu0 0
      %7937 = vmatpush1.bf16.msra.mxu0 0
      %7938 = vmatprep.subr.bf16.mxu0 0
      %7939 = vmatpush1.bf16.msra.mxu0 0
      %7940 = vmatprep.subr.bf16.mxu0 0
      %7941 = vmatpush1.bf16.msra.mxu0 0
      %7942 = vmatprep.subr.bf16.mxu0 0
      %7943 = vmatpush1.bf16.msra.mxu0 0
      %7944 = vmatprep.subr.bf16.mxu0 0
      %7945 = vmatpush1.bf16.msra.mxu0 0
      %7946 = vmatprep.subr.bf16.mxu0 0
      %7947 = vmatpush1.bf16.msra.mxu0 0
      %7948 = vmatprep.subr.bf16.mxu0 0
      %7949 = vmatpush1.bf16.msra.mxu0 0
      %7950 = vmatprep.mubr.bf16.mxu0 0
      %7951 = vmatmul.mubr.bf16.gmra.mrb[0].mxu0 %v7913
      %v7952 = vpop.f32.mrb[0].mxu0
      %v7953 = vadd.f32 0.0, %v7952
      %v7954 = vpop.f32.mrb[0].mxu0
      %v7955 = vpop.f32.mrb[0].mxu0
      %v7956 = vpop.f32.mrb[0].mxu0
      %7957 = vdwg.mxu0
      %7958 = vrot.lane.b32.xlu0 %v1085, 32
      %v7959 = vpop.permute.xlu0 %7958
      %v7961 = vsel %vm1826, %v7378, 0
      %v7964 = vsel %vm2022, %v7959, 0
      %7966 = vmatprep.subr.bf16.mxu0 0
      %7967 = vmatpush1.bf16.msra.mxu0 %v7964
      %7968 = vmatprep.subr.bf16.mxu0 0
      %7969 = vmatpush1.bf16.msra.mxu0 0
      %7970 = vmatprep.subr.bf16.mxu0 0
      %7971 = vmatpush1.bf16.msra.mxu0 0
      %7972 = vmatprep.subr.bf16.mxu0 0
      %7973 = vmatpush1.bf16.msra.mxu0 0
      %7974 = vmatprep.subr.bf16.mxu0 0
      %7975 = vmatpush1.bf16.msra.mxu0 0
      %7976 = vmatprep.subr.bf16.mxu0 0
      %7977 = vmatpush1.bf16.msra.mxu0 0
      %7978 = vmatprep.subr.bf16.mxu0 0
      %7979 = vmatpush1.bf16.msra.mxu0 0
      %7980 = vmatprep.subr.bf16.mxu0 0
      %7981 = vmatpush1.bf16.msra.mxu0 0
      %7982 = vmatprep.subr.bf16.mxu0 0
      %7983 = vmatpush1.bf16.msra.mxu0 0
      %7984 = vmatprep.subr.bf16.mxu0 0
      %7985 = vmatpush1.bf16.msra.mxu0 0
      %7986 = vmatprep.subr.bf16.mxu0 0
      %7987 = vmatpush1.bf16.msra.mxu0 0
      %7988 = vmatprep.subr.bf16.mxu0 0
      %7989 = vmatpush1.bf16.msra.mxu0 0
      %7990 = vmatprep.subr.bf16.mxu0 0
      %7991 = vmatpush1.bf16.msra.mxu0 0
      %7992 = vmatprep.subr.bf16.mxu0 0
      %7993 = vmatpush1.bf16.msra.mxu0 0
      %7994 = vmatprep.subr.bf16.mxu0 0
      %7995 = vmatpush1.bf16.msra.mxu0 0
      %7996 = vmatprep.subr.bf16.mxu0 0
      %7997 = vmatpush1.bf16.msra.mxu0 0
      %7998 = vmatprep.mubr.bf16.mxu0 0
      %7999 = vmatmul.mubr.bf16.gmra.mrb[0].mxu0 %v7961
      %v8000 = vpop.f32.mrb[0].mxu0
      %v8001 = vadd.f32 0.0, %v8000
      %v8002 = vpop.f32.mrb[0].mxu0
      %v8003 = vpop.f32.mrb[0].mxu0
      %v8004 = vpop.f32.mrb[0].mxu0
      %8005 = vdwg.mxu0
      %8006 = vrot.lane.b32.xlu0 %v1086, 32
      %v8007 = vpop.permute.xlu0 %8006
      %v8009 = vsel %vm1826, %v7379, 0
      %v8012 = vsel %vm2022, %v8007, 0
      %8014 = vmatprep.subr.bf16.mxu0 0
      %8015 = vmatpush1.bf16.msra.mxu0 %v8012
      %8016 = vmatprep.subr.bf16.mxu0 0
      %8017 = vmatpush1.bf16.msra.mxu0 0
      %8018 = vmatprep.subr.bf16.mxu0 0
      %8019 = vmatpush1.bf16.msra.mxu0 0
      %8020 = vmatprep.subr.bf16.mxu0 0
      %8021 = vmatpush1.bf16.msra.mxu0 0
      %8022 = vmatprep.subr.bf16.mxu0 0
      %8023 = vmatpush1.bf16.msra.mxu0 0
      %8024 = vmatprep.subr.bf16.mxu0 0
      %8025 = vmatpush1.bf16.msra.mxu0 0
      %8026 = vmatprep.subr.bf16.mxu0 0
      %8027 = vmatpush1.bf16.msra.mxu0 0
      %8028 = vmatprep.subr.bf16.mxu0 0
      %8029 = vmatpush1.bf16.msra.mxu0 0
      %8030 = vmatprep.subr.bf16.mxu0 0
      %8031 = vmatpush1.bf16.msra.mxu0 0
      %8032 = vmatprep.subr.bf16.mxu0 0
      %8033 = vmatpush1.bf16.msra.mxu0 0
      %8034 = vmatprep.subr.bf16.mxu0 0
      %8035 = vmatpush1.bf16.msra.mxu0 0
      %8036 = vmatprep.subr.bf16.mxu0 0
      %8037 = vmatpush1.bf16.msra.mxu0 0
      %8038 = vmatprep.subr.bf16.mxu0 0
      %8039 = vmatpush1.bf16.msra.mxu0 0
      %8040 = vmatprep.subr.bf16.mxu0 0
      %8041 = vmatpush1.bf16.msra.mxu0 0
      %8042 = vmatprep.subr.bf16.mxu0 0
      %8043 = vmatpush1.bf16.msra.mxu0 0
      %8044 = vmatprep.subr.bf16.mxu0 0
      %8045 = vmatpush1.bf16.msra.mxu0 0
      %8046 = vmatprep.mubr.bf16.mxu0 0
      %8047 = vmatmul.mubr.bf16.gmra.mrb[0].mxu0 %v8009
      %v8048 = vpop.f32.mrb[0].mxu0
      %v8049 = vadd.f32 0.0, %v8048
      %v8050 = vpop.f32.mrb[0].mxu0
      %v8051 = vpop.f32.mrb[0].mxu0
      %v8052 = vpop.f32.mrb[0].mxu0
      %8053 = vdwg.mxu0
      %8054 = vrot.lane.b32.xlu0 %v1087, 32
      %v8055 = vpop.permute.xlu0 %8054
      %v8057 = vsel %vm1826, %v7380, 0
      %v8060 = vsel %vm2022, %v8055, 0
      %8062 = vmatprep.subr.bf16.mxu0 0
      %8063 = vmatpush1.bf16.msra.mxu0 %v8060
      %8064 = vmatprep.subr.bf16.mxu0 0
      %8065 = vmatpush1.bf16.msra.mxu0 0
      %8066 = vmatprep.subr.bf16.mxu0 0
      %8067 = vmatpush1.bf16.msra.mxu0 0
      %8068 = vmatprep.subr.bf16.mxu0 0
      %8069 = vmatpush1.bf16.msra.mxu0 0
      %8070 = vmatprep.subr.bf16.mxu0 0
      %8071 = vmatpush1.bf16.msra.mxu0 0
      %8072 = vmatprep.subr.bf16.mxu0 0
      %8073 = vmatpush1.bf16.msra.mxu0 0
      %8074 = vmatprep.subr.bf16.mxu0 0
      %8075 = vmatpush1.bf16.msra.mxu0 0
      %8076 = vmatprep.subr.bf16.mxu0 0
      %8077 = vmatpush1.bf16.msra.mxu0 0
      %8078 = vmatprep.subr.bf16.mxu0 0
      %8079 = vmatpush1.bf16.msra.mxu0 0
      %8080 = vmatprep.subr.bf16.mxu0 0
      %8081 = vmatpush1.bf16.msra.mxu0 0
      %8082 = vmatprep.subr.bf16.mxu0 0
      %8083 = vmatpush1.bf16.msra.mxu0 0
      %8084 = vmatprep.subr.bf16.mxu0 0
      %8085 = vmatpush1.bf16.msra.mxu0 0
      %8086 = vmatprep.subr.bf16.mxu0 0
      %8087 = vmatpush1.bf16.msra.mxu0 0
      %8088 = vmatprep.subr.bf16.mxu0 0
      %8089 = vmatpush1.bf16.msra.mxu0 0
      %8090 = vmatprep.subr.bf16.mxu0 0
      %8091 = vmatpush1.bf16.msra.mxu0 0
      %8092 = vmatprep.subr.bf16.mxu0 0
      %8093 = vmatpush1.bf16.msra.mxu0 0
      %8094 = vmatprep.mubr.bf16.mxu0 0
      %8095 = vmatmul.mubr.bf16.gmra.mrb[0].mxu0 %v8057
      %v8096 = vpop.f32.mrb[0].mxu0
      %v8097 = vadd.f32 0.0, %v8096
      %v8098 = vpop.f32.mrb[0].mxu0
      %v8099 = vpop.f32.mrb[0].mxu0
      %v8100 = vpop.f32.mrb[0].mxu0
      %8101 = vdwg.mxu0
      %8102 = vrot.lane.b32.xlu0 %v1088, 32
      %v8103 = vpop.permute.xlu0 %8102
      %v8105 = vsel %vm1826, %v7381, 0
      %v8108 = vsel %vm2022, %v8103, 0
      %8110 = vmatprep.subr.bf16.mxu0 0
      %8111 = vmatpush1.bf16.msra.mxu0 %v8108
      %8112 = vmatprep.subr.bf16.mxu0 0
      %8113 = vmatpush1.bf16.msra.mxu0 0
      %8114 = vmatprep.subr.bf16.mxu0 0
      %8115 = vmatpush1.bf16.msra.mxu0 0
      %8116 = vmatprep.subr.bf16.mxu0 0
      %8117 = vmatpush1.bf16.msra.mxu0 0
      %8118 = vmatprep.subr.bf16.mxu0 0
      %8119 = vmatpush1.bf16.msra.mxu0 0
      %8120 = vmatprep.subr.bf16.mxu0 0
      %8121 = vmatpush1.bf16.msra.mxu0 0
      %8122 = vmatprep.subr.bf16.mxu0 0
      %8123 = vmatpush1.bf16.msra.mxu0 0
      %8124 = vmatprep.subr.bf16.mxu0 0
      %8125 = vmatpush1.bf16.msra.mxu0 0
      %8126 = vmatprep.subr.bf16.mxu0 0
      %8127 = vmatpush1.bf16.msra.mxu0 0
      %8128 = vmatprep.subr.bf16.mxu0 0
      %8129 = vmatpush1.bf16.msra.mxu0 0
      %8130 = vmatprep.subr.bf16.mxu0 0
      %8131 = vmatpush1.bf16.msra.mxu0 0
      %8132 = vmatprep.subr.bf16.mxu0 0
      %8133 = vmatpush1.bf16.msra.mxu0 0
      %8134 = vmatprep.subr.bf16.mxu0 0
      %8135 = vmatpush1.bf16.msra.mxu0 0
      %8136 = vmatprep.subr.bf16.mxu0 0
      %8137 = vmatpush1.bf16.msra.mxu0 0
      %8138 = vmatprep.subr.bf16.mxu0 0
      %8139 = vmatpush1.bf16.msra.mxu0 0
      %8140 = vmatprep.subr.bf16.mxu0 0
      %8141 = vmatpush1.bf16.msra.mxu0 0
      %8142 = vmatprep.mubr.bf16.mxu0 0
      %8143 = vmatmul.mubr.bf16.gmra.mrb[0].mxu0 %v8105
      %v8144 = vpop.f32.mrb[0].mxu0
      %v8145 = vadd.f32 0.0, %v8144
      %v8146 = vpop.f32.mrb[0].mxu0
      %v8147 = vpop.f32.mrb[0].mxu0
      %v8148 = vpop.f32.mrb[0].mxu0
      %8149 = vdwg.mxu0
      %v8150 = vpack.c.bf16 %v7473, %v7425
      %v8151 = vpack.c.bf16 %v7569, %v7521
      %v8152 = vpack.c.bf16 %v7665, %v7617
      %v8153 = vpack.c.bf16 %v7761, %v7713
      %v8154 = vpack.c.bf16 %v7857, %v7809
      %v8155 = vpack.c.bf16 %v7953, %v7905
      %v8156 = vpack.c.bf16 %v8049, %v8001
      %v8157 = vpack.c.bf16 %v8145, %v8097
      %8166 = vrot.lane.b32.xlu0 %v8150, 96
      %v8167 = vpop.permute.xlu0 %8166
      %8168 = vrot.lane.b32.xlu0 %v8151, 96
      %v8169 = vpop.permute.xlu0 %8168
      %8170 = vrot.lane.b32.xlu0 %v8152, 96
      %v8171 = vpop.permute.xlu0 %8170
      %8172 = vrot.lane.b32.xlu0 %v8153, 96
      %v8173 = vpop.permute.xlu0 %8172
      %8174 = vrot.lane.b32.xlu0 %v8154, 96
      %v8175 = vpop.permute.xlu0 %8174
      %8176 = vrot.lane.b32.xlu0 %v8155, 96
      %v8177 = vpop.permute.xlu0 %8176
      %8178 = vrot.lane.b32.xlu0 %v8156, 96
      %v8179 = vpop.permute.xlu0 %8178
      %8180 = vrot.lane.b32.xlu0 %v8157, 96
      %v8181 = vpop.permute.xlu0 %8180
      %vm8190 = vcmask 1048320
      %8191 = vst.msk [vmem:[#allocation2] sm:$0xff] %vm8190, %v8167
      %8192 = vst.msk [vmem:[#allocation2 + $0x8] sm:$0xff] %vm8190, %v8169
      %8193 = vst.msk [vmem:[#allocation2 + $0x10] sm:$0xff] %vm8190, %v8171
      %8194 = vst.msk [vmem:[#allocation2 + $0x18] sm:$0xff] %vm8190, %v8173
      %8195 = vst.msk [vmem:[#allocation2 + $0x20] sm:$0xff] %vm8190, %v8175
      %8196 = vst.msk [vmem:[#allocation2 + $0x28] sm:$0xff] %vm8190, %v8177
      %8197 = vst.msk [vmem:[#allocation2 + $0x30] sm:$0xff] %vm8190, %v8179
      %8198 = vst.msk [vmem:[#allocation2 + $0x38] sm:$0xff] %vm8190, %v8181
      %v8199 = vld [vmem:[#allocation2] sm:$0xff]
      %v8200 = vld [vmem:[#allocation2 + $0x8] sm:$0xff]
      %v8201 = vld [vmem:[#allocation2 + $0x10] sm:$0xff]
      %v8202 = vld [vmem:[#allocation2 + $0x18] sm:$0xff]
      %v8203 = vld [vmem:[#allocation2 + $0x20] sm:$0xff]
      %v8204 = vld [vmem:[#allocation2 + $0x28] sm:$0xff]
      %v8205 = vld [vmem:[#allocation2 + $0x30] sm:$0xff]
      %v8206 = vld [vmem:[#allocation2 + $0x38] sm:$0xff]
      %v8207 = vld [vmem:[%s3] sm:$0xf]
      %v8208 = vld [vmem:[%s3 + $0x4] sm:$0xf]
      %v8209 = vld [vmem:[%s3 + $0x8] sm:$0xf]
      %v8210 = vld [vmem:[%s3 + $0xc] sm:$0xf]
      %v8211 = vld [vmem:[%s3 + $0x10] sm:$0xf]
      %v8212 = vld [vmem:[%s3 + $0x14] sm:$0xf]
      %v8213 = vld [vmem:[%s3 + $0x18] sm:$0xf]
      %v8214 = vld [vmem:[%s3 + $0x1c] sm:$0xf]
      %v8215 = vld [vmem:[%s3 + $0x20] sm:$0xf]
      %v8216 = vld [vmem:[%s3 + $0x24] sm:$0xf]
      %v8217 = vld [vmem:[%s3 + $0x28] sm:$0xf]
      %v8218 = vld [vmem:[%s3 + $0x2c] sm:$0xf]
      %v8219 = vld [vmem:[%s3 + $0x30] sm:$0xf]
      %v8220 = vld [vmem:[%s3 + $0x34] sm:$0xf]
      %v8221 = vld [vmem:[%s3 + $0x38] sm:$0xf]
      %v8222 = vld [vmem:[%s3 + $0x3c] sm:$0xf]
      %v8239 = vunpack.c.l.b16 %v8207
      %v8240 = vunpack.c.l.b16 %v8208
      %v8241 = vunpack.c.l.b16 %v8209
      %v8242 = vunpack.c.l.b16 %v8210
      %v8243 = vunpack.c.l.b16 %v8211
      %v8244 = vunpack.c.l.b16 %v8212
      %v8245 = vunpack.c.l.b16 %v8213
      %v8246 = vunpack.c.l.b16 %v8214
      %v8247 = vunpack.c.l.b16 %v8215
      %v8248 = vunpack.c.l.b16 %v8216
      %v8249 = vunpack.c.l.b16 %v8217
      %v8250 = vunpack.c.l.b16 %v8218
      %v8251 = vunpack.c.l.b16 %v8219
      %v8252 = vunpack.c.l.b16 %v8220
      %v8253 = vunpack.c.l.b16 %v8221
      %v8254 = vunpack.c.l.b16 %v8222
      %v8255 = vpack.c.b16 %v8240, %v8239
      %v8256 = vpack.c.b16 %v8242, %v8241
      %v8257 = vpack.c.b16 %v8244, %v8243
      %v8258 = vpack.c.b16 %v8246, %v8245
      %v8259 = vpack.c.b16 %v8248, %v8247
      %v8260 = vpack.c.b16 %v8250, %v8249
      %v8261 = vpack.c.b16 %v8252, %v8251
      %v8262 = vpack.c.b16 %v8254, %v8253
      %8271 = vmatprep.subr.bf16.mxu0 0
      %8272 = vmatpush1.bf16.msra.mxu0 %v8255
      %8273 = vmatprep.subr.bf16.mxu0 0
      %8274 = vmatpush1.bf16.msra.mxu0 %v8256
      %8275 = vmatprep.subr.bf16.mxu0 0
      %8276 = vmatpush1.bf16.msra.mxu0 %v8257
      %8277 = vmatprep.subr.bf16.mxu0 0
      %8278 = vmatpush1.bf16.msra.mxu0 %v8258
      %8279 = vmatprep.subr.bf16.mxu0 0
      %8280 = vmatpush1.bf16.msra.mxu0 %v8259
      %8281 = vmatprep.subr.bf16.mxu0 0
      %8282 = vmatpush1.bf16.msra.mxu0 %v8260
      %8283 = vmatprep.subr.bf16.mxu0 0
      %8284 = vmatpush1.bf16.msra.mxu0 %v8261
      %8285 = vmatprep.subr.bf16.mxu0 0
      %8286 = vmatpush1.bf16.msra.mxu0 %v8262
      %8287 = vmatprep.subr.bf16.mxu0 0
      %8288 = vmatpush1.bf16.msra.mxu0 0
      %8289 = vmatprep.subr.bf16.mxu0 0
      %8290 = vmatpush1.bf16.msra.mxu0 0
      %8291 = vmatprep.subr.bf16.mxu0 0
      %8292 = vmatpush1.bf16.msra.mxu0 0
      %8293 = vmatprep.subr.bf16.mxu0 0
      %8294 = vmatpush1.bf16.msra.mxu0 0
      %8295 = vmatprep.subr.bf16.mxu0 0
      %8296 = vmatpush1.bf16.msra.mxu0 0
      %8297 = vmatprep.subr.bf16.mxu0 0
      %8298 = vmatpush1.bf16.msra.mxu0 0
      %8299 = vmatprep.subr.bf16.mxu0 0
      %8300 = vmatpush1.bf16.msra.mxu0 0
      %8301 = vmatprep.subr.bf16.mxu0 0
      %8302 = vmatpush1.bf16.msra.mxu0 0
      %8303 = vmatprep.mubr.bf16.mxu0 0
      %8304 = vmatmul.mubr.bf16.gmra.mrb[0].mxu0 %v8199
      %v8305 = vpop.f32.mrb[0].mxu0
      %v8306 = vadd.f32 0.0, %v8305
      %v8307 = vpop.f32.mrb[0].mxu0
      %v8308 = vpop.f32.mrb[0].mxu0
      %v8309 = vadd.f32 0.0, %v8308
      %v8310 = vpop.f32.mrb[0].mxu0
      %8311 = vmatprep.mubr.bf16.mxu0 0
      %8312 = vmatmul.mubr.bf16.gmra.mrb[0].mxu0 %v8200
      %v8313 = vpop.f32.mrb[0].mxu0
      %v8314 = vadd.f32 0.0, %v8313
      %v8315 = vpop.f32.mrb[0].mxu0
      %v8316 = vpop.f32.mrb[0].mxu0
      %v8317 = vadd.f32 0.0, %v8316
      %v8318 = vpop.f32.mrb[0].mxu0
      %8319 = vmatprep.mubr.bf16.mxu0 0
      %8320 = vmatmul.mubr.bf16.gmra.mrb[0].mxu0 %v8201
      %v8321 = vpop.f32.mrb[0].mxu0
      %v8322 = vadd.f32 0.0, %v8321
      %v8323 = vpop.f32.mrb[0].mxu0
      %v8324 = vpop.f32.mrb[0].mxu0
      %v8325 = vadd.f32 0.0, %v8324
      %v8326 = vpop.f32.mrb[0].mxu0
      %8327 = vmatprep.mubr.bf16.mxu0 0
      %8328 = vmatmul.mubr.bf16.gmra.mrb[0].mxu0 %v8202
      %v8329 = vpop.f32.mrb[0].mxu0
      %v8330 = vadd.f32 0.0, %v8329
      %v8331 = vpop.f32.mrb[0].mxu0
      %v8332 = vpop.f32.mrb[0].mxu0
      %v8333 = vadd.f32 0.0, %v8332
      %v8334 = vpop.f32.mrb[0].mxu0
      %8335 = vmatprep.mubr.bf16.mxu0 0
      %8336 = vmatmul.mubr.bf16.gmra.mrb[0].mxu0 %v8203
      %v8337 = vpop.f32.mrb[0].mxu0
      %v8338 = vadd.f32 0.0, %v8337
      %v8339 = vpop.f32.mrb[0].mxu0
      %v8340 = vpop.f32.mrb[0].mxu0
      %v8341 = vadd.f32 0.0, %v8340
      %v8342 = vpop.f32.mrb[0].mxu0
      %8343 = vmatprep.mubr.bf16.mxu0 0
      %8344 = vmatmul.mubr.bf16.gmra.mrb[0].mxu0 %v8204
      %v8345 = vpop.f32.mrb[0].mxu0
      %v8346 = vadd.f32 0.0, %v8345
      %v8347 = vpop.f32.mrb[0].mxu0
      %v8348 = vpop.f32.mrb[0].mxu0
      %v8349 = vadd.f32 0.0, %v8348
      %v8350 = vpop.f32.mrb[0].mxu0
      %8351 = vmatprep.mubr.bf16.mxu0 0
      %8352 = vmatmul.mubr.bf16.gmra.mrb[0].mxu0 %v8205
      %v8353 = vpop.f32.mrb[0].mxu0
      %v8354 = vadd.f32 0.0, %v8353
      %v8355 = vpop.f32.mrb[0].mxu0
      %v8356 = vpop.f32.mrb[0].mxu0
      %v8357 = vadd.f32 0.0, %v8356
      %v8358 = vpop.f32.mrb[0].mxu0
      %8359 = vmatprep.mubr.bf16.mxu0 0
      %8360 = vmatmul.mubr.bf16.gmra.mrb[0].mxu0 %v8206
      %v8361 = vpop.f32.mrb[0].mxu0
      %v8362 = vadd.f32 0.0, %v8361
      %v8363 = vpop.f32.mrb[0].mxu0
      %v8364 = vpop.f32.mrb[0].mxu0
      %v8365 = vadd.f32 0.0, %v8364
      %v8366 = vpop.f32.mrb[0].mxu0
      %8367 = vdwg.mxu0
      %v8368 = vadd.f32 %v353, %v8306
      %v8369 = vadd.f32 %v354, %v8309
      %v8370 = vadd.f32 %v355, %v8314
      %v8371 = vadd.f32 %v356, %v8317
      %v8372 = vadd.f32 %v357, %v8322
      %v8373 = vadd.f32 %v358, %v8325
      %v8374 = vadd.f32 %v359, %v8330
      %v8375 = vadd.f32 %v360, %v8333
      %v8376 = vadd.f32 %v361, %v8338
      %v8377 = vadd.f32 %v362, %v8341
      %v8378 = vadd.f32 %v363, %v8346
      %v8379 = vadd.f32 %v364, %v8349
      %v8380 = vadd.f32 %v365, %v8354
      %v8381 = vadd.f32 %v366, %v8357
      %v8382 = vadd.f32 %v367, %v8362
      %v8383 = vadd.f32 %v368, %v8365
      %v8384 = vld [vmem:[%s4] sm:$0x1]
      %v8386 = vlaneseq
      %v8387 = vshrl.u32 %v8386, 7
      %v8388 = vsub.s32 0, %v8387
      %v8389 = vrot.slane %v8384, %v8388
      %v8391 = vadd.f32 %v8368, %v8389
      %v8392 = vadd.f32 %v8369, %v8389
      %v8393 = vadd.f32 %v8370, %v8389
      %v8394 = vadd.f32 %v8371, %v8389
      %v8395 = vadd.f32 %v8372, %v8389
      %v8396 = vadd.f32 %v8373, %v8389
      %v8397 = vadd.f32 %v8374, %v8389
      %v8398 = vadd.f32 %v8375, %v8389
      %v8399 = vadd.f32 %v8376, %v8389
      %v8400 = vadd.f32 %v8377, %v8389
      %v8401 = vadd.f32 %v8378, %v8389
      %v8402 = vadd.f32 %v8379, %v8389
      %v8403 = vadd.f32 %v8380, %v8389
      %v8404 = vadd.f32 %v8381, %v8389
      %v8405 = vadd.f32 %v8382, %v8389
      %v8406 = vadd.f32 %v8383, %v8389
      %8407 = vadd.xlane.f32.xlu0 %v8391
      %v8408 = vpop.xlane.xlu0 %8407
      %8409 = vadd.xlane.f32.xlu0 %v8392
      %v8410 = vpop.xlane.xlu0 %8409
      %8411 = vadd.xlane.f32.xlu0 %v8393
      %v8412 = vpop.xlane.xlu0 %8411
      %8413 = vadd.xlane.f32.xlu0 %v8394
      %v8414 = vpop.xlane.xlu0 %8413
      %8415 = vadd.xlane.f32.xlu0 %v8395
      %v8416 = vpop.xlane.xlu0 %8415
      %8417 = vadd.xlane.f32.xlu0 %v8396
      %v8418 = vpop.xlane.xlu0 %8417
      %8419 = vadd.xlane.f32.xlu0 %v8397
      %v8420 = vpop.xlane.xlu0 %8419
      %8421 = vadd.xlane.f32.xlu0 %v8398
      %v8422 = vpop.xlane.xlu0 %8421
      %8423 = vadd.xlane.f32.xlu0 %v8399
      %v8424 = vpop.xlane.xlu0 %8423
      %8425 = vadd.xlane.f32.xlu0 %v8400
      %v8426 = vpop.xlane.xlu0 %8425
      %8427 = vadd.xlane.f32.xlu0 %v8401
      %v8428 = vpop.xlane.xlu0 %8427
      %8429 = vadd.xlane.f32.xlu0 %v8402
      %v8430 = vpop.xlane.xlu0 %8429
      %8431 = vadd.xlane.f32.xlu0 %v8403
      %v8432 = vpop.xlane.xlu0 %8431
      %8433 = vadd.xlane.f32.xlu0 %v8404
      %v8434 = vpop.xlane.xlu0 %8433
      %8435 = vadd.xlane.f32.xlu0 %v8405
      %v8436 = vpop.xlane.xlu0 %8435
      %8437 = vadd.xlane.f32.xlu0 %v8406
      %v8438 = vpop.xlane.xlu0 %8437
      %v8439 = vmul.f32 %v8408, %v401
      %v8440 = vmul.f32 %v8410, %v401
      %v8441 = vmul.f32 %v8412, %v401
      %v8442 = vmul.f32 %v8414, %v401
      %v8443 = vmul.f32 %v8416, %v401
      %v8444 = vmul.f32 %v8418, %v401
      %v8445 = vmul.f32 %v8420, %v401
      %v8446 = vmul.f32 %v8422, %v401
      %v8447 = vmul.f32 %v8424, %v401
      %v8448 = vmul.f32 %v8426, %v401
      %v8449 = vmul.f32 %v8428, %v401
      %v8450 = vmul.f32 %v8430, %v401
      %v8451 = vmul.f32 %v8432, %v401
      %v8452 = vmul.f32 %v8434, %v401
      %v8453 = vmul.f32 %v8436, %v401
      %v8454 = vmul.f32 %v8438, %v401
      %v8455 = vsub.f32 %v8391, %v8439
      %v8456 = vsub.f32 %v8392, %v8440
      %v8457 = vsub.f32 %v8393, %v8441
      %v8458 = vsub.f32 %v8394, %v8442
      %v8459 = vsub.f32 %v8395, %v8443
      %v8460 = vsub.f32 %v8396, %v8444
      %v8461 = vsub.f32 %v8397, %v8445
      %v8462 = vsub.f32 %v8398, %v8446
      %v8463 = vsub.f32 %v8399, %v8447
      %v8464 = vsub.f32 %v8400, %v8448
      %v8465 = vsub.f32 %v8401, %v8449
      %v8466 = vsub.f32 %v8402, %v8450
      %v8467 = vsub.f32 %v8403, %v8451
      %v8468 = vsub.f32 %v8404, %v8452
      %v8469 = vsub.f32 %v8405, %v8453
      %v8470 = vsub.f32 %v8406, %v8454
      %v8471 = vmul.f32 %v8455, %v8455
      %v8472 = vmul.f32 %v8456, %v8456
      %v8473 = vmul.f32 %v8457, %v8457
      %v8474 = vmul.f32 %v8458, %v8458
      %v8475 = vmul.f32 %v8459, %v8459
      %v8476 = vmul.f32 %v8460, %v8460
      %v8477 = vmul.f32 %v8461, %v8461
      %v8478 = vmul.f32 %v8462, %v8462
      %v8479 = vmul.f32 %v8463, %v8463
      %v8480 = vmul.f32 %v8464, %v8464
      %v8481 = vmul.f32 %v8465, %v8465
      %v8482 = vmul.f32 %v8466, %v8466
      %v8483 = vmul.f32 %v8467, %v8467
      %v8484 = vmul.f32 %v8468, %v8468
      %v8485 = vmul.f32 %v8469, %v8469
      %v8486 = vmul.f32 %v8470, %v8470
      %8487 = vadd.xlane.f32.xlu0 %v8471
      %v8488 = vpop.xlane.xlu0 %8487
      %8489 = vadd.xlane.f32.xlu0 %v8472
      %v8490 = vpop.xlane.xlu0 %8489
      %8491 = vadd.xlane.f32.xlu0 %v8473
      %v8492 = vpop.xlane.xlu0 %8491
      %8493 = vadd.xlane.f32.xlu0 %v8474
      %v8494 = vpop.xlane.xlu0 %8493
      %8495 = vadd.xlane.f32.xlu0 %v8475
      %v8496 = vpop.xlane.xlu0 %8495
      %8497 = vadd.xlane.f32.xlu0 %v8476
      %v8498 = vpop.xlane.xlu0 %8497
      %8499 = vadd.xlane.f32.xlu0 %v8477
      %v8500 = vpop.xlane.xlu0 %8499
      %8501 = vadd.xlane.f32.xlu0 %v8478
      %v8502 = vpop.xlane.xlu0 %8501
      %8503 = vadd.xlane.f32.xlu0 %v8479
      %v8504 = vpop.xlane.xlu0 %8503
      %8505 = vadd.xlane.f32.xlu0 %v8480
      %v8506 = vpop.xlane.xlu0 %8505
      %8507 = vadd.xlane.f32.xlu0 %v8481
      %v8508 = vpop.xlane.xlu0 %8507
      %8509 = vadd.xlane.f32.xlu0 %v8482
      %v8510 = vpop.xlane.xlu0 %8509
      %8511 = vadd.xlane.f32.xlu0 %v8483
      %v8512 = vpop.xlane.xlu0 %8511
      %8513 = vadd.xlane.f32.xlu0 %v8484
      %v8514 = vpop.xlane.xlu0 %8513
      %8515 = vadd.xlane.f32.xlu0 %v8485
      %v8516 = vpop.xlane.xlu0 %8515
      %8517 = vadd.xlane.f32.xlu0 %v8486
      %v8518 = vpop.xlane.xlu0 %8517
      %v8519 = vmul.f32 %v8488, %v401
      %v8520 = vmul.f32 %v8490, %v401
      %v8521 = vmul.f32 %v8492, %v401
      %v8522 = vmul.f32 %v8494, %v401
      %v8523 = vmul.f32 %v8496, %v401
      %v8524 = vmul.f32 %v8498, %v401
      %v8525 = vmul.f32 %v8500, %v401
      %v8526 = vmul.f32 %v8502, %v401
      %v8527 = vmul.f32 %v8504, %v401
      %v8528 = vmul.f32 %v8506, %v401
      %v8529 = vmul.f32 %v8508, %v401
      %v8530 = vmul.f32 %v8510, %v401
      %v8531 = vmul.f32 %v8512, %v401
      %v8532 = vmul.f32 %v8514, %v401
      %v8533 = vmul.f32 %v8516, %v401
      %v8534 = vmul.f32 %v8518, %v401
      %v8535 = vadd.f32 %v8519, 1e-06
      %v8536 = vadd.f32 %v8520, 1e-06
      %v8537 = vadd.f32 %v8521, 1e-06
      %v8538 = vadd.f32 %v8522, 1e-06
      %v8539 = vadd.f32 %v8523, 1e-06
      %v8540 = vadd.f32 %v8524, 1e-06
      %v8541 = vadd.f32 %v8525, 1e-06
      %v8542 = vadd.f32 %v8526, 1e-06
      %v8543 = vadd.f32 %v8527, 1e-06
      %v8544 = vadd.f32 %v8528, 1e-06
      %v8545 = vadd.f32 %v8529, 1e-06
      %v8546 = vadd.f32 %v8530, 1e-06
      %v8547 = vadd.f32 %v8531, 1e-06
      %v8548 = vadd.f32 %v8532, 1e-06
      %v8549 = vadd.f32 %v8533, 1e-06
      %v8550 = vadd.f32 %v8534, 1e-06
      %v8551 = vrsqrt.pop %v8535
      %v8552 = vrsqrt.pop %v8536
      %v8553 = vrsqrt.pop %v8537
      %v8554 = vrsqrt.pop %v8538
      %v8555 = vrsqrt.pop %v8539
      %v8556 = vrsqrt.pop %v8540
      %v8557 = vrsqrt.pop %v8541
      %v8558 = vrsqrt.pop %v8542
      %v8559 = vrsqrt.pop %v8543
      %v8560 = vrsqrt.pop %v8544
      %v8561 = vrsqrt.pop %v8545
      %v8562 = vrsqrt.pop %v8546
      %v8563 = vrsqrt.pop %v8547
      %v8564 = vrsqrt.pop %v8548
      %v8565 = vrsqrt.pop %v8549
      %v8566 = vrsqrt.pop %v8550
      %v8567 = vmul.f32 %v8455, %v8551
      %v8568 = vmul.f32 %v8456, %v8552
      %v8569 = vmul.f32 %v8457, %v8553
      %v8570 = vmul.f32 %v8458, %v8554
      %v8571 = vmul.f32 %v8459, %v8555
      %v8572 = vmul.f32 %v8460, %v8556
      %v8573 = vmul.f32 %v8461, %v8557
      %v8574 = vmul.f32 %v8462, %v8558
      %v8575 = vmul.f32 %v8463, %v8559
      %v8576 = vmul.f32 %v8464, %v8560
      %v8577 = vmul.f32 %v8465, %v8561
      %v8578 = vmul.f32 %v8466, %v8562
      %v8579 = vmul.f32 %v8467, %v8563
      %v8580 = vmul.f32 %v8468, %v8564
      %v8581 = vmul.f32 %v8469, %v8565
      %v8582 = vmul.f32 %v8470, %v8566
      %v8583 = vpack.c.bf16 %v8568, %v8567
      %v8584 = vpack.c.bf16 %v8570, %v8569
      %v8585 = vpack.c.bf16 %v8572, %v8571
      %v8586 = vpack.c.bf16 %v8574, %v8573
      %v8587 = vpack.c.bf16 %v8576, %v8575
      %v8588 = vpack.c.bf16 %v8578, %v8577
      %v8589 = vpack.c.bf16 %v8580, %v8579
      %v8590 = vpack.c.bf16 %v8582, %v8581
      %v8591 = vld [vmem:[%s5] sm:$0xff]
      %v8592 = vld [vmem:[%s5 + $0x8] sm:$0xff]
      %v8593 = vld [vmem:[%s5 + $0x10] sm:$0xff]
      %v8594 = vld [vmem:[%s5 + $0x18] sm:$0xff]
      %v8595 = vld [vmem:[%s5 + $0x20] sm:$0xff]
      %v8596 = vld [vmem:[%s5 + $0x28] sm:$0xff]
      %v8597 = vld [vmem:[%s5 + $0x30] sm:$0xff]
      %v8598 = vld [vmem:[%s5 + $0x38] sm:$0xff]
      %v8599 = vld [vmem:[%s5 + $0x40] sm:$0xff]
      %v8600 = vld [vmem:[%s5 + $0x48] sm:$0xff]
      %v8601 = vld [vmem:[%s5 + $0x50] sm:$0xff]
      %v8602 = vld [vmem:[%s5 + $0x58] sm:$0xff]
      %v8603 = vld [vmem:[%s5 + $0x60] sm:$0xff]
      %v8604 = vld [vmem:[%s5 + $0x68] sm:$0xff]
      %v8605 = vld [vmem:[%s5 + $0x70] sm:$0xff]
      %v8606 = vld [vmem:[%s5 + $0x78] sm:$0xff]
      %v8607 = vld [vmem:[%s5 + $0x80] sm:$0xff]
      %v8608 = vld [vmem:[%s5 + $0x88] sm:$0xff]
      %v8609 = vld [vmem:[%s5 + $0x90] sm:$0xff]
      %v8610 = vld [vmem:[%s5 + $0x98] sm:$0xff]
      %v8611 = vld [vmem:[%s5 + $0xa0] sm:$0xff]
      %v8612 = vld [vmem:[%s5 + $0xa8] sm:$0xff]
      %v8613 = vld [vmem:[%s5 + $0xb0] sm:$0xff]
      %v8614 = vld [vmem:[%s5 + $0xb8] sm:$0xff]
      %v8615 = vld [vmem:[%s5 + $0xc0] sm:$0xff]
      %v8616 = vld [vmem:[%s5 + $0xc8] sm:$0xff]
      %v8617 = vld [vmem:[%s5 + $0xd0] sm:$0xff]
      %v8618 = vld [vmem:[%s5 + $0xd8] sm:$0xff]
      %v8619 = vld [vmem:[%s5 + $0xe0] sm:$0xff]
      %v8620 = vld [vmem:[%s5 + $0xe8] sm:$0xff]
      %v8621 = vld [vmem:[%s5 + $0xf0] sm:$0xff]
      %v8622 = vld [vmem:[%s5 + $0xf8] sm:$0xff]
      %v8623 = vld [vmem:[%s6] sm:$0xf]
      %v8625 = vlaneseq
      %v8626 = vshrl.u32 %v8625, 7
      %v8627 = vsub.s32 0, %v8626
      %v8628 = vrot.slane %v8623, %v8627
      %v8629 = vlaneseq
      %v8630 = vshrl.u32 %v8629, 7
      %v8631 = vsub.s32 1, %v8630
      %v8632 = vrot.slane %v8623, %v8631
      %v8633 = vlaneseq
      %v8634 = vshrl.u32 %v8633, 7
      %v8635 = vsub.s32 2, %v8634
      %v8636 = vrot.slane %v8623, %v8635
      %v8637 = vlaneseq
      %v8638 = vshrl.u32 %v8637, 7
      %v8639 = vsub.s32 3, %v8638
      %v8640 = vrot.slane %v8623, %v8639
      %v8677 = vunpack.c.l.b16 %v8591
      %v8678 = vunpack.c.h.b16 %v8591
      %v8679 = vunpack.c.l.b16 %v8592
      %v8680 = vunpack.c.h.b16 %v8592
      %v8681 = vunpack.c.l.b16 %v8593
      %v8682 = vunpack.c.h.b16 %v8593
      %v8683 = vunpack.c.l.b16 %v8594
      %v8684 = vunpack.c.h.b16 %v8594
      %v8685 = vunpack.c.l.b16 %v8595
      %v8686 = vunpack.c.h.b16 %v8595
      %v8687 = vunpack.c.l.b16 %v8596
      %v8688 = vunpack.c.h.b16 %v8596
      %v8689 = vunpack.c.l.b16 %v8597
      %v8690 = vunpack.c.h.b16 %v8597
      %v8691 = vunpack.c.l.b16 %v8598
      %v8692 = vunpack.c.h.b16 %v8598
      %v8693 = vunpack.c.l.b16 %v8599
      %v8694 = vunpack.c.h.b16 %v8599
      %v8695 = vunpack.c.l.b16 %v8600
      %v8696 = vunpack.c.h.b16 %v8600
      %v8697 = vunpack.c.l.b16 %v8601
      %v8698 = vunpack.c.h.b16 %v8601
      %v8699 = vunpack.c.l.b16 %v8602
      %v8700 = vunpack.c.h.b16 %v8602
      %v8701 = vunpack.c.l.b16 %v8603
      %v8702 = vunpack.c.h.b16 %v8603
      %v8703 = vunpack.c.l.b16 %v8604
      %v8704 = vunpack.c.h.b16 %v8604
      %v8705 = vunpack.c.l.b16 %v8605
      %v8706 = vunpack.c.h.b16 %v8605
      %v8707 = vunpack.c.l.b16 %v8606
      %v8708 = vunpack.c.h.b16 %v8606
      %v8709 = vunpack.c.l.b16 %v8607
      %v8710 = vunpack.c.h.b16 %v8607
      %v8711 = vunpack.c.l.b16 %v8608
      %v8712 = vunpack.c.h.b16 %v8608
      %v8713 = vunpack.c.l.b16 %v8609
      %v8714 = vunpack.c.h.b16 %v8609
      %v8715 = vunpack.c.l.b16 %v8610
      %v8716 = vunpack.c.h.b16 %v8610
      %v8717 = vunpack.c.l.b16 %v8611
      %v8718 = vunpack.c.h.b16 %v8611
      %v8719 = vunpack.c.l.b16 %v8612
      %v8720 = vunpack.c.h.b16 %v8612
      %v8721 = vunpack.c.l.b16 %v8613
      %v8722 = vunpack.c.h.b16 %v8613
      %v8723 = vunpack.c.l.b16 %v8614
      %v8724 = vunpack.c.h.b16 %v8614
      %v8725 = vunpack.c.l.b16 %v8615
      %v8726 = vunpack.c.h.b16 %v8615
      %v8727 = vunpack.c.l.b16 %v8616
      %v8728 = vunpack.c.h.b16 %v8616
      %v8729 = vunpack.c.l.b16 %v8617
      %v8730 = vunpack.c.h.b16 %v8617
      %v8731 = vunpack.c.l.b16 %v8618
      %v8732 = vunpack.c.h.b16 %v8618
      %v8733 = vunpack.c.l.b16 %v8619
      %v8734 = vunpack.c.h.b16 %v8619
      %v8735 = vunpack.c.l.b16 %v8620
      %v8736 = vunpack.c.h.b16 %v8620
      %v8737 = vunpack.c.l.b16 %v8621
      %v8738 = vunpack.c.h.b16 %v8621
      %v8739 = vunpack.c.l.b16 %v8622
      %v8740 = vunpack.c.h.b16 %v8622
      %v8741 = vpack.c.b16 %v8681, %v8677
      %v8742 = vpack.c.b16 %v8682, %v8678
      %v8743 = vpack.c.b16 %v8683, %v8679
      %v8744 = vpack.c.b16 %v8684, %v8680
      %v8745 = vpack.c.b16 %v8689, %v8685
      %v8746 = vpack.c.b16 %v8690, %v8686
      %v8747 = vpack.c.b16 %v8691, %v8687
      %v8748 = vpack.c.b16 %v8692, %v8688
      %v8749 = vpack.c.b16 %v8697, %v8693
      %v8750 = vpack.c.b16 %v8698, %v8694
      %v8751 = vpack.c.b16 %v8699, %v8695
      %v8752 = vpack.c.b16 %v8700, %v8696
      %v8753 = vpack.c.b16 %v8705, %v8701
      %v8754 = vpack.c.b16 %v8706, %v8702
      %v8755 = vpack.c.b16 %v8707, %v8703
      %v8756 = vpack.c.b16 %v8708, %v8704
      %v8757 = vpack.c.b16 %v8713, %v8709
      %v8758 = vpack.c.b16 %v8714, %v8710
      %v8759 = vpack.c.b16 %v8715, %v8711
      %v8760 = vpack.c.b16 %v8716, %v8712
      %v8761 = vpack.c.b16 %v8721, %v8717
      %v8762 = vpack.c.b16 %v8722, %v8718
      %v8763 = vpack.c.b16 %v8723, %v8719
      %v8764 = vpack.c.b16 %v8724, %v8720
      %v8765 = vpack.c.b16 %v8729, %v8725
      %v8766 = vpack.c.b16 %v8730, %v8726
      %v8767 = vpack.c.b16 %v8731, %v8727
      %v8768 = vpack.c.b16 %v8732, %v8728
      %v8769 = vpack.c.b16 %v8737, %v8733
      %v8770 = vpack.c.b16 %v8738, %v8734
      %v8771 = vpack.c.b16 %v8739, %v8735
      %v8772 = vpack.c.b16 %v8740, %v8736
      %8805 = vmatprep.subr.bf16.mxu0 %v8742
      %8806 = vmatpush1.bf16.msra.mxu0 %v8741
      %8807 = vmatprep.subr.bf16.mxu0 %v8746
      %8808 = vmatpush1.bf16.msra.mxu0 %v8745
      %8809 = vmatprep.subr.bf16.mxu0 %v8750
      %8810 = vmatpush1.bf16.msra.mxu0 %v8749
      %8811 = vmatprep.subr.bf16.mxu0 %v8754
      %8812 = vmatpush1.bf16.msra.mxu0 %v8753
      %8813 = vmatprep.subr.bf16.mxu0 %v8758
      %8814 = vmatpush1.bf16.msra.mxu0 %v8757
      %8815 = vmatprep.subr.bf16.mxu0 %v8762
      %8816 = vmatpush1.bf16.msra.mxu0 %v8761
      %8817 = vmatprep.subr.bf16.mxu0 %v8766
      %8818 = vmatpush1.bf16.msra.mxu0 %v8765
      %8819 = vmatprep.subr.bf16.mxu0 %v8770
      %8820 = vmatpush1.bf16.msra.mxu0 %v8769
      %8821 = vmatprep.subr.bf16.mxu0 0
      %8822 = vmatpush1.bf16.msra.mxu0 0
      %8823 = vmatprep.subr.bf16.mxu0 0
      %8824 = vmatpush1.bf16.msra.mxu0 0
      %8825 = vmatprep.subr.bf16.mxu0 0
      %8826 = vmatpush1.bf16.msra.mxu0 0
      %8827 = vmatprep.subr.bf16.mxu0 0
      %8828 = vmatpush1.bf16.msra.mxu0 0
      %8829 = vmatprep.subr.bf16.mxu0 0
      %8830 = vmatpush1.bf16.msra.mxu0 0
      %8831 = vmatprep.subr.bf16.mxu0 0
      %8832 = vmatpush1.bf16.msra.mxu0 0
      %8833 = vmatprep.subr.bf16.mxu0 0
      %8834 = vmatpush1.bf16.msra.mxu0 0
      %8835 = vmatprep.subr.bf16.mxu0 0
      %8836 = vmatpush1.bf16.msra.mxu0 0
      %8837 = vmatprep.mubr.bf16.mxu0 0
      %8838 = vmatmul.mubr.bf16.gmra.mrb[0].mxu0 %v8583
      %v8839 = vpop.f32.mrb[0].mxu0
      %v8840 = vadd.f32 %v8628, %v8839
      %v8841 = vpop.f32.mrb[0].mxu0
      %v8842 = vadd.f32 %v8632, %v8841
      %v8843 = vpop.f32.mrb[0].mxu0
      %v8844 = vadd.f32 %v8628, %v8843
      %v8845 = vpop.f32.mrb[0].mxu0
      %v8846 = vadd.f32 %v8632, %v8845
      %8847 = vmatprep.mubr.bf16.mxu0 0
      %8848 = vmatmul.mubr.bf16.gmra.mrb[0].mxu0 %v8584
      %v8849 = vpop.f32.mrb[0].mxu0
      %v8850 = vadd.f32 %v8628, %v8849
      %v8851 = vpop.f32.mrb[0].mxu0
      %v8852 = vadd.f32 %v8632, %v8851
      %v8853 = vpop.f32.mrb[0].mxu0
      %v8854 = vadd.f32 %v8628, %v8853
      %v8855 = vpop.f32.mrb[0].mxu0
      %v8856 = vadd.f32 %v8632, %v8855
      %8857 = vmatprep.mubr.bf16.mxu0 0
      %8858 = vmatmul.mubr.bf16.gmra.mrb[0].mxu0 %v8585
      %v8859 = vpop.f32.mrb[0].mxu0
      %v8860 = vadd.f32 %v8628, %v8859
      %v8861 = vpop.f32.mrb[0].mxu0
      %v8862 = vadd.f32 %v8632, %v8861
      %v8863 = vpop.f32.mrb[0].mxu0
      %v8864 = vadd.f32 %v8628, %v8863
      %v8865 = vpop.f32.mrb[0].mxu0
      %v8866 = vadd.f32 %v8632, %v8865
      %8867 = vmatprep.mubr.bf16.mxu0 0
      %8868 = vmatmul.mubr.bf16.gmra.mrb[0].mxu0 %v8586
      %v8869 = vpop.f32.mrb[0].mxu0
      %v8870 = vadd.f32 %v8628, %v8869
      %v8871 = vpop.f32.mrb[0].mxu0
      %v8872 = vadd.f32 %v8632, %v8871
      %v8873 = vpop.f32.mrb[0].mxu0
      %v8874 = vadd.f32 %v8628, %v8873
      %v8875 = vpop.f32.mrb[0].mxu0
      %v8876 = vadd.f32 %v8632, %v8875
      %8877 = vmatprep.mubr.bf16.mxu0 0
      %8878 = vmatmul.mubr.bf16.gmra.mrb[0].mxu0 %v8587
      %v8879 = vpop.f32.mrb[0].mxu0
      %v8880 = vadd.f32 %v8628, %v8879
      %v8881 = vpop.f32.mrb[0].mxu0
      %v8882 = vadd.f32 %v8632, %v8881
      %v8883 = vpop.f32.mrb[0].mxu0
      %v8884 = vadd.f32 %v8628, %v8883
      %v8885 = vpop.f32.mrb[0].mxu0
      %v8886 = vadd.f32 %v8632, %v8885
      %8887 = vmatprep.mubr.bf16.mxu0 0
      %8888 = vmatmul.mubr.bf16.gmra.mrb[0].mxu0 %v8588
      %v8889 = vpop.f32.mrb[0].mxu0
      %v8890 = vadd.f32 %v8628, %v8889
      %v8891 = vpop.f32.mrb[0].mxu0
      %v8892 = vadd.f32 %v8632, %v8891
      %v8893 = vpop.f32.mrb[0].mxu0
      %v8894 = vadd.f32 %v8628, %v8893
      %v8895 = vpop.f32.mrb[0].mxu0
      %v8896 = vadd.f32 %v8632, %v8895
      %8897 = vmatprep.mubr.bf16.mxu0 0
      %8898 = vmatmul.mubr.bf16.gmra.mrb[0].mxu0 %v8589
      %v8899 = vpop.f32.mrb[0].mxu0
      %v8900 = vadd.f32 %v8628, %v8899
      %v8901 = vpop.f32.mrb[0].mxu0
      %v8902 = vadd.f32 %v8632, %v8901
      %v8903 = vpop.f32.mrb[0].mxu0
      %v8904 = vadd.f32 %v8628, %v8903
      %v8905 = vpop.f32.mrb[0].mxu0
      %v8906 = vadd.f32 %v8632, %v8905
      %8907 = vmatprep.mubr.bf16.mxu0 0
      %8908 = vmatmul.mubr.bf16.gmra.mrb[0].mxu0 %v8590
      %v8909 = vpop.f32.mrb[0].mxu0
      %v8910 = vadd.f32 %v8628, %v8909
      %v8911 = vpop.f32.mrb[0].mxu0
      %v8912 = vadd.f32 %v8632, %v8911
      %v8913 = vpop.f32.mrb[0].mxu0
      %v8914 = vadd.f32 %v8628, %v8913
      %v8915 = vpop.f32.mrb[0].mxu0
      %v8916 = vadd.f32 %v8632, %v8915
      %8917 = vdwg.mxu0
      %8918 = vmatprep.subr.bf16.mxu0 %v8744
      %8919 = vmatpush1.bf16.msra.mxu0 %v8743
      %8920 = vmatprep.subr.bf16.mxu0 %v8748
      %8921 = vmatpush1.bf16.msra.mxu0 %v8747
      %8922 = vmatprep.subr.bf16.mxu0 %v8752
      %8923 = vmatpush1.bf16.msra.mxu0 %v8751
      %8924 = vmatprep.subr.bf16.mxu0 %v8756
      %8925 = vmatpush1.bf16.msra.mxu0 %v8755
      %8926 = vmatprep.subr.bf16.mxu0 %v8760
      %8927 = vmatpush1.bf16.msra.mxu0 %v8759
      %8928 = vmatprep.subr.bf16.mxu0 %v8764
      %8929 = vmatpush1.bf16.msra.mxu0 %v8763
      %8930 = vmatprep.subr.bf16.mxu0 %v8768
      %8931 = vmatpush1.bf16.msra.mxu0 %v8767
      %8932 = vmatprep.subr.bf16.mxu0 %v8772
      %8933 = vmatpush1.bf16.msra.mxu0 %v8771
      %8934 = vmatprep.subr.bf16.mxu0 0
      %8935 = vmatpush1.bf16.msra.mxu0 0
      %8936 = vmatprep.subr.bf16.mxu0 0
      %8937 = vmatpush1.bf16.msra.mxu0 0
      %8938 = vmatprep.subr.bf16.mxu0 0
      %8939 = vmatpush1.bf16.msra.mxu0 0
      %8940 = vmatprep.subr.bf16.mxu0 0
      %8941 = vmatpush1.bf16.msra.mxu0 0
      %8942 = vmatprep.subr.bf16.mxu0 0
      %8943 = vmatpush1.bf16.msra.mxu0 0
      %8944 = vmatprep.subr.bf16.mxu0 0
      %8945 = vmatpush1.bf16.msra.mxu0 0
      %8946 = vmatprep.subr.bf16.mxu0 0
      %8947 = vmatpush1.bf16.msra.mxu0 0
      %8948 = vmatprep.subr.bf16.mxu0 0
      %8949 = vmatpush1.bf16.msra.mxu0 0
      %8950 = vmatprep.mubr.bf16.mxu0 0
      %8951 = vmatmul.mubr.bf16.gmra.mrb[0].mxu0 %v8583
      %v8952 = vpop.f32.mrb[0].mxu0
      %v8953 = vadd.f32 %v8636, %v8952
      %v8954 = vpop.f32.mrb[0].mxu0
      %v8955 = vadd.f32 %v8640, %v8954
      %v8956 = vpop.f32.mrb[0].mxu0
      %v8957 = vadd.f32 %v8636, %v8956
      %v8958 = vpop.f32.mrb[0].mxu0
      %v8959 = vadd.f32 %v8640, %v8958
      %8960 = vmatprep.mubr.bf16.mxu0 0
      %8961 = vmatmul.mubr.bf16.gmra.mrb[0].mxu0 %v8584
      %v8962 = vpop.f32.mrb[0].mxu0
      %v8963 = vadd.f32 %v8636, %v8962
      %v8964 = vpop.f32.mrb[0].mxu0
      %v8965 = vadd.f32 %v8640, %v8964
      %v8966 = vpop.f32.mrb[0].mxu0
      %v8967 = vadd.f32 %v8636, %v8966
      %v8968 = vpop.f32.mrb[0].mxu0
      %v8969 = vadd.f32 %v8640, %v8968
      %8970 = vmatprep.mubr.bf16.mxu0 0
      %8971 = vmatmul.mubr.bf16.gmra.mrb[0].mxu0 %v8585
      %v8972 = vpop.f32.mrb[0].mxu0
      %v8973 = vadd.f32 %v8636, %v8972
      %v8974 = vpop.f32.mrb[0].mxu0
      %v8975 = vadd.f32 %v8640, %v8974
      %v8976 = vpop.f32.mrb[0].mxu0
      %v8977 = vadd.f32 %v8636, %v8976
      %v8978 = vpop.f32.mrb[0].mxu0
      %v8979 = vadd.f32 %v8640, %v8978
      %8980 = vmatprep.mubr.bf16.mxu0 0
      %8981 = vmatmul.mubr.bf16.gmra.mrb[0].mxu0 %v8586
      %v8982 = vpop.f32.mrb[0].mxu0
      %v8983 = vadd.f32 %v8636, %v8982
      %v8984 = vpop.f32.mrb[0].mxu0
      %v8985 = vadd.f32 %v8640, %v8984
      %v8986 = vpop.f32.mrb[0].mxu0
      %v8987 = vadd.f32 %v8636, %v8986
      %v8988 = vpop.f32.mrb[0].mxu0
      %v8989 = vadd.f32 %v8640, %v8988
      %8990 = vmatprep.mubr.bf16.mxu0 0
      %8991 = vmatmul.mubr.bf16.gmra.mrb[0].mxu0 %v8587
      %v8992 = vpop.f32.mrb[0].mxu0
      %v8993 = vadd.f32 %v8636, %v8992
      %v8994 = vpop.f32.mrb[0].mxu0
      %v8995 = vadd.f32 %v8640, %v8994
      %v8996 = vpop.f32.mrb[0].mxu0
      %v8997 = vadd.f32 %v8636, %v8996
      %v8998 = vpop.f32.mrb[0].mxu0
      %v8999 = vadd.f32 %v8640, %v8998
      %9000 = vmatprep.mubr.bf16.mxu0 0
      %9001 = vmatmul.mubr.bf16.gmra.mrb[0].mxu0 %v8588
      %v9002 = vpop.f32.mrb[0].mxu0
      %v9003 = vadd.f32 %v8636, %v9002
      %v9004 = vpop.f32.mrb[0].mxu0
      %v9005 = vadd.f32 %v8640, %v9004
      %v9006 = vpop.f32.mrb[0].mxu0
      %v9007 = vadd.f32 %v8636, %v9006
      %v9008 = vpop.f32.mrb[0].mxu0
      %v9009 = vadd.f32 %v8640, %v9008
      %9010 = vmatprep.mubr.bf16.mxu0 0
      %9011 = vmatmul.mubr.bf16.gmra.mrb[0].mxu0 %v8589
      %v9012 = vpop.f32.mrb[0].mxu0
      %v9013 = vadd.f32 %v8636, %v9012
      %v9014 = vpop.f32.mrb[0].mxu0
      %v9015 = vadd.f32 %v8640, %v9014
      %v9016 = vpop.f32.mrb[0].mxu0
      %v9017 = vadd.f32 %v8636, %v9016
      %v9018 = vpop.f32.mrb[0].mxu0
      %v9019 = vadd.f32 %v8640, %v9018
      %9020 = vmatprep.mubr.bf16.mxu0 0
      %9021 = vmatmul.mubr.bf16.gmra.mrb[0].mxu0 %v8590
      %v9022 = vpop.f32.mrb[0].mxu0
      %v9023 = vadd.f32 %v8636, %v9022
      %v9024 = vpop.f32.mrb[0].mxu0
      %v9025 = vadd.f32 %v8640, %v9024
      %v9026 = vpop.f32.mrb[0].mxu0
      %v9027 = vadd.f32 %v8636, %v9026
      %v9028 = vpop.f32.mrb[0].mxu0
      %v9029 = vadd.f32 %v8640, %v9028
      %9030 = vdwg.mxu0
      %v9031 = vmul.f32 %v8840, 0.5
      %v9032 = vmul.f32 %v8842, 0.5
      %v9033 = vmul.f32 %v8953, 0.5
      %v9034 = vmul.f32 %v8955, 0.5
      %v9035 = vmul.f32 %v8844, 0.5
      %v9036 = vmul.f32 %v8846, 0.5
      %v9037 = vmul.f32 %v8957, 0.5
      %v9038 = vmul.f32 %v8959, 0.5
      %v9039 = vmul.f32 %v8850, 0.5
      %v9040 = vmul.f32 %v8852, 0.5
      %v9041 = vmul.f32 %v8963, 0.5
      %v9042 = vmul.f32 %v8965, 0.5
      %v9043 = vmul.f32 %v8854, 0.5
      %v9044 = vmul.f32 %v8856, 0.5
      %v9045 = vmul.f32 %v8967, 0.5
      %v9046 = vmul.f32 %v8969, 0.5
      %v9047 = vmul.f32 %v8860, 0.5
      %v9048 = vmul.f32 %v8862, 0.5
      %v9049 = vmul.f32 %v8973, 0.5
      %v9050 = vmul.f32 %v8975, 0.5
      %v9051 = vmul.f32 %v8864, 0.5
      %v9052 = vmul.f32 %v8866, 0.5
      %v9053 = vmul.f32 %v8977, 0.5
      %v9054 = vmul.f32 %v8979, 0.5
      %v9055 = vmul.f32 %v8870, 0.5
      %v9056 = vmul.f32 %v8872, 0.5
      %v9057 = vmul.f32 %v8983, 0.5
      %v9058 = vmul.f32 %v8985, 0.5
      %v9059 = vmul.f32 %v8874, 0.5
      %v9060 = vmul.f32 %v8876, 0.5
      %v9061 = vmul.f32 %v8987, 0.5
      %v9062 = vmul.f32 %v8989, 0.5
      %v9063 = vmul.f32 %v8880, 0.5
      %v9064 = vmul.f32 %v8882, 0.5
      %v9065 = vmul.f32 %v8993, 0.5
      %v9066 = vmul.f32 %v8995, 0.5
      %v9067 = vmul.f32 %v8884, 0.5
      %v9068 = vmul.f32 %v8886, 0.5
      %v9069 = vmul.f32 %v8997, 0.5
      %v9070 = vmul.f32 %v8999, 0.5
      %v9071 = vmul.f32 %v8890, 0.5
      %v9072 = vmul.f32 %v8892, 0.5
      %v9073 = vmul.f32 %v9003, 0.5
      %v9074 = vmul.f32 %v9005, 0.5
      %v9075 = vmul.f32 %v8894, 0.5
      %v9076 = vmul.f32 %v8896, 0.5
      %v9077 = vmul.f32 %v9007, 0.5
      %v9078 = vmul.f32 %v9009, 0.5
      %v9079 = vmul.f32 %v8900, 0.5
      %v9080 = vmul.f32 %v8902, 0.5
      %v9081 = vmul.f32 %v9013, 0.5
      %v9082 = vmul.f32 %v9015, 0.5
      %v9083 = vmul.f32 %v8904, 0.5
      %v9084 = vmul.f32 %v8906, 0.5
      %v9085 = vmul.f32 %v9017, 0.5
      %v9086 = vmul.f32 %v9019, 0.5
      %v9087 = vmul.f32 %v8910, 0.5
      %v9088 = vmul.f32 %v8912, 0.5
      %v9089 = vmul.f32 %v9023, 0.5
      %v9090 = vmul.f32 %v9025, 0.5
      %v9091 = vmul.f32 %v8914, 0.5
      %v9092 = vmul.f32 %v8916, 0.5
      %v9093 = vmul.f32 %v9027, 0.5
      %v9094 = vmul.f32 %v9029, 0.5
      %v9095 = vmul.f32 %v8840, 0.70710677
      %v9096 = vmul.f32 %v8842, 0.70710677
      %v9097 = vmul.f32 %v8953, 0.70710677
      %v9098 = vmul.f32 %v8955, 0.70710677
      %v9099 = vmul.f32 %v8844, 0.70710677
      %v9100 = vmul.f32 %v8846, 0.70710677
      %v9101 = vmul.f32 %v8957, 0.70710677
      %v9102 = vmul.f32 %v8959, 0.70710677
      %v9103 = vmul.f32 %v8850, 0.70710677
      %v9104 = vmul.f32 %v8852, 0.70710677
      %v9105 = vmul.f32 %v8963, 0.70710677
      %v9106 = vmul.f32 %v8965, 0.70710677
      %v9107 = vmul.f32 %v8854, 0.70710677
      %v9108 = vmul.f32 %v8856, 0.70710677
      %v9109 = vmul.f32 %v8967, 0.70710677
      %v9110 = vmul.f32 %v8969, 0.70710677
      %v9111 = vmul.f32 %v8860, 0.70710677
      %v9112 = vmul.f32 %v8862, 0.70710677
      %v9113 = vmul.f32 %v8973, 0.70710677
      %v9114 = vmul.f32 %v8975, 0.70710677
      %v9115 = vmul.f32 %v8864, 0.70710677
      %v9116 = vmul.f32 %v8866, 0.70710677
      %v9117 = vmul.f32 %v8977, 0.70710677
      %v9118 = vmul.f32 %v8979, 0.70710677
      %v9119 = vmul.f32 %v8870, 0.70710677
      %v9120 = vmul.f32 %v8872, 0.70710677
      %v9121 = vmul.f32 %v8983, 0.70710677
      %v9122 = vmul.f32 %v8985, 0.70710677
      %v9123 = vmul.f32 %v8874, 0.70710677
      %v9124 = vmul.f32 %v8876, 0.70710677
      %v9125 = vmul.f32 %v8987, 0.70710677
      %v9126 = vmul.f32 %v8989, 0.70710677
      %v9127 = vmul.f32 %v8880, 0.70710677
      %v9128 = vmul.f32 %v8882, 0.70710677
      %v9129 = vmul.f32 %v8993, 0.70710677
      %v9130 = vmul.f32 %v8995, 0.70710677
      %v9131 = vmul.f32 %v8884, 0.70710677
      %v9132 = vmul.f32 %v8886, 0.70710677
      %v9133 = vmul.f32 %v8997, 0.70710677
      %v9134 = vmul.f32 %v8999, 0.70710677
      %v9135 = vmul.f32 %v8890, 0.70710677
      %v9136 = vmul.f32 %v8892, 0.70710677
      %v9137 = vmul.f32 %v9003, 0.70710677
      %v9138 = vmul.f32 %v9005, 0.70710677
      %v9139 = vmul.f32 %v8894, 0.70710677
      %v9140 = vmul.f32 %v8896, 0.70710677
      %v9141 = vmul.f32 %v9007, 0.70710677
      %v9142 = vmul.f32 %v9009, 0.70710677
      %v9143 = vmul.f32 %v8900, 0.70710677
      %v9144 = vmul.f32 %v8902, 0.70710677
      %v9145 = vmul.f32 %v9013, 0.70710677
      %v9146 = vmul.f32 %v9015, 0.70710677
      %v9147 = vmul.f32 %v8904, 0.70710677
      %v9148 = vmul.f32 %v8906, 0.70710677
      %v9149 = vmul.f32 %v9017, 0.70710677
      %v9150 = vmul.f32 %v9019, 0.70710677
      %v9151 = vmul.f32 %v8910, 0.70710677
      %v9152 = vmul.f32 %v8912, 0.70710677
      %v9153 = vmul.f32 %v9023, 0.70710677
      %v9154 = vmul.f32 %v9025, 0.70710677
      %v9155 = vmul.f32 %v8914, 0.70710677
      %v9156 = vmul.f32 %v8916, 0.70710677
      %v9157 = vmul.f32 %v9027, 0.70710677
      %v9158 = vmul.f32 %v9029, 0.70710677
      %v9159 = verf.f32.pop %v9095
      %v9160 = verf.f32.pop %v9096
      %v9161 = verf.f32.pop %v9097
      %v9162 = verf.f32.pop %v9098
      %v9163 = verf.f32.pop %v9099
      %v9164 = verf.f32.pop %v9100
      %v9165 = verf.f32.pop %v9101
      %v9166 = verf.f32.pop %v9102
      %v9167 = verf.f32.pop %v9103
      %v9168 = verf.f32.pop %v9104
      %v9169 = verf.f32.pop %v9105
      %v9170 = verf.f32.pop %v9106
      %v9171 = verf.f32.pop %v9107
      %v9172 = verf.f32.pop %v9108
      %v9173 = verf.f32.pop %v9109
      %v9174 = verf.f32.pop %v9110
      %v9175 = verf.f32.pop %v9111
      %v9176 = verf.f32.pop %v9112
      %v9177 = verf.f32.pop %v9113
      %v9178 = verf.f32.pop %v9114
      %v9179 = verf.f32.pop %v9115
      %v9180 = verf.f32.pop %v9116
      %v9181 = verf.f32.pop %v9117
      %v9182 = verf.f32.pop %v9118
      %v9183 = verf.f32.pop %v9119
      %v9184 = verf.f32.pop %v9120
      %v9185 = verf.f32.pop %v9121
      %v9186 = verf.f32.pop %v9122
      %v9187 = verf.f32.pop %v9123
      %v9188 = verf.f32.pop %v9124
      %v9189 = verf.f32.pop %v9125
      %v9190 = verf.f32.pop %v9126
      %v9191 = verf.f32.pop %v9127
      %v9192 = verf.f32.pop %v9128
      %v9193 = verf.f32.pop %v9129
      %v9194 = verf.f32.pop %v9130
      %v9195 = verf.f32.pop %v9131
      %v9196 = verf.f32.pop %v9132
      %v9197 = verf.f32.pop %v9133
      %v9198 = verf.f32.pop %v9134
      %v9199 = verf.f32.pop %v9135
      %v9200 = verf.f32.pop %v9136
      %v9201 = verf.f32.pop %v9137
      %v9202 = verf.f32.pop %v9138
      %v9203 = verf.f32.pop %v9139
      %v9204 = verf.f32.pop %v9140
      %v9205 = verf.f32.pop %v9141
      %v9206 = verf.f32.pop %v9142
      %v9207 = verf.f32.pop %v9143
      %v9208 = verf.f32.pop %v9144
      %v9209 = verf.f32.pop %v9145
      %v9210 = verf.f32.pop %v9146
      %v9211 = verf.f32.pop %v9147
      %v9212 = verf.f32.pop %v9148
      %v9213 = verf.f32.pop %v9149
      %v9214 = verf.f32.pop %v9150
      %v9215 = verf.f32.pop %v9151
      %v9216 = verf.f32.pop %v9152
      %v9217 = verf.f32.pop %v9153
      %v9218 = verf.f32.pop %v9154
      %v9219 = verf.f32.pop %v9155
      %v9220 = verf.f32.pop %v9156
      %v9221 = verf.f32.pop %v9157
      %v9222 = verf.f32.pop %v9158
      %v9223 = vadd.f32 %v9159, 1.0
      %v9224 = vadd.f32 %v9160, 1.0
      %v9225 = vadd.f32 %v9161, 1.0
      %v9226 = vadd.f32 %v9162, 1.0
      %v9227 = vadd.f32 %v9163, 1.0
      %v9228 = vadd.f32 %v9164, 1.0
      %v9229 = vadd.f32 %v9165, 1.0
      %v9230 = vadd.f32 %v9166, 1.0
      %v9231 = vadd.f32 %v9167, 1.0
      %v9232 = vadd.f32 %v9168, 1.0
      %v9233 = vadd.f32 %v9169, 1.0
      %v9234 = vadd.f32 %v9170, 1.0
      %v9235 = vadd.f32 %v9171, 1.0
      %v9236 = vadd.f32 %v9172, 1.0
      %v9237 = vadd.f32 %v9173, 1.0
      %v9238 = vadd.f32 %v9174, 1.0
      %v9239 = vadd.f32 %v9175, 1.0
      %v9240 = vadd.f32 %v9176, 1.0
      %v9241 = vadd.f32 %v9177, 1.0
      %v9242 = vadd.f32 %v9178, 1.0
      %v9243 = vadd.f32 %v9179, 1.0
      %v9244 = vadd.f32 %v9180, 1.0
      %v9245 = vadd.f32 %v9181, 1.0
      %v9246 = vadd.f32 %v9182, 1.0
      %v9247 = vadd.f32 %v9183, 1.0
      %v9248 = vadd.f32 %v9184, 1.0
      %v9249 = vadd.f32 %v9185, 1.0
      %v9250 = vadd.f32 %v9186, 1.0
      %v9251 = vadd.f32 %v9187, 1.0
      %v9252 = vadd.f32 %v9188, 1.0
      %v9253 = vadd.f32 %v9189, 1.0
      %v9254 = vadd.f32 %v9190, 1.0
      %v9255 = vadd.f32 %v9191, 1.0
      %v9256 = vadd.f32 %v9192, 1.0
      %v9257 = vadd.f32 %v9193, 1.0
      %v9258 = vadd.f32 %v9194, 1.0
      %v9259 = vadd.f32 %v9195, 1.0
      %v9260 = vadd.f32 %v9196, 1.0
      %v9261 = vadd.f32 %v9197, 1.0
      %v9262 = vadd.f32 %v9198, 1.0
      %v9263 = vadd.f32 %v9199, 1.0
      %v9264 = vadd.f32 %v9200, 1.0
      %v9265 = vadd.f32 %v9201, 1.0
      %v9266 = vadd.f32 %v9202, 1.0
      %v9267 = vadd.f32 %v9203, 1.0
      %v9268 = vadd.f32 %v9204, 1.0
      %v9269 = vadd.f32 %v9205, 1.0
      %v9270 = vadd.f32 %v9206, 1.0
      %v9271 = vadd.f32 %v9207, 1.0
      %v9272 = vadd.f32 %v9208, 1.0
      %v9273 = vadd.f32 %v9209, 1.0
      %v9274 = vadd.f32 %v9210, 1.0
      %v9275 = vadd.f32 %v9211, 1.0
      %v9276 = vadd.f32 %v9212, 1.0
      %v9277 = vadd.f32 %v9213, 1.0
      %v9278 = vadd.f32 %v9214, 1.0
      %v9279 = vadd.f32 %v9215, 1.0
      %v9280 = vadd.f32 %v9216, 1.0
      %v9281 = vadd.f32 %v9217, 1.0
      %v9282 = vadd.f32 %v9218, 1.0
      %v9283 = vadd.f32 %v9219, 1.0
      %v9284 = vadd.f32 %v9220, 1.0
      %v9285 = vadd.f32 %v9221, 1.0
      %v9286 = vadd.f32 %v9222, 1.0
      %v9287 = vmul.f32 %v9031, %v9223
      %v9288 = vmul.f32 %v9032, %v9224
      %v9289 = vmul.f32 %v9033, %v9225
      %v9290 = vmul.f32 %v9034, %v9226
      %v9291 = vmul.f32 %v9035, %v9227
      %v9292 = vmul.f32 %v9036, %v9228
      %v9293 = vmul.f32 %v9037, %v9229
      %v9294 = vmul.f32 %v9038, %v9230
      %v9295 = vmul.f32 %v9039, %v9231
      %v9296 = vmul.f32 %v9040, %v9232
      %v9297 = vmul.f32 %v9041, %v9233
      %v9298 = vmul.f32 %v9042, %v9234
      %v9299 = vmul.f32 %v9043, %v9235
      %v9300 = vmul.f32 %v9044, %v9236
      %v9301 = vmul.f32 %v9045, %v9237
      %v9302 = vmul.f32 %v9046, %v9238
      %v9303 = vmul.f32 %v9047, %v9239
      %v9304 = vmul.f32 %v9048, %v9240
      %v9305 = vmul.f32 %v9049, %v9241
      %v9306 = vmul.f32 %v9050, %v9242
      %v9307 = vmul.f32 %v9051, %v9243
      %v9308 = vmul.f32 %v9052, %v9244
      %v9309 = vmul.f32 %v9053, %v9245
      %v9310 = vmul.f32 %v9054, %v9246
      %v9311 = vmul.f32 %v9055, %v9247
      %v9312 = vmul.f32 %v9056, %v9248
      %v9313 = vmul.f32 %v9057, %v9249
      %v9314 = vmul.f32 %v9058, %v9250
      %v9315 = vmul.f32 %v9059, %v9251
      %v9316 = vmul.f32 %v9060, %v9252
      %v9317 = vmul.f32 %v9061, %v9253
      %v9318 = vmul.f32 %v9062, %v9254
      %v9319 = vmul.f32 %v9063, %v9255
      %v9320 = vmul.f32 %v9064, %v9256
      %v9321 = vmul.f32 %v9065, %v9257
      %v9322 = vmul.f32 %v9066, %v9258
      %v9323 = vmul.f32 %v9067, %v9259
      %v9324 = vmul.f32 %v9068, %v9260
      %v9325 = vmul.f32 %v9069, %v9261
      %v9326 = vmul.f32 %v9070, %v9262
      %v9327 = vmul.f32 %v9071, %v9263
      %v9328 = vmul.f32 %v9072, %v9264
      %v9329 = vmul.f32 %v9073, %v9265
      %v9330 = vmul.f32 %v9074, %v9266
      %v9331 = vmul.f32 %v9075, %v9267
      %v9332 = vmul.f32 %v9076, %v9268
      %v9333 = vmul.f32 %v9077, %v9269
      %v9334 = vmul.f32 %v9078, %v9270
      %v9335 = vmul.f32 %v9079, %v9271
      %v9336 = vmul.f32 %v9080, %v9272
      %v9337 = vmul.f32 %v9081, %v9273
      %v9338 = vmul.f32 %v9082, %v9274
      %v9339 = vmul.f32 %v9083, %v9275
      %v9340 = vmul.f32 %v9084, %v9276
      %v9341 = vmul.f32 %v9085, %v9277
      %v9342 = vmul.f32 %v9086, %v9278
      %v9343 = vmul.f32 %v9087, %v9279
      %v9344 = vmul.f32 %v9088, %v9280
      %v9345 = vmul.f32 %v9089, %v9281
      %v9346 = vmul.f32 %v9090, %v9282
      %v9347 = vmul.f32 %v9091, %v9283
      %v9348 = vmul.f32 %v9092, %v9284
      %v9349 = vmul.f32 %v9093, %v9285
      %v9350 = vmul.f32 %v9094, %v9286
      %v9351 = vpack.c.bf16 %v9291, %v9287
      %v9352 = vpack.c.bf16 %v9292, %v9288
      %v9353 = vpack.c.bf16 %v9293, %v9289
      %v9354 = vpack.c.bf16 %v9294, %v9290
      %v9355 = vpack.c.bf16 %v9299, %v9295
      %v9356 = vpack.c.bf16 %v9300, %v9296
      %v9357 = vpack.c.bf16 %v9301, %v9297
      %v9358 = vpack.c.bf16 %v9302, %v9298
      %v9359 = vpack.c.bf16 %v9307, %v9303
      %v9360 = vpack.c.bf16 %v9308, %v9304
      %v9361 = vpack.c.bf16 %v9309, %v9305
      %v9362 = vpack.c.bf16 %v9310, %v9306
      %v9363 = vpack.c.bf16 %v9315, %v9311
      %v9364 = vpack.c.bf16 %v9316, %v9312
      %v9365 = vpack.c.bf16 %v9317, %v9313
      %v9366 = vpack.c.bf16 %v9318, %v9314
      %v9367 = vpack.c.bf16 %v9323, %v9319
      %v9368 = vpack.c.bf16 %v9324, %v9320
      %v9369 = vpack.c.bf16 %v9325, %v9321
      %v9370 = vpack.c.bf16 %v9326, %v9322
      %v9371 = vpack.c.bf16 %v9331, %v9327
      %v9372 = vpack.c.bf16 %v9332, %v9328
      %v9373 = vpack.c.bf16 %v9333, %v9329
      %v9374 = vpack.c.bf16 %v9334, %v9330
      %v9375 = vpack.c.bf16 %v9339, %v9335
      %v9376 = vpack.c.bf16 %v9340, %v9336
      %v9377 = vpack.c.bf16 %v9341, %v9337
      %v9378 = vpack.c.bf16 %v9342, %v9338
      %v9379 = vpack.c.bf16 %v9347, %v9343
      %v9380 = vpack.c.bf16 %v9348, %v9344
      %v9381 = vpack.c.bf16 %v9349, %v9345
      %v9382 = vpack.c.bf16 %v9350, %v9346
      %v9383 = vld [vmem:[%s7] sm:$0xf]
      %v9384 = vld [vmem:[%s7 + $0x4] sm:$0xf]
      %v9385 = vld [vmem:[%s7 + $0x8] sm:$0xf]
      %v9386 = vld [vmem:[%s7 + $0xc] sm:$0xf]
      %v9387 = vld [vmem:[%s7 + $0x10] sm:$0xf]
      %v9388 = vld [vmem:[%s7 + $0x14] sm:$0xf]
      %v9389 = vld [vmem:[%s7 + $0x18] sm:$0xf]
      %v9390 = vld [vmem:[%s7 + $0x1c] sm:$0xf]
      %v9391 = vld [vmem:[%s7 + $0x20] sm:$0xf]
      %v9392 = vld [vmem:[%s7 + $0x24] sm:$0xf]
      %v9393 = vld [vmem:[%s7 + $0x28] sm:$0xf]
      %v9394 = vld [vmem:[%s7 + $0x2c] sm:$0xf]
      %v9395 = vld [vmem:[%s7 + $0x30] sm:$0xf]
      %v9396 = vld [vmem:[%s7 + $0x34] sm:$0xf]
      %v9397 = vld [vmem:[%s7 + $0x38] sm:$0xf]
      %v9398 = vld [vmem:[%s7 + $0x3c] sm:$0xf]
      %v9399 = vld [vmem:[%s7 + $0x40] sm:$0xf]
      %v9400 = vld [vmem:[%s7 + $0x44] sm:$0xf]
      %v9401 = vld [vmem:[%s7 + $0x48] sm:$0xf]
      %v9402 = vld [vmem:[%s7 + $0x4c] sm:$0xf]
      %v9403 = vld [vmem:[%s7 + $0x50] sm:$0xf]
      %v9404 = vld [vmem:[%s7 + $0x54] sm:$0xf]
      %v9405 = vld [vmem:[%s7 + $0x58] sm:$0xf]
      %v9406 = vld [vmem:[%s7 + $0x5c] sm:$0xf]
      %v9407 = vld [vmem:[%s7 + $0x60] sm:$0xf]
      %v9408 = vld [vmem:[%s7 + $0x64] sm:$0xf]
      %v9409 = vld [vmem:[%s7 + $0x68] sm:$0xf]
      %v9410 = vld [vmem:[%s7 + $0x6c] sm:$0xf]
      %v9411 = vld [vmem:[%s7 + $0x70] sm:$0xf]
      %v9412 = vld [vmem:[%s7 + $0x74] sm:$0xf]
      %v9413 = vld [vmem:[%s7 + $0x78] sm:$0xf]
      %v9414 = vld [vmem:[%s7 + $0x7c] sm:$0xf]
      %v9415 = vld [vmem:[%s7 + $0x80] sm:$0xf]
      %v9416 = vld [vmem:[%s7 + $0x84] sm:$0xf]
      %v9417 = vld [vmem:[%s7 + $0x88] sm:$0xf]
      %v9418 = vld [vmem:[%s7 + $0x8c] sm:$0xf]
      %v9419 = vld [vmem:[%s7 + $0x90] sm:$0xf]
      %v9420 = vld [vmem:[%s7 + $0x94] sm:$0xf]
      %v9421 = vld [vmem:[%s7 + $0x98] sm:$0xf]
      %v9422 = vld [vmem:[%s7 + $0x9c] sm:$0xf]
      %v9423 = vld [vmem:[%s7 + $0xa0] sm:$0xf]
      %v9424 = vld [vmem:[%s7 + $0xa4] sm:$0xf]
      %v9425 = vld [vmem:[%s7 + $0xa8] sm:$0xf]
      %v9426 = vld [vmem:[%s7 + $0xac] sm:$0xf]
      %v9427 = vld [vmem:[%s7 + $0xb0] sm:$0xf]
      %v9428 = vld [vmem:[%s7 + $0xb4] sm:$0xf]
      %v9429 = vld [vmem:[%s7 + $0xb8] sm:$0xf]
      %v9430 = vld [vmem:[%s7 + $0xbc] sm:$0xf]
      %v9431 = vld [vmem:[%s7 + $0xc0] sm:$0xf]
      %v9432 = vld [vmem:[%s7 + $0xc4] sm:$0xf]
      %v9433 = vld [vmem:[%s7 + $0xc8] sm:$0xf]
      %v9434 = vld [vmem:[%s7 + $0xcc] sm:$0xf]
      %v9435 = vld [vmem:[%s7 + $0xd0] sm:$0xf]
      %v9436 = vld [vmem:[%s7 + $0xd4] sm:$0xf]
      %v9437 = vld [vmem:[%s7 + $0xd8] sm:$0xf]
      %v9438 = vld [vmem:[%s7 + $0xdc] sm:$0xf]
      %v9439 = vld [vmem:[%s7 + $0xe0] sm:$0xf]
      %v9440 = vld [vmem:[%s7 + $0xe4] sm:$0xf]
      %v9441 = vld [vmem:[%s7 + $0xe8] sm:$0xf]
      %v9442 = vld [vmem:[%s7 + $0xec] sm:$0xf]
      %v9443 = vld [vmem:[%s7 + $0xf0] sm:$0xf]
      %v9444 = vld [vmem:[%s7 + $0xf4] sm:$0xf]
      %v9445 = vld [vmem:[%s7 + $0xf8] sm:$0xf]
      %v9446 = vld [vmem:[%s7 + $0xfc] sm:$0xf]
      %v9511 = vunpack.c.l.b16 %v9383
      %v9512 = vunpack.c.l.b16 %v9384
      %v9513 = vunpack.c.l.b16 %v9385
      %v9514 = vunpack.c.l.b16 %v9386
      %v9515 = vunpack.c.l.b16 %v9387
      %v9516 = vunpack.c.l.b16 %v9388
      %v9517 = vunpack.c.l.b16 %v9389
      %v9518 = vunpack.c.l.b16 %v9390
      %v9519 = vunpack.c.l.b16 %v9391
      %v9520 = vunpack.c.l.b16 %v9392
      %v9521 = vunpack.c.l.b16 %v9393
      %v9522 = vunpack.c.l.b16 %v9394
      %v9523 = vunpack.c.l.b16 %v9395
      %v9524 = vunpack.c.l.b16 %v9396
      %v9525 = vunpack.c.l.b16 %v9397
      %v9526 = vunpack.c.l.b16 %v9398
      %v9527 = vunpack.c.l.b16 %v9399
      %v9528 = vunpack.c.l.b16 %v9400
      %v9529 = vunpack.c.l.b16 %v9401
      %v9530 = vunpack.c.l.b16 %v9402
      %v9531 = vunpack.c.l.b16 %v9403
      %v9532 = vunpack.c.l.b16 %v9404
      %v9533 = vunpack.c.l.b16 %v9405
      %v9534 = vunpack.c.l.b16 %v9406
      %v9535 = vunpack.c.l.b16 %v9407
      %v9536 = vunpack.c.l.b16 %v9408
      %v9537 = vunpack.c.l.b16 %v9409
      %v9538 = vunpack.c.l.b16 %v9410
      %v9539 = vunpack.c.l.b16 %v9411
      %v9540 = vunpack.c.l.b16 %v9412
      %v9541 = vunpack.c.l.b16 %v9413
      %v9542 = vunpack.c.l.b16 %v9414
      %v9543 = vunpack.c.l.b16 %v9415
      %v9544 = vunpack.c.l.b16 %v9416
      %v9545 = vunpack.c.l.b16 %v9417
      %v9546 = vunpack.c.l.b16 %v9418
      %v9547 = vunpack.c.l.b16 %v9419
      %v9548 = vunpack.c.l.b16 %v9420
      %v9549 = vunpack.c.l.b16 %v9421
      %v9550 = vunpack.c.l.b16 %v9422
      %v9551 = vunpack.c.l.b16 %v9423
      %v9552 = vunpack.c.l.b16 %v9424
      %v9553 = vunpack.c.l.b16 %v9425
      %v9554 = vunpack.c.l.b16 %v9426
      %v9555 = vunpack.c.l.b16 %v9427
      %v9556 = vunpack.c.l.b16 %v9428
      %v9557 = vunpack.c.l.b16 %v9429
      %v9558 = vunpack.c.l.b16 %v9430
      %v9559 = vunpack.c.l.b16 %v9431
      %v9560 = vunpack.c.l.b16 %v9432
      %v9561 = vunpack.c.l.b16 %v9433
      %v9562 = vunpack.c.l.b16 %v9434
      %v9563 = vunpack.c.l.b16 %v9435
      %v9564 = vunpack.c.l.b16 %v9436
      %v9565 = vunpack.c.l.b16 %v9437
      %v9566 = vunpack.c.l.b16 %v9438
      %v9567 = vunpack.c.l.b16 %v9439
      %v9568 = vunpack.c.l.b16 %v9440
      %v9569 = vunpack.c.l.b16 %v9441
      %v9570 = vunpack.c.l.b16 %v9442
      %v9571 = vunpack.c.l.b16 %v9443
      %v9572 = vunpack.c.l.b16 %v9444
      %v9573 = vunpack.c.l.b16 %v9445
      %v9574 = vunpack.c.l.b16 %v9446
      %v9575 = vpack.c.b16 %v9512, %v9511
      %v9576 = vpack.c.b16 %v9514, %v9513
      %v9577 = vpack.c.b16 %v9516, %v9515
      %v9578 = vpack.c.b16 %v9518, %v9517
      %v9579 = vpack.c.b16 %v9520, %v9519
      %v9580 = vpack.c.b16 %v9522, %v9521
      %v9581 = vpack.c.b16 %v9524, %v9523
      %v9582 = vpack.c.b16 %v9526, %v9525
      %v9583 = vpack.c.b16 %v9528, %v9527
      %v9584 = vpack.c.b16 %v9530, %v9529
      %v9585 = vpack.c.b16 %v9532, %v9531
      %v9586 = vpack.c.b16 %v9534, %v9533
      %v9587 = vpack.c.b16 %v9536, %v9535
      %v9588 = vpack.c.b16 %v9538, %v9537
      %v9589 = vpack.c.b16 %v9540, %v9539
      %v9590 = vpack.c.b16 %v9542, %v9541
      %v9591 = vpack.c.b16 %v9544, %v9543
      %v9592 = vpack.c.b16 %v9546, %v9545
      %v9593 = vpack.c.b16 %v9548, %v9547
      %v9594 = vpack.c.b16 %v9550, %v9549
      %v9595 = vpack.c.b16 %v9552, %v9551
      %v9596 = vpack.c.b16 %v9554, %v9553
      %v9597 = vpack.c.b16 %v9556, %v9555
      %v9598 = vpack.c.b16 %v9558, %v9557
      %v9599 = vpack.c.b16 %v9560, %v9559
      %v9600 = vpack.c.b16 %v9562, %v9561
      %v9601 = vpack.c.b16 %v9564, %v9563
      %v9602 = vpack.c.b16 %v9566, %v9565
      %v9603 = vpack.c.b16 %v9568, %v9567
      %v9604 = vpack.c.b16 %v9570, %v9569
      %v9605 = vpack.c.b16 %v9572, %v9571
      %v9606 = vpack.c.b16 %v9574, %v9573
      %9639 = vmatprep.subr.bf16.mxu0 0
      %9640 = vmatpush1.bf16.msra.mxu0 %v9575
      %9641 = vmatprep.subr.bf16.mxu0 0
      %9642 = vmatpush1.bf16.msra.mxu0 %v9576
      %9643 = vmatprep.subr.bf16.mxu0 0
      %9644 = vmatpush1.bf16.msra.mxu0 %v9577
      %9645 = vmatprep.subr.bf16.mxu0 0
      %9646 = vmatpush1.bf16.msra.mxu0 %v9578
      %9647 = vmatprep.subr.bf16.mxu0 0
      %9648 = vmatpush1.bf16.msra.mxu0 %v9579
      %9649 = vmatprep.subr.bf16.mxu0 0
      %9650 = vmatpush1.bf16.msra.mxu0 %v9580
      %9651 = vmatprep.subr.bf16.mxu0 0
      %9652 = vmatpush1.bf16.msra.mxu0 %v9581
      %9653 = vmatprep.subr.bf16.mxu0 0
      %9654 = vmatpush1.bf16.msra.mxu0 %v9582
      %9655 = vmatprep.subr.bf16.mxu0 0
      %9656 = vmatpush1.bf16.msra.mxu0 %v9583
      %9657 = vmatprep.subr.bf16.mxu0 0
      %9658 = vmatpush1.bf16.msra.mxu0 %v9584
      %9659 = vmatprep.subr.bf16.mxu0 0
      %9660 = vmatpush1.bf16.msra.mxu0 %v9585
      %9661 = vmatprep.subr.bf16.mxu0 0
      %9662 = vmatpush1.bf16.msra.mxu0 %v9586
      %9663 = vmatprep.subr.bf16.mxu0 0
      %9664 = vmatpush1.bf16.msra.mxu0 %v9587
      %9665 = vmatprep.subr.bf16.mxu0 0
      %9666 = vmatpush1.bf16.msra.mxu0 %v9588
      %9667 = vmatprep.subr.bf16.mxu0 0
      %9668 = vmatpush1.bf16.msra.mxu0 %v9589
      %9669 = vmatprep.subr.bf16.mxu0 0
      %9670 = vmatpush1.bf16.msra.mxu0 %v9590
      %9671 = vmatprep.mubr.bf16.mxu0 %v9352
      %9672 = vmatmul.mubr.bf16.gmra.mrb[0].mxu0 %v9351
      %v9673 = vpop.f32.mrb[0].mxu0
      %v9674 = vadd.f32 0.0, %v9673
      %v9675 = vpop.f32.mrb[0].mxu0
      %v9676 = vpop.f32.mrb[0].mxu0
      %v9677 = vadd.f32 0.0, %v9676
      %v9678 = vpop.f32.mrb[0].mxu0
      %9679 = vmatprep.mubr.bf16.mxu0 %v9356
      %9680 = vmatmul.mubr.bf16.gmra.mrb[0].mxu0 %v9355
      %v9681 = vpop.f32.mrb[0].mxu0
      %v9682 = vadd.f32 0.0, %v9681
      %v9683 = vpop.f32.mrb[0].mxu0
      %v9684 = vpop.f32.mrb[0].mxu0
      %v9685 = vadd.f32 0.0, %v9684
      %v9686 = vpop.f32.mrb[0].mxu0
      %9687 = vmatprep.mubr.bf16.mxu0 %v9360
      %9688 = vmatmul.mubr.bf16.gmra.mrb[0].mxu0 %v9359
      %v9689 = vpop.f32.mrb[0].mxu0
      %v9690 = vadd.f32 0.0, %v9689
      %v9691 = vpop.f32.mrb[0].mxu0
      %v9692 = vpop.f32.mrb[0].mxu0
      %v9693 = vadd.f32 0.0, %v9692
      %v9694 = vpop.f32.mrb[0].mxu0
      %9695 = vmatprep.mubr.bf16.mxu0 %v9364
      %9696 = vmatmul.mubr.bf16.gmra.mrb[0].mxu0 %v9363
      %v9697 = vpop.f32.mrb[0].mxu0
      %v9698 = vadd.f32 0.0, %v9697
      %v9699 = vpop.f32.mrb[0].mxu0
      %v9700 = vpop.f32.mrb[0].mxu0
      %v9701 = vadd.f32 0.0, %v9700
      %v9702 = vpop.f32.mrb[0].mxu0
      %9703 = vmatprep.mubr.bf16.mxu0 %v9368
      %9704 = vmatmul.mubr.bf16.gmra.mrb[0].mxu0 %v9367
      %v9705 = vpop.f32.mrb[0].mxu0
      %v9706 = vadd.f32 0.0, %v9705
      %v9707 = vpop.f32.mrb[0].mxu0
      %v9708 = vpop.f32.mrb[0].mxu0
      %v9709 = vadd.f32 0.0, %v9708
      %v9710 = vpop.f32.mrb[0].mxu0
      %9711 = vmatprep.mubr.bf16.mxu0 %v9372
      %9712 = vmatmul.mubr.bf16.gmra.mrb[0].mxu0 %v9371
      %v9713 = vpop.f32.mrb[0].mxu0
      %v9714 = vadd.f32 0.0, %v9713
      %v9715 = vpop.f32.mrb[0].mxu0
      %v9716 = vpop.f32.mrb[0].mxu0
      %v9717 = vadd.f32 0.0, %v9716
      %v9718 = vpop.f32.mrb[0].mxu0
      %9719 = vmatprep.mubr.bf16.mxu0 %v9376
      %9720 = vmatmul.mubr.bf16.gmra.mrb[0].mxu0 %v9375
      %v9721 = vpop.f32.mrb[0].mxu0
      %v9722 = vadd.f32 0.0, %v9721
      %v9723 = vpop.f32.mrb[0].mxu0
      %v9724 = vpop.f32.mrb[0].mxu0
      %v9725 = vadd.f32 0.0, %v9724
      %v9726 = vpop.f32.mrb[0].mxu0
      %9727 = vmatprep.mubr.bf16.mxu0 %v9380
      %9728 = vmatmul.mubr.bf16.gmra.mrb[0].mxu0 %v9379
      %v9729 = vpop.f32.mrb[0].mxu0
      %v9730 = vadd.f32 0.0, %v9729
      %v9731 = vpop.f32.mrb[0].mxu0
      %v9732 = vpop.f32.mrb[0].mxu0
      %v9733 = vadd.f32 0.0, %v9732
      %v9734 = vpop.f32.mrb[0].mxu0
      %9735 = vdwg.mxu0
      %9736 = vmatprep.subr.bf16.mxu0 0
      %9737 = vmatpush1.bf16.msra.mxu0 %v9591
      %9738 = vmatprep.subr.bf16.mxu0 0
      %9739 = vmatpush1.bf16.msra.mxu0 %v9592
      %9740 = vmatprep.subr.bf16.mxu0 0
      %9741 = vmatpush1.bf16.msra.mxu0 %v9593
      %9742 = vmatprep.subr.bf16.mxu0 0
      %9743 = vmatpush1.bf16.msra.mxu0 %v9594
      %9744 = vmatprep.subr.bf16.mxu0 0
      %9745 = vmatpush1.bf16.msra.mxu0 %v9595
      %9746 = vmatprep.subr.bf16.mxu0 0
      %9747 = vmatpush1.bf16.msra.mxu0 %v9596
      %9748 = vmatprep.subr.bf16.mxu0 0
      %9749 = vmatpush1.bf16.msra.mxu0 %v9597
      %9750 = vmatprep.subr.bf16.mxu0 0
      %9751 = vmatpush1.bf16.msra.mxu0 %v9598
      %9752 = vmatprep.subr.bf16.mxu0 0
      %9753 = vmatpush1.bf16.msra.mxu0 %v9599
      %9754 = vmatprep.subr.bf16.mxu0 0
      %9755 = vmatpush1.bf16.msra.mxu0 %v9600
      %9756 = vmatprep.subr.bf16.mxu0 0
      %9757 = vmatpush1.bf16.msra.mxu0 %v9601
      %9758 = vmatprep.subr.bf16.mxu0 0
      %9759 = vmatpush1.bf16.msra.mxu0 %v9602
      %9760 = vmatprep.subr.bf16.mxu0 0
      %9761 = vmatpush1.bf16.msra.mxu0 %v9603
      %9762 = vmatprep.subr.bf16.mxu0 0
      %9763 = vmatpush1.bf16.msra.mxu0 %v9604
      %9764 = vmatprep.subr.bf16.mxu0 0
      %9765 = vmatpush1.bf16.msra.mxu0 %v9605
      %9766 = vmatprep.subr.bf16.mxu0 0
      %9767 = vmatpush1.bf16.msra.mxu0 %v9606
      %9768 = vmatprep.mubr.bf16.mxu0 %v9354
      %9769 = vmatmul.mubr.bf16.gmra.mrb[0].mxu0 %v9353
      %v9770 = vpop.f32.mrb[0].mxu0
      %v9771 = vadd.f32 %v9674, %v9770
      %v9772 = vpop.f32.mrb[0].mxu0
      %v9773 = vpop.f32.mrb[0].mxu0
      %v9774 = vadd.f32 %v9677, %v9773
      %v9775 = vpop.f32.mrb[0].mxu0
      %9776 = vmatprep.mubr.bf16.mxu0 %v9358
      %9777 = vmatmul.mubr.bf16.gmra.mrb[0].mxu0 %v9357
      %v9778 = vpop.f32.mrb[0].mxu0
      %v9779 = vadd.f32 %v9682, %v9778
      %v9780 = vpop.f32.mrb[0].mxu0
      %v9781 = vpop.f32.mrb[0].mxu0
      %v9782 = vadd.f32 %v9685, %v9781
      %v9783 = vpop.f32.mrb[0].mxu0
      %9784 = vmatprep.mubr.bf16.mxu0 %v9362
      %9785 = vmatmul.mubr.bf16.gmra.mrb[0].mxu0 %v9361
      %v9786 = vpop.f32.mrb[0].mxu0
      %v9787 = vadd.f32 %v9690, %v9786
      %v9788 = vpop.f32.mrb[0].mxu0
      %v9789 = vpop.f32.mrb[0].mxu0
      %v9790 = vadd.f32 %v9693, %v9789
      %v9791 = vpop.f32.mrb[0].mxu0
      %9792 = vmatprep.mubr.bf16.mxu0 %v9366
      %9793 = vmatmul.mubr.bf16.gmra.mrb[0].mxu0 %v9365
      %v9794 = vpop.f32.mrb[0].mxu0
      %v9795 = vadd.f32 %v9698, %v9794
      %v9796 = vpop.f32.mrb[0].mxu0
      %v9797 = vpop.f32.mrb[0].mxu0
      %v9798 = vadd.f32 %v9701, %v9797
      %v9799 = vpop.f32.mrb[0].mxu0
      %9800 = vmatprep.mubr.bf16.mxu0 %v9370
      %9801 = vmatmul.mubr.bf16.gmra.mrb[0].mxu0 %v9369
      %v9802 = vpop.f32.mrb[0].mxu0
      %v9803 = vadd.f32 %v9706, %v9802
      %v9804 = vpop.f32.mrb[0].mxu0
      %v9805 = vpop.f32.mrb[0].mxu0
      %v9806 = vadd.f32 %v9709, %v9805
      %v9807 = vpop.f32.mrb[0].mxu0
      %9808 = vmatprep.mubr.bf16.mxu0 %v9374
      %9809 = vmatmul.mubr.bf16.gmra.mrb[0].mxu0 %v9373
      %v9810 = vpop.f32.mrb[0].mxu0
      %v9811 = vadd.f32 %v9714, %v9810
      %v9812 = vpop.f32.mrb[0].mxu0
      %v9813 = vpop.f32.mrb[0].mxu0
      %v9814 = vadd.f32 %v9717, %v9813
      %v9815 = vpop.f32.mrb[0].mxu0
      %9816 = vmatprep.mubr.bf16.mxu0 %v9378
      %9817 = vmatmul.mubr.bf16.gmra.mrb[0].mxu0 %v9377
      %v9818 = vpop.f32.mrb[0].mxu0
      %v9819 = vadd.f32 %v9722, %v9818
      %v9820 = vpop.f32.mrb[0].mxu0
      %v9821 = vpop.f32.mrb[0].mxu0
      %v9822 = vadd.f32 %v9725, %v9821
      %v9823 = vpop.f32.mrb[0].mxu0
      %9824 = vmatprep.mubr.bf16.mxu0 %v9382
      %9825 = vmatmul.mubr.bf16.gmra.mrb[0].mxu0 %v9381
      %v9826 = vpop.f32.mrb[0].mxu0
      %v9827 = vadd.f32 %v9730, %v9826
      %v9828 = vpop.f32.mrb[0].mxu0
      %v9829 = vpop.f32.mrb[0].mxu0
      %v9830 = vadd.f32 %v9733, %v9829
      %v9831 = vpop.f32.mrb[0].mxu0
      %9832 = vdwg.mxu0
      %v9833 = vadd.f32 %v8391, %v9771
      %v9834 = vadd.f32 %v8392, %v9774
      %v9835 = vadd.f32 %v8393, %v9779
      %v9836 = vadd.f32 %v8394, %v9782
      %v9837 = vadd.f32 %v8395, %v9787
      %v9838 = vadd.f32 %v8396, %v9790
      %v9839 = vadd.f32 %v8397, %v9795
      %v9840 = vadd.f32 %v8398, %v9798
      %v9841 = vadd.f32 %v8399, %v9803
      %v9842 = vadd.f32 %v8400, %v9806
      %v9843 = vadd.f32 %v8401, %v9811
      %v9844 = vadd.f32 %v8402, %v9814
      %v9845 = vadd.f32 %v8403, %v9819
      %v9846 = vadd.f32 %v8404, %v9822
      %v9847 = vadd.f32 %v8405, %v9827
      %v9848 = vadd.f32 %v8406, %v9830
      %v9849 = vld [vmem:[%s8] sm:$0x1]
      %v9851 = vlaneseq
      %v9852 = vshrl.u32 %v9851, 7
      %v9853 = vsub.s32 0, %v9852
      %v9854 = vrot.slane %v9849, %v9853
      %v9856 = vadd.f32 %v9833, %v9854
      %v9857 = vadd.f32 %v9834, %v9854
      %v9858 = vadd.f32 %v9835, %v9854
      %v9859 = vadd.f32 %v9836, %v9854
      %v9860 = vadd.f32 %v9837, %v9854
      %v9861 = vadd.f32 %v9838, %v9854
      %v9862 = vadd.f32 %v9839, %v9854
      %v9863 = vadd.f32 %v9840, %v9854
      %v9864 = vadd.f32 %v9841, %v9854
      %v9865 = vadd.f32 %v9842, %v9854
      %v9866 = vadd.f32 %v9843, %v9854
      %v9867 = vadd.f32 %v9844, %v9854
      %v9868 = vadd.f32 %v9845, %v9854
      %v9869 = vadd.f32 %v9846, %v9854
      %v9870 = vadd.f32 %v9847, %v9854
      %v9871 = vadd.f32 %v9848, %v9854
      %v9872 = vpack.c.bf16 %v9856, %v9856
      %v9873 = vpack.c.bf16 %v9857, %v9857
      %v9874 = vpack.c.bf16 %v9858, %v9858
      %v9875 = vpack.c.bf16 %v9859, %v9859
      %v9876 = vpack.c.bf16 %v9860, %v9860
      %v9877 = vpack.c.bf16 %v9861, %v9861
      %v9878 = vpack.c.bf16 %v9862, %v9862
      %v9879 = vpack.c.bf16 %v9863, %v9863
      %v9880 = vpack.c.bf16 %v9864, %v9864
      %v9881 = vpack.c.bf16 %v9865, %v9865
      %v9882 = vpack.c.bf16 %v9866, %v9866
      %v9883 = vpack.c.bf16 %v9867, %v9867
      %v9884 = vpack.c.bf16 %v9868, %v9868
      %v9885 = vpack.c.bf16 %v9869, %v9869
      %v9886 = vpack.c.bf16 %v9870, %v9870
      %v9887 = vpack.c.bf16 %v9871, %v9871
      %9888 = vst [vmem:[%s334] sm:$0xf] %v9872
      %9889 = vst [vmem:[%s334 + $0x4] sm:$0xf] %v9873
      %9890 = vst [vmem:[%s334 + $0x8] sm:$0xf] %v9874
      %9891 = vst [vmem:[%s334 + $0xc] sm:$0xf] %v9875
      %9892 = vst [vmem:[%s334 + $0x10] sm:$0xf] %v9876
      %9893 = vst [vmem:[%s334 + $0x14] sm:$0xf] %v9877
      %9894 = vst [vmem:[%s334 + $0x18] sm:$0xf] %v9878
      %9895 = vst [vmem:[%s334 + $0x1c] sm:$0xf] %v9879
      %9896 = vst [vmem:[%s334 + $0x20] sm:$0xf] %v9880
      %9897 = vst [vmem:[%s334 + $0x24] sm:$0xf] %v9881
      %9898 = vst [vmem:[%s334 + $0x28] sm:$0xf] %v9882
      %9899 = vst [vmem:[%s334 + $0x2c] sm:$0xf] %v9883
      %9900 = vst [vmem:[%s334 + $0x30] sm:$0xf] %v9884
      %9901 = vst [vmem:[%s334 + $0x34] sm:$0xf] %v9885
      %9902 = vst [vmem:[%s334 + $0x38] sm:$0xf] %v9886
      %9903 = vst [vmem:[%s334 + $0x3c] sm:$0xf] %v9887
      %s9904 = smul.u32 16, %s20
      %p9905 = scmp.lt.s32.totalorder %s9904, 31
      %s9906 = scalar_select %p9905, %s9904, 31
      %s9907 = smul.addr %s9906, 4
      %s9908 = scalar_lea.vmem %s9, %s9907
      // Predicated region
      $region57: #{rgbd_vit_forward.5} parent=55 // pred_check
        %p9909 = pneg %p232
      $region58: #{rgbd_vit_forward.5} parent=55 // pred_check_branch
        %9911 = sbr.rel (%p9909) target = $region60
      $region59: #{rgbd_vit_forward.5} parent=55 // pred_region
        %s9912 = smul.u32 16, %s20
      $region60: #{rgbd_vit_forward.5} parent=55 // pred_fallthru
        _
    $region56: #{rgbd_vit_forward.5} parent=5 // pred_fallthru
      _
    %p9913 = scmp.le.s32.totalorder 2, %s15
    // Predicated region
    $region61: #{rgbd_vit_forward.5} parent=5 // pred_check
      %p9914 = pneg %p9913
    $region62: #{rgbd_vit_forward.5} parent=5 // pred_check_branch
      %9916 = sbr.rel (%p9914) target = $region64
    $region63: #{rgbd_vit_forward.5} parent=5 // pred_region
      %s9917 = ssub.s32 %s15, 2
      // Predicated region
      $region65: #{rgbd_vit_forward.5} parent=63 // pred_check
        %p9918 = pneg %p238
      $region66: #{rgbd_vit_forward.5} parent=63 // pred_check_branch
        %9920 = sbr.rel (%p9918) target = $region68
      $region67: #{rgbd_vit_forward.5} parent=63 // pred_region
        %s9921 = smul.u32 16, %s21
        %p9922 = scmp.lt.s32.totalorder %s9921, 31
        %s9923 = scalar_select %p9922, %s9921, 31
        %s9924 = smul.addr %s9923, 4
        %s9925 = scalar_lea.vmem %s9, %s9924
      $region68: #{rgbd_vit_forward.5} parent=63 // pred_fallthru
        _
    $region64: #{rgbd_vit_forward.5} parent=5 // pred_fallthru
      _
  $region6: #{rgbd_vit_forward.5} parent=0 // loop_footer
    %s19 = sadd.s32 1, %s15
  $region7: #{rgbd_vit_forward.5} parent=0 // loop_footer_branch
    %14 = sbr.rel target = $region3
  $region8: #{rgbd_vit_forward.5} parent=0 // loop_exit
    _

</llo_original>
